<compile_context>
chip_gen: v7x
topology: tpu7x:2x2x1
jax: 0.10.0
libtpu: 0.0.40
codegen_flags: <defaults>
</compile_context>

<pallas_src>
import functools
import math

import jax
import jax.numpy as jnp
from jax.experimental import pallas as pl
from jax.experimental.pallas import tpu as pltpu


# Row indices of the per-layer (18, D) bias / LayerNorm slab.
(R_SA_BQ, R_SA_BK, R_SA_BV,
 R_CS_BQ, R_CG_BQ,
 R_CS_BK, R_CS_BV,
 R_CG_BK, R_CG_BV,
 R_SA_BO, R_X_BO, R_B2,
 R_N1G, R_N1B, R_N2G, R_N2B, R_N3G, R_N3B) = range(18)
_N_VEC_ROWS = 18


def _layernorm(x, gamma, beta, eps=1e-5):
    # PyTorch LayerNorm: biased variance over the last dim; f32 math.
    mu = jnp.mean(x, axis=-1, keepdims=True)
    var = jnp.mean(jnp.square(x - mu), axis=-1, keepdims=True)
    return (x - mu) * jax.lax.rsqrt(var + eps) * gamma + beta


# ----------------------------------------------------------------------------
# Fused decoder-stack kernel
# ----------------------------------------------------------------------------
def decoder_stack_kernel(tgt_ref, sent_ref, graph_ref,
                         w_in_ref, w_out_ref, w_ff1_ref, w_ff2_ref,
                         vecs_ref, b_ff1_ref, *rest,
                         nhead, has_final_norm):
    if has_final_norm:
        fn_g_ref, fn_b_ref, out_ref = rest
    else:
        (out_ref,) = rest

    layer = pl.program_id(1)
    num_layers = pl.num_programs(1)

    Bt, S, D = tgt_ref.shape
    Ss = sent_ref.shape[1]
    Sg = graph_ref.shape[1]
    H = nhead
    dh = D // H
    M = Bt * S

    # Seed the VMEM-resident carry (the output block) from tgt on the first layer.
    @pl.when(layer == 0)
    def _():
        out_ref[...] = tgt_ref[...].astype(out_ref.dtype)

    x = out_ref[...].reshape(M, D)          # (Bt*S, D) f32, carried across layers

    wi = w_in_ref[0]    # (D, 9D) bf16: [sa_q|sa_k|sa_v | cs_q|cg_q | cs_k|cs_v | cg_k|cg_v]
    wo = w_out_ref[0]   # (3D, D) bf16: rows [sa_wo ; cs_wo ; cg_wo]
    vec = vecs_ref[0]   # (18, D) f32 biases / LN params (1/sqrt(dh) folded into q rows)

    smb = sent_ref[...].reshape(Bt * Ss, D)   # bf16 memories
    gmb = graph_ref[...].reshape(Bt * Sg, D)

    def attn(q, k, v, Sq, Sk):
        """MHA core on flat (Bt*Sq, D) queries / (Bt*Sk, D) keys & values (f32 in)."""
        outs = []
        for bi in range(Bt):   # static unroll: softmax must not mix batch elements
            qh = jnp.swapaxes(
                q[bi * Sq:(bi + 1) * Sq, :].reshape(Sq, H, dh), 0, 1).astype(jnp.bfloat16)
            kh = jnp.swapaxes(
                k[bi * Sk:(bi + 1) * Sk, :].reshape(Sk, H, dh), 0, 1).astype(jnp.bfloat16)
            vh = jnp.swapaxes(
                v[bi * Sk:(bi + 1) * Sk, :].reshape(Sk, H, dh), 0, 1).astype(jnp.bfloat16)
            s = jnp.einsum('hqd,hkd->hqk', qh, kh,
                           preferred_element_type=jnp.float32)        # (H, Sq, Sk)
            s = s - jnp.max(s, axis=-1, keepdims=True)
            e = jnp.exp(s)
            p = e * pl.reciprocal(jnp.sum(e, axis=-1, keepdims=True), approx=True)
            o = jnp.einsum('hqk,hkd->hqd', p.astype(jnp.bfloat16), vh,
                           preferred_element_type=jnp.float32)        # (H, Sq, dh)
            outs.append(jnp.swapaxes(o, 0, 1).reshape(Sq, D))
        return jnp.concatenate(outs, axis=0)                          # (Bt*Sq, D)

    # ---- block 1: self-attention (fused QKV projection, width 3D) -----------
    xb = x.astype(jnp.bfloat16)
    qkv = jnp.dot(xb, wi[:, 0:3 * D], preferred_element_type=jnp.float32)   # (M, 3D)
    o_sa = attn(qkv[:, 0:D] + vec[R_SA_BQ],
                qkv[:, D:2 * D] + vec[R_SA_BK],
                qkv[:, 2 * D:3 * D] + vec[R_SA_BV], S, S)
    a_sa = jnp.dot(o_sa.astype(jnp.bfloat16), wo[0:D, :],
                   preferred_element_type=jnp.float32) + vec[R_SA_BO]
    x = _layernorm(x + a_sa, vec[R_N1G], vec[R_N1B])

    # ---- block 2: double cross-attention (sentence + graph memory) ----------
    x1b = x.astype(jnp.bfloat16)
    cq = jnp.dot(x1b, wi[:, 3 * D:5 * D], preferred_element_type=jnp.float32)    # [cs_q|cg_q]
    kvs = jnp.dot(smb, wi[:, 5 * D:7 * D], preferred_element_type=jnp.float32)   # [cs_k|cs_v]
    kvg = jnp.dot(gmb, wi[:, 7 * D:9 * D], preferred_element_type=jnp.float32)   # [cg_k|cg_v]
    o_cs = attn(cq[:, 0:D] + vec[R_CS_BQ],
                kvs[:, 0:D] + vec[R_CS_BK],
                kvs[:, D:2 * D] + vec[R_CS_BV], S, Ss)
    o_cg = attn(cq[:, D:2 * D] + vec[R_CG_BQ],
                kvg[:, 0:D] + vec[R_CG_BK],
                kvg[:, D:2 * D] + vec[R_CG_BV], S, Sg)
    # One (M, 2D) x (2D, D) matmul does both cross output projections + their sum.
    o_x = jnp.concatenate([o_cs, o_cg], axis=-1).astype(jnp.bfloat16)
    a_x = jnp.dot(o_x, wo[D:3 * D, :],
                  preferred_element_type=jnp.float32) + vec[R_X_BO]
    x = _layernorm(x + a_x, vec[R_N2G], vec[R_N2B])

    # ---- block 3: feed-forward (Linear -> ReLU -> Linear) -------------------
    h = jnp.maximum(
        jnp.dot(x.astype(jnp.bfloat16), w_ff1_ref[0],
                preferred_element_type=jnp.float32) + b_ff1_ref[0, 0], 0.0)
    f = jnp.dot(h.astype(jnp.bfloat16), w_ff2_ref[0],
                preferred_element_type=jnp.float32) + vec[R_B2]
    x = _layernorm(x + f, vec[R_N3G], vec[R_N3B])

    # Carry for the next layer (stays VMEM-resident; HBM writeback only happens
    # when the batch block changes, i.e. once after the last layer).
    out_ref[...] = x.reshape(Bt, S, D).astype(out_ref.dtype)

    if has_final_norm:
        @pl.when(layer == num_layers - 1)
        def _():
            y = _layernorm(x, fn_g_ref[0], fn_b_ref[0])
            out_ref[...] = y.reshape(Bt, S, D).astype(out_ref.dtype)


# ----------------------------------------------------------------------------
# Wrapper (BlockSpecs, grid, VMEM budget)
# ----------------------------------------------------------------------------
def decoder_stack_call(x, sent, graph, params, final_norm, nhead, *,
                       batch_block=None):
    # x: (B, S, D) f32, sent: (B, Ss, D), graph: (B, Sg, D)
    B, S, D = x.shape
    Ss, Sg = sent.shape[1], graph.shape[1]
    L = params["w_in"].shape[0]
    F = params["w_ff1"].shape[-1]
    Bt = B if batch_block is None else batch_block
    assert B % Bt == 0, "batch_block must divide the batch size"
    nb = B // Bt
    has_final_norm = final_norm is not None

    # bf16 memories: halves the sent/graph DMA bytes (keys/values go straight to MXU).
    sent_bf = sent.astype(jnp.bfloat16)
    graph_bf = graph.astype(jnp.bfloat16)

    def w_spec(a):
        # stacked per-layer slab: one layer slice per inner grid step
        return pl.BlockSpec((1,) + tuple(a.shape[1:]), lambda b, l: (l, 0, 0))

    in_specs = [
        pl.BlockSpec((Bt, S, D), lambda b, l: (b, 0, 0)),
        pl.BlockSpec((Bt, Ss, D), lambda b, l: (b, 0, 0)),
        pl.BlockSpec((Bt, Sg, D), lambda b, l: (b, 0, 0)),
        w_spec(params["w_in"]), w_spec(params["w_out"]),
        w_spec(params["w_ff1"]), w_spec(params["w_ff2"]),
        w_spec(params["vecs"]), w_spec(params["b_ff1"]),
    ]
    args = [x, sent_bf, graph_bf,
            params["w_in"], params["w_out"],
            params["w_ff1"], params["w_ff2"],
            params["vecs"], params["b_ff1"]]
    if has_final_norm:
        fn_g = final_norm[0].reshape(1, D).astype(jnp.float32)
        fn_b = final_norm[1].reshape(1, D).astype(jnp.float32)
        in_specs += [pl.BlockSpec((1, D), lambda b, l: (0, 0)),
                     pl.BlockSpec((1, D), lambda b, l: (0, 0))]
        args += [fn_g, fn_b]

    # Explicit VMEM budget (double-buffered per-step blocks + headroom), so the
    # same kernel scales to DialogRE sizes on v5e (16 MiB default scoped limit)
    # and stays within v7x's 64 MiB physical VMEM.
    per_step_bytes = (
        Bt * S * D * 4 + Bt * Ss * D * 2 + Bt * Sg * D * 2 + Bt * S * D * 4
        + D * 9 * D * 2 + 3 * D * D * 2 + D * F * 2 + F * D * 2
        + _N_VEC_ROWS * D * 4 + F * 4
        + (2 * D * 4 if has_final_norm else 0))
    vmem_limit = int(min(max(4 * per_step_bytes, 32 << 20), 100 << 20))

    kernel = functools.partial(decoder_stack_kernel, nhead=nhead,
                               has_final_norm=has_final_norm)

    return pl.pallas_call(
        kernel,
        out_shape=jax.ShapeDtypeStruct((B, S, D), jnp.float32),
        grid=(nb, L),                       # batch blocks outer, layers inner
        in_specs=in_specs,
        out_specs=pl.BlockSpec((Bt, S, D), lambda b, l: (b, 0, 0)),
        compiler_params=pltpu.CompilerParams(
            dimension_semantics=("parallel", "arbitrary"),
            vmem_limit_bytes=vmem_limit),
    )(*args)


def double_attn_transformer_decoder(tgt, sent_memory, graph_memory,
                                    prepared_params, norm_params, nhead,
                                    batch_block=None):
    """tgt: (T, B, D), sent_memory: (Ss, B, D), graph_memory: (Sg, B, D)."""
    x = jnp.transpose(tgt, (1, 0, 2))
    sm = jnp.transpose(sent_memory, (1, 0, 2))
    gm = jnp.transpose(graph_memory, (1, 0, 2))
    y = decoder_stack_call(x, sm, gm, prepared_params, norm_params, nhead,
                           batch_block=batch_block)
    return jnp.transpose(y, (1, 0, 2))


# ----------------------------------------------------------------------------
# Host-side, one-time parameter preparation (NOT on the forward path):
#   * self-attn QKV fused into one (D, 3D) slab; cross Q's into (D, 2D);
#     each memory's K/V into (D, 2D)   -> one (D, 9D) bf16 slab per layer
#   * output projections stacked into a (3D, D) bf16 slab (cross pair uses K=2D)
#   * 1/sqrt(dh) folded into the Q weights / biases
#   * all D-length biases + LayerNorm params packed into one (18, D) f32 slab
# ----------------------------------------------------------------------------
def prepare_decoder_params(layer_params, nhead):
    D = layer_params[0]["sa_wq"].shape[0]
    scale = 1.0 / math.sqrt(D // nhead)
    w_in, w_out, w1, w2, vecs, b1 = [], [], [], [], [], []
    for p in layer_params:
        w_in.append(jnp.concatenate(
            [p["sa_wq"] * scale, p["sa_wk"], p["sa_wv"],
             p["cs_wq"] * scale, p["cg_wq"] * scale,
             p["cs_wk"], p["cs_wv"], p["cg_wk"], p["cg_wv"]],
            axis=1).astype(jnp.bfloat16))
        w_out.append(jnp.concatenate(
            [p["sa_wo"], p["cs_wo"], p["cg_wo"]], axis=0).astype(jnp.bfloat16))
        w1.append(p["w1"].astype(jnp.bfloat16))
        w2.append(p["w2"].astype(jnp.bfloat16))
        vecs.append(jnp.stack(
            [p["sa_bq"] * scale, p["sa_bk"], p["sa_bv"],
             p["cs_bq"] * scale, p["cg_bq"] * scale,
             p["cs_bk"], p["cs_bv"], p["cg_bk"], p["cg_bv"],
             p["sa_bo"], p["cs_bo"] + p["cg_bo"], p["b2"],
             p["n1_g"], p["n1_b"], p["n2_g"], p["n2_b"],
             p["n3_g"], p["n3_b"]], axis=0).astype(jnp.float32))
        b1.append(p["b1"].reshape(1, -1).astype(jnp.float32))
    return {"w_in": jnp.stack(w_in), "w_out": jnp.stack(w_out),
            "w_ff1": jnp.stack(w1), "w_ff2": jnp.stack(w2),
            "vecs": jnp.stack(vecs), "b_ff1": jnp.stack(b1)}


def init_layer_params(key, d_model, dim_ff):
    """Synthetic per-layer weights (x @ W convention), f32."""
    keys = iter(jax.random.split(key, 32))

    def w(shape):
        return jax.random.normal(next(keys), shape, jnp.float32) * 0.02

    p = {}
    for pre in ("sa", "cs", "cg"):
        p[f"{pre}_wq"] = w((d_model, d_model)); p[f"{pre}_bq"] = w((d_model,))
        p[f"{pre}_wk"] = w((d_model, d_model)); p[f"{pre}_bk"] = w((d_model,))
        p[f"{pre}_wv"] = w((d_model, d_model)); p[f"{pre}_bv"] = w((d_model,))
        p[f"{pre}_wo"] = w((d_model, d_model)); p[f"{pre}_bo"] = w((d_model,))
    p["w1"] = w((d_model, dim_ff)); p["b1"] = w((dim_ff,))
    p["w2"] = w((dim_ff, d_model)); p["b2"] = w((d_model,))
    for n in ("n1", "n2", "n3"):
        p[f"{n}_g"] = jnp.ones((d_model,), jnp.float32)
        p[f"{n}_b"] = jnp.zeros((d_model,), jnp.float32)
    return p


if __name__ == "__main__":
    # Small, lane-dense shapes: d_model multiple of 128, seq dims multiple of 8.
    T, B, D, H, F = 8, 2, 128, 4, 256      # tgt_len, batch, d_model, nhead, dim_feedforward
    Ss, Sg = 16, 8                         # sentence / graph memory lengths
    num_layers = 2

    key = jax.random.PRNGKey(0)
    k_in, k_p = jax.random.split(key)
    k1, k2, k3 = jax.random.split(k_in, 3)
    tgt = jax.random.normal(k1, (T, B, D), jnp.float32)
    sent_memory = jax.random.normal(k2, (Ss, B, D), jnp.float32)
    graph_memory = jax.random.normal(k3, (Sg, B, D), jnp.float32)

    layer_keys = jax.random.split(k_p, num_layers)
    raw_layers = [init_layer_params(layer_keys[i], D, F) for i in range(num_layers)]
    prepared = prepare_decoder_params(raw_layers, nhead=H)       # once, at init
    final_norm = (jnp.ones((D,), jnp.float32), jnp.zeros((D,), jnp.float32))

    out = double_attn_transformer_decoder(
        tgt, sent_memory, graph_memory, prepared, final_norm, H)
    out = jax.block_until_ready(out)
    assert out.shape == (T, B, D)
    assert bool(jnp.all(jnp.isfinite(out)))
    print("KERNEL_OK")
</pallas_src>

<mosaic_0001>
module attributes {stable_mosaic.version = 11 : i64} {
  func.func @decoder_stack_kernel(%arg0: i32, %arg1: i32, %arg2: memref<2x8x128xf32, #tpu.memory_space<vmem>>, %arg3: memref<2x16x128xbf16, #tpu.memory_space<vmem>>, %arg4: memref<2x8x128xbf16, #tpu.memory_space<vmem>>, %arg5: memref<1x128x1152xbf16, #tpu.memory_space<vmem>>, %arg6: memref<1x384x128xbf16, #tpu.memory_space<vmem>>, %arg7: memref<1x128x256xbf16, #tpu.memory_space<vmem>>, %arg8: memref<1x256x128xbf16, #tpu.memory_space<vmem>>, %arg9: memref<1x18x128xf32, #tpu.memory_space<vmem>>, %arg10: memref<1x1x256xf32, #tpu.memory_space<vmem>>, %arg11: memref<1x128xf32, #tpu.memory_space<vmem>>, %arg12: memref<1x128xf32, #tpu.memory_space<vmem>>, %arg13: memref<2x8x128xf32, #tpu.memory_space<vmem>>) attributes {dimension_semantics = [#tpu.dimension_semantics<parallel>, #tpu.dimension_semantics<arbitrary>], iteration_bounds = array<i64: 1, 2>, scalar_prefetch = 0 : i64, scratch_operands = 0 : i64, tpu.core_type = #tpu.core_type<tc>, window_params = [{transform_indices = @transform_0, window_bounds = array<i64: 2, 8, 128>}, {transform_indices = @transform_1, window_bounds = array<i64: 2, 16, 128>}, {transform_indices = @transform_2, window_bounds = array<i64: 2, 8, 128>}, {transform_indices = @transform_3, window_bounds = array<i64: 1, 128, 1152>}, {transform_indices = @transform_4, window_bounds = array<i64: 1, 384, 128>}, {transform_indices = @transform_5, window_bounds = array<i64: 1, 128, 256>}, {transform_indices = @transform_6, window_bounds = array<i64: 1, 256, 128>}, {transform_indices = @transform_7, window_bounds = array<i64: 1, 18, 128>}, {transform_indices = @transform_8, window_bounds = array<i64: 1, 1, 256>}, {pipeline_mode = #tpu.pipeline_mode<synchronous>, transform_indices = @transform_9, window_bounds = array<i64: 1, 128>}, {pipeline_mode = #tpu.pipeline_mode<synchronous>, transform_indices = @transform_10, window_bounds = array<i64: 1, 128>}, {transform_indices = @transform_11, window_bounds = array<i64: 2, 8, 128>}]} {
    %c0_i32 = arith.constant 0 : i32
    %0 = arith.cmpi eq, %arg1, %c0_i32 : i32
    %1 = arith.extui %0 : i1 to i32
    %c0_i32_0 = arith.constant 0 : i32
    %2 = arith.cmpi ne, %1, %c0_i32_0 : i32
    scf.if %2 {
      %c0_78 = arith.constant 0 : index
      %c0_79 = arith.constant 0 : index
      %c0_80 = arith.constant 0 : index
      %373 = vector.load %arg2[%c0_78, %c0_79, %c0_80] : memref<2x8x128xf32, #tpu.memory_space<vmem>>, vector<2x8x128xf32>
      %c0_81 = arith.constant 0 : index
      %c0_82 = arith.constant 0 : index
      %c0_83 = arith.constant 0 : index
      %374 = vector.load %arg13[%c0_81, %c0_82, %c0_83] : memref<2x8x128xf32, #tpu.memory_space<vmem>>, vector<2x8x128xf32>
      tpu.vector_store %arg13[%c0_81, %c0_82, %c0_83], %373 {strides = array<i32>} : memref<2x8x128xf32, #tpu.memory_space<vmem>>, vector<2x8x128xf32>,
    } else {
    }
    %c0 = arith.constant 0 : index
    %c0_1 = arith.constant 0 : index
    %c0_2 = arith.constant 0 : index
    %3 = vector.load %arg13[%c0, %c0_1, %c0_2] : memref<2x8x128xf32, #tpu.memory_space<vmem>>, vector<2x8x128xf32>
    %4 = vector.shape_cast %3 : vector<2x8x128xf32> to vector<16x128xf32>
    %c0_3 = arith.constant 0 : index
    %c0_4 = arith.constant 0 : index
    %c0_5 = arith.constant 0 : index
    %5 = vector.load %arg5[%c0_3, %c0_4, %c0_5] : memref<1x128x1152xbf16, #tpu.memory_space<vmem>>, vector<1x128x1152xbf16>
    %6 = vector.shape_cast %5 : vector<1x128x1152xbf16> to vector<128x1152xbf16>
    %c0_6 = arith.constant 0 : index
    %c0_7 = arith.constant 0 : index
    %c0_8 = arith.constant 0 : index
    %7 = vector.load %arg6[%c0_6, %c0_7, %c0_8] : memref<1x384x128xbf16, #tpu.memory_space<vmem>>, vector<1x384x128xbf16>
    %8 = vector.shape_cast %7 : vector<1x384x128xbf16> to vector<384x128xbf16>
    %c0_9 = arith.constant 0 : index
    %c0_10 = arith.constant 0 : index
    %c0_11 = arith.constant 0 : index
    %9 = vector.load %arg9[%c0_9, %c0_10, %c0_11] : memref<1x18x128xf32, #tpu.memory_space<vmem>>, vector<1x18x128xf32>
    %10 = vector.shape_cast %9 : vector<1x18x128xf32> to vector<18x128xf32>
    %c0_12 = arith.constant 0 : index
    %c0_13 = arith.constant 0 : index
    %c0_14 = arith.constant 0 : index
    %11 = vector.load %arg3[%c0_12, %c0_13, %c0_14] : memref<2x16x128xbf16, #tpu.memory_space<vmem>>, vector<2x16x128xbf16>
    %12 = vector.shape_cast %11 : vector<2x16x128xbf16> to vector<32x128xbf16>
    %c0_15 = arith.constant 0 : index
    %c0_16 = arith.constant 0 : index
    %c0_17 = arith.constant 0 : index
    %13 = vector.load %arg4[%c0_15, %c0_16, %c0_17] : memref<2x8x128xbf16, #tpu.memory_space<vmem>>, vector<2x8x128xbf16>
    %14 = vector.shape_cast %13 : vector<2x8x128xbf16> to vector<16x128xbf16>
    %15 = arith.truncf %4 : vector<16x128xf32> to vector<16x128xbf16>
    %16 = vector.extract_strided_slice %6 {offsets = [0, 0], sizes = [128, 384], strides = [1, 1]} : vector<128x1152xbf16> to vector<128x384xbf16>
    %cst = arith.constant dense<0.000000e+00> : vector<16x384xf32>
    %17 = tpu.matmul %15, %16, %cst {dimension_numbers = #tpu.dot_dimension_numbers<[1], [0], [0], [1], [0, 0, 1, 1], [], []>} : vector<16x128xbf16>, vector<128x384xbf16>, vector<16x384xf32> -> vector<16x384xf32>
    %18 = vector.extract_strided_slice %17 {offsets = [0, 0], sizes = [16, 128], strides = [1, 1]} : vector<16x384xf32> to vector<16x128xf32>
    %19 = vector.extract_strided_slice %10 {offsets = [0, 0], sizes = [1, 128], strides = [1, 1]} : vector<18x128xf32> to vector<1x128xf32>
    %20 = vector.shape_cast %19 : vector<1x128xf32> to vector<128xf32>
    %21 = vector.shape_cast %20 : vector<128xf32> to vector<1x128xf32>
    %22 = vector.broadcast %21 : vector<1x128xf32> to vector<16x128xf32>
    %23 = arith.addf %18, %22 : vector<16x128xf32>
    %24 = vector.extract_strided_slice %17 {offsets = [0, 128], sizes = [16, 128], strides = [1, 1]} : vector<16x384xf32> to vector<16x128xf32>
    %25 = vector.extract_strided_slice %10 {offsets = [1, 0], sizes = [1, 128], strides = [1, 1]} : vector<18x128xf32> to vector<1x128xf32>
    %26 = vector.shape_cast %25 : vector<1x128xf32> to vector<128xf32>
    %27 = vector.shape_cast %26 : vector<128xf32> to vector<1x128xf32>
    %28 = vector.broadcast %27 : vector<1x128xf32> to vector<16x128xf32>
    %29 = arith.addf %24, %28 : vector<16x128xf32>
    %30 = vector.extract_strided_slice %17 {offsets = [0, 256], sizes = [16, 128], strides = [1, 1]} : vector<16x384xf32> to vector<16x128xf32>
    %31 = vector.extract_strided_slice %10 {offsets = [2, 0], sizes = [1, 128], strides = [1, 1]} : vector<18x128xf32> to vector<1x128xf32>
    %32 = vector.shape_cast %31 : vector<1x128xf32> to vector<128xf32>
    %33 = vector.shape_cast %32 : vector<128xf32> to vector<1x128xf32>
    %34 = vector.broadcast %33 : vector<1x128xf32> to vector<16x128xf32>
    %35 = arith.addf %30, %34 : vector<16x128xf32>
    %36 = vector.extract_strided_slice %23 {offsets = [0, 0], sizes = [8, 128], strides = [1, 1]} : vector<16x128xf32> to vector<8x128xf32>
    %37 = vector.shape_cast %36 : vector<8x128xf32> to vector<8x4x32xf32>
    %38 = tpu.transpose %37, [1, 0, 2] : vector<8x4x32xf32> -> vector<4x8x32xf32>
    %39 = arith.truncf %38 : vector<4x8x32xf32> to vector<4x8x32xbf16>
    %40 = vector.extract_strided_slice %29 {offsets = [0, 0], sizes = [8, 128], strides = [1, 1]} : vector<16x128xf32> to vector<8x128xf32>
    %41 = vector.shape_cast %40 : vector<8x128xf32> to vector<8x4x32xf32>
    %42 = tpu.transpose %41, [1, 0, 2] : vector<8x4x32xf32> -> vector<4x8x32xf32>
    %43 = arith.truncf %42 : vector<4x8x32xf32> to vector<4x8x32xbf16>
    %44 = vector.extract_strided_slice %35 {offsets = [0, 0], sizes = [8, 128], strides = [1, 1]} : vector<16x128xf32> to vector<8x128xf32>
    %45 = vector.shape_cast %44 : vector<8x128xf32> to vector<8x4x32xf32>
    %46 = tpu.transpose %45, [1, 0, 2] : vector<8x4x32xf32> -> vector<4x8x32xf32>
    %47 = arith.truncf %46 : vector<4x8x32xf32> to vector<4x8x32xbf16>
    "tpu.trace_start"() <{level = 10 : i32, message = "hqd,hkd->hqk"}> : () -> ()
    %cst_18 = arith.constant dense<0.000000e+00> : vector<4x8x8xf32>
    %48 = tpu.matmul %39, %43, %cst_18 {dimension_numbers = #tpu.dot_dimension_numbers<[2], [2], [1], [1], [0, 0, 0, 1, 1, 1], [0], [0]>} : vector<4x8x32xbf16>, vector<4x8x32xbf16>, vector<4x8x8xf32> -> vector<4x8x8xf32>
    "tpu.trace_stop"() : () -> ()
    %cst_19 = arith.constant dense<0xFF800000> : vector<4x8xf32>
    %49 = vector.multi_reduction <maximumf>, %48, %cst_19 [2] : vector<4x8x8xf32> to vector<4x8xf32>
    %50 = vector.shape_cast %49 : vector<4x8xf32> to vector<4x8x1xf32>
    %51 = vector.broadcast %50 : vector<4x8x1xf32> to vector<4x8x8xf32>
    %52 = arith.subf %48, %51 : vector<4x8x8xf32>
    %53 = math.exp %52 : vector<4x8x8xf32>
    %cst_20 = arith.constant dense<0.000000e+00> : vector<4x8xf32>
    %54 = vector.multi_reduction <add>, %53, %cst_20 [2] : vector<4x8x8xf32> to vector<4x8xf32>
    %55 = vector.shape_cast %54 : vector<4x8xf32> to vector<4x8x1xf32>
    %56 = tpu.reciprocal %55 {approx = true} : vector<4x8x1xf32> -> vector<4x8x1xf32>
    %57 = vector.broadcast %56 : vector<4x8x1xf32> to vector<4x8x8xf32>
    %58 = arith.mulf %53, %57 : vector<4x8x8xf32>
    %59 = arith.truncf %58 : vector<4x8x8xf32> to vector<4x8x8xbf16>
    "tpu.trace_start"() <{level = 10 : i32, message = "hqk,hkd->hqd"}> : () -> ()
    %cst_21 = arith.constant dense<0.000000e+00> : vector<4x8x32xf32>
    %60 = tpu.matmul %59, %47, %cst_21 {dimension_numbers = #tpu.dot_dimension_numbers<[2], [1], [1], [2], [0, 0, 0, 1, 1, 2], [0], [0]>} : vector<4x8x8xbf16>, vector<4x8x32xbf16>, vector<4x8x32xf32> -> vector<4x8x32xf32>
    "tpu.trace_stop"() : () -> ()
    %61 = tpu.transpose %60, [1, 0, 2] : vector<4x8x32xf32> -> vector<8x4x32xf32>
    %62 = vector.shape_cast %61 : vector<8x4x32xf32> to vector<8x128xf32>
    %63 = vector.extract_strided_slice %23 {offsets = [8, 0], sizes = [8, 128], strides = [1, 1]} : vector<16x128xf32> to vector<8x128xf32>
    %64 = vector.shape_cast %63 : vector<8x128xf32> to vector<8x4x32xf32>
    %65 = tpu.transpose %64, [1, 0, 2] : vector<8x4x32xf32> -> vector<4x8x32xf32>
    %66 = arith.truncf %65 : vector<4x8x32xf32> to vector<4x8x32xbf16>
    %67 = vector.extract_strided_slice %29 {offsets = [8, 0], sizes = [8, 128], strides = [1, 1]} : vector<16x128xf32> to vector<8x128xf32>
    %68 = vector.shape_cast %67 : vector<8x128xf32> to vector<8x4x32xf32>
    %69 = tpu.transpose %68, [1, 0, 2] : vector<8x4x32xf32> -> vector<4x8x32xf32>
    %70 = arith.truncf %69 : vector<4x8x32xf32> to vector<4x8x32xbf16>
    %71 = vector.extract_strided_slice %35 {offsets = [8, 0], sizes = [8, 128], strides = [1, 1]} : vector<16x128xf32> to vector<8x128xf32>
    %72 = vector.shape_cast %71 : vector<8x128xf32> to vector<8x4x32xf32>
    %73 = tpu.transpose %72, [1, 0, 2] : vector<8x4x32xf32> -> vector<4x8x32xf32>
    %74 = arith.truncf %73 : vector<4x8x32xf32> to vector<4x8x32xbf16>
    "tpu.trace_start"() <{level = 10 : i32, message = "hqd,hkd->hqk"}> : () -> ()
    %cst_22 = arith.constant dense<0.000000e+00> : vector<4x8x8xf32>
    %75 = tpu.matmul %66, %70, %cst_22 {dimension_numbers = #tpu.dot_dimension_numbers<[2], [2], [1], [1], [0, 0, 0, 1, 1, 1], [0], [0]>} : vector<4x8x32xbf16>, vector<4x8x32xbf16>, vector<4x8x8xf32> -> vector<4x8x8xf32>
    "tpu.trace_stop"() : () -> ()
    %cst_23 = arith.constant dense<0xFF800000> : vector<4x8xf32>
    %76 = vector.multi_reduction <maximumf>, %75, %cst_23 [2] : vector<4x8x8xf32> to vector<4x8xf32>
    %77 = vector.shape_cast %76 : vector<4x8xf32> to vector<4x8x1xf32>
    %78 = vector.broadcast %77 : vector<4x8x1xf32> to vector<4x8x8xf32>
    %79 = arith.subf %75, %78 : vector<4x8x8xf32>
    %80 = math.exp %79 : vector<4x8x8xf32>
    %cst_24 = arith.constant dense<0.000000e+00> : vector<4x8xf32>
    %81 = vector.multi_reduction <add>, %80, %cst_24 [2] : vector<4x8x8xf32> to vector<4x8xf32>
    %82 = vector.shape_cast %81 : vector<4x8xf32> to vector<4x8x1xf32>
    %83 = tpu.reciprocal %82 {approx = true} : vector<4x8x1xf32> -> vector<4x8x1xf32>
    %84 = vector.broadcast %83 : vector<4x8x1xf32> to vector<4x8x8xf32>
    %85 = arith.mulf %80, %84 : vector<4x8x8xf32>
    %86 = arith.truncf %85 : vector<4x8x8xf32> to vector<4x8x8xbf16>
    "tpu.trace_start"() <{level = 10 : i32, message = "hqk,hkd->hqd"}> : () -> ()
    %cst_25 = arith.constant dense<0.000000e+00> : vector<4x8x32xf32>
    %87 = tpu.matmul %86, %74, %cst_25 {dimension_numbers = #tpu.dot_dimension_numbers<[2], [1], [1], [2], [0, 0, 0, 1, 1, 2], [0], [0]>} : vector<4x8x8xbf16>, vector<4x8x32xbf16>, vector<4x8x32xf32> -> vector<4x8x32xf32>
    "tpu.trace_stop"() : () -> ()
    %88 = tpu.transpose %87, [1, 0, 2] : vector<4x8x32xf32> -> vector<8x4x32xf32>
    %89 = vector.shape_cast %88 : vector<8x4x32xf32> to vector<8x128xf32>
    %90 = tpu.concatenate %62, %89 in 0 : vector<8x128xf32>, vector<8x128xf32> -> vector<16x128xf32>
    %91 = arith.truncf %90 : vector<16x128xf32> to vector<16x128xbf16>
    %92 = vector.extract_strided_slice %8 {offsets = [0, 0], sizes = [128, 128], strides = [1, 1]} : vector<384x128xbf16> to vector<128x128xbf16>
    %cst_26 = arith.constant dense<0.000000e+00> : vector<16x128xf32>
    %93 = tpu.matmul %91, %92, %cst_26 {dimension_numbers = #tpu.dot_dimension_numbers<[1], [0], [0], [1], [0, 0, 1, 1], [], []>} : vector<16x128xbf16>, vector<128x128xbf16>, vector<16x128xf32> -> vector<16x128xf32>
    %94 = vector.extract_strided_slice %10 {offsets = [9, 0], sizes = [1, 128], strides = [1, 1]} : vector<18x128xf32> to vector<1x128xf32>
    %95 = vector.shape_cast %94 : vector<1x128xf32> to vector<128xf32>
    %96 = vector.shape_cast %95 : vector<128xf32> to vector<1x128xf32>
    %97 = vector.broadcast %96 : vector<1x128xf32> to vector<16x128xf32>
    %98 = arith.addf %93, %97 : vector<16x128xf32>
    %99 = arith.addf %4, %98 : vector<16x128xf32>
    %100 = vector.extract_strided_slice %10 {offsets = [12, 0], sizes = [1, 128], strides = [1, 1]} : vector<18x128xf32> to vector<1x128xf32>
    %101 = vector.shape_cast %100 : vector<1x128xf32> to vector<128xf32>
    %102 = vector.extract_strided_slice %10 {offsets = [13, 0], sizes = [1, 128], strides = [1, 1]} : vector<18x128xf32> to vector<1x128xf32>
    %103 = vector.shape_cast %102 : vector<1x128xf32> to vector<128xf32>
    %cst_27 = arith.constant dense<0.000000e+00> : vector<16xf32>
    %104 = vector.multi_reduction <add>, %99, %cst_27 [1] : vector<16x128xf32> to vector<16xf32>
    %105 = vector.shape_cast %104 : vector<16xf32> to vector<16x1xf32>
    %cst_28 = arith.constant 1.280000e+02 : f32
    %106 = vector.broadcast %cst_28 : f32 to vector<16x1xf32>
    %107 = arith.divf %105, %106 : vector<16x1xf32>
    %108 = vector.broadcast %107 : vector<16x1xf32> to vector<16x128xf32>
    %109 = arith.subf %99, %108 : vector<16x128xf32>
    %110 = arith.mulf %109, %109 : vector<16x128xf32>
    %cst_29 = arith.constant dense<0.000000e+00> : vector<16xf32>
    %111 = vector.multi_reduction <add>, %110, %cst_29 [1] : vector<16x128xf32> to vector<16xf32>
    %112 = vector.shape_cast %111 : vector<16xf32> to vector<16x1xf32>
    %cst_30 = arith.constant 1.280000e+02 : f32
    %113 = vector.broadcast %cst_30 : f32 to vector<16x1xf32>
    %114 = arith.divf %112, %113 : vector<16x1xf32>
    %115 = vector.broadcast %107 : vector<16x1xf32> to vector<16x128xf32>
    %116 = arith.subf %99, %115 : vector<16x128xf32>
    %cst_31 = arith.constant 9.99999974E-6 : f32
    %117 = vector.broadcast %cst_31 : f32 to vector<16x1xf32>
    %118 = arith.addf %114, %117 : vector<16x1xf32>
    %119 = math.rsqrt %118 : vector<16x1xf32>
    %120 = vector.broadcast %119 : vector<16x1xf32> to vector<16x128xf32>
    %121 = arith.mulf %116, %120 : vector<16x128xf32>
    %122 = vector.shape_cast %101 : vector<128xf32> to vector<1x128xf32>
    %123 = vector.broadcast %122 : vector<1x128xf32> to vector<16x128xf32>
    %124 = arith.mulf %121, %123 : vector<16x128xf32>
    %125 = vector.shape_cast %103 : vector<128xf32> to vector<1x128xf32>
    %126 = vector.broadcast %125 : vector<1x128xf32> to vector<16x128xf32>
    %127 = arith.addf %124, %126 : vector<16x128xf32>
    %128 = arith.truncf %127 : vector<16x128xf32> to vector<16x128xbf16>
    %129 = vector.extract_strided_slice %6 {offsets = [0, 384], sizes = [128, 256], strides = [1, 1]} : vector<128x1152xbf16> to vector<128x256xbf16>
    %cst_32 = arith.constant dense<0.000000e+00> : vector<16x256xf32>
    %130 = tpu.matmul %128, %129, %cst_32 {dimension_numbers = #tpu.dot_dimension_numbers<[1], [0], [0], [1], [0, 0, 1, 1], [], []>} : vector<16x128xbf16>, vector<128x256xbf16>, vector<16x256xf32> -> vector<16x256xf32>
    %131 = vector.extract_strided_slice %6 {offsets = [0, 640], sizes = [128, 256], strides = [1, 1]} : vector<128x1152xbf16> to vector<128x256xbf16>
    %cst_33 = arith.constant dense<0.000000e+00> : vector<32x256xf32>
    %132 = tpu.matmul %12, %131, %cst_33 {dimension_numbers = #tpu.dot_dimension_numbers<[1], [0], [0], [1], [0, 0, 1, 1], [], []>} : vector<32x128xbf16>, vector<128x256xbf16>, vector<32x256xf32> -> vector<32x256xf32>
    %133 = vector.extract_strided_slice %6 {offsets = [0, 896], sizes = [128, 256], strides = [1, 1]} : vector<128x1152xbf16> to vector<128x256xbf16>
    %cst_34 = arith.constant dense<0.000000e+00> : vector<16x256xf32>
    %134 = tpu.matmul %14, %133, %cst_34 {dimension_numbers = #tpu.dot_dimension_numbers<[1], [0], [0], [1], [0, 0, 1, 1], [], []>} : vector<16x128xbf16>, vector<128x256xbf16>, vector<16x256xf32> -> vector<16x256xf32>
    %135 = vector.extract_strided_slice %130 {offsets = [0, 0], sizes = [16, 128], strides = [1, 1]} : vector<16x256xf32> to vector<16x128xf32>
    %136 = vector.extract_strided_slice %10 {offsets = [3, 0], sizes = [1, 128], strides = [1, 1]} : vector<18x128xf32> to vector<1x128xf32>
    %137 = vector.shape_cast %136 : vector<1x128xf32> to vector<128xf32>
    %138 = vector.shape_cast %137 : vector<128xf32> to vector<1x128xf32>
    %139 = vector.broadcast %138 : vector<1x128xf32> to vector<16x128xf32>
    %140 = arith.addf %135, %139 : vector<16x128xf32>
    %141 = vector.extract_strided_slice %132 {offsets = [0, 0], sizes = [32, 128], strides = [1, 1]} : vector<32x256xf32> to vector<32x128xf32>
    %142 = vector.extract_strided_slice %10 {offsets = [5, 0], sizes = [1, 128], strides = [1, 1]} : vector<18x128xf32> to vector<1x128xf32>
    %143 = vector.shape_cast %142 : vector<1x128xf32> to vector<128xf32>
    %144 = vector.shape_cast %143 : vector<128xf32> to vector<1x128xf32>
    %145 = vector.broadcast %144 : vector<1x128xf32> to vector<32x128xf32>
    %146 = arith.addf %141, %145 : vector<32x128xf32>
    %147 = vector.extract_strided_slice %132 {offsets = [0, 128], sizes = [32, 128], strides = [1, 1]} : vector<32x256xf32> to vector<32x128xf32>
    %148 = vector.extract_strided_slice %10 {offsets = [6, 0], sizes = [1, 128], strides = [1, 1]} : vector<18x128xf32> to vector<1x128xf32>
    %149 = vector.shape_cast %148 : vector<1x128xf32> to vector<128xf32>
    %150 = vector.shape_cast %149 : vector<128xf32> to vector<1x128xf32>
    %151 = vector.broadcast %150 : vector<1x128xf32> to vector<32x128xf32>
    %152 = arith.addf %147, %151 : vector<32x128xf32>
    %153 = vector.extract_strided_slice %140 {offsets = [0, 0], sizes = [8, 128], strides = [1, 1]} : vector<16x128xf32> to vector<8x128xf32>
    %154 = vector.shape_cast %153 : vector<8x128xf32> to vector<8x4x32xf32>
    %155 = tpu.transpose %154, [1, 0, 2] : vector<8x4x32xf32> -> vector<4x8x32xf32>
    %156 = arith.truncf %155 : vector<4x8x32xf32> to vector<4x8x32xbf16>
    %157 = vector.extract_strided_slice %146 {offsets = [0, 0], sizes = [16, 128], strides = [1, 1]} : vector<32x128xf32> to vector<16x128xf32>
    %158 = vector.shape_cast %157 : vector<16x128xf32> to vector<16x4x32xf32>
    %159 = tpu.transpose %158, [1, 0, 2] : vector<16x4x32xf32> -> vector<4x16x32xf32>
    %160 = arith.truncf %159 : vector<4x16x32xf32> to vector<4x16x32xbf16>
    %161 = vector.extract_strided_slice %152 {offsets = [0, 0], sizes = [16, 128], strides = [1, 1]} : vector<32x128xf32> to vector<16x128xf32>
    %162 = vector.shape_cast %161 : vector<16x128xf32> to vector<16x4x32xf32>
    %163 = tpu.transpose %162, [1, 0, 2] : vector<16x4x32xf32> -> vector<4x16x32xf32>
    %164 = arith.truncf %163 : vector<4x16x32xf32> to vector<4x16x32xbf16>
    "tpu.trace_start"() <{level = 10 : i32, message = "hqd,hkd->hqk"}> : () -> ()
    %cst_35 = arith.constant dense<0.000000e+00> : vector<4x8x16xf32>
    %165 = tpu.matmul %156, %160, %cst_35 {dimension_numbers = #tpu.dot_dimension_numbers<[2], [2], [1], [1], [0, 0, 0, 1, 1, 1], [0], [0]>} : vector<4x8x32xbf16>, vector<4x16x32xbf16>, vector<4x8x16xf32> -> vector<4x8x16xf32>
    "tpu.trace_stop"() : () -> ()
    %cst_36 = arith.constant dense<0xFF800000> : vector<4x8xf32>
    %166 = vector.multi_reduction <maximumf>, %165, %cst_36 [2] : vector<4x8x16xf32> to vector<4x8xf32>
    %167 = vector.shape_cast %166 : vector<4x8xf32> to vector<4x8x1xf32>
    %168 = vector.broadcast %167 : vector<4x8x1xf32> to vector<4x8x16xf32>
    %169 = arith.subf %165, %168 : vector<4x8x16xf32>
    %170 = math.exp %169 : vector<4x8x16xf32>
    %cst_37 = arith.constant dense<0.000000e+00> : vector<4x8xf32>
    %171 = vector.multi_reduction <add>, %170, %cst_37 [2] : vector<4x8x16xf32> to vector<4x8xf32>
    %172 = vector.shape_cast %171 : vector<4x8xf32> to vector<4x8x1xf32>
    %173 = tpu.reciprocal %172 {approx = true} : vector<4x8x1xf32> -> vector<4x8x1xf32>
    %174 = vector.broadcast %173 : vector<4x8x1xf32> to vector<4x8x16xf32>
    %175 = arith.mulf %170, %174 : vector<4x8x16xf32>
    %176 = arith.truncf %175 : vector<4x8x16xf32> to vector<4x8x16xbf16>
    "tpu.trace_start"() <{level = 10 : i32, message = "hqk,hkd->hqd"}> : () -> ()
    %cst_38 = arith.constant dense<0.000000e+00> : vector<4x8x32xf32>
    %177 = tpu.matmul %176, %164, %cst_38 {dimension_numbers = #tpu.dot_dimension_numbers<[2], [1], [1], [2], [0, 0, 0, 1, 1, 2], [0], [0]>} : vector<4x8x16xbf16>, vector<4x16x32xbf16>, vector<4x8x32xf32> -> vector<4x8x32xf32>
    "tpu.trace_stop"() : () -> ()
    %178 = tpu.transpose %177, [1, 0, 2] : vector<4x8x32xf32> -> vector<8x4x32xf32>
    %179 = vector.shape_cast %178 : vector<8x4x32xf32> to vector<8x128xf32>
    %180 = vector.extract_strided_slice %140 {offsets = [8, 0], sizes = [8, 128], strides = [1, 1]} : vector<16x128xf32> to vector<8x128xf32>
    %181 = vector.shape_cast %180 : vector<8x128xf32> to vector<8x4x32xf32>
    %182 = tpu.transpose %181, [1, 0, 2] : vector<8x4x32xf32> -> vector<4x8x32xf32>
    %183 = arith.truncf %182 : vector<4x8x32xf32> to vector<4x8x32xbf16>
    %184 = vector.extract_strided_slice %146 {offsets = [16, 0], sizes = [16, 128], strides = [1, 1]} : vector<32x128xf32> to vector<16x128xf32>
    %185 = vector.shape_cast %184 : vector<16x128xf32> to vector<16x4x32xf32>
    %186 = tpu.transpose %185, [1, 0, 2] : vector<16x4x32xf32> -> vector<4x16x32xf32>
    %187 = arith.truncf %186 : vector<4x16x32xf32> to vector<4x16x32xbf16>
    %188 = vector.extract_strided_slice %152 {offsets = [16, 0], sizes = [16, 128], strides = [1, 1]} : vector<32x128xf32> to vector<16x128xf32>
    %189 = vector.shape_cast %188 : vector<16x128xf32> to vector<16x4x32xf32>
    %190 = tpu.transpose %189, [1, 0, 2] : vector<16x4x32xf32> -> vector<4x16x32xf32>
    %191 = arith.truncf %190 : vector<4x16x32xf32> to vector<4x16x32xbf16>
    "tpu.trace_start"() <{level = 10 : i32, message = "hqd,hkd->hqk"}> : () -> ()
    %cst_39 = arith.constant dense<0.000000e+00> : vector<4x8x16xf32>
    %192 = tpu.matmul %183, %187, %cst_39 {dimension_numbers = #tpu.dot_dimension_numbers<[2], [2], [1], [1], [0, 0, 0, 1, 1, 1], [0], [0]>} : vector<4x8x32xbf16>, vector<4x16x32xbf16>, vector<4x8x16xf32> -> vector<4x8x16xf32>
    "tpu.trace_stop"() : () -> ()
    %cst_40 = arith.constant dense<0xFF800000> : vector<4x8xf32>
    %193 = vector.multi_reduction <maximumf>, %192, %cst_40 [2] : vector<4x8x16xf32> to vector<4x8xf32>
    %194 = vector.shape_cast %193 : vector<4x8xf32> to vector<4x8x1xf32>
    %195 = vector.broadcast %194 : vector<4x8x1xf32> to vector<4x8x16xf32>
    %196 = arith.subf %192, %195 : vector<4x8x16xf32>
    %197 = math.exp %196 : vector<4x8x16xf32>
    %cst_41 = arith.constant dense<0.000000e+00> : vector<4x8xf32>
    %198 = vector.multi_reduction <add>, %197, %cst_41 [2] : vector<4x8x16xf32> to vector<4x8xf32>
    %199 = vector.shape_cast %198 : vector<4x8xf32> to vector<4x8x1xf32>
    %200 = tpu.reciprocal %199 {approx = true} : vector<4x8x1xf32> -> vector<4x8x1xf32>
    %201 = vector.broadcast %200 : vector<4x8x1xf32> to vector<4x8x16xf32>
    %202 = arith.mulf %197, %201 : vector<4x8x16xf32>
    %203 = arith.truncf %202 : vector<4x8x16xf32> to vector<4x8x16xbf16>
    "tpu.trace_start"() <{level = 10 : i32, message = "hqk,hkd->hqd"}> : () -> ()
    %cst_42 = arith.constant dense<0.000000e+00> : vector<4x8x32xf32>
    %204 = tpu.matmul %203, %191, %cst_42 {dimension_numbers = #tpu.dot_dimension_numbers<[2], [1], [1], [2], [0, 0, 0, 1, 1, 2], [0], [0]>} : vector<4x8x16xbf16>, vector<4x16x32xbf16>, vector<4x8x32xf32> -> vector<4x8x32xf32>
    "tpu.trace_stop"() : () -> ()
    %205 = tpu.transpose %204, [1, 0, 2] : vector<4x8x32xf32> -> vector<8x4x32xf32>
    %206 = vector.shape_cast %205 : vector<8x4x32xf32> to vector<8x128xf32>
    %207 = tpu.concatenate %179, %206 in 0 : vector<8x128xf32>, vector<8x128xf32> -> vector<16x128xf32>
    %208 = vector.extract_strided_slice %130 {offsets = [0, 128], sizes = [16, 128], strides = [1, 1]} : vector<16x256xf32> to vector<16x128xf32>
    %209 = vector.extract_strided_slice %10 {offsets = [4, 0], sizes = [1, 128], strides = [1, 1]} : vector<18x128xf32> to vector<1x128xf32>
    %210 = vector.shape_cast %209 : vector<1x128xf32> to vector<128xf32>
    %211 = vector.shape_cast %210 : vector<128xf32> to vector<1x128xf32>
    %212 = vector.broadcast %211 : vector<1x128xf32> to vector<16x128xf32>
    %213 = arith.addf %208, %212 : vector<16x128xf32>
    %214 = vector.extract_strided_slice %134 {offsets = [0, 0], sizes = [16, 128], strides = [1, 1]} : vector<16x256xf32> to vector<16x128xf32>
    %215 = vector.extract_strided_slice %10 {offsets = [7, 0], sizes = [1, 128], strides = [1, 1]} : vector<18x128xf32> to vector<1x128xf32>
    %216 = vector.shape_cast %215 : vector<1x128xf32> to vector<128xf32>
    %217 = vector.shape_cast %216 : vector<128xf32> to vector<1x128xf32>
    %218 = vector.broadcast %217 : vector<1x128xf32> to vector<16x128xf32>
    %219 = arith.addf %214, %218 : vector<16x128xf32>
    %220 = vector.extract_strided_slice %134 {offsets = [0, 128], sizes = [16, 128], strides = [1, 1]} : vector<16x256xf32> to vector<16x128xf32>
    %221 = vector.extract_strided_slice %10 {offsets = [8, 0], sizes = [1, 128], strides = [1, 1]} : vector<18x128xf32> to vector<1x128xf32>
    %222 = vector.shape_cast %221 : vector<1x128xf32> to vector<128xf32>
    %223 = vector.shape_cast %222 : vector<128xf32> to vector<1x128xf32>
    %224 = vector.broadcast %223 : vector<1x128xf32> to vector<16x128xf32>
    %225 = arith.addf %220, %224 : vector<16x128xf32>
    %226 = vector.extract_strided_slice %213 {offsets = [0, 0], sizes = [8, 128], strides = [1, 1]} : vector<16x128xf32> to vector<8x128xf32>
    %227 = vector.shape_cast %226 : vector<8x128xf32> to vector<8x4x32xf32>
    %228 = tpu.transpose %227, [1, 0, 2] : vector<8x4x32xf32> -> vector<4x8x32xf32>
    %229 = arith.truncf %228 : vector<4x8x32xf32> to vector<4x8x32xbf16>
    %230 = vector.extract_strided_slice %219 {offsets = [0, 0], sizes = [8, 128], strides = [1, 1]} : vector<16x128xf32> to vector<8x128xf32>
    %231 = vector.shape_cast %230 : vector<8x128xf32> to vector<8x4x32xf32>
    %232 = tpu.transpose %231, [1, 0, 2] : vector<8x4x32xf32> -> vector<4x8x32xf32>
    %233 = arith.truncf %232 : vector<4x8x32xf32> to vector<4x8x32xbf16>
    %234 = vector.extract_strided_slice %225 {offsets = [0, 0], sizes = [8, 128], strides = [1, 1]} : vector<16x128xf32> to vector<8x128xf32>
    %235 = vector.shape_cast %234 : vector<8x128xf32> to vector<8x4x32xf32>
    %236 = tpu.transpose %235, [1, 0, 2] : vector<8x4x32xf32> -> vector<4x8x32xf32>
    %237 = arith.truncf %236 : vector<4x8x32xf32> to vector<4x8x32xbf16>
    "tpu.trace_start"() <{level = 10 : i32, message = "hqd,hkd->hqk"}> : () -> ()
    %cst_43 = arith.constant dense<0.000000e+00> : vector<4x8x8xf32>
    %238 = tpu.matmul %229, %233, %cst_43 {dimension_numbers = #tpu.dot_dimension_numbers<[2], [2], [1], [1], [0, 0, 0, 1, 1, 1], [0], [0]>} : vector<4x8x32xbf16>, vector<4x8x32xbf16>, vector<4x8x8xf32> -> vector<4x8x8xf32>
    "tpu.trace_stop"() : () -> ()
    %cst_44 = arith.constant dense<0xFF800000> : vector<4x8xf32>
    %239 = vector.multi_reduction <maximumf>, %238, %cst_44 [2] : vector<4x8x8xf32> to vector<4x8xf32>
    %240 = vector.shape_cast %239 : vector<4x8xf32> to vector<4x8x1xf32>
    %241 = vector.broadcast %240 : vector<4x8x1xf32> to vector<4x8x8xf32>
    %242 = arith.subf %238, %241 : vector<4x8x8xf32>
    %243 = math.exp %242 : vector<4x8x8xf32>
    %cst_45 = arith.constant dense<0.000000e+00> : vector<4x8xf32>
    %244 = vector.multi_reduction <add>, %243, %cst_45 [2] : vector<4x8x8xf32> to vector<4x8xf32>
    %245 = vector.shape_cast %244 : vector<4x8xf32> to vector<4x8x1xf32>
    %246 = tpu.reciprocal %245 {approx = true} : vector<4x8x1xf32> -> vector<4x8x1xf32>
    %247 = vector.broadcast %246 : vector<4x8x1xf32> to vector<4x8x8xf32>
    %248 = arith.mulf %243, %247 : vector<4x8x8xf32>
    %249 = arith.truncf %248 : vector<4x8x8xf32> to vector<4x8x8xbf16>
    "tpu.trace_start"() <{level = 10 : i32, message = "hqk,hkd->hqd"}> : () -> ()
    %cst_46 = arith.constant dense<0.000000e+00> : vector<4x8x32xf32>
    %250 = tpu.matmul %249, %237, %cst_46 {dimension_numbers = #tpu.dot_dimension_numbers<[2], [1], [1], [2], [0, 0, 0, 1, 1, 2], [0], [0]>} : vector<4x8x8xbf16>, vector<4x8x32xbf16>, vector<4x8x32xf32> -> vector<4x8x32xf32>
    "tpu.trace_stop"() : () -> ()
    %251 = tpu.transpose %250, [1, 0, 2] : vector<4x8x32xf32> -> vector<8x4x32xf32>
    %252 = vector.shape_cast %251 : vector<8x4x32xf32> to vector<8x128xf32>
    %253 = vector.extract_strided_slice %213 {offsets = [8, 0], sizes = [8, 128], strides = [1, 1]} : vector<16x128xf32> to vector<8x128xf32>
    %254 = vector.shape_cast %253 : vector<8x128xf32> to vector<8x4x32xf32>
    %255 = tpu.transpose %254, [1, 0, 2] : vector<8x4x32xf32> -> vector<4x8x32xf32>
    %256 = arith.truncf %255 : vector<4x8x32xf32> to vector<4x8x32xbf16>
    %257 = vector.extract_strided_slice %219 {offsets = [8, 0], sizes = [8, 128], strides = [1, 1]} : vector<16x128xf32> to vector<8x128xf32>
    %258 = vector.shape_cast %257 : vector<8x128xf32> to vector<8x4x32xf32>
    %259 = tpu.transpose %258, [1, 0, 2] : vector<8x4x32xf32> -> vector<4x8x32xf32>
    %260 = arith.truncf %259 : vector<4x8x32xf32> to vector<4x8x32xbf16>
    %261 = vector.extract_strided_slice %225 {offsets = [8, 0], sizes = [8, 128], strides = [1, 1]} : vector<16x128xf32> to vector<8x128xf32>
    %262 = vector.shape_cast %261 : vector<8x128xf32> to vector<8x4x32xf32>
    %263 = tpu.transpose %262, [1, 0, 2] : vector<8x4x32xf32> -> vector<4x8x32xf32>
    %264 = arith.truncf %263 : vector<4x8x32xf32> to vector<4x8x32xbf16>
    "tpu.trace_start"() <{level = 10 : i32, message = "hqd,hkd->hqk"}> : () -> ()
    %cst_47 = arith.constant dense<0.000000e+00> : vector<4x8x8xf32>
    %265 = tpu.matmul %256, %260, %cst_47 {dimension_numbers = #tpu.dot_dimension_numbers<[2], [2], [1], [1], [0, 0, 0, 1, 1, 1], [0], [0]>} : vector<4x8x32xbf16>, vector<4x8x32xbf16>, vector<4x8x8xf32> -> vector<4x8x8xf32>
    "tpu.trace_stop"() : () -> ()
    %cst_48 = arith.constant dense<0xFF800000> : vector<4x8xf32>
    %266 = vector.multi_reduction <maximumf>, %265, %cst_48 [2] : vector<4x8x8xf32> to vector<4x8xf32>
    %267 = vector.shape_cast %266 : vector<4x8xf32> to vector<4x8x1xf32>
    %268 = vector.broadcast %267 : vector<4x8x1xf32> to vector<4x8x8xf32>
    %269 = arith.subf %265, %268 : vector<4x8x8xf32>
    %270 = math.exp %269 : vector<4x8x8xf32>
    %cst_49 = arith.constant dense<0.000000e+00> : vector<4x8xf32>
    %271 = vector.multi_reduction <add>, %270, %cst_49 [2] : vector<4x8x8xf32> to vector<4x8xf32>
    %272 = vector.shape_cast %271 : vector<4x8xf32> to vector<4x8x1xf32>
    %273 = tpu.reciprocal %272 {approx = true} : vector<4x8x1xf32> -> vector<4x8x1xf32>
    %274 = vector.broadcast %273 : vector<4x8x1xf32> to vector<4x8x8xf32>
    %275 = arith.mulf %270, %274 : vector<4x8x8xf32>
    %276 = arith.truncf %275 : vector<4x8x8xf32> to vector<4x8x8xbf16>
    "tpu.trace_start"() <{level = 10 : i32, message = "hqk,hkd->hqd"}> : () -> ()
    %cst_50 = arith.constant dense<0.000000e+00> : vector<4x8x32xf32>
    %277 = tpu.matmul %276, %264, %cst_50 {dimension_numbers = #tpu.dot_dimension_numbers<[2], [1], [1], [2], [0, 0, 0, 1, 1, 2], [0], [0]>} : vector<4x8x8xbf16>, vector<4x8x32xbf16>, vector<4x8x32xf32> -> vector<4x8x32xf32>
    "tpu.trace_stop"() : () -> ()
    %278 = tpu.transpose %277, [1, 0, 2] : vector<4x8x32xf32> -> vector<8x4x32xf32>
    %279 = vector.shape_cast %278 : vector<8x4x32xf32> to vector<8x128xf32>
    %280 = tpu.concatenate %252, %279 in 0 : vector<8x128xf32>, vector<8x128xf32> -> vector<16x128xf32>
    %281 = tpu.concatenate %207, %280 in 1 : vector<16x128xf32>, vector<16x128xf32> -> vector<16x256xf32>
    %282 = arith.truncf %281 : vector<16x256xf32> to vector<16x256xbf16>
    %283 = vector.extract_strided_slice %8 {offsets = [128, 0], sizes = [256, 128], strides = [1, 1]} : vector<384x128xbf16> to vector<256x128xbf16>
    %cst_51 = arith.constant dense<0.000000e+00> : vector<16x128xf32>
    %284 = tpu.matmul %282, %283, %cst_51 {dimension_numbers = #tpu.dot_dimension_numbers<[1], [0], [0], [1], [0, 0, 1, 1], [], []>} : vector<16x256xbf16>, vector<256x128xbf16>, vector<16x128xf32> -> vector<16x128xf32>
    %285 = vector.extract_strided_slice %10 {offsets = [10, 0], sizes = [1, 128], strides = [1, 1]} : vector<18x128xf32> to vector<1x128xf32>
    %286 = vector.shape_cast %285 : vector<1x128xf32> to vector<128xf32>
    %287 = vector.shape_cast %286 : vector<128xf32> to vector<1x128xf32>
    %288 = vector.broadcast %287 : vector<1x128xf32> to vector<16x128xf32>
    %289 = arith.addf %284, %288 : vector<16x128xf32>
    %290 = arith.addf %127, %289 : vector<16x128xf32>
    %291 = vector.extract_strided_slice %10 {offsets = [14, 0], sizes = [1, 128], strides = [1, 1]} : vector<18x128xf32> to vector<1x128xf32>
    %292 = vector.shape_cast %291 : vector<1x128xf32> to vector<128xf32>
    %293 = vector.extract_strided_slice %10 {offsets = [15, 0], sizes = [1, 128], strides = [1, 1]} : vector<18x128xf32> to vector<1x128xf32>
    %294 = vector.shape_cast %293 : vector<1x128xf32> to vector<128xf32>
    %cst_52 = arith.constant dense<0.000000e+00> : vector<16xf32>
    %295 = vector.multi_reduction <add>, %290, %cst_52 [1] : vector<16x128xf32> to vector<16xf32>
    %296 = vector.shape_cast %295 : vector<16xf32> to vector<16x1xf32>
    %cst_53 = arith.constant 1.280000e+02 : f32
    %297 = vector.broadcast %cst_53 : f32 to vector<16x1xf32>
    %298 = arith.divf %296, %297 : vector<16x1xf32>
    %299 = vector.broadcast %298 : vector<16x1xf32> to vector<16x128xf32>
    %300 = arith.subf %290, %299 : vector<16x128xf32>
    %301 = arith.mulf %300, %300 : vector<16x128xf32>
    %cst_54 = arith.constant dense<0.000000e+00> : vector<16xf32>
    %302 = vector.multi_reduction <add>, %301, %cst_54 [1] : vector<16x128xf32> to vector<16xf32>
    %303 = vector.shape_cast %302 : vector<16xf32> to vector<16x1xf32>
    %cst_55 = arith.constant 1.280000e+02 : f32
    %304 = vector.broadcast %cst_55 : f32 to vector<16x1xf32>
    %305 = arith.divf %303, %304 : vector<16x1xf32>
    %306 = vector.broadcast %298 : vector<16x1xf32> to vector<16x128xf32>
    %307 = arith.subf %290, %306 : vector<16x128xf32>
    %cst_56 = arith.constant 9.99999974E-6 : f32
    %308 = vector.broadcast %cst_56 : f32 to vector<16x1xf32>
    %309 = arith.addf %305, %308 : vector<16x1xf32>
    %310 = math.rsqrt %309 : vector<16x1xf32>
    %311 = vector.broadcast %310 : vector<16x1xf32> to vector<16x128xf32>
    %312 = arith.mulf %307, %311 : vector<16x128xf32>
    %313 = vector.shape_cast %292 : vector<128xf32> to vector<1x128xf32>
    %314 = vector.broadcast %313 : vector<1x128xf32> to vector<16x128xf32>
    %315 = arith.mulf %312, %314 : vector<16x128xf32>
    %316 = vector.shape_cast %294 : vector<128xf32> to vector<1x128xf32>
    %317 = vector.broadcast %316 : vector<1x128xf32> to vector<16x128xf32>
    %318 = arith.addf %315, %317 : vector<16x128xf32>
    %319 = arith.truncf %318 : vector<16x128xf32> to vector<16x128xbf16>
    %c0_57 = arith.constant 0 : index
    %c0_58 = arith.constant 0 : index
    %c0_59 = arith.constant 0 : index
    %320 = vector.load %arg7[%c0_57, %c0_58, %c0_59] : memref<1x128x256xbf16, #tpu.memory_space<vmem>>, vector<1x128x256xbf16>
    %321 = vector.shape_cast %320 : vector<1x128x256xbf16> to vector<128x256xbf16>
    %cst_60 = arith.constant dense<0.000000e+00> : vector<16x256xf32>
    %322 = tpu.matmul %319, %321, %cst_60 {dimension_numbers = #tpu.dot_dimension_numbers<[1], [0], [0], [1], [0, 0, 1, 1], [], []>} : vector<16x128xbf16>, vector<128x256xbf16>, vector<16x256xf32> -> vector<16x256xf32>
    %c0_61 = arith.constant 0 : index
    %c0_62 = arith.constant 0 : index
    %c0_63 = arith.constant 0 : index
    %323 = vector.load %arg10[%c0_61, %c0_62, %c0_63] : memref<1x1x256xf32, #tpu.memory_space<vmem>>, vector<1x1x256xf32>
    %324 = vector.shape_cast %323 : vector<1x1x256xf32> to vector<256xf32>
    %325 = vector.shape_cast %324 : vector<256xf32> to vector<1x256xf32>
    %326 = vector.broadcast %325 : vector<1x256xf32> to vector<16x256xf32>
    %327 = arith.addf %322, %326 : vector<16x256xf32>
    %cst_64 = arith.constant 0.000000e+00 : f32
    %328 = vector.broadcast %cst_64 : f32 to vector<16x256xf32>
    %329 = arith.maximumf %327, %328 : vector<16x256xf32>
    %330 = arith.truncf %329 : vector<16x256xf32> to vector<16x256xbf16>
    %c0_65 = arith.constant 0 : index
    %c0_66 = arith.constant 0 : index
    %c0_67 = arith.constant 0 : index
    %331 = vector.load %arg8[%c0_65, %c0_66, %c0_67] : memref<1x256x128xbf16, #tpu.memory_space<vmem>>, vector<1x256x128xbf16>
    %332 = vector.shape_cast %331 : vector<1x256x128xbf16> to vector<256x128xbf16>
    %cst_68 = arith.constant dense<0.000000e+00> : vector<16x128xf32>
    %333 = tpu.matmul %330, %332, %cst_68 {dimension_numbers = #tpu.dot_dimension_numbers<[1], [0], [0], [1], [0, 0, 1, 1], [], []>} : vector<16x256xbf16>, vector<256x128xbf16>, vector<16x128xf32> -> vector<16x128xf32>
    %334 = vector.extract_strided_slice %10 {offsets = [11, 0], sizes = [1, 128], strides = [1, 1]} : vector<18x128xf32> to vector<1x128xf32>
    %335 = vector.shape_cast %334 : vector<1x128xf32> to vector<128xf32>
    %336 = vector.shape_cast %335 : vector<128xf32> to vector<1x128xf32>
    %337 = vector.broadcast %336 : vector<1x128xf32> to vector<16x128xf32>
    %338 = arith.addf %333, %337 : vector<16x128xf32>
    %339 = arith.addf %318, %338 : vector<16x128xf32>
    %340 = vector.extract_strided_slice %10 {offsets = [16, 0], sizes = [1, 128], strides = [1, 1]} : vector<18x128xf32> to vector<1x128xf32>
    %341 = vector.shape_cast %340 : vector<1x128xf32> to vector<128xf32>
    %342 = vector.extract_strided_slice %10 {offsets = [17, 0], sizes = [1, 128], strides = [1, 1]} : vector<18x128xf32> to vector<1x128xf32>
    %343 = vector.shape_cast %342 : vector<1x128xf32> to vector<128xf32>
    %cst_69 = arith.constant dense<0.000000e+00> : vector<16xf32>
    %344 = vector.multi_reduction <add>, %339, %cst_69 [1] : vector<16x128xf32> to vector<16xf32>
    %345 = vector.shape_cast %344 : vector<16xf32> to vector<16x1xf32>
    %cst_70 = arith.constant 1.280000e+02 : f32
    %346 = vector.broadcast %cst_70 : f32 to vector<16x1xf32>
    %347 = arith.divf %345, %346 : vector<16x1xf32>
    %348 = vector.broadcast %347 : vector<16x1xf32> to vector<16x128xf32>
    %349 = arith.subf %339, %348 : vector<16x128xf32>
    %350 = arith.mulf %349, %349 : vector<16x128xf32>
    %cst_71 = arith.constant dense<0.000000e+00> : vector<16xf32>
    %351 = vector.multi_reduction <add>, %350, %cst_71 [1] : vector<16x128xf32> to vector<16xf32>
    %352 = vector.shape_cast %351 : vector<16xf32> to vector<16x1xf32>
    %cst_72 = arith.constant 1.280000e+02 : f32
    %353 = vector.broadcast %cst_72 : f32 to vector<16x1xf32>
    %354 = arith.divf %352, %353 : vector<16x1xf32>
    %355 = vector.broadcast %347 : vector<16x1xf32> to vector<16x128xf32>
    %356 = arith.subf %339, %355 : vector<16x128xf32>
    %cst_73 = arith.constant 9.99999974E-6 : f32
    %357 = vector.broadcast %cst_73 : f32 to vector<16x1xf32>
    %358 = arith.addf %354, %357 : vector<16x1xf32>
    %359 = math.rsqrt %358 : vector<16x1xf32>
    %360 = vector.broadcast %359 : vector<16x1xf32> to vector<16x128xf32>
    %361 = arith.mulf %356, %360 : vector<16x128xf32>
    %362 = vector.shape_cast %341 : vector<128xf32> to vector<1x128xf32>
    %363 = vector.broadcast %362 : vector<1x128xf32> to vector<16x128xf32>
    %364 = arith.mulf %361, %363 : vector<16x128xf32>
    %365 = vector.shape_cast %343 : vector<128xf32> to vector<1x128xf32>
    %366 = vector.broadcast %365 : vector<1x128xf32> to vector<16x128xf32>
    %367 = arith.addf %364, %366 : vector<16x128xf32>
    %368 = vector.shape_cast %367 : vector<16x128xf32> to vector<2x8x128xf32>
    %c0_74 = arith.constant 0 : index
    %c0_75 = arith.constant 0 : index
    %c0_76 = arith.constant 0 : index
    %369 = vector.load %arg13[%c0_74, %c0_75, %c0_76] : memref<2x8x128xf32, #tpu.memory_space<vmem>>, vector<2x8x128xf32>
    tpu.vector_store %arg13[%c0_74, %c0_75, %c0_76], %368 {strides = array<i32>} : memref<2x8x128xf32, #tpu.memory_space<vmem>>, vector<2x8x128xf32>,
    %c1_i32 = arith.constant 1 : i32
    %370 = arith.cmpi eq, %arg1, %c1_i32 : i32
    %371 = arith.extui %370 : i1 to i32
    %c0_i32_77 = arith.constant 0 : i32
    %372 = arith.cmpi ne, %371, %c0_i32_77 : i32
    scf.if %372 {
      %c0_78 = arith.constant 0 : index
      %c0_79 = arith.constant 0 : index
      %373 = vector.load %arg11[%c0_78, %c0_79] : memref<1x128xf32, #tpu.memory_space<vmem>>, vector<1x128xf32>
      %374 = vector.shape_cast %373 : vector<1x128xf32> to vector<128xf32>
      %c0_80 = arith.constant 0 : index
      %c0_81 = arith.constant 0 : index
      %375 = vector.load %arg12[%c0_80, %c0_81] : memref<1x128xf32, #tpu.memory_space<vmem>>, vector<1x128xf32>
      %376 = vector.shape_cast %375 : vector<1x128xf32> to vector<128xf32>
      %cst_82 = arith.constant dense<0.000000e+00> : vector<16xf32>
      %377 = vector.multi_reduction <add>, %367, %cst_82 [1] : vector<16x128xf32> to vector<16xf32>
      %378 = vector.shape_cast %377 : vector<16xf32> to vector<16x1xf32>
      %cst_83 = arith.constant 1.280000e+02 : f32
      %379 = vector.broadcast %cst_83 : f32 to vector<16x1xf32>
      %380 = arith.divf %378, %379 : vector<16x1xf32>
      %381 = vector.broadcast %380 : vector<16x1xf32> to vector<16x128xf32>
      %382 = arith.subf %367, %381 : vector<16x128xf32>
      %383 = arith.mulf %382, %382 : vector<16x128xf32>
      %cst_84 = arith.constant dense<0.000000e+00> : vector<16xf32>
      %384 = vector.multi_reduction <add>, %383, %cst_84 [1] : vector<16x128xf32> to vector<16xf32>
      %385 = vector.shape_cast %384 : vector<16xf32> to vector<16x1xf32>
      %cst_85 = arith.constant 1.280000e+02 : f32
      %386 = vector.broadcast %cst_85 : f32 to vector<16x1xf32>
      %387 = arith.divf %385, %386 : vector<16x1xf32>
      %388 = vector.broadcast %380 : vector<16x1xf32> to vector<16x128xf32>
      %389 = arith.subf %367, %388 : vector<16x128xf32>
      %cst_86 = arith.constant 9.99999974E-6 : f32
      %390 = vector.broadcast %cst_86 : f32 to vector<16x1xf32>
      %391 = arith.addf %387, %390 : vector<16x1xf32>
      %392 = math.rsqrt %391 : vector<16x1xf32>
      %393 = vector.broadcast %392 : vector<16x1xf32> to vector<16x128xf32>
      %394 = arith.mulf %389, %393 : vector<16x128xf32>
      %395 = vector.shape_cast %374 : vector<128xf32> to vector<1x128xf32>
      %396 = vector.broadcast %395 : vector<1x128xf32> to vector<16x128xf32>
      %397 = arith.mulf %394, %396 : vector<16x128xf32>
      %398 = vector.shape_cast %376 : vector<128xf32> to vector<1x128xf32>
      %399 = vector.broadcast %398 : vector<1x128xf32> to vector<16x128xf32>
      %400 = arith.addf %397, %399 : vector<16x128xf32>
      %401 = vector.shape_cast %400 : vector<16x128xf32> to vector<2x8x128xf32>
      %c0_87 = arith.constant 0 : index
      %c0_88 = arith.constant 0 : index
      %c0_89 = arith.constant 0 : index
      %402 = vector.load %arg13[%c0_87, %c0_88, %c0_89] : memref<2x8x128xf32, #tpu.memory_space<vmem>>, vector<2x8x128xf32>
      tpu.vector_store %arg13[%c0_87, %c0_88, %c0_89], %401 {strides = array<i32>} : memref<2x8x128xf32, #tpu.memory_space<vmem>>, vector<2x8x128xf32>,
    } else {
    }
    return
  }
  func.func @transform_0(%arg0: i32, %arg1: i32) -> (i32, i32, i32) {
    %c0_i32 = arith.constant 0 : i32
    %c0_i32_0 = arith.constant 0 : i32
    %c0_i32_1 = arith.constant 0 : i32
    return %arg0, %c0_i32, %c0_i32_0 : i32, i32, i32
  }
  func.func @transform_1(%arg0: i32, %arg1: i32) -> (i32, i32, i32) {
    %c0_i32 = arith.constant 0 : i32
    %c0_i32_0 = arith.constant 0 : i32
    %c0_i32_1 = arith.constant 0 : i32
    return %arg0, %c0_i32, %c0_i32_0 : i32, i32, i32
  }
  func.func @transform_2(%arg0: i32, %arg1: i32) -> (i32, i32, i32) {
    %c0_i32 = arith.constant 0 : i32
    %c0_i32_0 = arith.constant 0 : i32
    %c0_i32_1 = arith.constant 0 : i32
    return %arg0, %c0_i32, %c0_i32_0 : i32, i32, i32
  }
  func.func @transform_3(%arg0: i32, %arg1: i32) -> (i32, i32, i32) {
    %c0_i32 = arith.constant 0 : i32
    %c0_i32_0 = arith.constant 0 : i32
    %c0_i32_1 = arith.constant 0 : i32
    return %arg1, %c0_i32, %c0_i32_0 : i32, i32, i32
  }
  func.func @transform_4(%arg0: i32, %arg1: i32) -> (i32, i32, i32) {
    %c0_i32 = arith.constant 0 : i32
    %c0_i32_0 = arith.constant 0 : i32
    %c0_i32_1 = arith.constant 0 : i32
    return %arg1, %c0_i32, %c0_i32_0 : i32, i32, i32
  }
  func.func @transform_5(%arg0: i32, %arg1: i32) -> (i32, i32, i32) {
    %c0_i32 = arith.constant 0 : i32
    %c0_i32_0 = arith.constant 0 : i32
    %c0_i32_1 = arith.constant 0 : i32
    return %arg1, %c0_i32, %c0_i32_0 : i32, i32, i32
  }
  func.func @transform_6(%arg0: i32, %arg1: i32) -> (i32, i32, i32) {
    %c0_i32 = arith.constant 0 : i32
    %c0_i32_0 = arith.constant 0 : i32
    %c0_i32_1 = arith.constant 0 : i32
    return %arg1, %c0_i32, %c0_i32_0 : i32, i32, i32
  }
  func.func @transform_7(%arg0: i32, %arg1: i32) -> (i32, i32, i32) {
    %c0_i32 = arith.constant 0 : i32
    %c0_i32_0 = arith.constant 0 : i32
    %c0_i32_1 = arith.constant 0 : i32
    return %arg1, %c0_i32, %c0_i32_0 : i32, i32, i32
  }
  func.func @transform_8(%arg0: i32, %arg1: i32) -> (i32, i32, i32) {
    %c0_i32 = arith.constant 0 : i32
    %c0_i32_0 = arith.constant 0 : i32
    %c0_i32_1 = arith.constant 0 : i32
    return %arg1, %c0_i32, %c0_i32_0 : i32, i32, i32
  }
  func.func @transform_9(%arg0: i32, %arg1: i32) -> (i32, i32) {
    %c0_i32 = arith.constant 0 : i32
    %c0_i32_0 = arith.constant 0 : i32
    %c0_i32_1 = arith.constant 0 : i32
    return %c0_i32, %c0_i32_0 : i32, i32
  }
  func.func @transform_10(%arg0: i32, %arg1: i32) -> (i32, i32) {
    %c0_i32 = arith.constant 0 : i32
    %c0_i32_0 = arith.constant 0 : i32
    %c0_i32_1 = arith.constant 0 : i32
    return %c0_i32, %c0_i32_0 : i32, i32
  }
  func.func @transform_11(%arg0: i32, %arg1: i32) -> (i32, i32, i32) {
    %c0_i32 = arith.constant 0 : i32
    %c0_i32_0 = arith.constant 0 : i32
    %c0_i32_1 = arith.constant 0 : i32
    return %arg0, %c0_i32, %c0_i32_0 : i32, i32, i32
  }
}

</mosaic_0001>

<llo_original>
// kernel: tpu_custom_call.1
$region0: #{tpu_custom_call.1}
  #allocation0 [shape = 'u32[]', space=smem, size = 0x4, offset = 0x4, fixed_abs, tag = 'smem constant byte address 0x4 - core index']
  #allocation1 [shape = 'u32[144,128]{1,0:T(1,128)}', space=vmem, size = 0x12000, scoped, tag = 'internal scratch']
  %s0 = inlined_call_operand.vmem [shape: f32[2,8,128], index: 0, kind: input, shape index: {}]
  %s1 = inlined_call_operand.vmem [shape: bf16[2,16,128], index: 1, kind: input, shape index: {}]
  %s2 = inlined_call_operand.vmem [shape: bf16[2,8,128], index: 2, kind: input, shape index: {}]
  %s3 = inlined_call_operand.hbm [shape: bf16[2,128,1152], index: 3, kind: input, shape index: {}]
  %s4 = inlined_call_operand.hbm [shape: bf16[2,384,128], index: 4, kind: input, shape index: {}]
  %s5 = inlined_call_operand.hbm [shape: bf16[2,128,256], index: 5, kind: input, shape index: {}]
  %s6 = inlined_call_operand.hbm [shape: bf16[2,256,128], index: 6, kind: input, shape index: {}]
  %s7 = inlined_call_operand.vmem [shape: f32[2,18,128], index: 7, kind: input, shape index: {}]
  %s8 = inlined_call_operand.vmem [shape: f32[2,1,256], index: 8, kind: input, shape index: {}]
  %s9 = inlined_call_operand.vmem [shape: f32[1,128], index: 9, kind: input, shape index: {}]
  %s10 = inlined_call_operand.vmem [shape: f32[1,128], index: 10, kind: input, shape index: {}]
  %s11 = inlined_call_operand.hbm [shape: f32[2,8,128], index: 11, kind: output, shape index: {}]
  %s12 = sld [smem:[#allocation0]]
  $region101: #{tpu_custom_call.1} parent=0
    _
  %s14 = ssub.s32 1, %s12
  %s15 = scalar_select 0, %s14, %s12
  $region1: #{tpu_custom_call.1} parent=0
    #allocation2 [shape = 'u8[589824]{0}', space=vmem, size = 0x90000, scoped, tag = 'input window, operand 3']
    #allocation3 [shape = 's32[2]{0}', space=sflag, size = 0x8, scoped, tag = 'scoped memory for tpu_custom_call.1']
    #allocation4 [shape = 's32[2]{0}', space=sflag, size = 0x8, scoped, tag = 'scoped memory for tpu_custom_call.1']
    #allocation5 [shape = 'u8[196608]{0}', space=vmem, size = 0x30000, scoped, tag = 'input window, operand 4']
    #allocation6 [shape = 's32[2]{0}', space=sflag, size = 0x8, scoped, tag = 'scoped memory for tpu_custom_call.1']
    #allocation7 [shape = 'u8[131072]{0}', space=vmem, size = 0x20000, scoped, tag = 'input window, operand 5']
    #allocation8 [shape = 'u8[131072]{0}', space=vmem, size = 0x20000, scoped, tag = 'input window, operand 6']
    #allocation9 [shape = 's32[2]{0}', space=sflag, size = 0x8, scoped, tag = 'scoped memory for tpu_custom_call.1']
    #allocation10 [shape = 'u8[8192]{0}', space=vmem, size = 0x2000, scoped, tag = 'output window, operand 0, single buffered']
    %16 = vsyncpa [#allocation3], 0
    %s17 = scalar_lea.sflag [#allocation3], 1
    %18 = vsyncpa %s17, 0
    %19 = vsyncpa [#allocation6], 0
    %s20 = scalar_lea.sflag [#allocation6], 1
    %21 = vsyncpa %s20, 0
    %22 = vsyncpa [#allocation9], 0
    %s23 = scalar_lea.sflag [#allocation9], 1
    %24 = vsyncpa %s23, 0
    %25 = vsyncpa [#allocation4], 0
    loop: start=0, step=1, limit=4
    $region2: #{tpu_custom_call.1} parent=1 // loop_pre_header
      _
    $region3: #{tpu_custom_call.1} parent=1 // loop_header
      %s27 = sphi 0, %s31
      %p28 = scmp.ge.s32.totalorder %s27, 4
      %s34 = sphi 0, %s46
      %s35 = sphi 0, %s42
      %s36 = sphi 0, %s34
      %s37 = sphi 0, %s35
      %s38 = sphi 0, %s36
      %s39 = sphi 0, %s37
      %s49 = sphi 0, %s51
      %s52 = sphi 0, %s49
      %s53 = sphi 0, %s52
      %s69 = sphi 0, %s53
      %s75 = sphi 0, %s77
      %s78 = sphi 0, %s75
      %s79 = sphi 0, %s78
      %s95 = sphi 0, %s79
      %s101 = sphi 0, %s103
      %s104 = sphi 0, %s101
      %s105 = sphi 0, %s104
      %s121 = sphi 0, %s105
      %s127 = sphi 0, %s129
      %s130 = sphi 0, %s127
      %s131 = sphi 0, %s130
      %s147 = sphi 0, %s131
      %s153 = sphi 0, %s155
      %s156 = sphi 0, %s153
      %s157 = sphi 0, %s156
      %s173 = sphi 0, %s157
      %s179 = sphi 0, %s181
      %s182 = sphi 0, %s179
      %s183 = sphi 0, %s182
      %s199 = sphi 0, %s183
      %s205 = sphi 0, %s207
      %s208 = sphi 0, %s205
      %s209 = sphi 0, %s208
      %s225 = sphi 0, %s209
      %s231 = sphi 0, %s233
      %s234 = sphi 0, %s231
      %s235 = sphi 0, %s234
      %s251 = sphi 0, %s235
      %s257 = sphi 0, %s259
      %s260 = sphi 0, %s257
      %s261 = sphi 0, %s260
      %s277 = sphi 0, %s261
      %s281 = sphi 0, %s281
      %s283 = sphi 0, %s281
      %s284 = sphi 0, %s283
      %s298 = sphi 0, %s284
      %s302 = sphi 0, %s302
      %s304 = sphi 0, %s302
      %s305 = sphi 0, %s304
      %s319 = sphi 0, %s305
      %s325 = sphi 0, %s327
      %s328 = sphi 0, %s325
      %s329 = sphi 0, %s328
      %s345 = sphi 0, %s329
    $region4: #{tpu_custom_call.1} parent=1 // loop_header_branch
      %30 = sbr.rel (%p28) target = $region8
    $region5: #{tpu_custom_call.1} parent=1 // loop_body
      %s32 = ssub.s32 %s27, 1
      %s33 = ssub.s32 %s27, 2
      %s40 = sadd.s32 1, %s35
      %p41 = scmp.ge.s32.totalorder %s40, 2
      %s42 = scalar_select %p41, 0, %s40
      %s43 = sadd.s32 1, %s34
      %s44 = scalar_select %p41, %s43, %s34
      %p45 = scmp.ge.s32.totalorder %s44, 1
      %s46 = scalar_select %p45, 0, %s44
      %s47 = ssub.s32 %s34, %s46
      %p48 = scmp.eq.s32.totalorder %s47, 0
      %s50 = sadd.s32 %s49, 1
      %s51 = scalar_select %p48, %s49, %s50
      %p54 = pneg %p48
      %p55 = scmp.eq.s32.totalorder %s27, 1
      %p56 = por %p54, %p55
      %p57 = scmp.ne.s32.totalorder %s49, %s52
      %p58 = scmp.eq.s32.totalorder %s27, 0
      %p59 = por %p57, %p58
      %p60 = scmp.ne.s32.totalorder %s49, %s52
      %p61 = scmp.eq.s32.totalorder %s32, 1
      %p62 = por %p60, %p61
      %p63 = scmp.ne.s32.totalorder %s52, %s53
      %p64 = scmp.eq.s32.totalorder %s32, 0
      %p65 = por %p63, %p64
      %p66 = scmp.ne.s32.totalorder %s52, %s53
      %p67 = scmp.eq.s32.totalorder %s33, 1
      %p68 = por %p66, %p67
      %p70 = scmp.ne.s32.totalorder %s53, %s69
      %p71 = scmp.eq.s32.totalorder %s33, 0
      %p72 = por %p70, %p71
      %s73 = ssub.s32 %s34, %s46
      %p74 = scmp.eq.s32.totalorder %s73, 0
      %s76 = sadd.s32 %s75, 1
      %s77 = scalar_select %p74, %s75, %s76
      %p80 = pneg %p74
      %p81 = scmp.eq.s32.totalorder %s27, 1
      %p82 = por %p80, %p81
      %p83 = scmp.ne.s32.totalorder %s75, %s78
      %p84 = scmp.eq.s32.totalorder %s27, 0
      %p85 = por %p83, %p84
      %p86 = scmp.ne.s32.totalorder %s75, %s78
      %p87 = scmp.eq.s32.totalorder %s32, 1
      %p88 = por %p86, %p87
      %p89 = scmp.ne.s32.totalorder %s78, %s79
      %p90 = scmp.eq.s32.totalorder %s32, 0
      %p91 = por %p89, %p90
      %p92 = scmp.ne.s32.totalorder %s78, %s79
      %p93 = scmp.eq.s32.totalorder %s33, 1
      %p94 = por %p92, %p93
      %p96 = scmp.ne.s32.totalorder %s79, %s95
      %p97 = scmp.eq.s32.totalorder %s33, 0
      %p98 = por %p96, %p97
      %s99 = ssub.s32 %s34, %s46
      %p100 = scmp.eq.s32.totalorder %s99, 0
      %s102 = sadd.s32 %s101, 1
      %s103 = scalar_select %p100, %s101, %s102
      %p106 = pneg %p100
      %p107 = scmp.eq.s32.totalorder %s27, 1
      %p108 = por %p106, %p107
      %p109 = scmp.ne.s32.totalorder %s101, %s104
      %p110 = scmp.eq.s32.totalorder %s27, 0
      %p111 = por %p109, %p110
      %p112 = scmp.ne.s32.totalorder %s101, %s104
      %p113 = scmp.eq.s32.totalorder %s32, 1
      %p114 = por %p112, %p113
      %p115 = scmp.ne.s32.totalorder %s104, %s105
      %p116 = scmp.eq.s32.totalorder %s32, 0
      %p117 = por %p115, %p116
      %p118 = scmp.ne.s32.totalorder %s104, %s105
      %p119 = scmp.eq.s32.totalorder %s33, 1
      %p120 = por %p118, %p119
      %p122 = scmp.ne.s32.totalorder %s105, %s121
      %p123 = scmp.eq.s32.totalorder %s33, 0
      %p124 = por %p122, %p123
      %s125 = ssub.s32 %s35, %s42
      %p126 = scmp.eq.s32.totalorder %s125, 0
      %s128 = sadd.s32 %s127, 1
      %s129 = scalar_select %p126, %s127, %s128
      %p132 = pneg %p126
      %p133 = scmp.eq.s32.totalorder %s27, 1
      %p134 = por %p132, %p133
      %p135 = scmp.ne.s32.totalorder %s127, %s130
      %p136 = scmp.eq.s32.totalorder %s27, 0
      %p137 = por %p135, %p136
      %p138 = scmp.ne.s32.totalorder %s127, %s130
      %p139 = scmp.eq.s32.totalorder %s32, 1
      %p140 = por %p138, %p139
      %p141 = scmp.ne.s32.totalorder %s130, %s131
      %p142 = scmp.eq.s32.totalorder %s32, 0
      %p143 = por %p141, %p142
      %p144 = scmp.ne.s32.totalorder %s130, %s131
      %p145 = scmp.eq.s32.totalorder %s33, 1
      %p146 = por %p144, %p145
      %p148 = scmp.ne.s32.totalorder %s131, %s147
      %p149 = scmp.eq.s32.totalorder %s33, 0
      %p150 = por %p148, %p149
      %s151 = ssub.s32 %s35, %s42
      %p152 = scmp.eq.s32.totalorder %s151, 0
      %s154 = sadd.s32 %s153, 1
      %s155 = scalar_select %p152, %s153, %s154
      %p158 = pneg %p152
      %p159 = scmp.eq.s32.totalorder %s27, 1
      %p160 = por %p158, %p159
      %p161 = scmp.ne.s32.totalorder %s153, %s156
      %p162 = scmp.eq.s32.totalorder %s27, 0
      %p163 = por %p161, %p162
      %p164 = scmp.ne.s32.totalorder %s153, %s156
      %p165 = scmp.eq.s32.totalorder %s32, 1
      %p166 = por %p164, %p165
      %p167 = scmp.ne.s32.totalorder %s156, %s157
      %p168 = scmp.eq.s32.totalorder %s32, 0
      %p169 = por %p167, %p168
      %p170 = scmp.ne.s32.totalorder %s156, %s157
      %p171 = scmp.eq.s32.totalorder %s33, 1
      %p172 = por %p170, %p171
      %p174 = scmp.ne.s32.totalorder %s157, %s173
      %p175 = scmp.eq.s32.totalorder %s33, 0
      %p176 = por %p174, %p175
      %s177 = ssub.s32 %s35, %s42
      %p178 = scmp.eq.s32.totalorder %s177, 0
      %s180 = sadd.s32 %s179, 1
      %s181 = scalar_select %p178, %s179, %s180
      %p184 = pneg %p178
      %p185 = scmp.eq.s32.totalorder %s27, 1
      %p186 = por %p184, %p185
      %p187 = scmp.ne.s32.totalorder %s179, %s182
      %p188 = scmp.eq.s32.totalorder %s27, 0
      %p189 = por %p187, %p188
      %p190 = scmp.ne.s32.totalorder %s179, %s182
      %p191 = scmp.eq.s32.totalorder %s32, 1
      %p192 = por %p190, %p191
      %p193 = scmp.ne.s32.totalorder %s182, %s183
      %p194 = scmp.eq.s32.totalorder %s32, 0
      %p195 = por %p193, %p194
      %p196 = scmp.ne.s32.totalorder %s182, %s183
      %p197 = scmp.eq.s32.totalorder %s33, 1
      %p198 = por %p196, %p197
      %p200 = scmp.ne.s32.totalorder %s183, %s199
      %p201 = scmp.eq.s32.totalorder %s33, 0
      %p202 = por %p200, %p201
      %s203 = ssub.s32 %s35, %s42
      %p204 = scmp.eq.s32.totalorder %s203, 0
      %s206 = sadd.s32 %s205, 1
      %s207 = scalar_select %p204, %s205, %s206
      %p210 = pneg %p204
      %p211 = scmp.eq.s32.totalorder %s27, 1
      %p212 = por %p210, %p211
      %p213 = scmp.ne.s32.totalorder %s205, %s208
      %p214 = scmp.eq.s32.totalorder %s27, 0
      %p215 = por %p213, %p214
      %p216 = scmp.ne.s32.totalorder %s205, %s208
      %p217 = scmp.eq.s32.totalorder %s32, 1
      %p218 = por %p216, %p217
      %p219 = scmp.ne.s32.totalorder %s208, %s209
      %p220 = scmp.eq.s32.totalorder %s32, 0
      %p221 = por %p219, %p220
      %p222 = scmp.ne.s32.totalorder %s208, %s209
      %p223 = scmp.eq.s32.totalorder %s33, 1
      %p224 = por %p222, %p223
      %p226 = scmp.ne.s32.totalorder %s209, %s225
      %p227 = scmp.eq.s32.totalorder %s33, 0
      %p228 = por %p226, %p227
      %s229 = ssub.s32 %s35, %s42
      %p230 = scmp.eq.s32.totalorder %s229, 0
      %s232 = sadd.s32 %s231, 1
      %s233 = scalar_select %p230, %s231, %s232
      %p236 = pneg %p230
      %p237 = scmp.eq.s32.totalorder %s27, 1
      %p238 = por %p236, %p237
      %p239 = scmp.ne.s32.totalorder %s231, %s234
      %p240 = scmp.eq.s32.totalorder %s27, 0
      %p241 = por %p239, %p240
      %p242 = scmp.ne.s32.totalorder %s231, %s234
      %p243 = scmp.eq.s32.totalorder %s32, 1
      %p244 = por %p242, %p243
      %p245 = scmp.ne.s32.totalorder %s234, %s235
      %p246 = scmp.eq.s32.totalorder %s32, 0
      %p247 = por %p245, %p246
      %p248 = scmp.ne.s32.totalorder %s234, %s235
      %p249 = scmp.eq.s32.totalorder %s33, 1
      %p250 = por %p248, %p249
      %p252 = scmp.ne.s32.totalorder %s235, %s251
      %p253 = scmp.eq.s32.totalorder %s33, 0
      %p254 = por %p252, %p253
      %s255 = ssub.s32 %s35, %s42
      %p256 = scmp.eq.s32.totalorder %s255, 0
      %s258 = sadd.s32 %s257, 1
      %s259 = scalar_select %p256, %s257, %s258
      %p262 = pneg %p256
      %p263 = scmp.eq.s32.totalorder %s27, 1
      %p264 = por %p262, %p263
      %p265 = scmp.ne.s32.totalorder %s257, %s260
      %p266 = scmp.eq.s32.totalorder %s27, 0
      %p267 = por %p265, %p266
      %p268 = scmp.ne.s32.totalorder %s257, %s260
      %p269 = scmp.eq.s32.totalorder %s32, 1
      %p270 = por %p268, %p269
      %p271 = scmp.ne.s32.totalorder %s260, %s261
      %p272 = scmp.eq.s32.totalorder %s32, 0
      %p273 = por %p271, %p272
      %p274 = scmp.ne.s32.totalorder %s260, %s261
      %p275 = scmp.eq.s32.totalorder %s33, 1
      %p276 = por %p274, %p275
      %p278 = scmp.ne.s32.totalorder %s261, %s277
      %p279 = scmp.eq.s32.totalorder %s33, 0
      %p280 = por %p278, %p279
      %s282 = sadd.s32 %s281, 1
      %p285 = scmp.eq.s32.totalorder %s27, 1
      %p286 = scmp.ne.s32.totalorder %s281, %s283
      %p287 = scmp.eq.s32.totalorder %s27, 0
      %p288 = por %p286, %p287
      %p289 = scmp.ne.s32.totalorder %s281, %s283
      %p290 = scmp.eq.s32.totalorder %s32, 1
      %p291 = por %p289, %p290
      %p292 = scmp.ne.s32.totalorder %s283, %s284
      %p293 = scmp.eq.s32.totalorder %s32, 0
      %p294 = por %p292, %p293
      %p295 = scmp.ne.s32.totalorder %s283, %s284
      %p296 = scmp.eq.s32.totalorder %s33, 1
      %p297 = por %p295, %p296
      %p299 = scmp.ne.s32.totalorder %s284, %s298
      %p300 = scmp.eq.s32.totalorder %s33, 0
      %p301 = por %p299, %p300
      %s303 = sadd.s32 %s302, 1
      %p306 = scmp.eq.s32.totalorder %s27, 1
      %p307 = scmp.ne.s32.totalorder %s302, %s304
      %p308 = scmp.eq.s32.totalorder %s27, 0
      %p309 = por %p307, %p308
      %p310 = scmp.ne.s32.totalorder %s302, %s304
      %p311 = scmp.eq.s32.totalorder %s32, 1
      %p312 = por %p310, %p311
      %p313 = scmp.ne.s32.totalorder %s304, %s305
      %p314 = scmp.eq.s32.totalorder %s32, 0
      %p315 = por %p313, %p314
      %p316 = scmp.ne.s32.totalorder %s304, %s305
      %p317 = scmp.eq.s32.totalorder %s33, 1
      %p318 = por %p316, %p317
      %p320 = scmp.ne.s32.totalorder %s305, %s319
      %p321 = scmp.eq.s32.totalorder %s33, 0
      %p322 = por %p320, %p321
      %s323 = ssub.s32 %s34, %s46
      %p324 = scmp.eq.s32.totalorder %s323, 0
      %s326 = sadd.s32 %s325, 1
      %s327 = scalar_select %p324, %s325, %s326
      %p330 = pneg %p324
      %p331 = scmp.eq.s32.totalorder %s27, 1
      %p332 = por %p330, %p331
      %p333 = scmp.ne.s32.totalorder %s325, %s328
      %p334 = scmp.eq.s32.totalorder %s27, 0
      %p335 = por %p333, %p334
      %p336 = scmp.ne.s32.totalorder %s325, %s328
      %p337 = scmp.eq.s32.totalorder %s32, 1
      %p338 = por %p336, %p337
      %p339 = scmp.ne.s32.totalorder %s328, %s329
      %p340 = scmp.eq.s32.totalorder %s32, 0
      %p341 = por %p339, %p340
      %p342 = scmp.ne.s32.totalorder %s328, %s329
      %p343 = scmp.eq.s32.totalorder %s33, 1
      %p344 = por %p342, %p343
      %p346 = scmp.ne.s32.totalorder %s329, %s345
      %p347 = scmp.eq.s32.totalorder %s33, 0
      %p348 = por %p346, %p347
      %p349 = scmp.le.s32.totalorder 1, %s27
      %p350 = scmp.lt.s32.totalorder %s27, 3
      %p351 = pnand %p349, %p350
      %p352 = pneg %p351
      // Predicated region
      $region9: #{tpu_custom_call.1} parent=5 // pred_check
        _
      $region10: #{tpu_custom_call.1} parent=5 // pred_check_branch
        %354 = sbr.rel (%p351) target = $region12
      $region11: #{tpu_custom_call.1} parent=5 // pred_region
        %s355 = ssub.s32 %s27, 1
        // Predicated region
        $region13: #{tpu_custom_call.1} parent=11 // pred_check
          %p356 = pneg %p65
        $region14: #{tpu_custom_call.1} parent=11 // pred_check_branch
          %358 = sbr.rel (%p356) target = $region16
        $region15: #{tpu_custom_call.1} parent=11 // pred_region
          %s359 = smul.u32 2, %s36
          %p360 = scmp.lt.s32.totalorder %s359, 1
          %s361 = scalar_select %p360, %s359, 1
          %s362 = smul.addr %s361, 8
          %s363 = scalar_lea.vmem %s0, %s362
          %s364 = smul.u32 2, %s36
        $region16: #{tpu_custom_call.1} parent=11 // pred_fallthru
          _
        // Predicated region
        $region17: #{tpu_custom_call.1} parent=11 // pred_check
          %p365 = pneg %p91
        $region18: #{tpu_custom_call.1} parent=11 // pred_check_branch
          %367 = sbr.rel (%p365) target = $region20
        $region19: #{tpu_custom_call.1} parent=11 // pred_region
          %s368 = smul.u32 2, %s36
          %p369 = scmp.lt.s32.totalorder %s368, 1
          %s370 = scalar_select %p369, %s368, 1
          %s371 = smul.addr %s370, 2
          %s372 = smul.addr %s371, 4
          %s373 = scalar_lea.vmem %s1, %s372
          %s374 = smul.u32 2, %s36
        $region20: #{tpu_custom_call.1} parent=11 // pred_fallthru
          _
        // Predicated region
        $region21: #{tpu_custom_call.1} parent=11 // pred_check
          %p375 = pneg %p117
        $region22: #{tpu_custom_call.1} parent=11 // pred_check_branch
          %377 = sbr.rel (%p375) target = $region24
        $region23: #{tpu_custom_call.1} parent=11 // pred_region
          %s378 = smul.u32 2, %s36
          %p379 = scmp.lt.s32.totalorder %s378, 1
          %s380 = scalar_select %p379, %s378, 1
          %s381 = smul.addr %s380, 4
          %s382 = scalar_lea.vmem %s2, %s381
          %s383 = smul.u32 2, %s36
        $region24: #{tpu_custom_call.1} parent=11 // pred_fallthru
          _
        // Predicated region
        $region25: #{tpu_custom_call.1} parent=11 // pred_check
          %p384 = pneg %p294
        $region26: #{tpu_custom_call.1} parent=11 // pred_check_branch
          %386 = sbr.rel (%p384) target = $region28
        $region27: #{tpu_custom_call.1} parent=11 // pred_region
          _
        $region28: #{tpu_custom_call.1} parent=11 // pred_fallthru
          _
        // Predicated region
        $region29: #{tpu_custom_call.1} parent=11 // pred_check
          %p387 = pneg %p315
        $region30: #{tpu_custom_call.1} parent=11 // pred_check_branch
          %389 = sbr.rel (%p387) target = $region32
        $region31: #{tpu_custom_call.1} parent=11 // pred_region
          _
        $region32: #{tpu_custom_call.1} parent=11 // pred_fallthru
          _
      $region12: #{tpu_custom_call.1} parent=5 // pred_fallthru
        _
      %p390 = scmp.lt.s32.totalorder %s27, 2
      // Predicated region
      $region33: #{tpu_custom_call.1} parent=5 // pred_check
        %p391 = pneg %p390
      $region34: #{tpu_custom_call.1} parent=5 // pred_check_branch
        %393 = sbr.rel (%p391) target = $region36
      $region35: #{tpu_custom_call.1} parent=5 // pred_region
        // Predicated region
        $region37: #{tpu_custom_call.1} parent=35 // pred_check
          %p394 = pneg %p137
        $region38: #{tpu_custom_call.1} parent=35 // pred_check_branch
          %396 = sbr.rel (%p394) target = $region40
        $region39: #{tpu_custom_call.1} parent=35 // pred_region
          %s397 = sand.u32 %s127, 1
          %s398 = scalar_lea.sflag [#allocation3], %s397
          %s399 = sand.u32 %s127, 1
          %s400 = smul.addr %s399, 576
          %s401 = scalar_lea.vmem [#allocation2], %s400
          %s403 = ssub.s32 9216, 9216
          %404 = vsyncadd %s398, %s403
          %s405 = smul.addr %s35, 144
          %s406 = smul.addr %s405, 64
          %s407 = scalar_lea.hbm %s3, %s406
          %s408 = sshll.u32 %s401, 4
          %s409 = int_to_ptr.vmem [resolvable:$true] %s408
          %414 = dma.hbm_to_vmem [thread:$0]  %s407, 9216, %s409, %s398, 576, 576, 36
        $region40: #{tpu_custom_call.1} parent=35 // pred_fallthru
          _
        // Predicated region
        $region41: #{tpu_custom_call.1} parent=35 // pred_check
          %p415 = pneg %p163
        $region42: #{tpu_custom_call.1} parent=35 // pred_check_branch
          %417 = sbr.rel (%p415) target = $region44
        $region43: #{tpu_custom_call.1} parent=35 // pred_region
          %s418 = sand.u32 %s27, 1
          %s419 = scalar_lea.sflag [#allocation6], %s418
          %s420 = sand.u32 %s153, 1
          %s421 = smul.addr %s420, 192
          %s422 = scalar_lea.vmem [#allocation5], %s421
          %s424 = ssub.s32 3072, 3072
          %425 = vsyncadd %s419, %s424
          %s426 = smul.addr %s35, 48
          %s427 = smul.addr %s426, 64
          %s428 = scalar_lea.hbm %s4, %s427
          %s429 = sshll.u32 %s422, 4
          %s430 = int_to_ptr.vmem [resolvable:$true] %s429
          %435 = dma.hbm_to_vmem [thread:$0]  %s428, 3072, %s430, %s419, 64, 64, 4
        $region44: #{tpu_custom_call.1} parent=35 // pred_fallthru
          _
        // Predicated region
        $region45: #{tpu_custom_call.1} parent=35 // pred_check
          %p436 = pneg %p189
        $region46: #{tpu_custom_call.1} parent=35 // pred_check_branch
          %438 = sbr.rel (%p436) target = $region48
        $region47: #{tpu_custom_call.1} parent=35 // pred_region
          %s439 = sand.u32 %s27, 1
          %s440 = scalar_lea.sflag [#allocation6], %s439
          %s441 = sand.u32 %s179, 1
          %s442 = smul.addr %s441, 128
          %s443 = scalar_lea.vmem [#allocation7], %s442
          %s445 = ssub.s32 2048, 2048
          %446 = vsyncadd %s440, %s445
          %s447 = smul.addr %s35, 32
          %s448 = smul.addr %s447, 64
          %s449 = scalar_lea.hbm %s5, %s448
          %s450 = sshll.u32 %s443, 4
          %s451 = int_to_ptr.vmem [resolvable:$true] %s450
          %456 = dma.hbm_to_vmem [thread:$0]  %s449, 2048, %s451, %s440, 128, 128, 8
        $region48: #{tpu_custom_call.1} parent=35 // pred_fallthru
          _
        // Predicated region
        $region49: #{tpu_custom_call.1} parent=35 // pred_check
          %p457 = pneg %p215
        $region50: #{tpu_custom_call.1} parent=35 // pred_check_branch
          %459 = sbr.rel (%p457) target = $region52
        $region51: #{tpu_custom_call.1} parent=35 // pred_region
          %s460 = sand.u32 %s205, 1
          %s461 = scalar_lea.sflag [#allocation9], %s460
          %s462 = sand.u32 %s205, 1
          %s463 = smul.addr %s462, 128
          %s464 = scalar_lea.vmem [#allocation8], %s463
          %s466 = ssub.s32 2048, 2048
          %467 = vsyncadd %s461, %s466
          %s468 = smul.addr %s35, 32
          %s469 = smul.addr %s468, 64
          %s470 = scalar_lea.hbm %s6, %s469
          %s471 = sshll.u32 %s464, 4
          %s472 = int_to_ptr.vmem [resolvable:$true] %s471
          %477 = dma.hbm_to_vmem [thread:$0]  %s470, 2048, %s472, %s461, 64, 64, 4
        $region52: #{tpu_custom_call.1} parent=35 // pred_fallthru
          _
        // Predicated region
        $region53: #{tpu_custom_call.1} parent=35 // pred_check
          %p478 = pneg %p241
        $region54: #{tpu_custom_call.1} parent=35 // pred_check_branch
          %480 = sbr.rel (%p478) target = $region56
        $region55: #{tpu_custom_call.1} parent=35 // pred_region
          %p481 = scmp.lt.s32.totalorder %s35, 1
          %s482 = scalar_select %p481, %s35, 1
          %s483 = smul.addr %s482, 3
          %s484 = smul.addr %s483, 8
          %s485 = scalar_lea.vmem %s7, %s484
        $region56: #{tpu_custom_call.1} parent=35 // pred_fallthru
          _
        // Predicated region
        $region57: #{tpu_custom_call.1} parent=35 // pred_check
          %p486 = pneg %p267
        $region58: #{tpu_custom_call.1} parent=35 // pred_check_branch
          %488 = sbr.rel (%p486) target = $region60
        $region59: #{tpu_custom_call.1} parent=35 // pred_region
          %p489 = scmp.lt.s32.totalorder %s35, 1
          %s490 = scalar_select %p489, %s35, 1
          %s491 = smul.addr %s490, 2
          %s492 = scalar_lea.vmem %s8, %s491
        $region60: #{tpu_custom_call.1} parent=35 // pred_fallthru
          _
      $region36: #{tpu_custom_call.1} parent=5 // pred_fallthru
        _
      %p493 = scmp.le.s32.totalorder 1, %s27
      %p494 = scmp.lt.s32.totalorder %s27, 3
      %p495 = pnand %p493, %p494
      %p496 = pneg %p495
      // Predicated region
      $region61: #{tpu_custom_call.1} parent=5 // pred_check
        _
      $region62: #{tpu_custom_call.1} parent=5 // pred_check_branch
        %498 = sbr.rel (%p495) target = $region64
      $region63: #{tpu_custom_call.1} parent=5 // pred_region
        %s499 = ssub.s32 %s27, 1
        %s500 = sand.u32 %s130, 1
        %s501 = scalar_lea.sflag [#allocation3], %s500
        %s502 = sand.u32 %s130, 1
        %s503 = smul.addr %s502, 576
        %s504 = scalar_lea.vmem [#allocation2], %s503
        // Predicated region
        $region65: #{tpu_custom_call.1} parent=63 // pred_check
          %p505 = pneg %p143
        $region66: #{tpu_custom_call.1} parent=63 // pred_check_branch
          %507 = sbr.rel (%p505) target = $region68
        $region67: #{tpu_custom_call.1} parent=63 // pred_region
          %508 = dma.done %s501, 9216
        $region68: #{tpu_custom_call.1} parent=63 // pred_fallthru
          _
        %s509 = sand.u32 %s32, 1
        %s510 = scalar_lea.sflag [#allocation6], %s509
        %s511 = sand.u32 %s156, 1
        %s512 = smul.addr %s511, 192
        %s513 = scalar_lea.vmem [#allocation5], %s512
        // Predicated region
        $region69: #{tpu_custom_call.1} parent=63 // pred_check
          %p514 = pneg %p169
        $region70: #{tpu_custom_call.1} parent=63 // pred_check_branch
          %516 = sbr.rel (%p514) target = $region72
        $region71: #{tpu_custom_call.1} parent=63 // pred_region
          %517 = dma.done %s510, 3072
        $region72: #{tpu_custom_call.1} parent=63 // pred_fallthru
          _
        %s518 = sand.u32 %s32, 1
        %s519 = scalar_lea.sflag [#allocation6], %s518
        %s520 = sand.u32 %s182, 1
        %s521 = smul.addr %s520, 128
        %s522 = scalar_lea.vmem [#allocation7], %s521
        // Predicated region
        $region73: #{tpu_custom_call.1} parent=63 // pred_check
          %p523 = pneg %p195
        $region74: #{tpu_custom_call.1} parent=63 // pred_check_branch
          %525 = sbr.rel (%p523) target = $region76
        $region75: #{tpu_custom_call.1} parent=63 // pred_region
          %526 = dma.done %s519, 2048
        $region76: #{tpu_custom_call.1} parent=63 // pred_fallthru
          _
        %s527 = sand.u32 %s208, 1
        %s528 = scalar_lea.sflag [#allocation9], %s527
        %s529 = sand.u32 %s208, 1
        %s530 = smul.addr %s529, 128
        %s531 = scalar_lea.vmem [#allocation8], %s530
        // Predicated region
        $region77: #{tpu_custom_call.1} parent=63 // pred_check
          %p532 = pneg %p221
        $region78: #{tpu_custom_call.1} parent=63 // pred_check_branch
          %534 = sbr.rel (%p532) target = $region80
        $region79: #{tpu_custom_call.1} parent=63 // pred_region
          %535 = dma.done %s528, 2048
        $region80: #{tpu_custom_call.1} parent=63 // pred_fallthru
          _
        %s536 = smul.u32 2, %s36
        %p537 = scmp.lt.s32.totalorder %s536, 1
        %s538 = scalar_select %p537, %s536, 1
        %s539 = smul.addr %s538, 8
        %s540 = scalar_lea.vmem %s0, %s539
        %p541 = pneg %p65
        %p542 = pneg %p62
        %s543 = smul.u32 2, %s36
        %p544 = scmp.lt.s32.totalorder %s543, 1
        %s545 = scalar_select %p544, %s543, 1
        %s546 = smul.addr %s545, 2
        %s547 = smul.addr %s546, 4
        %s548 = scalar_lea.vmem %s1, %s547
        %p549 = pneg %p91
        %p550 = pneg %p88
        %s551 = smul.u32 2, %s36
        %p552 = scmp.lt.s32.totalorder %s551, 1
        %s553 = scalar_select %p552, %s551, 1
        %s554 = smul.addr %s553, 4
        %s555 = scalar_lea.vmem %s2, %s554
        %p556 = pneg %p117
        %p557 = pneg %p114
        %s558 = sand.u32 %s130, 1
        %s559 = scalar_lea.sflag [#allocation3], %s558
        %s560 = sand.u32 %s130, 1
        %s561 = smul.addr %s560, 576
        %s562 = scalar_lea.vmem [#allocation2], %s561
        %p563 = pneg %p143
        %p564 = pneg %p140
        %s565 = sand.u32 %s32, 1
        %s566 = scalar_lea.sflag [#allocation6], %s565
        %s567 = sand.u32 %s156, 1
        %s568 = smul.addr %s567, 192
        %s569 = scalar_lea.vmem [#allocation5], %s568
        %p570 = pneg %p169
        %p571 = pneg %p166
        %s572 = sand.u32 %s32, 1
        %s573 = scalar_lea.sflag [#allocation6], %s572
        %s574 = sand.u32 %s182, 1
        %s575 = smul.addr %s574, 128
        %s576 = scalar_lea.vmem [#allocation7], %s575
        %p577 = pneg %p195
        %p578 = pneg %p192
        %s579 = sand.u32 %s208, 1
        %s580 = scalar_lea.sflag [#allocation9], %s579
        %s581 = sand.u32 %s208, 1
        %s582 = smul.addr %s581, 128
        %s583 = scalar_lea.vmem [#allocation8], %s582
        %p584 = pneg %p221
        %p585 = pneg %p218
        %p586 = scmp.lt.s32.totalorder %s37, 1
        %s587 = scalar_select %p586, %s37, 1
        %s588 = smul.addr %s587, 3
        %s589 = smul.addr %s588, 8
        %s590 = scalar_lea.vmem %s7, %s589
        %p591 = pneg %p247
        %p592 = pneg %p244
        %p593 = scmp.lt.s32.totalorder %s37, 1
        %s594 = scalar_select %p593, %s37, 1
        %s595 = smul.addr %s594, 2
        %s596 = scalar_lea.vmem %s8, %s595
        %p597 = pneg %p273
        %p598 = pneg %p270
        %p599 = pneg %p294
        %p600 = pneg %p291
        %p601 = pneg %p315
        %p602 = pneg %p312
        %p603 = pneg %p341
        %p604 = pneg %p338
        %s605 = smul.u32 2, %s36
        %p606 = scmp.lt.s32.totalorder %s605, 1
        %s607 = scalar_select %p606, %s605, 1
        %s608 = smul.addr %s607, 8
        %s609 = scalar_lea.vmem %s0, %s608
        %s610 = smul.u32 2, %s36
        %s611 = smul.u32 2, %s36
        %p612 = scmp.lt.s32.totalorder %s611, 1
        %s613 = scalar_select %p612, %s611, 1
        %s614 = smul.addr %s613, 2
        %s615 = smul.addr %s614, 4
        %s616 = scalar_lea.vmem %s1, %s615
        %s617 = smul.u32 2, %s36
        %s618 = smul.u32 2, %s36
        %p619 = scmp.lt.s32.totalorder %s618, 1
        %s620 = scalar_select %p619, %s618, 1
        %s621 = smul.addr %s620, 4
        %s622 = scalar_lea.vmem %s2, %s621
        %s623 = smul.u32 2, %s36
        %p624 = scmp.lt.s32.totalorder %s37, 1
        %s625 = scalar_select %p624, %s37, 1
        %s626 = smul.addr %s625, 3
        %s627 = smul.addr %s626, 8
        %s628 = scalar_lea.vmem %s7, %s627
        %p629 = scmp.lt.s32.totalorder %s37, 1
        %s630 = scalar_select %p629, %s37, 1
        %s631 = smul.addr %s630, 2
        %s632 = scalar_lea.vmem %s8, %s631
        %s633 = smul.u32 2, %s36
        %p635 = scmp.eq.s32.totalorder %s37, 0
        // Predicated region
        $region81: #{tpu_custom_call.1} parent=63 // pred_check
          %p636 = pneg %p635
        $region82: #{tpu_custom_call.1} parent=63 // pred_check_branch
          %638 = sbr.rel (%p636) target = $region84
        $region83: #{tpu_custom_call.1} parent=63 // pred_region
          %v639 = vld [vmem:[%s609] sm:$0xff]
          %v640 = vld [vmem:[%s609 + $0x8] sm:$0xff]
          %641 = vst [vmem:[#allocation10] sm:$0xff] %v639
          %642 = vst [vmem:[#allocation10 + $0x8] sm:$0xff] %v640
        $region84: #{tpu_custom_call.1} parent=63 // pred_fallthru
          _
        %v643 = vld [vmem:[#allocation10] sm:$0xff]
        %v644 = vld [vmem:[#allocation10 + $0x8] sm:$0xff]
        %v645 = vld [vmem:[%s504] sm:$0xff]
        %v646 = vld [vmem:[%s504 + $0x8] sm:$0xff]
        %v647 = vld [vmem:[%s504 + $0x10] sm:$0xff]
        %v648 = vld [vmem:[%s504 + $0x18] sm:$0xff]
        %v649 = vld [vmem:[%s504 + $0x20] sm:$0xf]
        %v650 = vld [vmem:[%s504 + $0x24] sm:$0xff]
        %v651 = vld [vmem:[%s504 + $0x2c] sm:$0xff]
        %v652 = vld [vmem:[%s504 + $0x34] sm:$0xff]
        %v653 = vld [vmem:[%s504 + $0x3c] sm:$0xff]
        %v654 = vld [vmem:[%s504 + $0x44] sm:$0xf]
        %v655 = vld [vmem:[%s504 + $0x48] sm:$0xff]
        %v656 = vld [vmem:[%s504 + $0x50] sm:$0xff]
        %v657 = vld [vmem:[%s504 + $0x58] sm:$0xff]
        %v658 = vld [vmem:[%s504 + $0x60] sm:$0xff]
        %v659 = vld [vmem:[%s504 + $0x68] sm:$0xf]
        %v660 = vld [vmem:[%s504 + $0x6c] sm:$0xff]
        %v661 = vld [vmem:[%s504 + $0x74] sm:$0xff]
        %v662 = vld [vmem:[%s504 + $0x7c] sm:$0xff]
        %v663 = vld [vmem:[%s504 + $0x84] sm:$0xff]
        %v664 = vld [vmem:[%s504 + $0x8c] sm:$0xf]
        %v665 = vld [vmem:[%s504 + $0x90] sm:$0xff]
        %v666 = vld [vmem:[%s504 + $0x98] sm:$0xff]
        %v667 = vld [vmem:[%s504 + $0xa0] sm:$0xff]
        %v668 = vld [vmem:[%s504 + $0xa8] sm:$0xff]
        %v669 = vld [vmem:[%s504 + $0xb0] sm:$0xf]
        %v670 = vld [vmem:[%s504 + $0xb4] sm:$0xff]
        %v671 = vld [vmem:[%s504 + $0xbc] sm:$0xff]
        %v672 = vld [vmem:[%s504 + $0xc4] sm:$0xff]
        %v673 = vld [vmem:[%s504 + $0xcc] sm:$0xff]
        %v674 = vld [vmem:[%s504 + $0xd4] sm:$0xf]
        %v675 = vld [vmem:[%s504 + $0xd8] sm:$0xff]
        %v676 = vld [vmem:[%s504 + $0xe0] sm:$0xff]
        %v677 = vld [vmem:[%s504 + $0xe8] sm:$0xff]
        %v678 = vld [vmem:[%s504 + $0xf0] sm:$0xff]
        %v679 = vld [vmem:[%s504 + $0xf8] sm:$0xf]
        %v680 = vld [vmem:[%s504 + $0xfc] sm:$0xff]
        %v681 = vld [vmem:[%s504 + $0x104] sm:$0xff]
        %v682 = vld [vmem:[%s504 + $0x10c] sm:$0xff]
        %v683 = vld [vmem:[%s504 + $0x114] sm:$0xff]
        %v684 = vld [vmem:[%s504 + $0x11c] sm:$0xf]
        %v685 = vld [vmem:[%s504 + $0x120] sm:$0xff]
        %v686 = vld [vmem:[%s504 + $0x128] sm:$0xff]
        %v687 = vld [vmem:[%s504 + $0x130] sm:$0xff]
        %v688 = vld [vmem:[%s504 + $0x138] sm:$0xff]
        %v689 = vld [vmem:[%s504 + $0x140] sm:$0xf]
        %v690 = vld [vmem:[%s504 + $0x144] sm:$0xff]
        %v691 = vld [vmem:[%s504 + $0x14c] sm:$0xff]
        %v692 = vld [vmem:[%s504 + $0x154] sm:$0xff]
        %v693 = vld [vmem:[%s504 + $0x15c] sm:$0xff]
        %v694 = vld [vmem:[%s504 + $0x164] sm:$0xf]
        %v695 = vld [vmem:[%s504 + $0x168] sm:$0xff]
        %v696 = vld [vmem:[%s504 + $0x170] sm:$0xff]
        %v697 = vld [vmem:[%s504 + $0x178] sm:$0xff]
        %v698 = vld [vmem:[%s504 + $0x180] sm:$0xff]
        %v699 = vld [vmem:[%s504 + $0x188] sm:$0xf]
        %v700 = vld [vmem:[%s504 + $0x18c] sm:$0xff]
        %v701 = vld [vmem:[%s504 + $0x194] sm:$0xff]
        %v702 = vld [vmem:[%s504 + $0x19c] sm:$0xff]
        %v703 = vld [vmem:[%s504 + $0x1a4] sm:$0xff]
        %v704 = vld [vmem:[%s504 + $0x1ac] sm:$0xf]
        %v705 = vld [vmem:[%s504 + $0x1b0] sm:$0xff]
        %v706 = vld [vmem:[%s504 + $0x1b8] sm:$0xff]
        %v707 = vld [vmem:[%s504 + $0x1c0] sm:$0xff]
        %v708 = vld [vmem:[%s504 + $0x1c8] sm:$0xff]
        %v709 = vld [vmem:[%s504 + $0x1d0] sm:$0xf]
        %v710 = vld [vmem:[%s504 + $0x1d4] sm:$0xff]
        %v711 = vld [vmem:[%s504 + $0x1dc] sm:$0xff]
        %v712 = vld [vmem:[%s504 + $0x1e4] sm:$0xff]
        %v713 = vld [vmem:[%s504 + $0x1ec] sm:$0xff]
        %v714 = vld [vmem:[%s504 + $0x1f4] sm:$0xf]
        %v715 = vld [vmem:[%s504 + $0x1f8] sm:$0xff]
        %v716 = vld [vmem:[%s504 + $0x200] sm:$0xff]
        %v717 = vld [vmem:[%s504 + $0x208] sm:$0xff]
        %v718 = vld [vmem:[%s504 + $0x210] sm:$0xff]
        %v719 = vld [vmem:[%s504 + $0x218] sm:$0xf]
        %v720 = vld [vmem:[%s504 + $0x21c] sm:$0xff]
        %v721 = vld [vmem:[%s504 + $0x224] sm:$0xff]
        %v722 = vld [vmem:[%s504 + $0x22c] sm:$0xff]
        %v723 = vld [vmem:[%s504 + $0x234] sm:$0xff]
        %v724 = vld [vmem:[%s504 + $0x23c] sm:$0xf]
        %v725 = vld [vmem:[%s513] sm:$0xf]
        %v726 = vld [vmem:[%s513 + $0x4] sm:$0xf]
        %v727 = vld [vmem:[%s513 + $0x8] sm:$0xf]
        %v728 = vld [vmem:[%s513 + $0xc] sm:$0xf]
        %v729 = vld [vmem:[%s513 + $0x10] sm:$0xf]
        %v730 = vld [vmem:[%s513 + $0x14] sm:$0xf]
        %v731 = vld [vmem:[%s513 + $0x18] sm:$0xf]
        %v732 = vld [vmem:[%s513 + $0x1c] sm:$0xf]
        %v733 = vld [vmem:[%s513 + $0x20] sm:$0xf]
        %v734 = vld [vmem:[%s513 + $0x24] sm:$0xf]
        %v735 = vld [vmem:[%s513 + $0x28] sm:$0xf]
        %v736 = vld [vmem:[%s513 + $0x2c] sm:$0xf]
        %v737 = vld [vmem:[%s513 + $0x30] sm:$0xf]
        %v738 = vld [vmem:[%s513 + $0x34] sm:$0xf]
        %v739 = vld [vmem:[%s513 + $0x38] sm:$0xf]
        %v740 = vld [vmem:[%s513 + $0x3c] sm:$0xf]
        %v741 = vld [vmem:[%s513 + $0x40] sm:$0xf]
        %v742 = vld [vmem:[%s513 + $0x44] sm:$0xf]
        %v743 = vld [vmem:[%s513 + $0x48] sm:$0xf]
        %v744 = vld [vmem:[%s513 + $0x4c] sm:$0xf]
        %v745 = vld [vmem:[%s513 + $0x50] sm:$0xf]
        %v746 = vld [vmem:[%s513 + $0x54] sm:$0xf]
        %v747 = vld [vmem:[%s513 + $0x58] sm:$0xf]
        %v748 = vld [vmem:[%s513 + $0x5c] sm:$0xf]
        %v749 = vld [vmem:[%s513 + $0x60] sm:$0xf]
        %v750 = vld [vmem:[%s513 + $0x64] sm:$0xf]
        %v751 = vld [vmem:[%s513 + $0x68] sm:$0xf]
        %v752 = vld [vmem:[%s513 + $0x6c] sm:$0xf]
        %v753 = vld [vmem:[%s513 + $0x70] sm:$0xf]
        %v754 = vld [vmem:[%s513 + $0x74] sm:$0xf]
        %v755 = vld [vmem:[%s513 + $0x78] sm:$0xf]
        %v756 = vld [vmem:[%s513 + $0x7c] sm:$0xf]
        %v757 = vld [vmem:[%s513 + $0x80] sm:$0xf]
        %v758 = vld [vmem:[%s513 + $0x84] sm:$0xf]
        %v759 = vld [vmem:[%s513 + $0x88] sm:$0xf]
        %v760 = vld [vmem:[%s513 + $0x8c] sm:$0xf]
        %v761 = vld [vmem:[%s513 + $0x90] sm:$0xf]
        %v762 = vld [vmem:[%s513 + $0x94] sm:$0xf]
        %v763 = vld [vmem:[%s513 + $0x98] sm:$0xf]
        %v764 = vld [vmem:[%s513 + $0x9c] sm:$0xf]
        %v765 = vld [vmem:[%s513 + $0xa0] sm:$0xf]
        %v766 = vld [vmem:[%s513 + $0xa4] sm:$0xf]
        %v767 = vld [vmem:[%s513 + $0xa8] sm:$0xf]
        %v768 = vld [vmem:[%s513 + $0xac] sm:$0xf]
        %v769 = vld [vmem:[%s513 + $0xb0] sm:$0xf]
        %v770 = vld [vmem:[%s513 + $0xb4] sm:$0xf]
        %v771 = vld [vmem:[%s513 + $0xb8] sm:$0xf]
        %v772 = vld [vmem:[%s513 + $0xbc] sm:$0xf]
        %v773 = vld [vmem:[%s628] sm:$0xff]
        %v774 = vld [vmem:[%s628 + $0x8] sm:$0xff]
        %v775 = vld [vmem:[%s628 + $0x10] sm:$0x3]
        %v776 = vld [vmem:[%s616] sm:$0xf]
        %v777 = vld [vmem:[%s616 + $0x4] sm:$0xf]
        %v778 = vld [vmem:[%s616 + $0x8] sm:$0xf]
        %v779 = vld [vmem:[%s616 + $0xc] sm:$0xf]
        %v780 = vld [vmem:[%s622] sm:$0xf]
        %v781 = vld [vmem:[%s622 + $0x4] sm:$0xf]
        %v782 = vpack.c.bf16 %v644, %v643
        %v815 = vunpack.c.l.b16 %v645
        %v816 = vunpack.c.h.b16 %v645
        %v817 = vunpack.c.l.b16 %v646
        %v818 = vunpack.c.l.b16 %v650
        %v819 = vunpack.c.h.b16 %v650
        %v820 = vunpack.c.l.b16 %v651
        %v821 = vunpack.c.l.b16 %v655
        %v822 = vunpack.c.h.b16 %v655
        %v823 = vunpack.c.l.b16 %v656
        %v824 = vunpack.c.l.b16 %v660
        %v825 = vunpack.c.h.b16 %v660
        %v826 = vunpack.c.l.b16 %v661
        %v827 = vunpack.c.l.b16 %v665
        %v828 = vunpack.c.h.b16 %v665
        %v829 = vunpack.c.l.b16 %v666
        %v830 = vunpack.c.l.b16 %v670
        %v831 = vunpack.c.h.b16 %v670
        %v832 = vunpack.c.l.b16 %v671
        %v833 = vunpack.c.l.b16 %v675
        %v834 = vunpack.c.h.b16 %v675
        %v835 = vunpack.c.l.b16 %v676
        %v836 = vunpack.c.l.b16 %v680
        %v837 = vunpack.c.h.b16 %v680
        %v838 = vunpack.c.l.b16 %v681
        %v839 = vunpack.c.l.b16 %v685
        %v840 = vunpack.c.h.b16 %v685
        %v841 = vunpack.c.l.b16 %v686
        %v842 = vunpack.c.l.b16 %v690
        %v843 = vunpack.c.h.b16 %v690
        %v844 = vunpack.c.l.b16 %v691
        %v845 = vunpack.c.l.b16 %v695
        %v846 = vunpack.c.h.b16 %v695
        %v847 = vunpack.c.l.b16 %v696
        %v848 = vunpack.c.l.b16 %v700
        %v849 = vunpack.c.h.b16 %v700
        %v850 = vunpack.c.l.b16 %v701
        %v851 = vunpack.c.l.b16 %v705
        %v852 = vunpack.c.h.b16 %v705
        %v853 = vunpack.c.l.b16 %v706
        %v854 = vunpack.c.l.b16 %v710
        %v855 = vunpack.c.h.b16 %v710
        %v856 = vunpack.c.l.b16 %v711
        %v857 = vunpack.c.l.b16 %v715
        %v858 = vunpack.c.h.b16 %v715
        %v859 = vunpack.c.l.b16 %v716
        %v860 = vunpack.c.l.b16 %v720
        %v861 = vunpack.c.h.b16 %v720
        %v862 = vunpack.c.l.b16 %v721
        %v863 = vpack.c.b16 %v818, %v815
        %v864 = vpack.c.b16 %v819, %v816
        %v865 = vpack.c.b16 %v820, %v817
        %v866 = vpack.c.b16 %v824, %v821
        %v867 = vpack.c.b16 %v825, %v822
        %v868 = vpack.c.b16 %v826, %v823
        %v869 = vpack.c.b16 %v830, %v827
        %v870 = vpack.c.b16 %v831, %v828
        %v871 = vpack.c.b16 %v832, %v829
        %v872 = vpack.c.b16 %v836, %v833
        %v873 = vpack.c.b16 %v837, %v834
        %v874 = vpack.c.b16 %v838, %v835
        %v875 = vpack.c.b16 %v842, %v839
        %v876 = vpack.c.b16 %v843, %v840
        %v877 = vpack.c.b16 %v844, %v841
        %v878 = vpack.c.b16 %v848, %v845
        %v879 = vpack.c.b16 %v849, %v846
        %v880 = vpack.c.b16 %v850, %v847
        %v881 = vpack.c.b16 %v854, %v851
        %v882 = vpack.c.b16 %v855, %v852
        %v883 = vpack.c.b16 %v856, %v853
        %v884 = vpack.c.b16 %v860, %v857
        %v885 = vpack.c.b16 %v861, %v858
        %v886 = vpack.c.b16 %v862, %v859
        %911 = vmatprep.subr.bf16.mxu0 %v864
        %912 = vmatpush1.bf16.msra.mxu0 %v863
        %913 = vmatprep.subr.bf16.mxu0 %v867
        %914 = vmatpush1.bf16.msra.mxu0 %v866
        %915 = vmatprep.subr.bf16.mxu0 %v870
        %916 = vmatpush1.bf16.msra.mxu0 %v869
        %917 = vmatprep.subr.bf16.mxu0 %v873
        %918 = vmatpush1.bf16.msra.mxu0 %v872
        %919 = vmatprep.subr.bf16.mxu0 %v876
        %920 = vmatpush1.bf16.msra.mxu0 %v875
        %921 = vmatprep.subr.bf16.mxu0 %v879
        %922 = vmatpush1.bf16.msra.mxu0 %v878
        %923 = vmatprep.subr.bf16.mxu0 %v882
        %924 = vmatpush1.bf16.msra.mxu0 %v881
        %925 = vmatprep.subr.bf16.mxu0 %v885
        %926 = vmatpush1.bf16.msra.mxu0 %v884
        %927 = vmatprep.subr.bf16.mxu0 0
        %928 = vmatpush1.bf16.msra.mxu0 0
        %929 = vmatprep.subr.bf16.mxu0 0
        %930 = vmatpush1.bf16.msra.mxu0 0
        %931 = vmatprep.subr.bf16.mxu0 0
        %932 = vmatpush1.bf16.msra.mxu0 0
        %933 = vmatprep.subr.bf16.mxu0 0
        %934 = vmatpush1.bf16.msra.mxu0 0
        %935 = vmatprep.subr.bf16.mxu0 0
        %936 = vmatpush1.bf16.msra.mxu0 0
        %937 = vmatprep.subr.bf16.mxu0 0
        %938 = vmatpush1.bf16.msra.mxu0 0
        %939 = vmatprep.subr.bf16.mxu0 0
        %940 = vmatpush1.bf16.msra.mxu0 0
        %941 = vmatprep.subr.bf16.mxu0 0
        %942 = vmatpush1.bf16.msra.mxu0 0
        %943 = vmatprep.mubr.bf16.mxu0 0
        %944 = vmatmul.mubr.bf16.gmra.mrb[0].mxu0 %v782
        %v945 = vpop.f32.mrb[0].mxu0
        %v946 = vadd.f32 0.0, %v945
        %v947 = vpop.f32.mrb[0].mxu0
        %v948 = vadd.f32 0.0, %v947
        %v949 = vpop.f32.mrb[0].mxu0
        %v950 = vadd.f32 0.0, %v949
        %v951 = vpop.f32.mrb[0].mxu0
        %v952 = vadd.f32 0.0, %v951
        %953 = vdwg.mxu0
        %954 = vmatprep.subr.bf16.mxu0 0
        %955 = vmatpush1.bf16.msra.mxu0 %v865
        %956 = vmatprep.subr.bf16.mxu0 0
        %957 = vmatpush1.bf16.msra.mxu0 %v868
        %958 = vmatprep.subr.bf16.mxu0 0
        %959 = vmatpush1.bf16.msra.mxu0 %v871
        %960 = vmatprep.subr.bf16.mxu0 0
        %961 = vmatpush1.bf16.msra.mxu0 %v874
        %962 = vmatprep.subr.bf16.mxu0 0
        %963 = vmatpush1.bf16.msra.mxu0 %v877
        %964 = vmatprep.subr.bf16.mxu0 0
        %965 = vmatpush1.bf16.msra.mxu0 %v880
        %966 = vmatprep.subr.bf16.mxu0 0
        %967 = vmatpush1.bf16.msra.mxu0 %v883
        %968 = vmatprep.subr.bf16.mxu0 0
        %969 = vmatpush1.bf16.msra.mxu0 %v886
        %970 = vmatprep.subr.bf16.mxu0 0
        %971 = vmatpush1.bf16.msra.mxu0 0
        %972 = vmatprep.subr.bf16.mxu0 0
        %973 = vmatpush1.bf16.msra.mxu0 0
        %974 = vmatprep.subr.bf16.mxu0 0
        %975 = vmatpush1.bf16.msra.mxu0 0
        %976 = vmatprep.subr.bf16.mxu0 0
        %977 = vmatpush1.bf16.msra.mxu0 0
        %978 = vmatprep.subr.bf16.mxu0 0
        %979 = vmatpush1.bf16.msra.mxu0 0
        %980 = vmatprep.subr.bf16.mxu0 0
        %981 = vmatpush1.bf16.msra.mxu0 0
        %982 = vmatprep.subr.bf16.mxu0 0
        %983 = vmatpush1.bf16.msra.mxu0 0
        %984 = vmatprep.subr.bf16.mxu0 0
        %985 = vmatpush1.bf16.msra.mxu0 0
        %986 = vmatprep.mubr.bf16.mxu0 0
        %987 = vmatmul.mubr.bf16.gmra.mrb[0].mxu0 %v782
        %v988 = vpop.f32.mrb[0].mxu0
        %v989 = vadd.f32 0.0, %v988
        %v990 = vpop.f32.mrb[0].mxu0
        %v991 = vpop.f32.mrb[0].mxu0
        %v992 = vadd.f32 0.0, %v991
        %v993 = vpop.f32.mrb[0].mxu0
        %994 = vdwg.mxu0
        %v995 = vlaneseq
        %v996 = vshrl.u32 %v995, 7
        %v997 = vsub.s32 0, %v996
        %v998 = vrot.slane %v773, %v997
        %v999 = vadd.f32 %v946, %v998
        %v1000 = vadd.f32 %v950, %v998
        %v1001 = vlaneseq
        %v1002 = vshrl.u32 %v1001, 7
        %v1003 = vsub.s32 1, %v1002
        %v1004 = vrot.slane %v773, %v1003
        %v1005 = vadd.f32 %v948, %v1004
        %v1006 = vadd.f32 %v952, %v1004
        %v1007 = vlaneseq
        %v1008 = vshrl.u32 %v1007, 7
        %v1009 = vsub.s32 2, %v1008
        %v1010 = vrot.slane %v773, %v1009
        %v1011 = vadd.f32 %v989, %v1010
        %v1012 = vadd.f32 %v992, %v1010
        %1014 = vrot.lane.b32.xlu0 %v999, 96
        %v1015 = vpop.permute.xlu0 %1014
        %1017 = vrot.lane.b32.xlu0 %v999, 64
        %v1018 = vpop.permute.xlu0 %1017
        %1020 = vrot.lane.b32.xlu0 %v999, 32
        %v1021 = vpop.permute.xlu0 %1020
        %v1023 = vcombine.low %v999, %v1018
        %v1024 = vcombine.high %v999, %v1018
        %v1026 = vunpack.c.l.s4 1983009808
        %v1027 = vunpack.c.0.s8 %v1026
        %v1028 = vlaneseq
        %v1029 = vshrl.u32 %v1028, 7
        %v1030 = vsub.s32 %v1027, %v1029
        %v1031 = vrot.slane %v1023, %v1030
        %v1033 = vunpack.c.l.s4 1983009808
        %v1034 = vunpack.c.0.s8 %v1033
        %v1035 = vlaneseq
        %v1036 = vshrl.u32 %v1035, 7
        %v1037 = vsub.s32 %v1034, %v1036
        %v1038 = vrot.slane %v1024, %v1037
        %v1039 = vcombine.low %v1015, %v1021
        %v1040 = vcombine.high %v1015, %v1021
        %v1042 = vunpack.c.l.s4 1983009808
        %v1043 = vunpack.c.0.s8 %v1042
        %v1044 = vlaneseq
        %v1045 = vshrl.u32 %v1044, 7
        %v1046 = vsub.s32 %v1043, %v1045
        %v1047 = vrot.slane %v1039, %v1046
        %v1049 = vunpack.c.l.s4 1983009808
        %v1050 = vunpack.c.0.s8 %v1049
        %v1051 = vlaneseq
        %v1052 = vshrl.u32 %v1051, 7
        %v1053 = vsub.s32 %v1050, %v1052
        %v1054 = vrot.slane %v1040, %v1053
        %v1055 = vcombine.low %v1031, %v1047
        %v1056 = vcombine.high %v1031, %v1047
        %v1058 = vunpack.c.l.s4 1934713408
        %v1059 = vunpack.c.0.s8 %v1058
        %v1060 = vlaneseq
        %v1061 = vshrl.u32 %v1060, 7
        %v1062 = vsub.s32 %v1059, %v1061
        %v1063 = vrot.slane %v1055, %v1062
        %v1065 = vunpack.c.l.s4 1934713408
        %v1066 = vunpack.c.0.s8 %v1065
        %v1067 = vlaneseq
        %v1068 = vshrl.u32 %v1067, 7
        %v1069 = vsub.s32 %v1066, %v1068
        %v1070 = vrot.slane %v1056, %v1069
        %v1071 = vcombine.low %v1038, %v1054
        %v1072 = vcombine.high %v1038, %v1054
        %v1074 = vunpack.c.l.s4 1934713408
        %v1075 = vunpack.c.0.s8 %v1074
        %v1076 = vlaneseq
        %v1077 = vshrl.u32 %v1076, 7
        %v1078 = vsub.s32 %v1075, %v1077
        %v1079 = vrot.slane %v1071, %v1078
        %v1081 = vunpack.c.l.s4 1934713408
        %v1082 = vunpack.c.0.s8 %v1081
        %v1083 = vlaneseq
        %v1084 = vshrl.u32 %v1083, 7
        %v1085 = vsub.s32 %v1082, %v1084
        %v1086 = vrot.slane %v1072, %v1085
        %v1087 = vcombine.high %v1063, 0.0
        %v1088 = vcombine.high %v1070, 0.0
        %v1089 = vcombine.high %v1079, 0.0
        %v1090 = vcombine.high %v1086, 0.0
        %v1091 = vcombine.low %v1063, %v1070
        %v1093 = vunpack.c.l.s4 1983009808
        %v1094 = vunpack.c.0.s8 %v1093
        %v1095 = vlaneseq
        %v1096 = vshrl.u32 %v1095, 7
        %v1097 = vsub.s32 %v1094, %v1096
        %v1098 = vrot.slane %v1091, %v1097
        %v1099 = vcombine.low %v1087, %v1088
        %v1101 = vunpack.c.l.s4 1983009808
        %v1102 = vunpack.c.0.s8 %v1101
        %v1103 = vlaneseq
        %v1104 = vshrl.u32 %v1103, 7
        %v1105 = vsub.s32 %v1102, %v1104
        %v1106 = vrot.slane %v1099, %v1105
        %v1107 = vcombine.low %v1079, %v1086
        %v1109 = vunpack.c.l.s4 1983009808
        %v1110 = vunpack.c.0.s8 %v1109
        %v1111 = vlaneseq
        %v1112 = vshrl.u32 %v1111, 7
        %v1113 = vsub.s32 %v1110, %v1112
        %v1114 = vrot.slane %v1107, %v1113
        %v1115 = vcombine.low %v1089, %v1090
        %v1117 = vunpack.c.l.s4 1983009808
        %v1118 = vunpack.c.0.s8 %v1117
        %v1119 = vlaneseq
        %v1120 = vshrl.u32 %v1119, 7
        %v1121 = vsub.s32 %v1118, %v1120
        %v1122 = vrot.slane %v1115, %v1121
        %v1123 = vcombine.low %v1098, %v1106
        %v1124 = vcombine.high %v1098, %v1106
        %v1126 = vunpack.c.l.s4 1934713408
        %v1127 = vunpack.c.0.s8 %v1126
        %v1128 = vlaneseq
        %v1129 = vshrl.u32 %v1128, 7
        %v1130 = vsub.s32 %v1127, %v1129
        %v1131 = vrot.slane %v1123, %v1130
        %v1133 = vunpack.c.l.s4 1934713408
        %v1134 = vunpack.c.0.s8 %v1133
        %v1135 = vlaneseq
        %v1136 = vshrl.u32 %v1135, 7
        %v1137 = vsub.s32 %v1134, %v1136
        %v1138 = vrot.slane %v1124, %v1137
        %v1139 = vcombine.low %v1114, %v1122
        %v1140 = vcombine.high %v1114, %v1122
        %v1142 = vunpack.c.l.s4 1934713408
        %v1143 = vunpack.c.0.s8 %v1142
        %v1144 = vlaneseq
        %v1145 = vshrl.u32 %v1144, 7
        %v1146 = vsub.s32 %v1143, %v1145
        %v1147 = vrot.slane %v1139, %v1146
        %v1149 = vunpack.c.l.s4 1934713408
        %v1150 = vunpack.c.0.s8 %v1149
        %v1151 = vlaneseq
        %v1152 = vshrl.u32 %v1151, 7
        %v1153 = vsub.s32 %v1150, %v1152
        %v1154 = vrot.slane %v1140, %v1153
        %v1155 = vcombine.low %v1131, %v1147
        %v1156 = vcombine.high %v1131, %v1147
        %v1157 = vcombine.low %v1138, %v1154
        %v1158 = vcombine.high %v1138, %v1154
        %v1159 = vpack.c.bf16 %v1155, %v1155
        %v1160 = vpack.c.bf16 %v1156, %v1156
        %v1161 = vpack.c.bf16 %v1157, %v1157
        %v1162 = vpack.c.bf16 %v1158, %v1158
        %1164 = vrot.lane.b32.xlu0 %v1005, 96
        %v1165 = vpop.permute.xlu0 %1164
        %1167 = vrot.lane.b32.xlu0 %v1005, 64
        %v1168 = vpop.permute.xlu0 %1167
        %1170 = vrot.lane.b32.xlu0 %v1005, 32
        %v1171 = vpop.permute.xlu0 %1170
        %v1173 = vcombine.low %v1005, %v1168
        %v1174 = vcombine.high %v1005, %v1168
        %v1176 = vunpack.c.l.s4 1983009808
        %v1177 = vunpack.c.0.s8 %v1176
        %v1178 = vlaneseq
        %v1179 = vshrl.u32 %v1178, 7
        %v1180 = vsub.s32 %v1177, %v1179
        %v1181 = vrot.slane %v1173, %v1180
        %v1183 = vunpack.c.l.s4 1983009808
        %v1184 = vunpack.c.0.s8 %v1183
        %v1185 = vlaneseq
        %v1186 = vshrl.u32 %v1185, 7
        %v1187 = vsub.s32 %v1184, %v1186
        %v1188 = vrot.slane %v1174, %v1187
        %v1189 = vcombine.low %v1165, %v1171
        %v1190 = vcombine.high %v1165, %v1171
        %v1192 = vunpack.c.l.s4 1983009808
        %v1193 = vunpack.c.0.s8 %v1192
        %v1194 = vlaneseq
        %v1195 = vshrl.u32 %v1194, 7
        %v1196 = vsub.s32 %v1193, %v1195
        %v1197 = vrot.slane %v1189, %v1196
        %v1199 = vunpack.c.l.s4 1983009808
        %v1200 = vunpack.c.0.s8 %v1199
        %v1201 = vlaneseq
        %v1202 = vshrl.u32 %v1201, 7
        %v1203 = vsub.s32 %v1200, %v1202
        %v1204 = vrot.slane %v1190, %v1203
        %v1205 = vcombine.low %v1181, %v1197
        %v1206 = vcombine.high %v1181, %v1197
        %v1208 = vunpack.c.l.s4 1934713408
        %v1209 = vunpack.c.0.s8 %v1208
        %v1210 = vlaneseq
        %v1211 = vshrl.u32 %v1210, 7
        %v1212 = vsub.s32 %v1209, %v1211
        %v1213 = vrot.slane %v1205, %v1212
        %v1215 = vunpack.c.l.s4 1934713408
        %v1216 = vunpack.c.0.s8 %v1215
        %v1217 = vlaneseq
        %v1218 = vshrl.u32 %v1217, 7
        %v1219 = vsub.s32 %v1216, %v1218
        %v1220 = vrot.slane %v1206, %v1219
        %v1221 = vcombine.low %v1188, %v1204
        %v1222 = vcombine.high %v1188, %v1204
        %v1224 = vunpack.c.l.s4 1934713408
        %v1225 = vunpack.c.0.s8 %v1224
        %v1226 = vlaneseq
        %v1227 = vshrl.u32 %v1226, 7
        %v1228 = vsub.s32 %v1225, %v1227
        %v1229 = vrot.slane %v1221, %v1228
        %v1231 = vunpack.c.l.s4 1934713408
        %v1232 = vunpack.c.0.s8 %v1231
        %v1233 = vlaneseq
        %v1234 = vshrl.u32 %v1233, 7
        %v1235 = vsub.s32 %v1232, %v1234
        %v1236 = vrot.slane %v1222, %v1235
        %v1237 = vcombine.high %v1213, 0.0
        %v1238 = vcombine.high %v1220, 0.0
        %v1239 = vcombine.high %v1229, 0.0
        %v1240 = vcombine.high %v1236, 0.0
        %v1241 = vcombine.low %v1213, %v1220
        %v1243 = vunpack.c.l.s4 1983009808
        %v1244 = vunpack.c.0.s8 %v1243
        %v1245 = vlaneseq
        %v1246 = vshrl.u32 %v1245, 7
        %v1247 = vsub.s32 %v1244, %v1246
        %v1248 = vrot.slane %v1241, %v1247
        %v1249 = vcombine.low %v1237, %v1238
        %v1251 = vunpack.c.l.s4 1983009808
        %v1252 = vunpack.c.0.s8 %v1251
        %v1253 = vlaneseq
        %v1254 = vshrl.u32 %v1253, 7
        %v1255 = vsub.s32 %v1252, %v1254
        %v1256 = vrot.slane %v1249, %v1255
        %v1257 = vcombine.low %v1229, %v1236
        %v1259 = vunpack.c.l.s4 1983009808
        %v1260 = vunpack.c.0.s8 %v1259
        %v1261 = vlaneseq
        %v1262 = vshrl.u32 %v1261, 7
        %v1263 = vsub.s32 %v1260, %v1262
        %v1264 = vrot.slane %v1257, %v1263
        %v1265 = vcombine.low %v1239, %v1240
        %v1267 = vunpack.c.l.s4 1983009808
        %v1268 = vunpack.c.0.s8 %v1267
        %v1269 = vlaneseq
        %v1270 = vshrl.u32 %v1269, 7
        %v1271 = vsub.s32 %v1268, %v1270
        %v1272 = vrot.slane %v1265, %v1271
        %v1273 = vcombine.low %v1248, %v1256
        %v1274 = vcombine.high %v1248, %v1256
        %v1276 = vunpack.c.l.s4 1934713408
        %v1277 = vunpack.c.0.s8 %v1276
        %v1278 = vlaneseq
        %v1279 = vshrl.u32 %v1278, 7
        %v1280 = vsub.s32 %v1277, %v1279
        %v1281 = vrot.slane %v1273, %v1280
        %v1283 = vunpack.c.l.s4 1934713408
        %v1284 = vunpack.c.0.s8 %v1283
        %v1285 = vlaneseq
        %v1286 = vshrl.u32 %v1285, 7
        %v1287 = vsub.s32 %v1284, %v1286
        %v1288 = vrot.slane %v1274, %v1287
        %v1289 = vcombine.low %v1264, %v1272
        %v1290 = vcombine.high %v1264, %v1272
        %v1292 = vunpack.c.l.s4 1934713408
        %v1293 = vunpack.c.0.s8 %v1292
        %v1294 = vlaneseq
        %v1295 = vshrl.u32 %v1294, 7
        %v1296 = vsub.s32 %v1293, %v1295
        %v1297 = vrot.slane %v1289, %v1296
        %v1299 = vunpack.c.l.s4 1934713408
        %v1300 = vunpack.c.0.s8 %v1299
        %v1301 = vlaneseq
        %v1302 = vshrl.u32 %v1301, 7
        %v1303 = vsub.s32 %v1300, %v1302
        %v1304 = vrot.slane %v1290, %v1303
        %v1305 = vcombine.low %v1281, %v1297
        %v1306 = vcombine.high %v1281, %v1297
        %v1307 = vcombine.low %v1288, %v1304
        %v1308 = vcombine.high %v1288, %v1304
        %v1309 = vpack.c.bf16 %v1305, %v1305
        %v1310 = vpack.c.bf16 %v1306, %v1306
        %v1311 = vpack.c.bf16 %v1307, %v1307
        %v1312 = vpack.c.bf16 %v1308, %v1308
        %1314 = vrot.lane.b32.xlu0 %v1011, 96
        %v1315 = vpop.permute.xlu0 %1314
        %1317 = vrot.lane.b32.xlu0 %v1011, 64
        %v1318 = vpop.permute.xlu0 %1317
        %1320 = vrot.lane.b32.xlu0 %v1011, 32
        %v1321 = vpop.permute.xlu0 %1320
        %v1323 = vcombine.low %v1011, %v1318
        %v1324 = vcombine.high %v1011, %v1318
        %v1326 = vunpack.c.l.s4 1983009808
        %v1327 = vunpack.c.0.s8 %v1326
        %v1328 = vlaneseq
        %v1329 = vshrl.u32 %v1328, 7
        %v1330 = vsub.s32 %v1327, %v1329
        %v1331 = vrot.slane %v1323, %v1330
        %v1333 = vunpack.c.l.s4 1983009808
        %v1334 = vunpack.c.0.s8 %v1333
        %v1335 = vlaneseq
        %v1336 = vshrl.u32 %v1335, 7
        %v1337 = vsub.s32 %v1334, %v1336
        %v1338 = vrot.slane %v1324, %v1337
        %v1339 = vcombine.low %v1315, %v1321
        %v1340 = vcombine.high %v1315, %v1321
        %v1342 = vunpack.c.l.s4 1983009808
        %v1343 = vunpack.c.0.s8 %v1342
        %v1344 = vlaneseq
        %v1345 = vshrl.u32 %v1344, 7
        %v1346 = vsub.s32 %v1343, %v1345
        %v1347 = vrot.slane %v1339, %v1346
        %v1349 = vunpack.c.l.s4 1983009808
        %v1350 = vunpack.c.0.s8 %v1349
        %v1351 = vlaneseq
        %v1352 = vshrl.u32 %v1351, 7
        %v1353 = vsub.s32 %v1350, %v1352
        %v1354 = vrot.slane %v1340, %v1353
        %v1355 = vcombine.low %v1331, %v1347
        %v1356 = vcombine.high %v1331, %v1347
        %v1358 = vunpack.c.l.s4 1934713408
        %v1359 = vunpack.c.0.s8 %v1358
        %v1360 = vlaneseq
        %v1361 = vshrl.u32 %v1360, 7
        %v1362 = vsub.s32 %v1359, %v1361
        %v1363 = vrot.slane %v1355, %v1362
        %v1365 = vunpack.c.l.s4 1934713408
        %v1366 = vunpack.c.0.s8 %v1365
        %v1367 = vlaneseq
        %v1368 = vshrl.u32 %v1367, 7
        %v1369 = vsub.s32 %v1366, %v1368
        %v1370 = vrot.slane %v1356, %v1369
        %v1371 = vcombine.low %v1338, %v1354
        %v1372 = vcombine.high %v1338, %v1354
        %v1374 = vunpack.c.l.s4 1934713408
        %v1375 = vunpack.c.0.s8 %v1374
        %v1376 = vlaneseq
        %v1377 = vshrl.u32 %v1376, 7
        %v1378 = vsub.s32 %v1375, %v1377
        %v1379 = vrot.slane %v1371, %v1378
        %v1381 = vunpack.c.l.s4 1934713408
        %v1382 = vunpack.c.0.s8 %v1381
        %v1383 = vlaneseq
        %v1384 = vshrl.u32 %v1383, 7
        %v1385 = vsub.s32 %v1382, %v1384
        %v1386 = vrot.slane %v1372, %v1385
        %v1387 = vcombine.high %v1363, 0.0
        %v1388 = vcombine.high %v1370, 0.0
        %v1389 = vcombine.high %v1379, 0.0
        %v1390 = vcombine.high %v1386, 0.0
        %v1391 = vcombine.low %v1363, %v1370
        %v1393 = vunpack.c.l.s4 1983009808
        %v1394 = vunpack.c.0.s8 %v1393
        %v1395 = vlaneseq
        %v1396 = vshrl.u32 %v1395, 7
        %v1397 = vsub.s32 %v1394, %v1396
        %v1398 = vrot.slane %v1391, %v1397
        %v1399 = vcombine.low %v1387, %v1388
        %v1401 = vunpack.c.l.s4 1983009808
        %v1402 = vunpack.c.0.s8 %v1401
        %v1403 = vlaneseq
        %v1404 = vshrl.u32 %v1403, 7
        %v1405 = vsub.s32 %v1402, %v1404
        %v1406 = vrot.slane %v1399, %v1405
        %v1407 = vcombine.low %v1379, %v1386
        %v1409 = vunpack.c.l.s4 1983009808
        %v1410 = vunpack.c.0.s8 %v1409
        %v1411 = vlaneseq
        %v1412 = vshrl.u32 %v1411, 7
        %v1413 = vsub.s32 %v1410, %v1412
        %v1414 = vrot.slane %v1407, %v1413
        %v1415 = vcombine.low %v1389, %v1390
        %v1417 = vunpack.c.l.s4 1983009808
        %v1418 = vunpack.c.0.s8 %v1417
        %v1419 = vlaneseq
        %v1420 = vshrl.u32 %v1419, 7
        %v1421 = vsub.s32 %v1418, %v1420
        %v1422 = vrot.slane %v1415, %v1421
        %v1423 = vcombine.low %v1398, %v1406
        %v1424 = vcombine.high %v1398, %v1406
        %v1426 = vunpack.c.l.s4 1934713408
        %v1427 = vunpack.c.0.s8 %v1426
        %v1428 = vlaneseq
        %v1429 = vshrl.u32 %v1428, 7
        %v1430 = vsub.s32 %v1427, %v1429
        %v1431 = vrot.slane %v1423, %v1430
        %v1433 = vunpack.c.l.s4 1934713408
        %v1434 = vunpack.c.0.s8 %v1433
        %v1435 = vlaneseq
        %v1436 = vshrl.u32 %v1435, 7
        %v1437 = vsub.s32 %v1434, %v1436
        %v1438 = vrot.slane %v1424, %v1437
        %v1439 = vcombine.low %v1414, %v1422
        %v1440 = vcombine.high %v1414, %v1422
        %v1442 = vunpack.c.l.s4 1934713408
        %v1443 = vunpack.c.0.s8 %v1442
        %v1444 = vlaneseq
        %v1445 = vshrl.u32 %v1444, 7
        %v1446 = vsub.s32 %v1443, %v1445
        %v1447 = vrot.slane %v1439, %v1446
        %v1449 = vunpack.c.l.s4 1934713408
        %v1450 = vunpack.c.0.s8 %v1449
        %v1451 = vlaneseq
        %v1452 = vshrl.u32 %v1451, 7
        %v1453 = vsub.s32 %v1450, %v1452
        %v1454 = vrot.slane %v1440, %v1453
        %v1455 = vcombine.low %v1431, %v1447
        %v1456 = vcombine.high %v1431, %v1447
        %v1457 = vcombine.low %v1438, %v1454
        %v1458 = vcombine.high %v1438, %v1454
        %v1459 = vpack.c.bf16 %v1455, %v1455
        %v1460 = vpack.c.bf16 %v1456, %v1456
        %v1461 = vpack.c.bf16 %v1457, %v1457
        %v1462 = vpack.c.bf16 %v1458, %v1458
        %vm1463 = vcmask 261120
        %v1465 = vsel %vm1463, %v1159, 0
        %v1468 = vsel %vm1463, %v1309, 0
        %1470 = vmatprep.subr.bf16.mxu0 0
        %1471 = vmatpush1.bf16.xpose.msra.mxu0 %v1468
        %1472 = vmatprep.subr.bf16.mxu0 0
        %1473 = vmatpush1.bf16.xpose.msra.mxu0 0
        %1474 = vmatprep.subr.bf16.mxu0 0
        %1475 = vmatpush1.bf16.xpose.msra.mxu0 0
        %1476 = vmatprep.subr.bf16.mxu0 0
        %1477 = vmatpush1.bf16.xpose.msra.mxu0 0
        %1478 = vmatprep.subr.bf16.mxu0 0
        %1479 = vmatpush1.bf16.xpose.msra.mxu0 0
        %1480 = vmatprep.subr.bf16.mxu0 0
        %1481 = vmatpush1.bf16.xpose.msra.mxu0 0
        %1482 = vmatprep.subr.bf16.mxu0 0
        %1483 = vmatpush1.bf16.xpose.msra.mxu0 0
        %1484 = vmatprep.subr.bf16.mxu0 0
        %1485 = vmatpush1.bf16.xpose.msra.mxu0 0
        %1486 = vmatprep.subr.bf16.mxu0 0
        %1487 = vmatpush1.bf16.xpose.msra.mxu0 0
        %1488 = vmatprep.subr.bf16.mxu0 0
        %1489 = vmatpush1.bf16.xpose.msra.mxu0 0
        %1490 = vmatprep.subr.bf16.mxu0 0
        %1491 = vmatpush1.bf16.xpose.msra.mxu0 0
        %1492 = vmatprep.subr.bf16.mxu0 0
        %1493 = vmatpush1.bf16.xpose.msra.mxu0 0
        %1494 = vmatprep.subr.bf16.mxu0 0
        %1495 = vmatpush1.bf16.xpose.msra.mxu0 0
        %1496 = vmatprep.subr.bf16.mxu0 0
        %1497 = vmatpush1.bf16.xpose.msra.mxu0 0
        %1498 = vmatprep.subr.bf16.mxu0 0
        %1499 = vmatpush1.bf16.xpose.msra.mxu0 0
        %1500 = vmatprep.subr.bf16.mxu0 0
        %1501 = vmatpush1.bf16.xpose.msra.mxu0 0
        %1502 = vmatprep.mubr.bf16.mxu0 0
        %1503 = vmatmul.mubr.bf16.gmra.mrb[0].mxu0 %v1465
        %v1504 = vpop.f32.mrb[0].mxu0
        %v1505 = vadd.f32 0.0, %v1504
        %v1506 = vpop.f32.mrb[0].mxu0
        %v1507 = vpop.f32.mrb[0].mxu0
        %v1508 = vpop.f32.mrb[0].mxu0
        %1509 = vdwg.mxu0
        %v1511 = vsel %vm1463, %v1160, 0
        %v1514 = vsel %vm1463, %v1310, 0
        %1516 = vmatprep.subr.bf16.mxu0 0
        %1517 = vmatpush1.bf16.xpose.msra.mxu0 %v1514
        %1518 = vmatprep.subr.bf16.mxu0 0
        %1519 = vmatpush1.bf16.xpose.msra.mxu0 0
        %1520 = vmatprep.subr.bf16.mxu0 0
        %1521 = vmatpush1.bf16.xpose.msra.mxu0 0
        %1522 = vmatprep.subr.bf16.mxu0 0
        %1523 = vmatpush1.bf16.xpose.msra.mxu0 0
        %1524 = vmatprep.subr.bf16.mxu0 0
        %1525 = vmatpush1.bf16.xpose.msra.mxu0 0
        %1526 = vmatprep.subr.bf16.mxu0 0
        %1527 = vmatpush1.bf16.xpose.msra.mxu0 0
        %1528 = vmatprep.subr.bf16.mxu0 0
        %1529 = vmatpush1.bf16.xpose.msra.mxu0 0
        %1530 = vmatprep.subr.bf16.mxu0 0
        %1531 = vmatpush1.bf16.xpose.msra.mxu0 0
        %1532 = vmatprep.subr.bf16.mxu0 0
        %1533 = vmatpush1.bf16.xpose.msra.mxu0 0
        %1534 = vmatprep.subr.bf16.mxu0 0
        %1535 = vmatpush1.bf16.xpose.msra.mxu0 0
        %1536 = vmatprep.subr.bf16.mxu0 0
        %1537 = vmatpush1.bf16.xpose.msra.mxu0 0
        %1538 = vmatprep.subr.bf16.mxu0 0
        %1539 = vmatpush1.bf16.xpose.msra.mxu0 0
        %1540 = vmatprep.subr.bf16.mxu0 0
        %1541 = vmatpush1.bf16.xpose.msra.mxu0 0
        %1542 = vmatprep.subr.bf16.mxu0 0
        %1543 = vmatpush1.bf16.xpose.msra.mxu0 0
        %1544 = vmatprep.subr.bf16.mxu0 0
        %1545 = vmatpush1.bf16.xpose.msra.mxu0 0
        %1546 = vmatprep.subr.bf16.mxu0 0
        %1547 = vmatpush1.bf16.xpose.msra.mxu0 0
        %1548 = vmatprep.mubr.bf16.mxu0 0
        %1549 = vmatmul.mubr.bf16.gmra.mrb[0].mxu0 %v1511
        %v1550 = vpop.f32.mrb[0].mxu0
        %v1551 = vadd.f32 0.0, %v1550
        %v1552 = vpop.f32.mrb[0].mxu0
        %v1553 = vpop.f32.mrb[0].mxu0
        %v1554 = vpop.f32.mrb[0].mxu0
        %1555 = vdwg.mxu0
        %v1557 = vsel %vm1463, %v1161, 0
        %v1560 = vsel %vm1463, %v1311, 0
        %1562 = vmatprep.subr.bf16.mxu0 0
        %1563 = vmatpush1.bf16.xpose.msra.mxu0 %v1560
        %1564 = vmatprep.subr.bf16.mxu0 0
        %1565 = vmatpush1.bf16.xpose.msra.mxu0 0
        %1566 = vmatprep.subr.bf16.mxu0 0
        %1567 = vmatpush1.bf16.xpose.msra.mxu0 0
        %1568 = vmatprep.subr.bf16.mxu0 0
        %1569 = vmatpush1.bf16.xpose.msra.mxu0 0
        %1570 = vmatprep.subr.bf16.mxu0 0
        %1571 = vmatpush1.bf16.xpose.msra.mxu0 0
        %1572 = vmatprep.subr.bf16.mxu0 0
        %1573 = vmatpush1.bf16.xpose.msra.mxu0 0
        %1574 = vmatprep.subr.bf16.mxu0 0
        %1575 = vmatpush1.bf16.xpose.msra.mxu0 0
        %1576 = vmatprep.subr.bf16.mxu0 0
        %1577 = vmatpush1.bf16.xpose.msra.mxu0 0
        %1578 = vmatprep.subr.bf16.mxu0 0
        %1579 = vmatpush1.bf16.xpose.msra.mxu0 0
        %1580 = vmatprep.subr.bf16.mxu0 0
        %1581 = vmatpush1.bf16.xpose.msra.mxu0 0
        %1582 = vmatprep.subr.bf16.mxu0 0
        %1583 = vmatpush1.bf16.xpose.msra.mxu0 0
        %1584 = vmatprep.subr.bf16.mxu0 0
        %1585 = vmatpush1.bf16.xpose.msra.mxu0 0
        %1586 = vmatprep.subr.bf16.mxu0 0
        %1587 = vmatpush1.bf16.xpose.msra.mxu0 0
        %1588 = vmatprep.subr.bf16.mxu0 0
        %1589 = vmatpush1.bf16.xpose.msra.mxu0 0
        %1590 = vmatprep.subr.bf16.mxu0 0
        %1591 = vmatpush1.bf16.xpose.msra.mxu0 0
        %1592 = vmatprep.subr.bf16.mxu0 0
        %1593 = vmatpush1.bf16.xpose.msra.mxu0 0
        %1594 = vmatprep.mubr.bf16.mxu0 0
        %1595 = vmatmul.mubr.bf16.gmra.mrb[0].mxu0 %v1557
        %v1596 = vpop.f32.mrb[0].mxu0
        %v1597 = vadd.f32 0.0, %v1596
        %v1598 = vpop.f32.mrb[0].mxu0
        %v1599 = vpop.f32.mrb[0].mxu0
        %v1600 = vpop.f32.mrb[0].mxu0
        %1601 = vdwg.mxu0
        %v1603 = vsel %vm1463, %v1162, 0
        %v1606 = vsel %vm1463, %v1312, 0
        %1608 = vmatprep.subr.bf16.mxu0 0
        %1609 = vmatpush1.bf16.xpose.msra.mxu0 %v1606
        %1610 = vmatprep.subr.bf16.mxu0 0
        %1611 = vmatpush1.bf16.xpose.msra.mxu0 0
        %1612 = vmatprep.subr.bf16.mxu0 0
        %1613 = vmatpush1.bf16.xpose.msra.mxu0 0
        %1614 = vmatprep.subr.bf16.mxu0 0
        %1615 = vmatpush1.bf16.xpose.msra.mxu0 0
        %1616 = vmatprep.subr.bf16.mxu0 0
        %1617 = vmatpush1.bf16.xpose.msra.mxu0 0
        %1618 = vmatprep.subr.bf16.mxu0 0
        %1619 = vmatpush1.bf16.xpose.msra.mxu0 0
        %1620 = vmatprep.subr.bf16.mxu0 0
        %1621 = vmatpush1.bf16.xpose.msra.mxu0 0
        %1622 = vmatprep.subr.bf16.mxu0 0
        %1623 = vmatpush1.bf16.xpose.msra.mxu0 0
        %1624 = vmatprep.subr.bf16.mxu0 0
        %1625 = vmatpush1.bf16.xpose.msra.mxu0 0
        %1626 = vmatprep.subr.bf16.mxu0 0
        %1627 = vmatpush1.bf16.xpose.msra.mxu0 0
        %1628 = vmatprep.subr.bf16.mxu0 0
        %1629 = vmatpush1.bf16.xpose.msra.mxu0 0
        %1630 = vmatprep.subr.bf16.mxu0 0
        %1631 = vmatpush1.bf16.xpose.msra.mxu0 0
        %1632 = vmatprep.subr.bf16.mxu0 0
        %1633 = vmatpush1.bf16.xpose.msra.mxu0 0
        %1634 = vmatprep.subr.bf16.mxu0 0
        %1635 = vmatpush1.bf16.xpose.msra.mxu0 0
        %1636 = vmatprep.subr.bf16.mxu0 0
        %1637 = vmatpush1.bf16.xpose.msra.mxu0 0
        %1638 = vmatprep.subr.bf16.mxu0 0
        %1639 = vmatpush1.bf16.xpose.msra.mxu0 0
        %1640 = vmatprep.mubr.bf16.mxu0 0
        %1641 = vmatmul.mubr.bf16.gmra.mrb[0].mxu0 %v1603
        %v1642 = vpop.f32.mrb[0].mxu0
        %v1643 = vadd.f32 0.0, %v1642
        %v1644 = vpop.f32.mrb[0].mxu0
        %v1645 = vpop.f32.mrb[0].mxu0
        %v1646 = vpop.f32.mrb[0].mxu0
        %1647 = vdwg.mxu0
        %vm1648 = vcmask 64512
        %v1649 = vsel %vm1648, %v1505, -inf
        %1650 = vmax.xlane.f32.xlu0 %v1649
        %v1651 = vpop.xlane.xlu0 %1650
        %v1652 = vsel %vm1648, %v1551, -inf
        %1653 = vmax.xlane.f32.xlu0 %v1652
        %v1654 = vpop.xlane.xlu0 %1653
        %v1655 = vsel %vm1648, %v1597, -inf
        %1656 = vmax.xlane.f32.xlu0 %v1655
        %v1657 = vpop.xlane.xlu0 %1656
        %v1658 = vsel %vm1648, %v1643, -inf
        %1659 = vmax.xlane.f32.xlu0 %v1658
        %v1660 = vpop.xlane.xlu0 %1659
        %v1661 = vsub.f32 %v1505, %v1651
        %v1662 = vsub.f32 %v1551, %v1654
        %v1663 = vsub.f32 %v1597, %v1657
        %v1664 = vsub.f32 %v1643, %v1660
        %v1665 = vmul.f32 %v1661, 1.442695
        %v1666 = vpow.pop %v1665
        %v1667 = vmul.f32 %v1662, 1.442695
        %v1668 = vpow.pop %v1667
        %v1669 = vmul.f32 %v1663, 1.442695
        %v1670 = vpow.pop %v1669
        %v1671 = vmul.f32 %v1664, 1.442695
        %v1672 = vpow.pop %v1671
        %v1673 = vsel %vm1648, %v1666, 0.0
        %1674 = vadd.xlane.f32.xlu0 %v1673
        %v1675 = vpop.xlane.xlu0 %1674
        %v1676 = vsel %vm1648, %v1668, 0.0
        %1677 = vadd.xlane.f32.xlu0 %v1676
        %v1678 = vpop.xlane.xlu0 %1677
        %v1679 = vsel %vm1648, %v1670, 0.0
        %1680 = vadd.xlane.f32.xlu0 %v1679
        %v1681 = vpop.xlane.xlu0 %1680
        %v1682 = vsel %vm1648, %v1672, 0.0
        %1683 = vadd.xlane.f32.xlu0 %v1682
        %v1684 = vpop.xlane.xlu0 %1683
        %v1685 = vrcp.pop %v1675
        %v1686 = vrcp.pop %v1678
        %v1687 = vrcp.pop %v1681
        %v1688 = vrcp.pop %v1684
        %v1689 = vmul.f32 %v1666, %v1685
        %v1690 = vmul.f32 %v1668, %v1686
        %v1691 = vmul.f32 %v1670, %v1687
        %v1692 = vmul.f32 %v1672, %v1688
        %v1693 = vpack.c.bf16 %v1689, %v1689
        %v1694 = vpack.c.bf16 %v1690, %v1690
        %v1695 = vpack.c.bf16 %v1691, %v1691
        %v1696 = vpack.c.bf16 %v1692, %v1692
        %v1698 = vsel %vm1648, %v1693, 0
        %vm1700 = vcmask 1043456
        %v1702 = vsel %vm1700, %v1459, 0
        %1704 = vmatprep.subr.bf16.mxu0 0
        %1705 = vmatpush1.bf16.msra.mxu0 %v1702
        %1706 = vmatprep.subr.bf16.mxu0 0
        %1707 = vmatpush1.bf16.msra.mxu0 0
        %1708 = vmatprep.subr.bf16.mxu0 0
        %1709 = vmatpush1.bf16.msra.mxu0 0
        %1710 = vmatprep.subr.bf16.mxu0 0
        %1711 = vmatpush1.bf16.msra.mxu0 0
        %1712 = vmatprep.subr.bf16.mxu0 0
        %1713 = vmatpush1.bf16.msra.mxu0 0
        %1714 = vmatprep.subr.bf16.mxu0 0
        %1715 = vmatpush1.bf16.msra.mxu0 0
        %1716 = vmatprep.subr.bf16.mxu0 0
        %1717 = vmatpush1.bf16.msra.mxu0 0
        %1718 = vmatprep.subr.bf16.mxu0 0
        %1719 = vmatpush1.bf16.msra.mxu0 0
        %1720 = vmatprep.subr.bf16.mxu0 0
        %1721 = vmatpush1.bf16.msra.mxu0 0
        %1722 = vmatprep.subr.bf16.mxu0 0
        %1723 = vmatpush1.bf16.msra.mxu0 0
        %1724 = vmatprep.subr.bf16.mxu0 0
        %1725 = vmatpush1.bf16.msra.mxu0 0
        %1726 = vmatprep.subr.bf16.mxu0 0
        %1727 = vmatpush1.bf16.msra.mxu0 0
        %1728 = vmatprep.subr.bf16.mxu0 0
        %1729 = vmatpush1.bf16.msra.mxu0 0
        %1730 = vmatprep.subr.bf16.mxu0 0
        %1731 = vmatpush1.bf16.msra.mxu0 0
        %1732 = vmatprep.subr.bf16.mxu0 0
        %1733 = vmatpush1.bf16.msra.mxu0 0
        %1734 = vmatprep.subr.bf16.mxu0 0
        %1735 = vmatpush1.bf16.msra.mxu0 0
        %1736 = vmatprep.mubr.bf16.mxu0 0
        %1737 = vmatmul.mubr.bf16.gmra.mrb[0].mxu0 %v1698
        %v1738 = vpop.f32.mrb[0].mxu0
        %v1739 = vadd.f32 0.0, %v1738
        %v1740 = vpop.f32.mrb[0].mxu0
        %v1741 = vpop.f32.mrb[0].mxu0
        %v1742 = vpop.f32.mrb[0].mxu0
        %1743 = vdwg.mxu0
        %v1745 = vsel %vm1648, %v1694, 0
        %v1748 = vsel %vm1700, %v1460, 0
        %1750 = vmatprep.subr.bf16.mxu0 0
        %1751 = vmatpush1.bf16.msra.mxu0 %v1748
        %1752 = vmatprep.subr.bf16.mxu0 0
        %1753 = vmatpush1.bf16.msra.mxu0 0
        %1754 = vmatprep.subr.bf16.mxu0 0
        %1755 = vmatpush1.bf16.msra.mxu0 0
        %1756 = vmatprep.subr.bf16.mxu0 0
        %1757 = vmatpush1.bf16.msra.mxu0 0
        %1758 = vmatprep.subr.bf16.mxu0 0
        %1759 = vmatpush1.bf16.msra.mxu0 0
        %1760 = vmatprep.subr.bf16.mxu0 0
        %1761 = vmatpush1.bf16.msra.mxu0 0
        %1762 = vmatprep.subr.bf16.mxu0 0
        %1763 = vmatpush1.bf16.msra.mxu0 0
        %1764 = vmatprep.subr.bf16.mxu0 0
        %1765 = vmatpush1.bf16.msra.mxu0 0
        %1766 = vmatprep.subr.bf16.mxu0 0
        %1767 = vmatpush1.bf16.msra.mxu0 0
        %1768 = vmatprep.subr.bf16.mxu0 0
        %1769 = vmatpush1.bf16.msra.mxu0 0
        %1770 = vmatprep.subr.bf16.mxu0 0
        %1771 = vmatpush1.bf16.msra.mxu0 0
        %1772 = vmatprep.subr.bf16.mxu0 0
        %1773 = vmatpush1.bf16.msra.mxu0 0
        %1774 = vmatprep.subr.bf16.mxu0 0
        %1775 = vmatpush1.bf16.msra.mxu0 0
        %1776 = vmatprep.subr.bf16.mxu0 0
        %1777 = vmatpush1.bf16.msra.mxu0 0
        %1778 = vmatprep.subr.bf16.mxu0 0
        %1779 = vmatpush1.bf16.msra.mxu0 0
        %1780 = vmatprep.subr.bf16.mxu0 0
        %1781 = vmatpush1.bf16.msra.mxu0 0
        %1782 = vmatprep.mubr.bf16.mxu0 0
        %1783 = vmatmul.mubr.bf16.gmra.mrb[0].mxu0 %v1745
        %v1784 = vpop.f32.mrb[0].mxu0
        %v1785 = vadd.f32 0.0, %v1784
        %v1786 = vpop.f32.mrb[0].mxu0
        %v1787 = vpop.f32.mrb[0].mxu0
        %v1788 = vpop.f32.mrb[0].mxu0
        %1789 = vdwg.mxu0
        %v1791 = vsel %vm1648, %v1695, 0
        %v1794 = vsel %vm1700, %v1461, 0
        %1796 = vmatprep.subr.bf16.mxu0 0
        %1797 = vmatpush1.bf16.msra.mxu0 %v1794
        %1798 = vmatprep.subr.bf16.mxu0 0
        %1799 = vmatpush1.bf16.msra.mxu0 0
        %1800 = vmatprep.subr.bf16.mxu0 0
        %1801 = vmatpush1.bf16.msra.mxu0 0
        %1802 = vmatprep.subr.bf16.mxu0 0
        %1803 = vmatpush1.bf16.msra.mxu0 0
        %1804 = vmatprep.subr.bf16.mxu0 0
        %1805 = vmatpush1.bf16.msra.mxu0 0
        %1806 = vmatprep.subr.bf16.mxu0 0
        %1807 = vmatpush1.bf16.msra.mxu0 0
        %1808 = vmatprep.subr.bf16.mxu0 0
        %1809 = vmatpush1.bf16.msra.mxu0 0
        %1810 = vmatprep.subr.bf16.mxu0 0
        %1811 = vmatpush1.bf16.msra.mxu0 0
        %1812 = vmatprep.subr.bf16.mxu0 0
        %1813 = vmatpush1.bf16.msra.mxu0 0
        %1814 = vmatprep.subr.bf16.mxu0 0
        %1815 = vmatpush1.bf16.msra.mxu0 0
        %1816 = vmatprep.subr.bf16.mxu0 0
        %1817 = vmatpush1.bf16.msra.mxu0 0
        %1818 = vmatprep.subr.bf16.mxu0 0
        %1819 = vmatpush1.bf16.msra.mxu0 0
        %1820 = vmatprep.subr.bf16.mxu0 0
        %1821 = vmatpush1.bf16.msra.mxu0 0
        %1822 = vmatprep.subr.bf16.mxu0 0
        %1823 = vmatpush1.bf16.msra.mxu0 0
        %1824 = vmatprep.subr.bf16.mxu0 0
        %1825 = vmatpush1.bf16.msra.mxu0 0
        %1826 = vmatprep.subr.bf16.mxu0 0
        %1827 = vmatpush1.bf16.msra.mxu0 0
        %1828 = vmatprep.mubr.bf16.mxu0 0
        %1829 = vmatmul.mubr.bf16.gmra.mrb[0].mxu0 %v1791
        %v1830 = vpop.f32.mrb[0].mxu0
        %v1831 = vadd.f32 0.0, %v1830
        %v1832 = vpop.f32.mrb[0].mxu0
        %v1833 = vpop.f32.mrb[0].mxu0
        %v1834 = vpop.f32.mrb[0].mxu0
        %1835 = vdwg.mxu0
        %v1837 = vsel %vm1648, %v1696, 0
        %v1840 = vsel %vm1700, %v1462, 0
        %1842 = vmatprep.subr.bf16.mxu0 0
        %1843 = vmatpush1.bf16.msra.mxu0 %v1840
        %1844 = vmatprep.subr.bf16.mxu0 0
        %1845 = vmatpush1.bf16.msra.mxu0 0
        %1846 = vmatprep.subr.bf16.mxu0 0
        %1847 = vmatpush1.bf16.msra.mxu0 0
        %1848 = vmatprep.subr.bf16.mxu0 0
        %1849 = vmatpush1.bf16.msra.mxu0 0
        %1850 = vmatprep.subr.bf16.mxu0 0
        %1851 = vmatpush1.bf16.msra.mxu0 0
        %1852 = vmatprep.subr.bf16.mxu0 0
        %1853 = vmatpush1.bf16.msra.mxu0 0
        %1854 = vmatprep.subr.bf16.mxu0 0
        %1855 = vmatpush1.bf16.msra.mxu0 0
        %1856 = vmatprep.subr.bf16.mxu0 0
        %1857 = vmatpush1.bf16.msra.mxu0 0
        %1858 = vmatprep.subr.bf16.mxu0 0
        %1859 = vmatpush1.bf16.msra.mxu0 0
        %1860 = vmatprep.subr.bf16.mxu0 0
        %1861 = vmatpush1.bf16.msra.mxu0 0
        %1862 = vmatprep.subr.bf16.mxu0 0
        %1863 = vmatpush1.bf16.msra.mxu0 0
        %1864 = vmatprep.subr.bf16.mxu0 0
        %1865 = vmatpush1.bf16.msra.mxu0 0
        %1866 = vmatprep.subr.bf16.mxu0 0
        %1867 = vmatpush1.bf16.msra.mxu0 0
        %1868 = vmatprep.subr.bf16.mxu0 0
        %1869 = vmatpush1.bf16.msra.mxu0 0
        %1870 = vmatprep.subr.bf16.mxu0 0
        %1871 = vmatpush1.bf16.msra.mxu0 0
        %1872 = vmatprep.subr.bf16.mxu0 0
        %1873 = vmatpush1.bf16.msra.mxu0 0
        %1874 = vmatprep.mubr.bf16.mxu0 0
        %1875 = vmatmul.mubr.bf16.gmra.mrb[0].mxu0 %v1837
        %v1876 = vpop.f32.mrb[0].mxu0
        %v1877 = vadd.f32 0.0, %v1876
        %v1878 = vpop.f32.mrb[0].mxu0
        %v1879 = vpop.f32.mrb[0].mxu0
        %v1880 = vpop.f32.mrb[0].mxu0
        %1881 = vdwg.mxu0
        %v1882 = vcombine.low %v1739, %v1831
        %v1883 = vcombine.high %v1739, %v1831
        %v1885 = vunpack.c.l.s4 1983009808
        %v1886 = vunpack.c.0.s8 %v1885
        %v1887 = vlaneseq
        %v1888 = vshrl.u32 %v1887, 7
        %v1889 = vsub.s32 %v1886, %v1888
        %v1890 = vrot.slane %v1882, %v1889
        %v1892 = vunpack.c.l.s4 1983009808
        %v1893 = vunpack.c.0.s8 %v1892
        %v1894 = vlaneseq
        %v1895 = vshrl.u32 %v1894, 7
        %v1896 = vsub.s32 %v1893, %v1895
        %v1897 = vrot.slane %v1883, %v1896
        %v1898 = vcombine.low %v1785, %v1877
        %v1899 = vcombine.high %v1785, %v1877
        %v1901 = vunpack.c.l.s4 1983009808
        %v1902 = vunpack.c.0.s8 %v1901
        %v1903 = vlaneseq
        %v1904 = vshrl.u32 %v1903, 7
        %v1905 = vsub.s32 %v1902, %v1904
        %v1906 = vrot.slane %v1898, %v1905
        %v1908 = vunpack.c.l.s4 1983009808
        %v1909 = vunpack.c.0.s8 %v1908
        %v1910 = vlaneseq
        %v1911 = vshrl.u32 %v1910, 7
        %v1912 = vsub.s32 %v1909, %v1911
        %v1913 = vrot.slane %v1899, %v1912
        %v1914 = vcombine.low %v1890, %v1906
        %v1915 = vcombine.high %v1890, %v1906
        %v1917 = vunpack.c.l.s4 1934713408
        %v1918 = vunpack.c.0.s8 %v1917
        %v1919 = vlaneseq
        %v1920 = vshrl.u32 %v1919, 7
        %v1921 = vsub.s32 %v1918, %v1920
        %v1922 = vrot.slane %v1914, %v1921
        %v1924 = vunpack.c.l.s4 1934713408
        %v1925 = vunpack.c.0.s8 %v1924
        %v1926 = vlaneseq
        %v1927 = vshrl.u32 %v1926, 7
        %v1928 = vsub.s32 %v1925, %v1927
        %v1929 = vrot.slane %v1915, %v1928
        %v1930 = vcombine.low %v1897, %v1913
        %v1931 = vcombine.high %v1897, %v1913
        %v1933 = vunpack.c.l.s4 1934713408
        %v1934 = vunpack.c.0.s8 %v1933
        %v1935 = vlaneseq
        %v1936 = vshrl.u32 %v1935, 7
        %v1937 = vsub.s32 %v1934, %v1936
        %v1938 = vrot.slane %v1930, %v1937
        %v1940 = vunpack.c.l.s4 1934713408
        %v1941 = vunpack.c.0.s8 %v1940
        %v1942 = vlaneseq
        %v1943 = vshrl.u32 %v1942, 7
        %v1944 = vsub.s32 %v1941, %v1943
        %v1945 = vrot.slane %v1931, %v1944
        %v1946 = vcombine.high %v1922, 0.0
        %v1947 = vcombine.high %v1929, 0.0
        %v1948 = vcombine.high %v1938, 0.0
        %v1949 = vcombine.high %v1945, 0.0
        %v1950 = vcombine.low %v1922, %v1929
        %v1952 = vunpack.c.l.s4 1983009808
        %v1953 = vunpack.c.0.s8 %v1952
        %v1954 = vlaneseq
        %v1955 = vshrl.u32 %v1954, 7
        %v1956 = vsub.s32 %v1953, %v1955
        %v1957 = vrot.slane %v1950, %v1956
        %v1958 = vcombine.low %v1946, %v1947
        %v1960 = vunpack.c.l.s4 1983009808
        %v1961 = vunpack.c.0.s8 %v1960
        %v1962 = vlaneseq
        %v1963 = vshrl.u32 %v1962, 7
        %v1964 = vsub.s32 %v1961, %v1963
        %v1965 = vrot.slane %v1958, %v1964
        %v1966 = vcombine.low %v1938, %v1945
        %v1968 = vunpack.c.l.s4 1983009808
        %v1969 = vunpack.c.0.s8 %v1968
        %v1970 = vlaneseq
        %v1971 = vshrl.u32 %v1970, 7
        %v1972 = vsub.s32 %v1969, %v1971
        %v1973 = vrot.slane %v1966, %v1972
        %v1974 = vcombine.low %v1948, %v1949
        %v1976 = vunpack.c.l.s4 1983009808
        %v1977 = vunpack.c.0.s8 %v1976
        %v1978 = vlaneseq
        %v1979 = vshrl.u32 %v1978, 7
        %v1980 = vsub.s32 %v1977, %v1979
        %v1981 = vrot.slane %v1974, %v1980
        %v1982 = vcombine.low %v1957, %v1965
        %v1983 = vcombine.high %v1957, %v1965
        %v1985 = vunpack.c.l.s4 1934713408
        %v1986 = vunpack.c.0.s8 %v1985
        %v1987 = vlaneseq
        %v1988 = vshrl.u32 %v1987, 7
        %v1989 = vsub.s32 %v1986, %v1988
        %v1990 = vrot.slane %v1982, %v1989
        %v1992 = vunpack.c.l.s4 1934713408
        %v1993 = vunpack.c.0.s8 %v1992
        %v1994 = vlaneseq
        %v1995 = vshrl.u32 %v1994, 7
        %v1996 = vsub.s32 %v1993, %v1995
        %v1997 = vrot.slane %v1983, %v1996
        %v1998 = vcombine.low %v1973, %v1981
        %v1999 = vcombine.high %v1973, %v1981
        %v2001 = vunpack.c.l.s4 1934713408
        %v2002 = vunpack.c.0.s8 %v2001
        %v2003 = vlaneseq
        %v2004 = vshrl.u32 %v2003, 7
        %v2005 = vsub.s32 %v2002, %v2004
        %v2006 = vrot.slane %v1998, %v2005
        %v2008 = vunpack.c.l.s4 1934713408
        %v2009 = vunpack.c.0.s8 %v2008
        %v2010 = vlaneseq
        %v2011 = vshrl.u32 %v2010, 7
        %v2012 = vsub.s32 %v2009, %v2011
        %v2013 = vrot.slane %v1999, %v2012
        %v2014 = vcombine.low %v1990, %v2006
        %v2015 = vcombine.high %v1990, %v2006
        %v2016 = vcombine.low %v1997, %v2013
        %v2017 = vcombine.high %v1997, %v2013
        %2019 = vrot.lane.b32.xlu0 %v2015, 32
        %v2020 = vpop.permute.xlu0 %2019
        %2023 = vrot.lane.b32.xlu0 %v2016, 64
        %v2024 = vpop.permute.xlu0 %2023
        %2027 = vrot.lane.b32.xlu0 %v2017, 96
        %v2028 = vpop.permute.xlu0 %2027
        %v2030 = vsel %vm1463, %v2014, %v2020
        %vm2031 = vcmask 523264
        %v2032 = vsel %vm2031, %v2030, %v2024
        %vm2033 = vcmask 785408
        %v2034 = vsel %vm2033, %v2032, %v2028
        %2036 = vrot.lane.b32.xlu0 %v1000, 96
        %v2037 = vpop.permute.xlu0 %2036
        %2039 = vrot.lane.b32.xlu0 %v1000, 64
        %v2040 = vpop.permute.xlu0 %2039
        %2042 = vrot.lane.b32.xlu0 %v1000, 32
        %v2043 = vpop.permute.xlu0 %2042
        %v2045 = vcombine.low %v1000, %v2040
        %v2046 = vcombine.high %v1000, %v2040
        %v2048 = vunpack.c.l.s4 1983009808
        %v2049 = vunpack.c.0.s8 %v2048
        %v2050 = vlaneseq
        %v2051 = vshrl.u32 %v2050, 7
        %v2052 = vsub.s32 %v2049, %v2051
        %v2053 = vrot.slane %v2045, %v2052
        %v2055 = vunpack.c.l.s4 1983009808
        %v2056 = vunpack.c.0.s8 %v2055
        %v2057 = vlaneseq
        %v2058 = vshrl.u32 %v2057, 7
        %v2059 = vsub.s32 %v2056, %v2058
        %v2060 = vrot.slane %v2046, %v2059
        %v2061 = vcombine.low %v2037, %v2043
        %v2062 = vcombine.high %v2037, %v2043
        %v2064 = vunpack.c.l.s4 1983009808
        %v2065 = vunpack.c.0.s8 %v2064
        %v2066 = vlaneseq
        %v2067 = vshrl.u32 %v2066, 7
        %v2068 = vsub.s32 %v2065, %v2067
        %v2069 = vrot.slane %v2061, %v2068
        %v2071 = vunpack.c.l.s4 1983009808
        %v2072 = vunpack.c.0.s8 %v2071
        %v2073 = vlaneseq
        %v2074 = vshrl.u32 %v2073, 7
        %v2075 = vsub.s32 %v2072, %v2074
        %v2076 = vrot.slane %v2062, %v2075
        %v2077 = vcombine.low %v2053, %v2069
        %v2078 = vcombine.high %v2053, %v2069
        %v2080 = vunpack.c.l.s4 1934713408
        %v2081 = vunpack.c.0.s8 %v2080
        %v2082 = vlaneseq
        %v2083 = vshrl.u32 %v2082, 7
        %v2084 = vsub.s32 %v2081, %v2083
        %v2085 = vrot.slane %v2077, %v2084
        %v2087 = vunpack.c.l.s4 1934713408
        %v2088 = vunpack.c.0.s8 %v2087
        %v2089 = vlaneseq
        %v2090 = vshrl.u32 %v2089, 7
        %v2091 = vsub.s32 %v2088, %v2090
        %v2092 = vrot.slane %v2078, %v2091
        %v2093 = vcombine.low %v2060, %v2076
        %v2094 = vcombine.high %v2060, %v2076
        %v2096 = vunpack.c.l.s4 1934713408
        %v2097 = vunpack.c.0.s8 %v2096
        %v2098 = vlaneseq
        %v2099 = vshrl.u32 %v2098, 7
        %v2100 = vsub.s32 %v2097, %v2099
        %v2101 = vrot.slane %v2093, %v2100
        %v2103 = vunpack.c.l.s4 1934713408
        %v2104 = vunpack.c.0.s8 %v2103
        %v2105 = vlaneseq
        %v2106 = vshrl.u32 %v2105, 7
        %v2107 = vsub.s32 %v2104, %v2106
        %v2108 = vrot.slane %v2094, %v2107
        %v2109 = vcombine.high %v2085, 0.0
        %v2110 = vcombine.high %v2092, 0.0
        %v2111 = vcombine.high %v2101, 0.0
        %v2112 = vcombine.high %v2108, 0.0
        %v2113 = vcombine.low %v2085, %v2092
        %v2115 = vunpack.c.l.s4 1983009808
        %v2116 = vunpack.c.0.s8 %v2115
        %v2117 = vlaneseq
        %v2118 = vshrl.u32 %v2117, 7
        %v2119 = vsub.s32 %v2116, %v2118
        %v2120 = vrot.slane %v2113, %v2119
        %v2121 = vcombine.low %v2109, %v2110
        %v2123 = vunpack.c.l.s4 1983009808
        %v2124 = vunpack.c.0.s8 %v2123
        %v2125 = vlaneseq
        %v2126 = vshrl.u32 %v2125, 7
        %v2127 = vsub.s32 %v2124, %v2126
        %v2128 = vrot.slane %v2121, %v2127
        %v2129 = vcombine.low %v2101, %v2108
        %v2131 = vunpack.c.l.s4 1983009808
        %v2132 = vunpack.c.0.s8 %v2131
        %v2133 = vlaneseq
        %v2134 = vshrl.u32 %v2133, 7
        %v2135 = vsub.s32 %v2132, %v2134
        %v2136 = vrot.slane %v2129, %v2135
        %v2137 = vcombine.low %v2111, %v2112
        %v2139 = vunpack.c.l.s4 1983009808
        %v2140 = vunpack.c.0.s8 %v2139
        %v2141 = vlaneseq
        %v2142 = vshrl.u32 %v2141, 7
        %v2143 = vsub.s32 %v2140, %v2142
        %v2144 = vrot.slane %v2137, %v2143
        %v2145 = vcombine.low %v2120, %v2128
        %v2146 = vcombine.high %v2120, %v2128
        %v2148 = vunpack.c.l.s4 1934713408
        %v2149 = vunpack.c.0.s8 %v2148
        %v2150 = vlaneseq
        %v2151 = vshrl.u32 %v2150, 7
        %v2152 = vsub.s32 %v2149, %v2151
        %v2153 = vrot.slane %v2145, %v2152
        %v2155 = vunpack.c.l.s4 1934713408
        %v2156 = vunpack.c.0.s8 %v2155
        %v2157 = vlaneseq
        %v2158 = vshrl.u32 %v2157, 7
        %v2159 = vsub.s32 %v2156, %v2158
        %v2160 = vrot.slane %v2146, %v2159
        %v2161 = vcombine.low %v2136, %v2144
        %v2162 = vcombine.high %v2136, %v2144
        %v2164 = vunpack.c.l.s4 1934713408
        %v2165 = vunpack.c.0.s8 %v2164
        %v2166 = vlaneseq
        %v2167 = vshrl.u32 %v2166, 7
        %v2168 = vsub.s32 %v2165, %v2167
        %v2169 = vrot.slane %v2161, %v2168
        %v2171 = vunpack.c.l.s4 1934713408
        %v2172 = vunpack.c.0.s8 %v2171
        %v2173 = vlaneseq
        %v2174 = vshrl.u32 %v2173, 7
        %v2175 = vsub.s32 %v2172, %v2174
        %v2176 = vrot.slane %v2162, %v2175
        %v2177 = vcombine.low %v2153, %v2169
        %v2178 = vcombine.high %v2153, %v2169
        %v2179 = vcombine.low %v2160, %v2176
        %v2180 = vcombine.high %v2160, %v2176
        %v2181 = vpack.c.bf16 %v2177, %v2177
        %v2182 = vpack.c.bf16 %v2178, %v2178
        %v2183 = vpack.c.bf16 %v2179, %v2179
        %v2184 = vpack.c.bf16 %v2180, %v2180
        %2186 = vrot.lane.b32.xlu0 %v1006, 96
        %v2187 = vpop.permute.xlu0 %2186
        %2189 = vrot.lane.b32.xlu0 %v1006, 64
        %v2190 = vpop.permute.xlu0 %2189
        %2192 = vrot.lane.b32.xlu0 %v1006, 32
        %v2193 = vpop.permute.xlu0 %2192
        %v2195 = vcombine.low %v1006, %v2190
        %v2196 = vcombine.high %v1006, %v2190
        %v2198 = vunpack.c.l.s4 1983009808
        %v2199 = vunpack.c.0.s8 %v2198
        %v2200 = vlaneseq
        %v2201 = vshrl.u32 %v2200, 7
        %v2202 = vsub.s32 %v2199, %v2201
        %v2203 = vrot.slane %v2195, %v2202
        %v2205 = vunpack.c.l.s4 1983009808
        %v2206 = vunpack.c.0.s8 %v2205
        %v2207 = vlaneseq
        %v2208 = vshrl.u32 %v2207, 7
        %v2209 = vsub.s32 %v2206, %v2208
        %v2210 = vrot.slane %v2196, %v2209
        %v2211 = vcombine.low %v2187, %v2193
        %v2212 = vcombine.high %v2187, %v2193
        %v2214 = vunpack.c.l.s4 1983009808
        %v2215 = vunpack.c.0.s8 %v2214
        %v2216 = vlaneseq
        %v2217 = vshrl.u32 %v2216, 7
        %v2218 = vsub.s32 %v2215, %v2217
        %v2219 = vrot.slane %v2211, %v2218
        %v2221 = vunpack.c.l.s4 1983009808
        %v2222 = vunpack.c.0.s8 %v2221
        %v2223 = vlaneseq
        %v2224 = vshrl.u32 %v2223, 7
        %v2225 = vsub.s32 %v2222, %v2224
        %v2226 = vrot.slane %v2212, %v2225
        %v2227 = vcombine.low %v2203, %v2219
        %v2228 = vcombine.high %v2203, %v2219
        %v2230 = vunpack.c.l.s4 1934713408
        %v2231 = vunpack.c.0.s8 %v2230
        %v2232 = vlaneseq
        %v2233 = vshrl.u32 %v2232, 7
        %v2234 = vsub.s32 %v2231, %v2233
        %v2235 = vrot.slane %v2227, %v2234
        %v2237 = vunpack.c.l.s4 1934713408
        %v2238 = vunpack.c.0.s8 %v2237
        %v2239 = vlaneseq
        %v2240 = vshrl.u32 %v2239, 7
        %v2241 = vsub.s32 %v2238, %v2240
        %v2242 = vrot.slane %v2228, %v2241
        %v2243 = vcombine.low %v2210, %v2226
        %v2244 = vcombine.high %v2210, %v2226
        %v2246 = vunpack.c.l.s4 1934713408
        %v2247 = vunpack.c.0.s8 %v2246
        %v2248 = vlaneseq
        %v2249 = vshrl.u32 %v2248, 7
        %v2250 = vsub.s32 %v2247, %v2249
        %v2251 = vrot.slane %v2243, %v2250
        %v2253 = vunpack.c.l.s4 1934713408
        %v2254 = vunpack.c.0.s8 %v2253
        %v2255 = vlaneseq
        %v2256 = vshrl.u32 %v2255, 7
        %v2257 = vsub.s32 %v2254, %v2256
        %v2258 = vrot.slane %v2244, %v2257
        %v2259 = vcombine.high %v2235, 0.0
        %v2260 = vcombine.high %v2242, 0.0
        %v2261 = vcombine.high %v2251, 0.0
        %v2262 = vcombine.high %v2258, 0.0
        %v2263 = vcombine.low %v2235, %v2242
        %v2265 = vunpack.c.l.s4 1983009808
        %v2266 = vunpack.c.0.s8 %v2265
        %v2267 = vlaneseq
        %v2268 = vshrl.u32 %v2267, 7
        %v2269 = vsub.s32 %v2266, %v2268
        %v2270 = vrot.slane %v2263, %v2269
        %v2271 = vcombine.low %v2259, %v2260
        %v2273 = vunpack.c.l.s4 1983009808
        %v2274 = vunpack.c.0.s8 %v2273
        %v2275 = vlaneseq
        %v2276 = vshrl.u32 %v2275, 7
        %v2277 = vsub.s32 %v2274, %v2276
        %v2278 = vrot.slane %v2271, %v2277
        %v2279 = vcombine.low %v2251, %v2258
        %v2281 = vunpack.c.l.s4 1983009808
        %v2282 = vunpack.c.0.s8 %v2281
        %v2283 = vlaneseq
        %v2284 = vshrl.u32 %v2283, 7
        %v2285 = vsub.s32 %v2282, %v2284
        %v2286 = vrot.slane %v2279, %v2285
        %v2287 = vcombine.low %v2261, %v2262
        %v2289 = vunpack.c.l.s4 1983009808
        %v2290 = vunpack.c.0.s8 %v2289
        %v2291 = vlaneseq
        %v2292 = vshrl.u32 %v2291, 7
        %v2293 = vsub.s32 %v2290, %v2292
        %v2294 = vrot.slane %v2287, %v2293
        %v2295 = vcombine.low %v2270, %v2278
        %v2296 = vcombine.high %v2270, %v2278
        %v2298 = vunpack.c.l.s4 1934713408
        %v2299 = vunpack.c.0.s8 %v2298
        %v2300 = vlaneseq
        %v2301 = vshrl.u32 %v2300, 7
        %v2302 = vsub.s32 %v2299, %v2301
        %v2303 = vrot.slane %v2295, %v2302
        %v2305 = vunpack.c.l.s4 1934713408
        %v2306 = vunpack.c.0.s8 %v2305
        %v2307 = vlaneseq
        %v2308 = vshrl.u32 %v2307, 7
        %v2309 = vsub.s32 %v2306, %v2308
        %v2310 = vrot.slane %v2296, %v2309
        %v2311 = vcombine.low %v2286, %v2294
        %v2312 = vcombine.high %v2286, %v2294
        %v2314 = vunpack.c.l.s4 1934713408
        %v2315 = vunpack.c.0.s8 %v2314
        %v2316 = vlaneseq
        %v2317 = vshrl.u32 %v2316, 7
        %v2318 = vsub.s32 %v2315, %v2317
        %v2319 = vrot.slane %v2311, %v2318
        %v2321 = vunpack.c.l.s4 1934713408
        %v2322 = vunpack.c.0.s8 %v2321
        %v2323 = vlaneseq
        %v2324 = vshrl.u32 %v2323, 7
        %v2325 = vsub.s32 %v2322, %v2324
        %v2326 = vrot.slane %v2312, %v2325
        %v2327 = vcombine.low %v2303, %v2319
        %v2328 = vcombine.high %v2303, %v2319
        %v2329 = vcombine.low %v2310, %v2326
        %v2330 = vcombine.high %v2310, %v2326
        %v2331 = vpack.c.bf16 %v2327, %v2327
        %v2332 = vpack.c.bf16 %v2328, %v2328
        %v2333 = vpack.c.bf16 %v2329, %v2329
        %v2334 = vpack.c.bf16 %v2330, %v2330
        %2336 = vrot.lane.b32.xlu0 %v1012, 96
        %v2337 = vpop.permute.xlu0 %2336
        %2339 = vrot.lane.b32.xlu0 %v1012, 64
        %v2340 = vpop.permute.xlu0 %2339
        %2342 = vrot.lane.b32.xlu0 %v1012, 32
        %v2343 = vpop.permute.xlu0 %2342
        %v2345 = vcombine.low %v1012, %v2340
        %v2346 = vcombine.high %v1012, %v2340
        %v2348 = vunpack.c.l.s4 1983009808
        %v2349 = vunpack.c.0.s8 %v2348
        %v2350 = vlaneseq
        %v2351 = vshrl.u32 %v2350, 7
        %v2352 = vsub.s32 %v2349, %v2351
        %v2353 = vrot.slane %v2345, %v2352
        %v2355 = vunpack.c.l.s4 1983009808
        %v2356 = vunpack.c.0.s8 %v2355
        %v2357 = vlaneseq
        %v2358 = vshrl.u32 %v2357, 7
        %v2359 = vsub.s32 %v2356, %v2358
        %v2360 = vrot.slane %v2346, %v2359
        %v2361 = vcombine.low %v2337, %v2343
        %v2362 = vcombine.high %v2337, %v2343
        %v2364 = vunpack.c.l.s4 1983009808
        %v2365 = vunpack.c.0.s8 %v2364
        %v2366 = vlaneseq
        %v2367 = vshrl.u32 %v2366, 7
        %v2368 = vsub.s32 %v2365, %v2367
        %v2369 = vrot.slane %v2361, %v2368
        %v2371 = vunpack.c.l.s4 1983009808
        %v2372 = vunpack.c.0.s8 %v2371
        %v2373 = vlaneseq
        %v2374 = vshrl.u32 %v2373, 7
        %v2375 = vsub.s32 %v2372, %v2374
        %v2376 = vrot.slane %v2362, %v2375
        %v2377 = vcombine.low %v2353, %v2369
        %v2378 = vcombine.high %v2353, %v2369
        %v2380 = vunpack.c.l.s4 1934713408
        %v2381 = vunpack.c.0.s8 %v2380
        %v2382 = vlaneseq
        %v2383 = vshrl.u32 %v2382, 7
        %v2384 = vsub.s32 %v2381, %v2383
        %v2385 = vrot.slane %v2377, %v2384
        %v2387 = vunpack.c.l.s4 1934713408
        %v2388 = vunpack.c.0.s8 %v2387
        %v2389 = vlaneseq
        %v2390 = vshrl.u32 %v2389, 7
        %v2391 = vsub.s32 %v2388, %v2390
        %v2392 = vrot.slane %v2378, %v2391
        %v2393 = vcombine.low %v2360, %v2376
        %v2394 = vcombine.high %v2360, %v2376
        %v2396 = vunpack.c.l.s4 1934713408
        %v2397 = vunpack.c.0.s8 %v2396
        %v2398 = vlaneseq
        %v2399 = vshrl.u32 %v2398, 7
        %v2400 = vsub.s32 %v2397, %v2399
        %v2401 = vrot.slane %v2393, %v2400
        %v2403 = vunpack.c.l.s4 1934713408
        %v2404 = vunpack.c.0.s8 %v2403
        %v2405 = vlaneseq
        %v2406 = vshrl.u32 %v2405, 7
        %v2407 = vsub.s32 %v2404, %v2406
        %v2408 = vrot.slane %v2394, %v2407
        %v2409 = vcombine.high %v2385, 0.0
        %v2410 = vcombine.high %v2392, 0.0
        %v2411 = vcombine.high %v2401, 0.0
        %v2412 = vcombine.high %v2408, 0.0
        %v2413 = vcombine.low %v2385, %v2392
        %v2415 = vunpack.c.l.s4 1983009808
        %v2416 = vunpack.c.0.s8 %v2415
        %v2417 = vlaneseq
        %v2418 = vshrl.u32 %v2417, 7
        %v2419 = vsub.s32 %v2416, %v2418
        %v2420 = vrot.slane %v2413, %v2419
        %v2421 = vcombine.low %v2409, %v2410
        %v2423 = vunpack.c.l.s4 1983009808
        %v2424 = vunpack.c.0.s8 %v2423
        %v2425 = vlaneseq
        %v2426 = vshrl.u32 %v2425, 7
        %v2427 = vsub.s32 %v2424, %v2426
        %v2428 = vrot.slane %v2421, %v2427
        %v2429 = vcombine.low %v2401, %v2408
        %v2431 = vunpack.c.l.s4 1983009808
        %v2432 = vunpack.c.0.s8 %v2431
        %v2433 = vlaneseq
        %v2434 = vshrl.u32 %v2433, 7
        %v2435 = vsub.s32 %v2432, %v2434
        %v2436 = vrot.slane %v2429, %v2435
        %v2437 = vcombine.low %v2411, %v2412
        %v2439 = vunpack.c.l.s4 1983009808
        %v2440 = vunpack.c.0.s8 %v2439
        %v2441 = vlaneseq
        %v2442 = vshrl.u32 %v2441, 7
        %v2443 = vsub.s32 %v2440, %v2442
        %v2444 = vrot.slane %v2437, %v2443
        %v2445 = vcombine.low %v2420, %v2428
        %v2446 = vcombine.high %v2420, %v2428
        %v2448 = vunpack.c.l.s4 1934713408
        %v2449 = vunpack.c.0.s8 %v2448
        %v2450 = vlaneseq
        %v2451 = vshrl.u32 %v2450, 7
        %v2452 = vsub.s32 %v2449, %v2451
        %v2453 = vrot.slane %v2445, %v2452
        %v2455 = vunpack.c.l.s4 1934713408
        %v2456 = vunpack.c.0.s8 %v2455
        %v2457 = vlaneseq
        %v2458 = vshrl.u32 %v2457, 7
        %v2459 = vsub.s32 %v2456, %v2458
        %v2460 = vrot.slane %v2446, %v2459
        %v2461 = vcombine.low %v2436, %v2444
        %v2462 = vcombine.high %v2436, %v2444
        %v2464 = vunpack.c.l.s4 1934713408
        %v2465 = vunpack.c.0.s8 %v2464
        %v2466 = vlaneseq
        %v2467 = vshrl.u32 %v2466, 7
        %v2468 = vsub.s32 %v2465, %v2467
        %v2469 = vrot.slane %v2461, %v2468
        %v2471 = vunpack.c.l.s4 1934713408
        %v2472 = vunpack.c.0.s8 %v2471
        %v2473 = vlaneseq
        %v2474 = vshrl.u32 %v2473, 7
        %v2475 = vsub.s32 %v2472, %v2474
        %v2476 = vrot.slane %v2462, %v2475
        %v2477 = vcombine.low %v2453, %v2469
        %v2478 = vcombine.high %v2453, %v2469
        %v2479 = vcombine.low %v2460, %v2476
        %v2480 = vcombine.high %v2460, %v2476
        %v2481 = vpack.c.bf16 %v2477, %v2477
        %v2482 = vpack.c.bf16 %v2478, %v2478
        %v2483 = vpack.c.bf16 %v2479, %v2479
        %v2484 = vpack.c.bf16 %v2480, %v2480
        %v2486 = vsel %vm1463, %v2181, 0
        %v2489 = vsel %vm1463, %v2331, 0
        %2491 = vmatprep.subr.bf16.mxu0 0
        %2492 = vmatpush1.bf16.xpose.msra.mxu0 %v2489
        %2493 = vmatprep.subr.bf16.mxu0 0
        %2494 = vmatpush1.bf16.xpose.msra.mxu0 0
        %2495 = vmatprep.subr.bf16.mxu0 0
        %2496 = vmatpush1.bf16.xpose.msra.mxu0 0
        %2497 = vmatprep.subr.bf16.mxu0 0
        %2498 = vmatpush1.bf16.xpose.msra.mxu0 0
        %2499 = vmatprep.subr.bf16.mxu0 0
        %2500 = vmatpush1.bf16.xpose.msra.mxu0 0
        %2501 = vmatprep.subr.bf16.mxu0 0
        %2502 = vmatpush1.bf16.xpose.msra.mxu0 0
        %2503 = vmatprep.subr.bf16.mxu0 0
        %2504 = vmatpush1.bf16.xpose.msra.mxu0 0
        %2505 = vmatprep.subr.bf16.mxu0 0
        %2506 = vmatpush1.bf16.xpose.msra.mxu0 0
        %2507 = vmatprep.subr.bf16.mxu0 0
        %2508 = vmatpush1.bf16.xpose.msra.mxu0 0
        %2509 = vmatprep.subr.bf16.mxu0 0
        %2510 = vmatpush1.bf16.xpose.msra.mxu0 0
        %2511 = vmatprep.subr.bf16.mxu0 0
        %2512 = vmatpush1.bf16.xpose.msra.mxu0 0
        %2513 = vmatprep.subr.bf16.mxu0 0
        %2514 = vmatpush1.bf16.xpose.msra.mxu0 0
        %2515 = vmatprep.subr.bf16.mxu0 0
        %2516 = vmatpush1.bf16.xpose.msra.mxu0 0
        %2517 = vmatprep.subr.bf16.mxu0 0
        %2518 = vmatpush1.bf16.xpose.msra.mxu0 0
        %2519 = vmatprep.subr.bf16.mxu0 0
        %2520 = vmatpush1.bf16.xpose.msra.mxu0 0
        %2521 = vmatprep.subr.bf16.mxu0 0
        %2522 = vmatpush1.bf16.xpose.msra.mxu0 0
        %2523 = vmatprep.mubr.bf16.mxu0 0
        %2524 = vmatmul.mubr.bf16.gmra.mrb[0].mxu0 %v2486
        %v2525 = vpop.f32.mrb[0].mxu0
        %v2526 = vadd.f32 0.0, %v2525
        %v2527 = vpop.f32.mrb[0].mxu0
        %v2528 = vpop.f32.mrb[0].mxu0
        %v2529 = vpop.f32.mrb[0].mxu0
        %2530 = vdwg.mxu0
        %v2532 = vsel %vm1463, %v2182, 0
        %v2535 = vsel %vm1463, %v2332, 0
        %2537 = vmatprep.subr.bf16.mxu0 0
        %2538 = vmatpush1.bf16.xpose.msra.mxu0 %v2535
        %2539 = vmatprep.subr.bf16.mxu0 0
        %2540 = vmatpush1.bf16.xpose.msra.mxu0 0
        %2541 = vmatprep.subr.bf16.mxu0 0
        %2542 = vmatpush1.bf16.xpose.msra.mxu0 0
        %2543 = vmatprep.subr.bf16.mxu0 0
        %2544 = vmatpush1.bf16.xpose.msra.mxu0 0
        %2545 = vmatprep.subr.bf16.mxu0 0
        %2546 = vmatpush1.bf16.xpose.msra.mxu0 0
        %2547 = vmatprep.subr.bf16.mxu0 0
        %2548 = vmatpush1.bf16.xpose.msra.mxu0 0
        %2549 = vmatprep.subr.bf16.mxu0 0
        %2550 = vmatpush1.bf16.xpose.msra.mxu0 0
        %2551 = vmatprep.subr.bf16.mxu0 0
        %2552 = vmatpush1.bf16.xpose.msra.mxu0 0
        %2553 = vmatprep.subr.bf16.mxu0 0
        %2554 = vmatpush1.bf16.xpose.msra.mxu0 0
        %2555 = vmatprep.subr.bf16.mxu0 0
        %2556 = vmatpush1.bf16.xpose.msra.mxu0 0
        %2557 = vmatprep.subr.bf16.mxu0 0
        %2558 = vmatpush1.bf16.xpose.msra.mxu0 0
        %2559 = vmatprep.subr.bf16.mxu0 0
        %2560 = vmatpush1.bf16.xpose.msra.mxu0 0
        %2561 = vmatprep.subr.bf16.mxu0 0
        %2562 = vmatpush1.bf16.xpose.msra.mxu0 0
        %2563 = vmatprep.subr.bf16.mxu0 0
        %2564 = vmatpush1.bf16.xpose.msra.mxu0 0
        %2565 = vmatprep.subr.bf16.mxu0 0
        %2566 = vmatpush1.bf16.xpose.msra.mxu0 0
        %2567 = vmatprep.subr.bf16.mxu0 0
        %2568 = vmatpush1.bf16.xpose.msra.mxu0 0
        %2569 = vmatprep.mubr.bf16.mxu0 0
        %2570 = vmatmul.mubr.bf16.gmra.mrb[0].mxu0 %v2532
        %v2571 = vpop.f32.mrb[0].mxu0
        %v2572 = vadd.f32 0.0, %v2571
        %v2573 = vpop.f32.mrb[0].mxu0
        %v2574 = vpop.f32.mrb[0].mxu0
        %v2575 = vpop.f32.mrb[0].mxu0
        %2576 = vdwg.mxu0
        %v2578 = vsel %vm1463, %v2183, 0
        %v2581 = vsel %vm1463, %v2333, 0
        %2583 = vmatprep.subr.bf16.mxu0 0
        %2584 = vmatpush1.bf16.xpose.msra.mxu0 %v2581
        %2585 = vmatprep.subr.bf16.mxu0 0
        %2586 = vmatpush1.bf16.xpose.msra.mxu0 0
        %2587 = vmatprep.subr.bf16.mxu0 0
        %2588 = vmatpush1.bf16.xpose.msra.mxu0 0
        %2589 = vmatprep.subr.bf16.mxu0 0
        %2590 = vmatpush1.bf16.xpose.msra.mxu0 0
        %2591 = vmatprep.subr.bf16.mxu0 0
        %2592 = vmatpush1.bf16.xpose.msra.mxu0 0
        %2593 = vmatprep.subr.bf16.mxu0 0
        %2594 = vmatpush1.bf16.xpose.msra.mxu0 0
        %2595 = vmatprep.subr.bf16.mxu0 0
        %2596 = vmatpush1.bf16.xpose.msra.mxu0 0
        %2597 = vmatprep.subr.bf16.mxu0 0
        %2598 = vmatpush1.bf16.xpose.msra.mxu0 0
        %2599 = vmatprep.subr.bf16.mxu0 0
        %2600 = vmatpush1.bf16.xpose.msra.mxu0 0
        %2601 = vmatprep.subr.bf16.mxu0 0
        %2602 = vmatpush1.bf16.xpose.msra.mxu0 0
        %2603 = vmatprep.subr.bf16.mxu0 0
        %2604 = vmatpush1.bf16.xpose.msra.mxu0 0
        %2605 = vmatprep.subr.bf16.mxu0 0
        %2606 = vmatpush1.bf16.xpose.msra.mxu0 0
        %2607 = vmatprep.subr.bf16.mxu0 0
        %2608 = vmatpush1.bf16.xpose.msra.mxu0 0
        %2609 = vmatprep.subr.bf16.mxu0 0
        %2610 = vmatpush1.bf16.xpose.msra.mxu0 0
        %2611 = vmatprep.subr.bf16.mxu0 0
        %2612 = vmatpush1.bf16.xpose.msra.mxu0 0
        %2613 = vmatprep.subr.bf16.mxu0 0
        %2614 = vmatpush1.bf16.xpose.msra.mxu0 0
        %2615 = vmatprep.mubr.bf16.mxu0 0
        %2616 = vmatmul.mubr.bf16.gmra.mrb[0].mxu0 %v2578
        %v2617 = vpop.f32.mrb[0].mxu0
        %v2618 = vadd.f32 0.0, %v2617
        %v2619 = vpop.f32.mrb[0].mxu0
        %v2620 = vpop.f32.mrb[0].mxu0
        %v2621 = vpop.f32.mrb[0].mxu0
        %2622 = vdwg.mxu0
        %v2624 = vsel %vm1463, %v2184, 0
        %v2627 = vsel %vm1463, %v2334, 0
        %2629 = vmatprep.subr.bf16.mxu0 0
        %2630 = vmatpush1.bf16.xpose.msra.mxu0 %v2627
        %2631 = vmatprep.subr.bf16.mxu0 0
        %2632 = vmatpush1.bf16.xpose.msra.mxu0 0
        %2633 = vmatprep.subr.bf16.mxu0 0
        %2634 = vmatpush1.bf16.xpose.msra.mxu0 0
        %2635 = vmatprep.subr.bf16.mxu0 0
        %2636 = vmatpush1.bf16.xpose.msra.mxu0 0
        %2637 = vmatprep.subr.bf16.mxu0 0
        %2638 = vmatpush1.bf16.xpose.msra.mxu0 0
        %2639 = vmatprep.subr.bf16.mxu0 0
        %2640 = vmatpush1.bf16.xpose.msra.mxu0 0
        %2641 = vmatprep.subr.bf16.mxu0 0
        %2642 = vmatpush1.bf16.xpose.msra.mxu0 0
        %2643 = vmatprep.subr.bf16.mxu0 0
        %2644 = vmatpush1.bf16.xpose.msra.mxu0 0
        %2645 = vmatprep.subr.bf16.mxu0 0
        %2646 = vmatpush1.bf16.xpose.msra.mxu0 0
        %2647 = vmatprep.subr.bf16.mxu0 0
        %2648 = vmatpush1.bf16.xpose.msra.mxu0 0
        %2649 = vmatprep.subr.bf16.mxu0 0
        %2650 = vmatpush1.bf16.xpose.msra.mxu0 0
        %2651 = vmatprep.subr.bf16.mxu0 0
        %2652 = vmatpush1.bf16.xpose.msra.mxu0 0
        %2653 = vmatprep.subr.bf16.mxu0 0
        %2654 = vmatpush1.bf16.xpose.msra.mxu0 0
        %2655 = vmatprep.subr.bf16.mxu0 0
        %2656 = vmatpush1.bf16.xpose.msra.mxu0 0
        %2657 = vmatprep.subr.bf16.mxu0 0
        %2658 = vmatpush1.bf16.xpose.msra.mxu0 0
        %2659 = vmatprep.subr.bf16.mxu0 0
        %2660 = vmatpush1.bf16.xpose.msra.mxu0 0
        %2661 = vmatprep.mubr.bf16.mxu0 0
        %2662 = vmatmul.mubr.bf16.gmra.mrb[0].mxu0 %v2624
        %v2663 = vpop.f32.mrb[0].mxu0
        %v2664 = vadd.f32 0.0, %v2663
        %v2665 = vpop.f32.mrb[0].mxu0
        %v2666 = vpop.f32.mrb[0].mxu0
        %v2667 = vpop.f32.mrb[0].mxu0
        %2668 = vdwg.mxu0
        %v2669 = vsel %vm1648, %v2526, -inf
        %2670 = vmax.xlane.f32.xlu0 %v2669
        %v2671 = vpop.xlane.xlu0 %2670
        %v2672 = vsel %vm1648, %v2572, -inf
        %2673 = vmax.xlane.f32.xlu0 %v2672
        %v2674 = vpop.xlane.xlu0 %2673
        %v2675 = vsel %vm1648, %v2618, -inf
        %2676 = vmax.xlane.f32.xlu0 %v2675
        %v2677 = vpop.xlane.xlu0 %2676
        %v2678 = vsel %vm1648, %v2664, -inf
        %2679 = vmax.xlane.f32.xlu0 %v2678
        %v2680 = vpop.xlane.xlu0 %2679
        %v2681 = vsub.f32 %v2526, %v2671
        %v2682 = vsub.f32 %v2572, %v2674
        %v2683 = vsub.f32 %v2618, %v2677
        %v2684 = vsub.f32 %v2664, %v2680
        %v2685 = vmul.f32 %v2681, 1.442695
        %v2686 = vpow.pop %v2685
        %v2687 = vmul.f32 %v2682, 1.442695
        %v2688 = vpow.pop %v2687
        %v2689 = vmul.f32 %v2683, 1.442695
        %v2690 = vpow.pop %v2689
        %v2691 = vmul.f32 %v2684, 1.442695
        %v2692 = vpow.pop %v2691
        %v2693 = vsel %vm1648, %v2686, 0.0
        %2694 = vadd.xlane.f32.xlu0 %v2693
        %v2695 = vpop.xlane.xlu0 %2694
        %v2696 = vsel %vm1648, %v2688, 0.0
        %2697 = vadd.xlane.f32.xlu0 %v2696
        %v2698 = vpop.xlane.xlu0 %2697
        %v2699 = vsel %vm1648, %v2690, 0.0
        %2700 = vadd.xlane.f32.xlu0 %v2699
        %v2701 = vpop.xlane.xlu0 %2700
        %v2702 = vsel %vm1648, %v2692, 0.0
        %2703 = vadd.xlane.f32.xlu0 %v2702
        %v2704 = vpop.xlane.xlu0 %2703
        %v2705 = vrcp.pop %v2695
        %v2706 = vrcp.pop %v2698
        %v2707 = vrcp.pop %v2701
        %v2708 = vrcp.pop %v2704
        %v2709 = vmul.f32 %v2686, %v2705
        %v2710 = vmul.f32 %v2688, %v2706
        %v2711 = vmul.f32 %v2690, %v2707
        %v2712 = vmul.f32 %v2692, %v2708
        %v2713 = vpack.c.bf16 %v2709, %v2709
        %v2714 = vpack.c.bf16 %v2710, %v2710
        %v2715 = vpack.c.bf16 %v2711, %v2711
        %v2716 = vpack.c.bf16 %v2712, %v2712
        %v2718 = vsel %vm1648, %v2713, 0
        %v2721 = vsel %vm1700, %v2481, 0
        %2723 = vmatprep.subr.bf16.mxu0 0
        %2724 = vmatpush1.bf16.msra.mxu0 %v2721
        %2725 = vmatprep.subr.bf16.mxu0 0
        %2726 = vmatpush1.bf16.msra.mxu0 0
        %2727 = vmatprep.subr.bf16.mxu0 0
        %2728 = vmatpush1.bf16.msra.mxu0 0
        %2729 = vmatprep.subr.bf16.mxu0 0
        %2730 = vmatpush1.bf16.msra.mxu0 0
        %2731 = vmatprep.subr.bf16.mxu0 0
        %2732 = vmatpush1.bf16.msra.mxu0 0
        %2733 = vmatprep.subr.bf16.mxu0 0
        %2734 = vmatpush1.bf16.msra.mxu0 0
        %2735 = vmatprep.subr.bf16.mxu0 0
        %2736 = vmatpush1.bf16.msra.mxu0 0
        %2737 = vmatprep.subr.bf16.mxu0 0
        %2738 = vmatpush1.bf16.msra.mxu0 0
        %2739 = vmatprep.subr.bf16.mxu0 0
        %2740 = vmatpush1.bf16.msra.mxu0 0
        %2741 = vmatprep.subr.bf16.mxu0 0
        %2742 = vmatpush1.bf16.msra.mxu0 0
        %2743 = vmatprep.subr.bf16.mxu0 0
        %2744 = vmatpush1.bf16.msra.mxu0 0
        %2745 = vmatprep.subr.bf16.mxu0 0
        %2746 = vmatpush1.bf16.msra.mxu0 0
        %2747 = vmatprep.subr.bf16.mxu0 0
        %2748 = vmatpush1.bf16.msra.mxu0 0
        %2749 = vmatprep.subr.bf16.mxu0 0
        %2750 = vmatpush1.bf16.msra.mxu0 0
        %2751 = vmatprep.subr.bf16.mxu0 0
        %2752 = vmatpush1.bf16.msra.mxu0 0
        %2753 = vmatprep.subr.bf16.mxu0 0
        %2754 = vmatpush1.bf16.msra.mxu0 0
        %2755 = vmatprep.mubr.bf16.mxu0 0
        %2756 = vmatmul.mubr.bf16.gmra.mrb[0].mxu0 %v2718
        %v2757 = vpop.f32.mrb[0].mxu0
        %v2758 = vadd.f32 0.0, %v2757
        %v2759 = vpop.f32.mrb[0].mxu0
        %v2760 = vpop.f32.mrb[0].mxu0
        %v2761 = vpop.f32.mrb[0].mxu0
        %2762 = vdwg.mxu0
        %v2764 = vsel %vm1648, %v2714, 0
        %v2767 = vsel %vm1700, %v2482, 0
        %2769 = vmatprep.subr.bf16.mxu0 0
        %2770 = vmatpush1.bf16.msra.mxu0 %v2767
        %2771 = vmatprep.subr.bf16.mxu0 0
        %2772 = vmatpush1.bf16.msra.mxu0 0
        %2773 = vmatprep.subr.bf16.mxu0 0
        %2774 = vmatpush1.bf16.msra.mxu0 0
        %2775 = vmatprep.subr.bf16.mxu0 0
        %2776 = vmatpush1.bf16.msra.mxu0 0
        %2777 = vmatprep.subr.bf16.mxu0 0
        %2778 = vmatpush1.bf16.msra.mxu0 0
        %2779 = vmatprep.subr.bf16.mxu0 0
        %2780 = vmatpush1.bf16.msra.mxu0 0
        %2781 = vmatprep.subr.bf16.mxu0 0
        %2782 = vmatpush1.bf16.msra.mxu0 0
        %2783 = vmatprep.subr.bf16.mxu0 0
        %2784 = vmatpush1.bf16.msra.mxu0 0
        %2785 = vmatprep.subr.bf16.mxu0 0
        %2786 = vmatpush1.bf16.msra.mxu0 0
        %2787 = vmatprep.subr.bf16.mxu0 0
        %2788 = vmatpush1.bf16.msra.mxu0 0
        %2789 = vmatprep.subr.bf16.mxu0 0
        %2790 = vmatpush1.bf16.msra.mxu0 0
        %2791 = vmatprep.subr.bf16.mxu0 0
        %2792 = vmatpush1.bf16.msra.mxu0 0
        %2793 = vmatprep.subr.bf16.mxu0 0
        %2794 = vmatpush1.bf16.msra.mxu0 0
        %2795 = vmatprep.subr.bf16.mxu0 0
        %2796 = vmatpush1.bf16.msra.mxu0 0
        %2797 = vmatprep.subr.bf16.mxu0 0
        %2798 = vmatpush1.bf16.msra.mxu0 0
        %2799 = vmatprep.subr.bf16.mxu0 0
        %2800 = vmatpush1.bf16.msra.mxu0 0
        %2801 = vmatprep.mubr.bf16.mxu0 0
        %2802 = vmatmul.mubr.bf16.gmra.mrb[0].mxu0 %v2764
        %v2803 = vpop.f32.mrb[0].mxu0
        %v2804 = vadd.f32 0.0, %v2803
        %v2805 = vpop.f32.mrb[0].mxu0
        %v2806 = vpop.f32.mrb[0].mxu0
        %v2807 = vpop.f32.mrb[0].mxu0
        %2808 = vdwg.mxu0
        %v2810 = vsel %vm1648, %v2715, 0
        %v2813 = vsel %vm1700, %v2483, 0
        %2815 = vmatprep.subr.bf16.mxu0 0
        %2816 = vmatpush1.bf16.msra.mxu0 %v2813
        %2817 = vmatprep.subr.bf16.mxu0 0
        %2818 = vmatpush1.bf16.msra.mxu0 0
        %2819 = vmatprep.subr.bf16.mxu0 0
        %2820 = vmatpush1.bf16.msra.mxu0 0
        %2821 = vmatprep.subr.bf16.mxu0 0
        %2822 = vmatpush1.bf16.msra.mxu0 0
        %2823 = vmatprep.subr.bf16.mxu0 0
        %2824 = vmatpush1.bf16.msra.mxu0 0
        %2825 = vmatprep.subr.bf16.mxu0 0
        %2826 = vmatpush1.bf16.msra.mxu0 0
        %2827 = vmatprep.subr.bf16.mxu0 0
        %2828 = vmatpush1.bf16.msra.mxu0 0
        %2829 = vmatprep.subr.bf16.mxu0 0
        %2830 = vmatpush1.bf16.msra.mxu0 0
        %2831 = vmatprep.subr.bf16.mxu0 0
        %2832 = vmatpush1.bf16.msra.mxu0 0
        %2833 = vmatprep.subr.bf16.mxu0 0
        %2834 = vmatpush1.bf16.msra.mxu0 0
        %2835 = vmatprep.subr.bf16.mxu0 0
        %2836 = vmatpush1.bf16.msra.mxu0 0
        %2837 = vmatprep.subr.bf16.mxu0 0
        %2838 = vmatpush1.bf16.msra.mxu0 0
        %2839 = vmatprep.subr.bf16.mxu0 0
        %2840 = vmatpush1.bf16.msra.mxu0 0
        %2841 = vmatprep.subr.bf16.mxu0 0
        %2842 = vmatpush1.bf16.msra.mxu0 0
        %2843 = vmatprep.subr.bf16.mxu0 0
        %2844 = vmatpush1.bf16.msra.mxu0 0
        %2845 = vmatprep.subr.bf16.mxu0 0
        %2846 = vmatpush1.bf16.msra.mxu0 0
        %2847 = vmatprep.mubr.bf16.mxu0 0
        %2848 = vmatmul.mubr.bf16.gmra.mrb[0].mxu0 %v2810
        %v2849 = vpop.f32.mrb[0].mxu0
        %v2850 = vadd.f32 0.0, %v2849
        %v2851 = vpop.f32.mrb[0].mxu0
        %v2852 = vpop.f32.mrb[0].mxu0
        %v2853 = vpop.f32.mrb[0].mxu0
        %2854 = vdwg.mxu0
        %v2856 = vsel %vm1648, %v2716, 0
        %v2859 = vsel %vm1700, %v2484, 0
        %2861 = vmatprep.subr.bf16.mxu0 0
        %2862 = vmatpush1.bf16.msra.mxu0 %v2859
        %2863 = vmatprep.subr.bf16.mxu0 0
        %2864 = vmatpush1.bf16.msra.mxu0 0
        %2865 = vmatprep.subr.bf16.mxu0 0
        %2866 = vmatpush1.bf16.msra.mxu0 0
        %2867 = vmatprep.subr.bf16.mxu0 0
        %2868 = vmatpush1.bf16.msra.mxu0 0
        %2869 = vmatprep.subr.bf16.mxu0 0
        %2870 = vmatpush1.bf16.msra.mxu0 0
        %2871 = vmatprep.subr.bf16.mxu0 0
        %2872 = vmatpush1.bf16.msra.mxu0 0
        %2873 = vmatprep.subr.bf16.mxu0 0
        %2874 = vmatpush1.bf16.msra.mxu0 0
        %2875 = vmatprep.subr.bf16.mxu0 0
        %2876 = vmatpush1.bf16.msra.mxu0 0
        %2877 = vmatprep.subr.bf16.mxu0 0
        %2878 = vmatpush1.bf16.msra.mxu0 0
        %2879 = vmatprep.subr.bf16.mxu0 0
        %2880 = vmatpush1.bf16.msra.mxu0 0
        %2881 = vmatprep.subr.bf16.mxu0 0
        %2882 = vmatpush1.bf16.msra.mxu0 0
        %2883 = vmatprep.subr.bf16.mxu0 0
        %2884 = vmatpush1.bf16.msra.mxu0 0
        %2885 = vmatprep.subr.bf16.mxu0 0
        %2886 = vmatpush1.bf16.msra.mxu0 0
        %2887 = vmatprep.subr.bf16.mxu0 0
        %2888 = vmatpush1.bf16.msra.mxu0 0
        %2889 = vmatprep.subr.bf16.mxu0 0
        %2890 = vmatpush1.bf16.msra.mxu0 0
        %2891 = vmatprep.subr.bf16.mxu0 0
        %2892 = vmatpush1.bf16.msra.mxu0 0
        %2893 = vmatprep.mubr.bf16.mxu0 0
        %2894 = vmatmul.mubr.bf16.gmra.mrb[0].mxu0 %v2856
        %v2895 = vpop.f32.mrb[0].mxu0
        %v2896 = vadd.f32 0.0, %v2895
        %v2897 = vpop.f32.mrb[0].mxu0
        %v2898 = vpop.f32.mrb[0].mxu0
        %v2899 = vpop.f32.mrb[0].mxu0
        %2900 = vdwg.mxu0
        %v2901 = vcombine.low %v2758, %v2850
        %v2902 = vcombine.high %v2758, %v2850
        %v2904 = vunpack.c.l.s4 1983009808
        %v2905 = vunpack.c.0.s8 %v2904
        %v2906 = vlaneseq
        %v2907 = vshrl.u32 %v2906, 7
        %v2908 = vsub.s32 %v2905, %v2907
        %v2909 = vrot.slane %v2901, %v2908
        %v2911 = vunpack.c.l.s4 1983009808
        %v2912 = vunpack.c.0.s8 %v2911
        %v2913 = vlaneseq
        %v2914 = vshrl.u32 %v2913, 7
        %v2915 = vsub.s32 %v2912, %v2914
        %v2916 = vrot.slane %v2902, %v2915
        %v2917 = vcombine.low %v2804, %v2896
        %v2918 = vcombine.high %v2804, %v2896
        %v2920 = vunpack.c.l.s4 1983009808
        %v2921 = vunpack.c.0.s8 %v2920
        %v2922 = vlaneseq
        %v2923 = vshrl.u32 %v2922, 7
        %v2924 = vsub.s32 %v2921, %v2923
        %v2925 = vrot.slane %v2917, %v2924
        %v2927 = vunpack.c.l.s4 1983009808
        %v2928 = vunpack.c.0.s8 %v2927
        %v2929 = vlaneseq
        %v2930 = vshrl.u32 %v2929, 7
        %v2931 = vsub.s32 %v2928, %v2930
        %v2932 = vrot.slane %v2918, %v2931
        %v2933 = vcombine.low %v2909, %v2925
        %v2934 = vcombine.high %v2909, %v2925
        %v2936 = vunpack.c.l.s4 1934713408
        %v2937 = vunpack.c.0.s8 %v2936
        %v2938 = vlaneseq
        %v2939 = vshrl.u32 %v2938, 7
        %v2940 = vsub.s32 %v2937, %v2939
        %v2941 = vrot.slane %v2933, %v2940
        %v2943 = vunpack.c.l.s4 1934713408
        %v2944 = vunpack.c.0.s8 %v2943
        %v2945 = vlaneseq
        %v2946 = vshrl.u32 %v2945, 7
        %v2947 = vsub.s32 %v2944, %v2946
        %v2948 = vrot.slane %v2934, %v2947
        %v2949 = vcombine.low %v2916, %v2932
        %v2950 = vcombine.high %v2916, %v2932
        %v2952 = vunpack.c.l.s4 1934713408
        %v2953 = vunpack.c.0.s8 %v2952
        %v2954 = vlaneseq
        %v2955 = vshrl.u32 %v2954, 7
        %v2956 = vsub.s32 %v2953, %v2955
        %v2957 = vrot.slane %v2949, %v2956
        %v2959 = vunpack.c.l.s4 1934713408
        %v2960 = vunpack.c.0.s8 %v2959
        %v2961 = vlaneseq
        %v2962 = vshrl.u32 %v2961, 7
        %v2963 = vsub.s32 %v2960, %v2962
        %v2964 = vrot.slane %v2950, %v2963
        %v2965 = vcombine.high %v2941, 0.0
        %v2966 = vcombine.high %v2948, 0.0
        %v2967 = vcombine.high %v2957, 0.0
        %v2968 = vcombine.high %v2964, 0.0
        %v2969 = vcombine.low %v2941, %v2948
        %v2971 = vunpack.c.l.s4 1983009808
        %v2972 = vunpack.c.0.s8 %v2971
        %v2973 = vlaneseq
        %v2974 = vshrl.u32 %v2973, 7
        %v2975 = vsub.s32 %v2972, %v2974
        %v2976 = vrot.slane %v2969, %v2975
        %v2977 = vcombine.low %v2965, %v2966
        %v2979 = vunpack.c.l.s4 1983009808
        %v2980 = vunpack.c.0.s8 %v2979
        %v2981 = vlaneseq
        %v2982 = vshrl.u32 %v2981, 7
        %v2983 = vsub.s32 %v2980, %v2982
        %v2984 = vrot.slane %v2977, %v2983
        %v2985 = vcombine.low %v2957, %v2964
        %v2987 = vunpack.c.l.s4 1983009808
        %v2988 = vunpack.c.0.s8 %v2987
        %v2989 = vlaneseq
        %v2990 = vshrl.u32 %v2989, 7
        %v2991 = vsub.s32 %v2988, %v2990
        %v2992 = vrot.slane %v2985, %v2991
        %v2993 = vcombine.low %v2967, %v2968
        %v2995 = vunpack.c.l.s4 1983009808
        %v2996 = vunpack.c.0.s8 %v2995
        %v2997 = vlaneseq
        %v2998 = vshrl.u32 %v2997, 7
        %v2999 = vsub.s32 %v2996, %v2998
        %v3000 = vrot.slane %v2993, %v2999
        %v3001 = vcombine.low %v2976, %v2984
        %v3002 = vcombine.high %v2976, %v2984
        %v3004 = vunpack.c.l.s4 1934713408
        %v3005 = vunpack.c.0.s8 %v3004
        %v3006 = vlaneseq
        %v3007 = vshrl.u32 %v3006, 7
        %v3008 = vsub.s32 %v3005, %v3007
        %v3009 = vrot.slane %v3001, %v3008
        %v3011 = vunpack.c.l.s4 1934713408
        %v3012 = vunpack.c.0.s8 %v3011
        %v3013 = vlaneseq
        %v3014 = vshrl.u32 %v3013, 7
        %v3015 = vsub.s32 %v3012, %v3014
        %v3016 = vrot.slane %v3002, %v3015
        %v3017 = vcombine.low %v2992, %v3000
        %v3018 = vcombine.high %v2992, %v3000
        %v3020 = vunpack.c.l.s4 1934713408
        %v3021 = vunpack.c.0.s8 %v3020
        %v3022 = vlaneseq
        %v3023 = vshrl.u32 %v3022, 7
        %v3024 = vsub.s32 %v3021, %v3023
        %v3025 = vrot.slane %v3017, %v3024
        %v3027 = vunpack.c.l.s4 1934713408
        %v3028 = vunpack.c.0.s8 %v3027
        %v3029 = vlaneseq
        %v3030 = vshrl.u32 %v3029, 7
        %v3031 = vsub.s32 %v3028, %v3030
        %v3032 = vrot.slane %v3018, %v3031
        %v3033 = vcombine.low %v3009, %v3025
        %v3034 = vcombine.high %v3009, %v3025
        %v3035 = vcombine.low %v3016, %v3032
        %v3036 = vcombine.high %v3016, %v3032
        %3038 = vrot.lane.b32.xlu0 %v3034, 32
        %v3039 = vpop.permute.xlu0 %3038
        %3042 = vrot.lane.b32.xlu0 %v3035, 64
        %v3043 = vpop.permute.xlu0 %3042
        %3046 = vrot.lane.b32.xlu0 %v3036, 96
        %v3047 = vpop.permute.xlu0 %3046
        %v3049 = vsel %vm1463, %v3033, %v3039
        %v3050 = vsel %vm2031, %v3049, %v3043
        %v3051 = vsel %vm2033, %v3050, %v3047
        %v3052 = vpack.c.bf16 %v3051, %v2034
        %v3053 = vlaneseq
        %v3054 = vshrl.u32 %v3053, 7
        %v3055 = vsub.s32 1, %v3054
        %v3056 = vrot.slane %v774, %v3055
        %v3073 = vunpack.c.l.b16 %v725
        %v3074 = vunpack.c.l.b16 %v726
        %v3075 = vunpack.c.l.b16 %v727
        %v3076 = vunpack.c.l.b16 %v728
        %v3077 = vunpack.c.l.b16 %v729
        %v3078 = vunpack.c.l.b16 %v730
        %v3079 = vunpack.c.l.b16 %v731
        %v3080 = vunpack.c.l.b16 %v732
        %v3081 = vunpack.c.l.b16 %v733
        %v3082 = vunpack.c.l.b16 %v734
        %v3083 = vunpack.c.l.b16 %v735
        %v3084 = vunpack.c.l.b16 %v736
        %v3085 = vunpack.c.l.b16 %v737
        %v3086 = vunpack.c.l.b16 %v738
        %v3087 = vunpack.c.l.b16 %v739
        %v3088 = vunpack.c.l.b16 %v740
        %v3089 = vpack.c.b16 %v3074, %v3073
        %v3090 = vpack.c.b16 %v3076, %v3075
        %v3091 = vpack.c.b16 %v3078, %v3077
        %v3092 = vpack.c.b16 %v3080, %v3079
        %v3093 = vpack.c.b16 %v3082, %v3081
        %v3094 = vpack.c.b16 %v3084, %v3083
        %v3095 = vpack.c.b16 %v3086, %v3085
        %v3096 = vpack.c.b16 %v3088, %v3087
        %3105 = vmatprep.subr.bf16.mxu0 0
        %3106 = vmatpush1.bf16.msra.mxu0 %v3089
        %3107 = vmatprep.subr.bf16.mxu0 0
        %3108 = vmatpush1.bf16.msra.mxu0 %v3090
        %3109 = vmatprep.subr.bf16.mxu0 0
        %3110 = vmatpush1.bf16.msra.mxu0 %v3091
        %3111 = vmatprep.subr.bf16.mxu0 0
        %3112 = vmatpush1.bf16.msra.mxu0 %v3092
        %3113 = vmatprep.subr.bf16.mxu0 0
        %3114 = vmatpush1.bf16.msra.mxu0 %v3093
        %3115 = vmatprep.subr.bf16.mxu0 0
        %3116 = vmatpush1.bf16.msra.mxu0 %v3094
        %3117 = vmatprep.subr.bf16.mxu0 0
        %3118 = vmatpush1.bf16.msra.mxu0 %v3095
        %3119 = vmatprep.subr.bf16.mxu0 0
        %3120 = vmatpush1.bf16.msra.mxu0 %v3096
        %3121 = vmatprep.subr.bf16.mxu0 0
        %3122 = vmatpush1.bf16.msra.mxu0 0
        %3123 = vmatprep.subr.bf16.mxu0 0
        %3124 = vmatpush1.bf16.msra.mxu0 0
        %3125 = vmatprep.subr.bf16.mxu0 0
        %3126 = vmatpush1.bf16.msra.mxu0 0
        %3127 = vmatprep.subr.bf16.mxu0 0
        %3128 = vmatpush1.bf16.msra.mxu0 0
        %3129 = vmatprep.subr.bf16.mxu0 0
        %3130 = vmatpush1.bf16.msra.mxu0 0
        %3131 = vmatprep.subr.bf16.mxu0 0
        %3132 = vmatpush1.bf16.msra.mxu0 0
        %3133 = vmatprep.subr.bf16.mxu0 0
        %3134 = vmatpush1.bf16.msra.mxu0 0
        %3135 = vmatprep.subr.bf16.mxu0 0
        %3136 = vmatpush1.bf16.msra.mxu0 0
        %3137 = vmatprep.mubr.bf16.mxu0 0
        %3138 = vmatmul.mubr.bf16.gmra.mrb[0].mxu0 %v3052
        %v3139 = vpop.f32.mrb[0].mxu0
        %v3140 = vadd.f32 %v3056, %v3139
        %v3141 = vpop.f32.mrb[0].mxu0
        %v3142 = vpop.f32.mrb[0].mxu0
        %v3143 = vadd.f32 %v3056, %v3142
        %v3144 = vpop.f32.mrb[0].mxu0
        %3145 = vdwg.mxu0
        %v3146 = vadd.f32 %v643, %v3140
        %v3147 = vadd.f32 %v644, %v3143
        %3148 = vadd.xlane.f32.xlu0 %v3146
        %v3149 = vpop.xlane.xlu0 %3148
        %3150 = vadd.xlane.f32.xlu0 %v3147
        %v3151 = vpop.xlane.xlu0 %3150
        %v3152 = vrcp.pop 128.0
        %v3153 = vmul.f32 %v3149, %v3152
        %v3154 = vmul.f32 %v3151, %v3152
        %v3155 = vsub.f32 %v3146, %v3153
        %v3156 = vsub.f32 %v3147, %v3154
        %v3157 = vmul.f32 %v3155, %v3155
        %v3158 = vmul.f32 %v3156, %v3156
        %3159 = vadd.xlane.f32.xlu0 %v3157
        %v3160 = vpop.xlane.xlu0 %3159
        %3161 = vadd.xlane.f32.xlu0 %v3158
        %v3162 = vpop.xlane.xlu0 %3161
        %v3163 = vmul.f32 %v3160, %v3152
        %v3164 = vmul.f32 %v3162, %v3152
        %v3165 = vadd.f32 %v3163, 1e-05
        %v3166 = vadd.f32 %v3164, 1e-05
        %v3167 = vrsqrt.pop %v3165
        %v3168 = vrsqrt.pop %v3166
        %v3169 = vmul.f32 %v3155, %v3167
        %v3170 = vmul.f32 %v3156, %v3168
        %v3171 = vlaneseq
        %v3172 = vshrl.u32 %v3171, 7
        %v3173 = vsub.s32 4, %v3172
        %v3174 = vrot.slane %v774, %v3173
        %v3175 = vmul.f32 %v3169, %v3174
        %v3176 = vmul.f32 %v3170, %v3174
        %v3177 = vlaneseq
        %v3178 = vshrl.u32 %v3177, 7
        %v3179 = vsub.s32 5, %v3178
        %v3180 = vrot.slane %v774, %v3179
        %v3181 = vadd.f32 %v3175, %v3180
        %v3182 = vadd.f32 %v3176, %v3180
        %v3183 = vpack.c.bf16 %v3182, %v3181
        %v3200 = vunpack.c.h.b16 %v646
        %v3201 = vunpack.c.l.b16 %v647
        %v3202 = vunpack.c.h.b16 %v651
        %v3203 = vunpack.c.l.b16 %v652
        %v3204 = vunpack.c.h.b16 %v656
        %v3205 = vunpack.c.l.b16 %v657
        %v3206 = vunpack.c.h.b16 %v661
        %v3207 = vunpack.c.l.b16 %v662
        %v3208 = vunpack.c.h.b16 %v666
        %v3209 = vunpack.c.l.b16 %v667
        %v3210 = vunpack.c.h.b16 %v671
        %v3211 = vunpack.c.l.b16 %v672
        %v3212 = vunpack.c.h.b16 %v676
        %v3213 = vunpack.c.l.b16 %v677
        %v3214 = vunpack.c.h.b16 %v681
        %v3215 = vunpack.c.l.b16 %v682
        %v3216 = vunpack.c.h.b16 %v686
        %v3217 = vunpack.c.l.b16 %v687
        %v3218 = vunpack.c.h.b16 %v691
        %v3219 = vunpack.c.l.b16 %v692
        %v3220 = vunpack.c.h.b16 %v696
        %v3221 = vunpack.c.l.b16 %v697
        %v3222 = vunpack.c.h.b16 %v701
        %v3223 = vunpack.c.l.b16 %v702
        %v3224 = vunpack.c.h.b16 %v706
        %v3225 = vunpack.c.l.b16 %v707
        %v3226 = vunpack.c.h.b16 %v711
        %v3227 = vunpack.c.l.b16 %v712
        %v3228 = vunpack.c.h.b16 %v716
        %v3229 = vunpack.c.l.b16 %v717
        %v3230 = vunpack.c.h.b16 %v721
        %v3231 = vunpack.c.l.b16 %v722
        %v3232 = vpack.c.b16 %v3202, %v3200
        %v3233 = vpack.c.b16 %v3203, %v3201
        %v3234 = vpack.c.b16 %v3206, %v3204
        %v3235 = vpack.c.b16 %v3207, %v3205
        %v3236 = vpack.c.b16 %v3210, %v3208
        %v3237 = vpack.c.b16 %v3211, %v3209
        %v3238 = vpack.c.b16 %v3214, %v3212
        %v3239 = vpack.c.b16 %v3215, %v3213
        %v3240 = vpack.c.b16 %v3218, %v3216
        %v3241 = vpack.c.b16 %v3219, %v3217
        %v3242 = vpack.c.b16 %v3222, %v3220
        %v3243 = vpack.c.b16 %v3223, %v3221
        %v3244 = vpack.c.b16 %v3226, %v3224
        %v3245 = vpack.c.b16 %v3227, %v3225
        %v3246 = vpack.c.b16 %v3230, %v3228
        %v3247 = vpack.c.b16 %v3231, %v3229
        %3264 = vmatprep.subr.bf16.mxu0 %v3233
        %3265 = vmatpush1.bf16.msra.mxu0 %v3232
        %3266 = vmatprep.subr.bf16.mxu0 %v3235
        %3267 = vmatpush1.bf16.msra.mxu0 %v3234
        %3268 = vmatprep.subr.bf16.mxu0 %v3237
        %3269 = vmatpush1.bf16.msra.mxu0 %v3236
        %3270 = vmatprep.subr.bf16.mxu0 %v3239
        %3271 = vmatpush1.bf16.msra.mxu0 %v3238
        %3272 = vmatprep.subr.bf16.mxu0 %v3241
        %3273 = vmatpush1.bf16.msra.mxu0 %v3240
        %3274 = vmatprep.subr.bf16.mxu0 %v3243
        %3275 = vmatpush1.bf16.msra.mxu0 %v3242
        %3276 = vmatprep.subr.bf16.mxu0 %v3245
        %3277 = vmatpush1.bf16.msra.mxu0 %v3244
        %3278 = vmatprep.subr.bf16.mxu0 %v3247
        %3279 = vmatpush1.bf16.msra.mxu0 %v3246
        %3280 = vmatprep.subr.bf16.mxu0 0
        %3281 = vmatpush1.bf16.msra.mxu0 0
        %3282 = vmatprep.subr.bf16.mxu0 0
        %3283 = vmatpush1.bf16.msra.mxu0 0
        %3284 = vmatprep.subr.bf16.mxu0 0
        %3285 = vmatpush1.bf16.msra.mxu0 0
        %3286 = vmatprep.subr.bf16.mxu0 0
        %3287 = vmatpush1.bf16.msra.mxu0 0
        %3288 = vmatprep.subr.bf16.mxu0 0
        %3289 = vmatpush1.bf16.msra.mxu0 0
        %3290 = vmatprep.subr.bf16.mxu0 0
        %3291 = vmatpush1.bf16.msra.mxu0 0
        %3292 = vmatprep.subr.bf16.mxu0 0
        %3293 = vmatpush1.bf16.msra.mxu0 0
        %3294 = vmatprep.subr.bf16.mxu0 0
        %3295 = vmatpush1.bf16.msra.mxu0 0
        %3296 = vmatprep.mubr.bf16.mxu0 0
        %3297 = vmatmul.mubr.bf16.gmra.mrb[0].mxu0 %v3183
        %v3298 = vpop.f32.mrb[0].mxu0
        %v3299 = vadd.f32 0.0, %v3298
        %v3300 = vpop.f32.mrb[0].mxu0
        %v3301 = vadd.f32 0.0, %v3300
        %v3302 = vpop.f32.mrb[0].mxu0
        %v3303 = vadd.f32 0.0, %v3302
        %v3304 = vpop.f32.mrb[0].mxu0
        %v3305 = vadd.f32 0.0, %v3304
        %3306 = vdwg.mxu0
        %v3311 = vunpack.c.l.b16 %v776
        %v3312 = vunpack.c.l.b16 %v777
        %v3313 = vunpack.c.l.b16 %v778
        %v3314 = vunpack.c.l.b16 %v779
        %v3315 = vpack.c.b16 %v3312, %v3311
        %v3316 = vpack.c.b16 %v3314, %v3313
        %v3335 = vunpack.c.h.b16 %v647
        %v3336 = vunpack.c.l.b16 %v648
        %v3337 = vunpack.c.h.b16 %v652
        %v3338 = vunpack.c.l.b16 %v653
        %v3339 = vunpack.c.h.b16 %v657
        %v3340 = vunpack.c.l.b16 %v658
        %v3341 = vunpack.c.h.b16 %v662
        %v3342 = vunpack.c.l.b16 %v663
        %v3343 = vunpack.c.h.b16 %v667
        %v3344 = vunpack.c.l.b16 %v668
        %v3345 = vunpack.c.h.b16 %v672
        %v3346 = vunpack.c.l.b16 %v673
        %v3347 = vunpack.c.h.b16 %v677
        %v3348 = vunpack.c.l.b16 %v678
        %v3349 = vunpack.c.h.b16 %v682
        %v3350 = vunpack.c.l.b16 %v683
        %v3351 = vunpack.c.h.b16 %v687
        %v3352 = vunpack.c.l.b16 %v688
        %v3353 = vunpack.c.h.b16 %v692
        %v3354 = vunpack.c.l.b16 %v693
        %v3355 = vunpack.c.h.b16 %v697
        %v3356 = vunpack.c.l.b16 %v698
        %v3357 = vunpack.c.h.b16 %v702
        %v3358 = vunpack.c.l.b16 %v703
        %v3359 = vunpack.c.h.b16 %v707
        %v3360 = vunpack.c.l.b16 %v708
        %v3361 = vunpack.c.h.b16 %v712
        %v3362 = vunpack.c.l.b16 %v713
        %v3363 = vunpack.c.h.b16 %v717
        %v3364 = vunpack.c.l.b16 %v718
        %v3365 = vunpack.c.h.b16 %v722
        %v3366 = vunpack.c.l.b16 %v723
        %v3367 = vpack.c.b16 %v3337, %v3335
        %v3368 = vpack.c.b16 %v3338, %v3336
        %v3369 = vpack.c.b16 %v3341, %v3339
        %v3370 = vpack.c.b16 %v3342, %v3340
        %v3371 = vpack.c.b16 %v3345, %v3343
        %v3372 = vpack.c.b16 %v3346, %v3344
        %v3373 = vpack.c.b16 %v3349, %v3347
        %v3374 = vpack.c.b16 %v3350, %v3348
        %v3375 = vpack.c.b16 %v3353, %v3351
        %v3376 = vpack.c.b16 %v3354, %v3352
        %v3377 = vpack.c.b16 %v3357, %v3355
        %v3378 = vpack.c.b16 %v3358, %v3356
        %v3379 = vpack.c.b16 %v3361, %v3359
        %v3380 = vpack.c.b16 %v3362, %v3360
        %v3381 = vpack.c.b16 %v3365, %v3363
        %v3382 = vpack.c.b16 %v3366, %v3364
        %3399 = vmatprep.subr.bf16.mxu0 %v3368
        %3400 = vmatpush1.bf16.msra.mxu0 %v3367
        %3401 = vmatprep.subr.bf16.mxu0 %v3370
        %3402 = vmatpush1.bf16.msra.mxu0 %v3369
        %3403 = vmatprep.subr.bf16.mxu0 %v3372
        %3404 = vmatpush1.bf16.msra.mxu0 %v3371
        %3405 = vmatprep.subr.bf16.mxu0 %v3374
        %3406 = vmatpush1.bf16.msra.mxu0 %v3373
        %3407 = vmatprep.subr.bf16.mxu0 %v3376
        %3408 = vmatpush1.bf16.msra.mxu0 %v3375
        %3409 = vmatprep.subr.bf16.mxu0 %v3378
        %3410 = vmatpush1.bf16.msra.mxu0 %v3377
        %3411 = vmatprep.subr.bf16.mxu0 %v3380
        %3412 = vmatpush1.bf16.msra.mxu0 %v3379
        %3413 = vmatprep.subr.bf16.mxu0 %v3382
        %3414 = vmatpush1.bf16.msra.mxu0 %v3381
        %3415 = vmatprep.subr.bf16.mxu0 0
        %3416 = vmatpush1.bf16.msra.mxu0 0
        %3417 = vmatprep.subr.bf16.mxu0 0
        %3418 = vmatpush1.bf16.msra.mxu0 0
        %3419 = vmatprep.subr.bf16.mxu0 0
        %3420 = vmatpush1.bf16.msra.mxu0 0
        %3421 = vmatprep.subr.bf16.mxu0 0
        %3422 = vmatpush1.bf16.msra.mxu0 0
        %3423 = vmatprep.subr.bf16.mxu0 0
        %3424 = vmatpush1.bf16.msra.mxu0 0
        %3425 = vmatprep.subr.bf16.mxu0 0
        %3426 = vmatpush1.bf16.msra.mxu0 0
        %3427 = vmatprep.subr.bf16.mxu0 0
        %3428 = vmatpush1.bf16.msra.mxu0 0
        %3429 = vmatprep.subr.bf16.mxu0 0
        %3430 = vmatpush1.bf16.msra.mxu0 0
        %3431 = vmatprep.mubr.bf16.mxu0 0
        %3432 = vmatmul.mubr.bf16.gmra.mrb[0].mxu0 %v3315
        %v3433 = vpop.f32.mrb[0].mxu0
        %v3434 = vadd.f32 0.0, %v3433
        %v3435 = vpop.f32.mrb[0].mxu0
        %v3436 = vadd.f32 0.0, %v3435
        %v3437 = vpop.f32.mrb[0].mxu0
        %v3438 = vadd.f32 0.0, %v3437
        %v3439 = vpop.f32.mrb[0].mxu0
        %v3440 = vadd.f32 0.0, %v3439
        %3441 = vmatprep.mubr.bf16.mxu0 0
        %3442 = vmatmul.mubr.bf16.gmra.mrb[0].mxu0 %v3316
        %v3443 = vpop.f32.mrb[0].mxu0
        %v3444 = vadd.f32 0.0, %v3443
        %v3445 = vpop.f32.mrb[0].mxu0
        %v3446 = vadd.f32 0.0, %v3445
        %v3447 = vpop.f32.mrb[0].mxu0
        %v3448 = vadd.f32 0.0, %v3447
        %v3449 = vpop.f32.mrb[0].mxu0
        %v3450 = vadd.f32 0.0, %v3449
        %3451 = vdwg.mxu0
        %v3454 = vunpack.c.l.b16 %v780
        %v3455 = vunpack.c.l.b16 %v781
        %v3456 = vpack.c.b16 %v3455, %v3454
        %v3474 = vunpack.c.h.b16 %v648
        %v3475 = vunpack.c.l.b16 %v649
        %v3476 = vunpack.c.h.b16 %v653
        %v3477 = vunpack.c.l.b16 %v654
        %v3478 = vunpack.c.h.b16 %v658
        %v3479 = vunpack.c.l.b16 %v659
        %v3480 = vunpack.c.h.b16 %v663
        %v3481 = vunpack.c.l.b16 %v664
        %v3482 = vunpack.c.h.b16 %v668
        %v3483 = vunpack.c.l.b16 %v669
        %v3484 = vunpack.c.h.b16 %v673
        %v3485 = vunpack.c.l.b16 %v674
        %v3486 = vunpack.c.h.b16 %v678
        %v3487 = vunpack.c.l.b16 %v679
        %v3488 = vunpack.c.h.b16 %v683
        %v3489 = vunpack.c.l.b16 %v684
        %v3490 = vunpack.c.h.b16 %v688
        %v3491 = vunpack.c.l.b16 %v689
        %v3492 = vunpack.c.h.b16 %v693
        %v3493 = vunpack.c.l.b16 %v694
        %v3494 = vunpack.c.h.b16 %v698
        %v3495 = vunpack.c.l.b16 %v699
        %v3496 = vunpack.c.h.b16 %v703
        %v3497 = vunpack.c.l.b16 %v704
        %v3498 = vunpack.c.h.b16 %v708
        %v3499 = vunpack.c.l.b16 %v709
        %v3500 = vunpack.c.h.b16 %v713
        %v3501 = vunpack.c.l.b16 %v714
        %v3502 = vunpack.c.h.b16 %v718
        %v3503 = vunpack.c.l.b16 %v719
        %v3504 = vunpack.c.h.b16 %v723
        %v3505 = vunpack.c.l.b16 %v724
        %v3506 = vpack.c.b16 %v3476, %v3474
        %v3507 = vpack.c.b16 %v3477, %v3475
        %v3508 = vpack.c.b16 %v3480, %v3478
        %v3509 = vpack.c.b16 %v3481, %v3479
        %v3510 = vpack.c.b16 %v3484, %v3482
        %v3511 = vpack.c.b16 %v3485, %v3483
        %v3512 = vpack.c.b16 %v3488, %v3486
        %v3513 = vpack.c.b16 %v3489, %v3487
        %v3514 = vpack.c.b16 %v3492, %v3490
        %v3515 = vpack.c.b16 %v3493, %v3491
        %v3516 = vpack.c.b16 %v3496, %v3494
        %v3517 = vpack.c.b16 %v3497, %v3495
        %v3518 = vpack.c.b16 %v3500, %v3498
        %v3519 = vpack.c.b16 %v3501, %v3499
        %v3520 = vpack.c.b16 %v3504, %v3502
        %v3521 = vpack.c.b16 %v3505, %v3503
        %3538 = vmatprep.subr.bf16.mxu0 %v3507
        %3539 = vmatpush1.bf16.msra.mxu0 %v3506
        %3540 = vmatprep.subr.bf16.mxu0 %v3509
        %3541 = vmatpush1.bf16.msra.mxu0 %v3508
        %3542 = vmatprep.subr.bf16.mxu0 %v3511
        %3543 = vmatpush1.bf16.msra.mxu0 %v3510
        %3544 = vmatprep.subr.bf16.mxu0 %v3513
        %3545 = vmatpush1.bf16.msra.mxu0 %v3512
        %3546 = vmatprep.subr.bf16.mxu0 %v3515
        %3547 = vmatpush1.bf16.msra.mxu0 %v3514
        %3548 = vmatprep.subr.bf16.mxu0 %v3517
        %3549 = vmatpush1.bf16.msra.mxu0 %v3516
        %3550 = vmatprep.subr.bf16.mxu0 %v3519
        %3551 = vmatpush1.bf16.msra.mxu0 %v3518
        %3552 = vmatprep.subr.bf16.mxu0 %v3521
        %3553 = vmatpush1.bf16.msra.mxu0 %v3520
        %3554 = vmatprep.subr.bf16.mxu0 0
        %3555 = vmatpush1.bf16.msra.mxu0 0
        %3556 = vmatprep.subr.bf16.mxu0 0
        %3557 = vmatpush1.bf16.msra.mxu0 0
        %3558 = vmatprep.subr.bf16.mxu0 0
        %3559 = vmatpush1.bf16.msra.mxu0 0
        %3560 = vmatprep.subr.bf16.mxu0 0
        %3561 = vmatpush1.bf16.msra.mxu0 0
        %3562 = vmatprep.subr.bf16.mxu0 0
        %3563 = vmatpush1.bf16.msra.mxu0 0
        %3564 = vmatprep.subr.bf16.mxu0 0
        %3565 = vmatpush1.bf16.msra.mxu0 0
        %3566 = vmatprep.subr.bf16.mxu0 0
        %3567 = vmatpush1.bf16.msra.mxu0 0
        %3568 = vmatprep.subr.bf16.mxu0 0
        %3569 = vmatpush1.bf16.msra.mxu0 0
        %3570 = vmatprep.mubr.bf16.mxu0 0
        %3571 = vmatmul.mubr.bf16.gmra.mrb[0].mxu0 %v3456
        %v3572 = vpop.f32.mrb[0].mxu0
        %v3573 = vadd.f32 0.0, %v3572
        %v3574 = vpop.f32.mrb[0].mxu0
        %v3575 = vadd.f32 0.0, %v3574
        %v3576 = vpop.f32.mrb[0].mxu0
        %v3577 = vadd.f32 0.0, %v3576
        %v3578 = vpop.f32.mrb[0].mxu0
        %v3579 = vadd.f32 0.0, %v3578
        %3580 = vdwg.mxu0
        %v3581 = vlaneseq
        %v3582 = vshrl.u32 %v3581, 7
        %v3583 = vsub.s32 3, %v3582
        %v3584 = vrot.slane %v773, %v3583
        %v3585 = vadd.f32 %v3299, %v3584
        %v3586 = vadd.f32 %v3303, %v3584
        %v3587 = vlaneseq
        %v3588 = vshrl.u32 %v3587, 7
        %v3589 = vsub.s32 5, %v3588
        %v3590 = vrot.slane %v773, %v3589
        %v3591 = vadd.f32 %v3434, %v3590
        %v3592 = vadd.f32 %v3438, %v3590
        %v3593 = vadd.f32 %v3444, %v3590
        %v3594 = vadd.f32 %v3448, %v3590
        %v3595 = vlaneseq
        %v3596 = vshrl.u32 %v3595, 7
        %v3597 = vsub.s32 6, %v3596
        %v3598 = vrot.slane %v773, %v3597
        %v3599 = vadd.f32 %v3436, %v3598
        %v3600 = vadd.f32 %v3440, %v3598
        %v3601 = vadd.f32 %v3446, %v3598
        %v3602 = vadd.f32 %v3450, %v3598
        %3604 = vrot.lane.b32.xlu0 %v3585, 96
        %v3605 = vpop.permute.xlu0 %3604
        %3607 = vrot.lane.b32.xlu0 %v3585, 64
        %v3608 = vpop.permute.xlu0 %3607
        %3610 = vrot.lane.b32.xlu0 %v3585, 32
        %v3611 = vpop.permute.xlu0 %3610
        %v3613 = vcombine.low %v3585, %v3608
        %v3614 = vcombine.high %v3585, %v3608
        %v3616 = vunpack.c.l.s4 1983009808
        %v3617 = vunpack.c.0.s8 %v3616
        %v3618 = vlaneseq
        %v3619 = vshrl.u32 %v3618, 7
        %v3620 = vsub.s32 %v3617, %v3619
        %v3621 = vrot.slane %v3613, %v3620
        %v3623 = vunpack.c.l.s4 1983009808
        %v3624 = vunpack.c.0.s8 %v3623
        %v3625 = vlaneseq
        %v3626 = vshrl.u32 %v3625, 7
        %v3627 = vsub.s32 %v3624, %v3626
        %v3628 = vrot.slane %v3614, %v3627
        %v3629 = vcombine.low %v3605, %v3611
        %v3630 = vcombine.high %v3605, %v3611
        %v3632 = vunpack.c.l.s4 1983009808
        %v3633 = vunpack.c.0.s8 %v3632
        %v3634 = vlaneseq
        %v3635 = vshrl.u32 %v3634, 7
        %v3636 = vsub.s32 %v3633, %v3635
        %v3637 = vrot.slane %v3629, %v3636
        %v3639 = vunpack.c.l.s4 1983009808
        %v3640 = vunpack.c.0.s8 %v3639
        %v3641 = vlaneseq
        %v3642 = vshrl.u32 %v3641, 7
        %v3643 = vsub.s32 %v3640, %v3642
        %v3644 = vrot.slane %v3630, %v3643
        %v3645 = vcombine.low %v3621, %v3637
        %v3646 = vcombine.high %v3621, %v3637
        %v3648 = vunpack.c.l.s4 1934713408
        %v3649 = vunpack.c.0.s8 %v3648
        %v3650 = vlaneseq
        %v3651 = vshrl.u32 %v3650, 7
        %v3652 = vsub.s32 %v3649, %v3651
        %v3653 = vrot.slane %v3645, %v3652
        %v3655 = vunpack.c.l.s4 1934713408
        %v3656 = vunpack.c.0.s8 %v3655
        %v3657 = vlaneseq
        %v3658 = vshrl.u32 %v3657, 7
        %v3659 = vsub.s32 %v3656, %v3658
        %v3660 = vrot.slane %v3646, %v3659
        %v3661 = vcombine.low %v3628, %v3644
        %v3662 = vcombine.high %v3628, %v3644
        %v3664 = vunpack.c.l.s4 1934713408
        %v3665 = vunpack.c.0.s8 %v3664
        %v3666 = vlaneseq
        %v3667 = vshrl.u32 %v3666, 7
        %v3668 = vsub.s32 %v3665, %v3667
        %v3669 = vrot.slane %v3661, %v3668
        %v3671 = vunpack.c.l.s4 1934713408
        %v3672 = vunpack.c.0.s8 %v3671
        %v3673 = vlaneseq
        %v3674 = vshrl.u32 %v3673, 7
        %v3675 = vsub.s32 %v3672, %v3674
        %v3676 = vrot.slane %v3662, %v3675
        %v3677 = vcombine.high %v3653, 0.0
        %v3678 = vcombine.high %v3660, 0.0
        %v3679 = vcombine.high %v3669, 0.0
        %v3680 = vcombine.high %v3676, 0.0
        %v3681 = vcombine.low %v3653, %v3660
        %v3683 = vunpack.c.l.s4 1983009808
        %v3684 = vunpack.c.0.s8 %v3683
        %v3685 = vlaneseq
        %v3686 = vshrl.u32 %v3685, 7
        %v3687 = vsub.s32 %v3684, %v3686
        %v3688 = vrot.slane %v3681, %v3687
        %v3689 = vcombine.low %v3677, %v3678
        %v3691 = vunpack.c.l.s4 1983009808
        %v3692 = vunpack.c.0.s8 %v3691
        %v3693 = vlaneseq
        %v3694 = vshrl.u32 %v3693, 7
        %v3695 = vsub.s32 %v3692, %v3694
        %v3696 = vrot.slane %v3689, %v3695
        %v3697 = vcombine.low %v3669, %v3676
        %v3699 = vunpack.c.l.s4 1983009808
        %v3700 = vunpack.c.0.s8 %v3699
        %v3701 = vlaneseq
        %v3702 = vshrl.u32 %v3701, 7
        %v3703 = vsub.s32 %v3700, %v3702
        %v3704 = vrot.slane %v3697, %v3703
        %v3705 = vcombine.low %v3679, %v3680
        %v3707 = vunpack.c.l.s4 1983009808
        %v3708 = vunpack.c.0.s8 %v3707
        %v3709 = vlaneseq
        %v3710 = vshrl.u32 %v3709, 7
        %v3711 = vsub.s32 %v3708, %v3710
        %v3712 = vrot.slane %v3705, %v3711
        %v3713 = vcombine.low %v3688, %v3696
        %v3714 = vcombine.high %v3688, %v3696
        %v3716 = vunpack.c.l.s4 1934713408
        %v3717 = vunpack.c.0.s8 %v3716
        %v3718 = vlaneseq
        %v3719 = vshrl.u32 %v3718, 7
        %v3720 = vsub.s32 %v3717, %v3719
        %v3721 = vrot.slane %v3713, %v3720
        %v3723 = vunpack.c.l.s4 1934713408
        %v3724 = vunpack.c.0.s8 %v3723
        %v3725 = vlaneseq
        %v3726 = vshrl.u32 %v3725, 7
        %v3727 = vsub.s32 %v3724, %v3726
        %v3728 = vrot.slane %v3714, %v3727
        %v3729 = vcombine.low %v3704, %v3712
        %v3730 = vcombine.high %v3704, %v3712
        %v3732 = vunpack.c.l.s4 1934713408
        %v3733 = vunpack.c.0.s8 %v3732
        %v3734 = vlaneseq
        %v3735 = vshrl.u32 %v3734, 7
        %v3736 = vsub.s32 %v3733, %v3735
        %v3737 = vrot.slane %v3729, %v3736
        %v3739 = vunpack.c.l.s4 1934713408
        %v3740 = vunpack.c.0.s8 %v3739
        %v3741 = vlaneseq
        %v3742 = vshrl.u32 %v3741, 7
        %v3743 = vsub.s32 %v3740, %v3742
        %v3744 = vrot.slane %v3730, %v3743
        %v3745 = vcombine.low %v3721, %v3737
        %v3746 = vcombine.high %v3721, %v3737
        %v3747 = vcombine.low %v3728, %v3744
        %v3748 = vcombine.high %v3728, %v3744
        %v3749 = vpack.c.bf16 %v3745, %v3745
        %v3750 = vpack.c.bf16 %v3746, %v3746
        %v3751 = vpack.c.bf16 %v3747, %v3747
        %v3752 = vpack.c.bf16 %v3748, %v3748
        %3755 = vrot.lane.b32.xlu0 %v3591, 96
        %v3756 = vpop.permute.xlu0 %3755
        %3757 = vrot.lane.b32.xlu0 %v3592, 96
        %v3758 = vpop.permute.xlu0 %3757
        %3761 = vrot.lane.b32.xlu0 %v3591, 64
        %v3762 = vpop.permute.xlu0 %3761
        %3763 = vrot.lane.b32.xlu0 %v3592, 64
        %v3764 = vpop.permute.xlu0 %3763
        %3767 = vrot.lane.b32.xlu0 %v3591, 32
        %v3768 = vpop.permute.xlu0 %3767
        %3769 = vrot.lane.b32.xlu0 %v3592, 32
        %v3770 = vpop.permute.xlu0 %3769
        %v3773 = vcombine.low %v3591, %v3762
        %v3774 = vcombine.high %v3591, %v3762
        %v3776 = vunpack.c.l.s4 1983009808
        %v3777 = vunpack.c.0.s8 %v3776
        %v3778 = vlaneseq
        %v3779 = vshrl.u32 %v3778, 7
        %v3780 = vsub.s32 %v3777, %v3779
        %v3781 = vrot.slane %v3773, %v3780
        %v3783 = vunpack.c.l.s4 1983009808
        %v3784 = vunpack.c.0.s8 %v3783
        %v3785 = vlaneseq
        %v3786 = vshrl.u32 %v3785, 7
        %v3787 = vsub.s32 %v3784, %v3786
        %v3788 = vrot.slane %v3774, %v3787
        %v3789 = vcombine.low %v3756, %v3768
        %v3790 = vcombine.high %v3756, %v3768
        %v3792 = vunpack.c.l.s4 1983009808
        %v3793 = vunpack.c.0.s8 %v3792
        %v3794 = vlaneseq
        %v3795 = vshrl.u32 %v3794, 7
        %v3796 = vsub.s32 %v3793, %v3795
        %v3797 = vrot.slane %v3789, %v3796
        %v3799 = vunpack.c.l.s4 1983009808
        %v3800 = vunpack.c.0.s8 %v3799
        %v3801 = vlaneseq
        %v3802 = vshrl.u32 %v3801, 7
        %v3803 = vsub.s32 %v3800, %v3802
        %v3804 = vrot.slane %v3790, %v3803
        %v3805 = vcombine.low %v3781, %v3797
        %v3806 = vcombine.high %v3781, %v3797
        %v3808 = vunpack.c.l.s4 1934713408
        %v3809 = vunpack.c.0.s8 %v3808
        %v3810 = vlaneseq
        %v3811 = vshrl.u32 %v3810, 7
        %v3812 = vsub.s32 %v3809, %v3811
        %v3813 = vrot.slane %v3805, %v3812
        %v3815 = vunpack.c.l.s4 1934713408
        %v3816 = vunpack.c.0.s8 %v3815
        %v3817 = vlaneseq
        %v3818 = vshrl.u32 %v3817, 7
        %v3819 = vsub.s32 %v3816, %v3818
        %v3820 = vrot.slane %v3806, %v3819
        %v3821 = vcombine.low %v3788, %v3804
        %v3822 = vcombine.high %v3788, %v3804
        %v3824 = vunpack.c.l.s4 1934713408
        %v3825 = vunpack.c.0.s8 %v3824
        %v3826 = vlaneseq
        %v3827 = vshrl.u32 %v3826, 7
        %v3828 = vsub.s32 %v3825, %v3827
        %v3829 = vrot.slane %v3821, %v3828
        %v3831 = vunpack.c.l.s4 1934713408
        %v3832 = vunpack.c.0.s8 %v3831
        %v3833 = vlaneseq
        %v3834 = vshrl.u32 %v3833, 7
        %v3835 = vsub.s32 %v3832, %v3834
        %v3836 = vrot.slane %v3822, %v3835
        %v3837 = vcombine.high %v3813, 0.0
        %v3838 = vcombine.high %v3820, 0.0
        %v3839 = vcombine.high %v3829, 0.0
        %v3840 = vcombine.high %v3836, 0.0
        %v3841 = vcombine.low %v3592, %v3764
        %v3842 = vcombine.high %v3592, %v3764
        %v3844 = vunpack.c.l.s4 1983009808
        %v3845 = vunpack.c.0.s8 %v3844
        %v3846 = vlaneseq
        %v3847 = vshrl.u32 %v3846, 7
        %v3848 = vsub.s32 %v3845, %v3847
        %v3849 = vrot.slane %v3841, %v3848
        %v3851 = vunpack.c.l.s4 1983009808
        %v3852 = vunpack.c.0.s8 %v3851
        %v3853 = vlaneseq
        %v3854 = vshrl.u32 %v3853, 7
        %v3855 = vsub.s32 %v3852, %v3854
        %v3856 = vrot.slane %v3842, %v3855
        %v3857 = vcombine.low %v3758, %v3770
        %v3858 = vcombine.high %v3758, %v3770
        %v3860 = vunpack.c.l.s4 1983009808
        %v3861 = vunpack.c.0.s8 %v3860
        %v3862 = vlaneseq
        %v3863 = vshrl.u32 %v3862, 7
        %v3864 = vsub.s32 %v3861, %v3863
        %v3865 = vrot.slane %v3857, %v3864
        %v3867 = vunpack.c.l.s4 1983009808
        %v3868 = vunpack.c.0.s8 %v3867
        %v3869 = vlaneseq
        %v3870 = vshrl.u32 %v3869, 7
        %v3871 = vsub.s32 %v3868, %v3870
        %v3872 = vrot.slane %v3858, %v3871
        %v3873 = vcombine.low %v3849, %v3865
        %v3874 = vcombine.high %v3849, %v3865
        %v3876 = vunpack.c.l.s4 1934713408
        %v3877 = vunpack.c.0.s8 %v3876
        %v3878 = vlaneseq
        %v3879 = vshrl.u32 %v3878, 7
        %v3880 = vsub.s32 %v3877, %v3879
        %v3881 = vrot.slane %v3873, %v3880
        %v3883 = vunpack.c.l.s4 1934713408
        %v3884 = vunpack.c.0.s8 %v3883
        %v3885 = vlaneseq
        %v3886 = vshrl.u32 %v3885, 7
        %v3887 = vsub.s32 %v3884, %v3886
        %v3888 = vrot.slane %v3874, %v3887
        %v3889 = vcombine.low %v3856, %v3872
        %v3890 = vcombine.high %v3856, %v3872
        %v3892 = vunpack.c.l.s4 1934713408
        %v3893 = vunpack.c.0.s8 %v3892
        %v3894 = vlaneseq
        %v3895 = vshrl.u32 %v3894, 7
        %v3896 = vsub.s32 %v3893, %v3895
        %v3897 = vrot.slane %v3889, %v3896
        %v3899 = vunpack.c.l.s4 1934713408
        %v3900 = vunpack.c.0.s8 %v3899
        %v3901 = vlaneseq
        %v3902 = vshrl.u32 %v3901, 7
        %v3903 = vsub.s32 %v3900, %v3902
        %v3904 = vrot.slane %v3890, %v3903
        %v3905 = vcombine.high %v3881, 0.0
        %v3906 = vcombine.high %v3888, 0.0
        %v3907 = vcombine.high %v3897, 0.0
        %v3908 = vcombine.high %v3904, 0.0
        %v3909 = vcombine.low %v3813, %v3820
        %v3911 = vunpack.c.l.s4 1983009808
        %v3912 = vunpack.c.0.s8 %v3911
        %v3913 = vlaneseq
        %v3914 = vshrl.u32 %v3913, 7
        %v3915 = vsub.s32 %v3912, %v3914
        %v3916 = vrot.slane %v3909, %v3915
        %v3917 = vcombine.low %v3837, %v3838
        %v3919 = vunpack.c.l.s4 1983009808
        %v3920 = vunpack.c.0.s8 %v3919
        %v3921 = vlaneseq
        %v3922 = vshrl.u32 %v3921, 7
        %v3923 = vsub.s32 %v3920, %v3922
        %v3924 = vrot.slane %v3917, %v3923
        %v3925 = vcombine.low %v3829, %v3836
        %v3927 = vunpack.c.l.s4 1983009808
        %v3928 = vunpack.c.0.s8 %v3927
        %v3929 = vlaneseq
        %v3930 = vshrl.u32 %v3929, 7
        %v3931 = vsub.s32 %v3928, %v3930
        %v3932 = vrot.slane %v3925, %v3931
        %v3933 = vcombine.low %v3839, %v3840
        %v3935 = vunpack.c.l.s4 1983009808
        %v3936 = vunpack.c.0.s8 %v3935
        %v3937 = vlaneseq
        %v3938 = vshrl.u32 %v3937, 7
        %v3939 = vsub.s32 %v3936, %v3938
        %v3940 = vrot.slane %v3933, %v3939
        %v3941 = vcombine.low %v3916, %v3924
        %v3942 = vcombine.high %v3916, %v3924
        %v3944 = vunpack.c.l.s4 1934713408
        %v3945 = vunpack.c.0.s8 %v3944
        %v3946 = vlaneseq
        %v3947 = vshrl.u32 %v3946, 7
        %v3948 = vsub.s32 %v3945, %v3947
        %v3949 = vrot.slane %v3941, %v3948
        %v3951 = vunpack.c.l.s4 1934713408
        %v3952 = vunpack.c.0.s8 %v3951
        %v3953 = vlaneseq
        %v3954 = vshrl.u32 %v3953, 7
        %v3955 = vsub.s32 %v3952, %v3954
        %v3956 = vrot.slane %v3942, %v3955
        %v3957 = vcombine.low %v3932, %v3940
        %v3958 = vcombine.high %v3932, %v3940
        %v3960 = vunpack.c.l.s4 1934713408
        %v3961 = vunpack.c.0.s8 %v3960
        %v3962 = vlaneseq
        %v3963 = vshrl.u32 %v3962, 7
        %v3964 = vsub.s32 %v3961, %v3963
        %v3965 = vrot.slane %v3957, %v3964
        %v3967 = vunpack.c.l.s4 1934713408
        %v3968 = vunpack.c.0.s8 %v3967
        %v3969 = vlaneseq
        %v3970 = vshrl.u32 %v3969, 7
        %v3971 = vsub.s32 %v3968, %v3970
        %v3972 = vrot.slane %v3958, %v3971
        %v3973 = vcombine.low %v3949, %v3965
        %v3974 = vcombine.high %v3949, %v3965
        %v3975 = vcombine.low %v3956, %v3972
        %v3976 = vcombine.high %v3956, %v3972
        %v3977 = vcombine.low %v3881, %v3888
        %v3979 = vunpack.c.l.s4 1983009808
        %v3980 = vunpack.c.0.s8 %v3979
        %v3981 = vlaneseq
        %v3982 = vshrl.u32 %v3981, 7
        %v3983 = vsub.s32 %v3980, %v3982
        %v3984 = vrot.slane %v3977, %v3983
        %v3985 = vcombine.low %v3905, %v3906
        %v3987 = vunpack.c.l.s4 1983009808
        %v3988 = vunpack.c.0.s8 %v3987
        %v3989 = vlaneseq
        %v3990 = vshrl.u32 %v3989, 7
        %v3991 = vsub.s32 %v3988, %v3990
        %v3992 = vrot.slane %v3985, %v3991
        %v3993 = vcombine.low %v3897, %v3904
        %v3995 = vunpack.c.l.s4 1983009808
        %v3996 = vunpack.c.0.s8 %v3995
        %v3997 = vlaneseq
        %v3998 = vshrl.u32 %v3997, 7
        %v3999 = vsub.s32 %v3996, %v3998
        %v4000 = vrot.slane %v3993, %v3999
        %v4001 = vcombine.low %v3907, %v3908
        %v4003 = vunpack.c.l.s4 1983009808
        %v4004 = vunpack.c.0.s8 %v4003
        %v4005 = vlaneseq
        %v4006 = vshrl.u32 %v4005, 7
        %v4007 = vsub.s32 %v4004, %v4006
        %v4008 = vrot.slane %v4001, %v4007
        %v4009 = vcombine.low %v3984, %v3992
        %v4010 = vcombine.high %v3984, %v3992
        %v4012 = vunpack.c.l.s4 1934713408
        %v4013 = vunpack.c.0.s8 %v4012
        %v4014 = vlaneseq
        %v4015 = vshrl.u32 %v4014, 7
        %v4016 = vsub.s32 %v4013, %v4015
        %v4017 = vrot.slane %v4009, %v4016
        %v4019 = vunpack.c.l.s4 1934713408
        %v4020 = vunpack.c.0.s8 %v4019
        %v4021 = vlaneseq
        %v4022 = vshrl.u32 %v4021, 7
        %v4023 = vsub.s32 %v4020, %v4022
        %v4024 = vrot.slane %v4010, %v4023
        %v4025 = vcombine.low %v4000, %v4008
        %v4026 = vcombine.high %v4000, %v4008
        %v4028 = vunpack.c.l.s4 1934713408
        %v4029 = vunpack.c.0.s8 %v4028
        %v4030 = vlaneseq
        %v4031 = vshrl.u32 %v4030, 7
        %v4032 = vsub.s32 %v4029, %v4031
        %v4033 = vrot.slane %v4025, %v4032
        %v4035 = vunpack.c.l.s4 1934713408
        %v4036 = vunpack.c.0.s8 %v4035
        %v4037 = vlaneseq
        %v4038 = vshrl.u32 %v4037, 7
        %v4039 = vsub.s32 %v4036, %v4038
        %v4040 = vrot.slane %v4026, %v4039
        %v4041 = vcombine.low %v4017, %v4033
        %v4042 = vcombine.high %v4017, %v4033
        %v4043 = vcombine.low %v4024, %v4040
        %v4044 = vcombine.high %v4024, %v4040
        %v4045 = vpack.c.bf16 %v4041, %v3973
        %v4046 = vpack.c.bf16 %v4042, %v3974
        %v4047 = vpack.c.bf16 %v4043, %v3975
        %v4048 = vpack.c.bf16 %v4044, %v3976
        %4051 = vrot.lane.b32.xlu0 %v3599, 96
        %v4052 = vpop.permute.xlu0 %4051
        %4053 = vrot.lane.b32.xlu0 %v3600, 96
        %v4054 = vpop.permute.xlu0 %4053
        %4057 = vrot.lane.b32.xlu0 %v3599, 64
        %v4058 = vpop.permute.xlu0 %4057
        %4059 = vrot.lane.b32.xlu0 %v3600, 64
        %v4060 = vpop.permute.xlu0 %4059
        %4063 = vrot.lane.b32.xlu0 %v3599, 32
        %v4064 = vpop.permute.xlu0 %4063
        %4065 = vrot.lane.b32.xlu0 %v3600, 32
        %v4066 = vpop.permute.xlu0 %4065
        %v4069 = vcombine.low %v3599, %v4058
        %v4070 = vcombine.high %v3599, %v4058
        %v4072 = vunpack.c.l.s4 1983009808
        %v4073 = vunpack.c.0.s8 %v4072
        %v4074 = vlaneseq
        %v4075 = vshrl.u32 %v4074, 7
        %v4076 = vsub.s32 %v4073, %v4075
        %v4077 = vrot.slane %v4069, %v4076
        %v4079 = vunpack.c.l.s4 1983009808
        %v4080 = vunpack.c.0.s8 %v4079
        %v4081 = vlaneseq
        %v4082 = vshrl.u32 %v4081, 7
        %v4083 = vsub.s32 %v4080, %v4082
        %v4084 = vrot.slane %v4070, %v4083
        %v4085 = vcombine.low %v4052, %v4064
        %v4086 = vcombine.high %v4052, %v4064
        %v4088 = vunpack.c.l.s4 1983009808
        %v4089 = vunpack.c.0.s8 %v4088
        %v4090 = vlaneseq
        %v4091 = vshrl.u32 %v4090, 7
        %v4092 = vsub.s32 %v4089, %v4091
        %v4093 = vrot.slane %v4085, %v4092
        %v4095 = vunpack.c.l.s4 1983009808
        %v4096 = vunpack.c.0.s8 %v4095
        %v4097 = vlaneseq
        %v4098 = vshrl.u32 %v4097, 7
        %v4099 = vsub.s32 %v4096, %v4098
        %v4100 = vrot.slane %v4086, %v4099
        %v4101 = vcombine.low %v4077, %v4093
        %v4102 = vcombine.high %v4077, %v4093
        %v4104 = vunpack.c.l.s4 1934713408
        %v4105 = vunpack.c.0.s8 %v4104
        %v4106 = vlaneseq
        %v4107 = vshrl.u32 %v4106, 7
        %v4108 = vsub.s32 %v4105, %v4107
        %v4109 = vrot.slane %v4101, %v4108
        %v4111 = vunpack.c.l.s4 1934713408
        %v4112 = vunpack.c.0.s8 %v4111
        %v4113 = vlaneseq
        %v4114 = vshrl.u32 %v4113, 7
        %v4115 = vsub.s32 %v4112, %v4114
        %v4116 = vrot.slane %v4102, %v4115
        %v4117 = vcombine.low %v4084, %v4100
        %v4118 = vcombine.high %v4084, %v4100
        %v4120 = vunpack.c.l.s4 1934713408
        %v4121 = vunpack.c.0.s8 %v4120
        %v4122 = vlaneseq
        %v4123 = vshrl.u32 %v4122, 7
        %v4124 = vsub.s32 %v4121, %v4123
        %v4125 = vrot.slane %v4117, %v4124
        %v4127 = vunpack.c.l.s4 1934713408
        %v4128 = vunpack.c.0.s8 %v4127
        %v4129 = vlaneseq
        %v4130 = vshrl.u32 %v4129, 7
        %v4131 = vsub.s32 %v4128, %v4130
        %v4132 = vrot.slane %v4118, %v4131
        %v4133 = vcombine.high %v4109, 0.0
        %v4134 = vcombine.high %v4116, 0.0
        %v4135 = vcombine.high %v4125, 0.0
        %v4136 = vcombine.high %v4132, 0.0
        %v4137 = vcombine.low %v3600, %v4060
        %v4138 = vcombine.high %v3600, %v4060
        %v4140 = vunpack.c.l.s4 1983009808
        %v4141 = vunpack.c.0.s8 %v4140
        %v4142 = vlaneseq
        %v4143 = vshrl.u32 %v4142, 7
        %v4144 = vsub.s32 %v4141, %v4143
        %v4145 = vrot.slane %v4137, %v4144
        %v4147 = vunpack.c.l.s4 1983009808
        %v4148 = vunpack.c.0.s8 %v4147
        %v4149 = vlaneseq
        %v4150 = vshrl.u32 %v4149, 7
        %v4151 = vsub.s32 %v4148, %v4150
        %v4152 = vrot.slane %v4138, %v4151
        %v4153 = vcombine.low %v4054, %v4066
        %v4154 = vcombine.high %v4054, %v4066
        %v4156 = vunpack.c.l.s4 1983009808
        %v4157 = vunpack.c.0.s8 %v4156
        %v4158 = vlaneseq
        %v4159 = vshrl.u32 %v4158, 7
        %v4160 = vsub.s32 %v4157, %v4159
        %v4161 = vrot.slane %v4153, %v4160
        %v4163 = vunpack.c.l.s4 1983009808
        %v4164 = vunpack.c.0.s8 %v4163
        %v4165 = vlaneseq
        %v4166 = vshrl.u32 %v4165, 7
        %v4167 = vsub.s32 %v4164, %v4166
        %v4168 = vrot.slane %v4154, %v4167
        %v4169 = vcombine.low %v4145, %v4161
        %v4170 = vcombine.high %v4145, %v4161
        %v4172 = vunpack.c.l.s4 1934713408
        %v4173 = vunpack.c.0.s8 %v4172
        %v4174 = vlaneseq
        %v4175 = vshrl.u32 %v4174, 7
        %v4176 = vsub.s32 %v4173, %v4175
        %v4177 = vrot.slane %v4169, %v4176
        %v4179 = vunpack.c.l.s4 1934713408
        %v4180 = vunpack.c.0.s8 %v4179
        %v4181 = vlaneseq
        %v4182 = vshrl.u32 %v4181, 7
        %v4183 = vsub.s32 %v4180, %v4182
        %v4184 = vrot.slane %v4170, %v4183
        %v4185 = vcombine.low %v4152, %v4168
        %v4186 = vcombine.high %v4152, %v4168
        %v4188 = vunpack.c.l.s4 1934713408
        %v4189 = vunpack.c.0.s8 %v4188
        %v4190 = vlaneseq
        %v4191 = vshrl.u32 %v4190, 7
        %v4192 = vsub.s32 %v4189, %v4191
        %v4193 = vrot.slane %v4185, %v4192
        %v4195 = vunpack.c.l.s4 1934713408
        %v4196 = vunpack.c.0.s8 %v4195
        %v4197 = vlaneseq
        %v4198 = vshrl.u32 %v4197, 7
        %v4199 = vsub.s32 %v4196, %v4198
        %v4200 = vrot.slane %v4186, %v4199
        %v4201 = vcombine.high %v4177, 0.0
        %v4202 = vcombine.high %v4184, 0.0
        %v4203 = vcombine.high %v4193, 0.0
        %v4204 = vcombine.high %v4200, 0.0
        %v4205 = vcombine.low %v4109, %v4116
        %v4207 = vunpack.c.l.s4 1983009808
        %v4208 = vunpack.c.0.s8 %v4207
        %v4209 = vlaneseq
        %v4210 = vshrl.u32 %v4209, 7
        %v4211 = vsub.s32 %v4208, %v4210
        %v4212 = vrot.slane %v4205, %v4211
        %v4213 = vcombine.low %v4133, %v4134
        %v4215 = vunpack.c.l.s4 1983009808
        %v4216 = vunpack.c.0.s8 %v4215
        %v4217 = vlaneseq
        %v4218 = vshrl.u32 %v4217, 7
        %v4219 = vsub.s32 %v4216, %v4218
        %v4220 = vrot.slane %v4213, %v4219
        %v4221 = vcombine.low %v4125, %v4132
        %v4223 = vunpack.c.l.s4 1983009808
        %v4224 = vunpack.c.0.s8 %v4223
        %v4225 = vlaneseq
        %v4226 = vshrl.u32 %v4225, 7
        %v4227 = vsub.s32 %v4224, %v4226
        %v4228 = vrot.slane %v4221, %v4227
        %v4229 = vcombine.low %v4135, %v4136
        %v4231 = vunpack.c.l.s4 1983009808
        %v4232 = vunpack.c.0.s8 %v4231
        %v4233 = vlaneseq
        %v4234 = vshrl.u32 %v4233, 7
        %v4235 = vsub.s32 %v4232, %v4234
        %v4236 = vrot.slane %v4229, %v4235
        %v4237 = vcombine.low %v4212, %v4220
        %v4238 = vcombine.high %v4212, %v4220
        %v4240 = vunpack.c.l.s4 1934713408
        %v4241 = vunpack.c.0.s8 %v4240
        %v4242 = vlaneseq
        %v4243 = vshrl.u32 %v4242, 7
        %v4244 = vsub.s32 %v4241, %v4243
        %v4245 = vrot.slane %v4237, %v4244
        %v4247 = vunpack.c.l.s4 1934713408
        %v4248 = vunpack.c.0.s8 %v4247
        %v4249 = vlaneseq
        %v4250 = vshrl.u32 %v4249, 7
        %v4251 = vsub.s32 %v4248, %v4250
        %v4252 = vrot.slane %v4238, %v4251
        %v4253 = vcombine.low %v4228, %v4236
        %v4254 = vcombine.high %v4228, %v4236
        %v4256 = vunpack.c.l.s4 1934713408
        %v4257 = vunpack.c.0.s8 %v4256
        %v4258 = vlaneseq
        %v4259 = vshrl.u32 %v4258, 7
        %v4260 = vsub.s32 %v4257, %v4259
        %v4261 = vrot.slane %v4253, %v4260
        %v4263 = vunpack.c.l.s4 1934713408
        %v4264 = vunpack.c.0.s8 %v4263
        %v4265 = vlaneseq
        %v4266 = vshrl.u32 %v4265, 7
        %v4267 = vsub.s32 %v4264, %v4266
        %v4268 = vrot.slane %v4254, %v4267
        %v4269 = vcombine.low %v4245, %v4261
        %v4270 = vcombine.high %v4245, %v4261
        %v4271 = vcombine.low %v4252, %v4268
        %v4272 = vcombine.high %v4252, %v4268
        %v4273 = vcombine.low %v4177, %v4184
        %v4275 = vunpack.c.l.s4 1983009808
        %v4276 = vunpack.c.0.s8 %v4275
        %v4277 = vlaneseq
        %v4278 = vshrl.u32 %v4277, 7
        %v4279 = vsub.s32 %v4276, %v4278
        %v4280 = vrot.slane %v4273, %v4279
        %v4281 = vcombine.low %v4201, %v4202
        %v4283 = vunpack.c.l.s4 1983009808
        %v4284 = vunpack.c.0.s8 %v4283
        %v4285 = vlaneseq
        %v4286 = vshrl.u32 %v4285, 7
        %v4287 = vsub.s32 %v4284, %v4286
        %v4288 = vrot.slane %v4281, %v4287
        %v4289 = vcombine.low %v4193, %v4200
        %v4291 = vunpack.c.l.s4 1983009808
        %v4292 = vunpack.c.0.s8 %v4291
        %v4293 = vlaneseq
        %v4294 = vshrl.u32 %v4293, 7
        %v4295 = vsub.s32 %v4292, %v4294
        %v4296 = vrot.slane %v4289, %v4295
        %v4297 = vcombine.low %v4203, %v4204
        %v4299 = vunpack.c.l.s4 1983009808
        %v4300 = vunpack.c.0.s8 %v4299
        %v4301 = vlaneseq
        %v4302 = vshrl.u32 %v4301, 7
        %v4303 = vsub.s32 %v4300, %v4302
        %v4304 = vrot.slane %v4297, %v4303
        %v4305 = vcombine.low %v4280, %v4288
        %v4306 = vcombine.high %v4280, %v4288
        %v4308 = vunpack.c.l.s4 1934713408
        %v4309 = vunpack.c.0.s8 %v4308
        %v4310 = vlaneseq
        %v4311 = vshrl.u32 %v4310, 7
        %v4312 = vsub.s32 %v4309, %v4311
        %v4313 = vrot.slane %v4305, %v4312
        %v4315 = vunpack.c.l.s4 1934713408
        %v4316 = vunpack.c.0.s8 %v4315
        %v4317 = vlaneseq
        %v4318 = vshrl.u32 %v4317, 7
        %v4319 = vsub.s32 %v4316, %v4318
        %v4320 = vrot.slane %v4306, %v4319
        %v4321 = vcombine.low %v4296, %v4304
        %v4322 = vcombine.high %v4296, %v4304
        %v4324 = vunpack.c.l.s4 1934713408
        %v4325 = vunpack.c.0.s8 %v4324
        %v4326 = vlaneseq
        %v4327 = vshrl.u32 %v4326, 7
        %v4328 = vsub.s32 %v4325, %v4327
        %v4329 = vrot.slane %v4321, %v4328
        %v4331 = vunpack.c.l.s4 1934713408
        %v4332 = vunpack.c.0.s8 %v4331
        %v4333 = vlaneseq
        %v4334 = vshrl.u32 %v4333, 7
        %v4335 = vsub.s32 %v4332, %v4334
        %v4336 = vrot.slane %v4322, %v4335
        %v4337 = vcombine.low %v4313, %v4329
        %v4338 = vcombine.high %v4313, %v4329
        %v4339 = vcombine.low %v4320, %v4336
        %v4340 = vcombine.high %v4320, %v4336
        %v4341 = vpack.c.bf16 %v4337, %v4269
        %v4342 = vpack.c.bf16 %v4338, %v4270
        %v4343 = vpack.c.bf16 %v4339, %v4271
        %v4344 = vpack.c.bf16 %v4340, %v4272
        %v4346 = vsel %vm1463, %v3749, 0
        %v4349 = vsel %vm1463, %v4045, 0
        %4351 = vmatprep.subr.bf16.mxu0 0
        %4352 = vmatpush1.bf16.xpose.msra.mxu0 %v4349
        %4353 = vmatprep.subr.bf16.mxu0 0
        %4354 = vmatpush1.bf16.xpose.msra.mxu0 0
        %4355 = vmatprep.subr.bf16.mxu0 0
        %4356 = vmatpush1.bf16.xpose.msra.mxu0 0
        %4357 = vmatprep.subr.bf16.mxu0 0
        %4358 = vmatpush1.bf16.xpose.msra.mxu0 0
        %4359 = vmatprep.subr.bf16.mxu0 0
        %4360 = vmatpush1.bf16.xpose.msra.mxu0 0
        %4361 = vmatprep.subr.bf16.mxu0 0
        %4362 = vmatpush1.bf16.xpose.msra.mxu0 0
        %4363 = vmatprep.subr.bf16.mxu0 0
        %4364 = vmatpush1.bf16.xpose.msra.mxu0 0
        %4365 = vmatprep.subr.bf16.mxu0 0
        %4366 = vmatpush1.bf16.xpose.msra.mxu0 0
        %4367 = vmatprep.subr.bf16.mxu0 0
        %4368 = vmatpush1.bf16.xpose.msra.mxu0 0
        %4369 = vmatprep.subr.bf16.mxu0 0
        %4370 = vmatpush1.bf16.xpose.msra.mxu0 0
        %4371 = vmatprep.subr.bf16.mxu0 0
        %4372 = vmatpush1.bf16.xpose.msra.mxu0 0
        %4373 = vmatprep.subr.bf16.mxu0 0
        %4374 = vmatpush1.bf16.xpose.msra.mxu0 0
        %4375 = vmatprep.subr.bf16.mxu0 0
        %4376 = vmatpush1.bf16.xpose.msra.mxu0 0
        %4377 = vmatprep.subr.bf16.mxu0 0
        %4378 = vmatpush1.bf16.xpose.msra.mxu0 0
        %4379 = vmatprep.subr.bf16.mxu0 0
        %4380 = vmatpush1.bf16.xpose.msra.mxu0 0
        %4381 = vmatprep.subr.bf16.mxu0 0
        %4382 = vmatpush1.bf16.xpose.msra.mxu0 0
        %4383 = vmatprep.mubr.bf16.mxu0 0
        %4384 = vmatmul.mubr.bf16.gmra.mrb[0].mxu0 %v4346
        %v4385 = vpop.f32.mrb[0].mxu0
        %v4386 = vadd.f32 0.0, %v4385
        %v4387 = vpop.f32.mrb[0].mxu0
        %v4388 = vpop.f32.mrb[0].mxu0
        %v4389 = vpop.f32.mrb[0].mxu0
        %4390 = vdwg.mxu0
        %v4392 = vsel %vm1463, %v3750, 0
        %v4395 = vsel %vm1463, %v4046, 0
        %4397 = vmatprep.subr.bf16.mxu0 0
        %4398 = vmatpush1.bf16.xpose.msra.mxu0 %v4395
        %4399 = vmatprep.subr.bf16.mxu0 0
        %4400 = vmatpush1.bf16.xpose.msra.mxu0 0
        %4401 = vmatprep.subr.bf16.mxu0 0
        %4402 = vmatpush1.bf16.xpose.msra.mxu0 0
        %4403 = vmatprep.subr.bf16.mxu0 0
        %4404 = vmatpush1.bf16.xpose.msra.mxu0 0
        %4405 = vmatprep.subr.bf16.mxu0 0
        %4406 = vmatpush1.bf16.xpose.msra.mxu0 0
        %4407 = vmatprep.subr.bf16.mxu0 0
        %4408 = vmatpush1.bf16.xpose.msra.mxu0 0
        %4409 = vmatprep.subr.bf16.mxu0 0
        %4410 = vmatpush1.bf16.xpose.msra.mxu0 0
        %4411 = vmatprep.subr.bf16.mxu0 0
        %4412 = vmatpush1.bf16.xpose.msra.mxu0 0
        %4413 = vmatprep.subr.bf16.mxu0 0
        %4414 = vmatpush1.bf16.xpose.msra.mxu0 0
        %4415 = vmatprep.subr.bf16.mxu0 0
        %4416 = vmatpush1.bf16.xpose.msra.mxu0 0
        %4417 = vmatprep.subr.bf16.mxu0 0
        %4418 = vmatpush1.bf16.xpose.msra.mxu0 0
        %4419 = vmatprep.subr.bf16.mxu0 0
        %4420 = vmatpush1.bf16.xpose.msra.mxu0 0
        %4421 = vmatprep.subr.bf16.mxu0 0
        %4422 = vmatpush1.bf16.xpose.msra.mxu0 0
        %4423 = vmatprep.subr.bf16.mxu0 0
        %4424 = vmatpush1.bf16.xpose.msra.mxu0 0
        %4425 = vmatprep.subr.bf16.mxu0 0
        %4426 = vmatpush1.bf16.xpose.msra.mxu0 0
        %4427 = vmatprep.subr.bf16.mxu0 0
        %4428 = vmatpush1.bf16.xpose.msra.mxu0 0
        %4429 = vmatprep.mubr.bf16.mxu0 0
        %4430 = vmatmul.mubr.bf16.gmra.mrb[0].mxu0 %v4392
        %v4431 = vpop.f32.mrb[0].mxu0
        %v4432 = vadd.f32 0.0, %v4431
        %v4433 = vpop.f32.mrb[0].mxu0
        %v4434 = vpop.f32.mrb[0].mxu0
        %v4435 = vpop.f32.mrb[0].mxu0
        %4436 = vdwg.mxu0
        %v4438 = vsel %vm1463, %v3751, 0
        %v4441 = vsel %vm1463, %v4047, 0
        %4443 = vmatprep.subr.bf16.mxu0 0
        %4444 = vmatpush1.bf16.xpose.msra.mxu0 %v4441
        %4445 = vmatprep.subr.bf16.mxu0 0
        %4446 = vmatpush1.bf16.xpose.msra.mxu0 0
        %4447 = vmatprep.subr.bf16.mxu0 0
        %4448 = vmatpush1.bf16.xpose.msra.mxu0 0
        %4449 = vmatprep.subr.bf16.mxu0 0
        %4450 = vmatpush1.bf16.xpose.msra.mxu0 0
        %4451 = vmatprep.subr.bf16.mxu0 0
        %4452 = vmatpush1.bf16.xpose.msra.mxu0 0
        %4453 = vmatprep.subr.bf16.mxu0 0
        %4454 = vmatpush1.bf16.xpose.msra.mxu0 0
        %4455 = vmatprep.subr.bf16.mxu0 0
        %4456 = vmatpush1.bf16.xpose.msra.mxu0 0
        %4457 = vmatprep.subr.bf16.mxu0 0
        %4458 = vmatpush1.bf16.xpose.msra.mxu0 0
        %4459 = vmatprep.subr.bf16.mxu0 0
        %4460 = vmatpush1.bf16.xpose.msra.mxu0 0
        %4461 = vmatprep.subr.bf16.mxu0 0
        %4462 = vmatpush1.bf16.xpose.msra.mxu0 0
        %4463 = vmatprep.subr.bf16.mxu0 0
        %4464 = vmatpush1.bf16.xpose.msra.mxu0 0
        %4465 = vmatprep.subr.bf16.mxu0 0
        %4466 = vmatpush1.bf16.xpose.msra.mxu0 0
        %4467 = vmatprep.subr.bf16.mxu0 0
        %4468 = vmatpush1.bf16.xpose.msra.mxu0 0
        %4469 = vmatprep.subr.bf16.mxu0 0
        %4470 = vmatpush1.bf16.xpose.msra.mxu0 0
        %4471 = vmatprep.subr.bf16.mxu0 0
        %4472 = vmatpush1.bf16.xpose.msra.mxu0 0
        %4473 = vmatprep.subr.bf16.mxu0 0
        %4474 = vmatpush1.bf16.xpose.msra.mxu0 0
        %4475 = vmatprep.mubr.bf16.mxu0 0
        %4476 = vmatmul.mubr.bf16.gmra.mrb[0].mxu0 %v4438
        %v4477 = vpop.f32.mrb[0].mxu0
        %v4478 = vadd.f32 0.0, %v4477
        %v4479 = vpop.f32.mrb[0].mxu0
        %v4480 = vpop.f32.mrb[0].mxu0
        %v4481 = vpop.f32.mrb[0].mxu0
        %4482 = vdwg.mxu0
        %v4484 = vsel %vm1463, %v3752, 0
        %v4487 = vsel %vm1463, %v4048, 0
        %4489 = vmatprep.subr.bf16.mxu0 0
        %4490 = vmatpush1.bf16.xpose.msra.mxu0 %v4487
        %4491 = vmatprep.subr.bf16.mxu0 0
        %4492 = vmatpush1.bf16.xpose.msra.mxu0 0
        %4493 = vmatprep.subr.bf16.mxu0 0
        %4494 = vmatpush1.bf16.xpose.msra.mxu0 0
        %4495 = vmatprep.subr.bf16.mxu0 0
        %4496 = vmatpush1.bf16.xpose.msra.mxu0 0
        %4497 = vmatprep.subr.bf16.mxu0 0
        %4498 = vmatpush1.bf16.xpose.msra.mxu0 0
        %4499 = vmatprep.subr.bf16.mxu0 0
        %4500 = vmatpush1.bf16.xpose.msra.mxu0 0
        %4501 = vmatprep.subr.bf16.mxu0 0
        %4502 = vmatpush1.bf16.xpose.msra.mxu0 0
        %4503 = vmatprep.subr.bf16.mxu0 0
        %4504 = vmatpush1.bf16.xpose.msra.mxu0 0
        %4505 = vmatprep.subr.bf16.mxu0 0
        %4506 = vmatpush1.bf16.xpose.msra.mxu0 0
        %4507 = vmatprep.subr.bf16.mxu0 0
        %4508 = vmatpush1.bf16.xpose.msra.mxu0 0
        %4509 = vmatprep.subr.bf16.mxu0 0
        %4510 = vmatpush1.bf16.xpose.msra.mxu0 0
        %4511 = vmatprep.subr.bf16.mxu0 0
        %4512 = vmatpush1.bf16.xpose.msra.mxu0 0
        %4513 = vmatprep.subr.bf16.mxu0 0
        %4514 = vmatpush1.bf16.xpose.msra.mxu0 0
        %4515 = vmatprep.subr.bf16.mxu0 0
        %4516 = vmatpush1.bf16.xpose.msra.mxu0 0
        %4517 = vmatprep.subr.bf16.mxu0 0
        %4518 = vmatpush1.bf16.xpose.msra.mxu0 0
        %4519 = vmatprep.subr.bf16.mxu0 0
        %4520 = vmatpush1.bf16.xpose.msra.mxu0 0
        %4521 = vmatprep.mubr.bf16.mxu0 0
        %4522 = vmatmul.mubr.bf16.gmra.mrb[0].mxu0 %v4484
        %v4523 = vpop.f32.mrb[0].mxu0
        %v4524 = vadd.f32 0.0, %v4523
        %v4525 = vpop.f32.mrb[0].mxu0
        %v4526 = vpop.f32.mrb[0].mxu0
        %v4527 = vpop.f32.mrb[0].mxu0
        %4528 = vdwg.mxu0
        %vm4529 = vcmask 130048
        %v4530 = vsel %vm4529, %v4386, -inf
        %4531 = vmax.xlane.f32.xlu0 %v4530
        %v4532 = vpop.xlane.xlu0 %4531
        %v4533 = vsel %vm4529, %v4432, -inf
        %4534 = vmax.xlane.f32.xlu0 %v4533
        %v4535 = vpop.xlane.xlu0 %4534
        %v4536 = vsel %vm4529, %v4478, -inf
        %4537 = vmax.xlane.f32.xlu0 %v4536
        %v4538 = vpop.xlane.xlu0 %4537
        %v4539 = vsel %vm4529, %v4524, -inf
        %4540 = vmax.xlane.f32.xlu0 %v4539
        %v4541 = vpop.xlane.xlu0 %4540
        %v4542 = vsub.f32 %v4386, %v4532
        %v4543 = vsub.f32 %v4432, %v4535
        %v4544 = vsub.f32 %v4478, %v4538
        %v4545 = vsub.f32 %v4524, %v4541
        %v4546 = vmul.f32 %v4542, 1.442695
        %v4547 = vpow.pop %v4546
        %v4548 = vmul.f32 %v4543, 1.442695
        %v4549 = vpow.pop %v4548
        %v4550 = vmul.f32 %v4544, 1.442695
        %v4551 = vpow.pop %v4550
        %v4552 = vmul.f32 %v4545, 1.442695
        %v4553 = vpow.pop %v4552
        %v4554 = vsel %vm4529, %v4547, 0.0
        %4555 = vadd.xlane.f32.xlu0 %v4554
        %v4556 = vpop.xlane.xlu0 %4555
        %v4557 = vsel %vm4529, %v4549, 0.0
        %4558 = vadd.xlane.f32.xlu0 %v4557
        %v4559 = vpop.xlane.xlu0 %4558
        %v4560 = vsel %vm4529, %v4551, 0.0
        %4561 = vadd.xlane.f32.xlu0 %v4560
        %v4562 = vpop.xlane.xlu0 %4561
        %v4563 = vsel %vm4529, %v4553, 0.0
        %4564 = vadd.xlane.f32.xlu0 %v4563
        %v4565 = vpop.xlane.xlu0 %4564
        %v4566 = vrcp.pop %v4556
        %v4567 = vrcp.pop %v4559
        %v4568 = vrcp.pop %v4562
        %v4569 = vrcp.pop %v4565
        %v4570 = vmul.f32 %v4547, %v4566
        %v4571 = vmul.f32 %v4549, %v4567
        %v4572 = vmul.f32 %v4551, %v4568
        %v4573 = vmul.f32 %v4553, %v4569
        %v4574 = vpack.c.bf16 %v4570, %v4570
        %v4575 = vpack.c.bf16 %v4571, %v4571
        %v4576 = vpack.c.bf16 %v4572, %v4572
        %v4577 = vpack.c.bf16 %v4573, %v4573
        %v4579 = vsel %vm4529, %v4574, 0
        %4581 = vmatprep.subr.bf16.mxu0 0
        %4582 = vmatpush1.bf16.msra.mxu0 %v4341
        %4583 = vmatprep.subr.bf16.mxu0 0
        %4584 = vmatpush1.bf16.msra.mxu0 0
        %4585 = vmatprep.subr.bf16.mxu0 0
        %4586 = vmatpush1.bf16.msra.mxu0 0
        %4587 = vmatprep.subr.bf16.mxu0 0
        %4588 = vmatpush1.bf16.msra.mxu0 0
        %4589 = vmatprep.subr.bf16.mxu0 0
        %4590 = vmatpush1.bf16.msra.mxu0 0
        %4591 = vmatprep.subr.bf16.mxu0 0
        %4592 = vmatpush1.bf16.msra.mxu0 0
        %4593 = vmatprep.subr.bf16.mxu0 0
        %4594 = vmatpush1.bf16.msra.mxu0 0
        %4595 = vmatprep.subr.bf16.mxu0 0
        %4596 = vmatpush1.bf16.msra.mxu0 0
        %4597 = vmatprep.subr.bf16.mxu0 0
        %4598 = vmatpush1.bf16.msra.mxu0 0
        %4599 = vmatprep.subr.bf16.mxu0 0
        %4600 = vmatpush1.bf16.msra.mxu0 0
        %4601 = vmatprep.subr.bf16.mxu0 0
        %4602 = vmatpush1.bf16.msra.mxu0 0
        %4603 = vmatprep.subr.bf16.mxu0 0
        %4604 = vmatpush1.bf16.msra.mxu0 0
        %4605 = vmatprep.subr.bf16.mxu0 0
        %4606 = vmatpush1.bf16.msra.mxu0 0
        %4607 = vmatprep.subr.bf16.mxu0 0
        %4608 = vmatpush1.bf16.msra.mxu0 0
        %4609 = vmatprep.subr.bf16.mxu0 0
        %4610 = vmatpush1.bf16.msra.mxu0 0
        %4611 = vmatprep.subr.bf16.mxu0 0
        %4612 = vmatpush1.bf16.msra.mxu0 0
        %4613 = vmatprep.mubr.bf16.mxu0 0
        %4614 = vmatmul.mubr.bf16.gmra.mrb[0].mxu0 %v4579
        %v4615 = vpop.f32.mrb[0].mxu0
        %v4616 = vadd.f32 0.0, %v4615
        %v4617 = vpop.f32.mrb[0].mxu0
        %v4618 = vpop.f32.mrb[0].mxu0
        %v4619 = vpop.f32.mrb[0].mxu0
        %4620 = vdwg.mxu0
        %v4622 = vsel %vm4529, %v4575, 0
        %4624 = vmatprep.subr.bf16.mxu0 0
        %4625 = vmatpush1.bf16.msra.mxu0 %v4342
        %4626 = vmatprep.subr.bf16.mxu0 0
        %4627 = vmatpush1.bf16.msra.mxu0 0
        %4628 = vmatprep.subr.bf16.mxu0 0
        %4629 = vmatpush1.bf16.msra.mxu0 0
        %4630 = vmatprep.subr.bf16.mxu0 0
        %4631 = vmatpush1.bf16.msra.mxu0 0
        %4632 = vmatprep.subr.bf16.mxu0 0
        %4633 = vmatpush1.bf16.msra.mxu0 0
        %4634 = vmatprep.subr.bf16.mxu0 0
        %4635 = vmatpush1.bf16.msra.mxu0 0
        %4636 = vmatprep.subr.bf16.mxu0 0
        %4637 = vmatpush1.bf16.msra.mxu0 0
        %4638 = vmatprep.subr.bf16.mxu0 0
        %4639 = vmatpush1.bf16.msra.mxu0 0
        %4640 = vmatprep.subr.bf16.mxu0 0
        %4641 = vmatpush1.bf16.msra.mxu0 0
        %4642 = vmatprep.subr.bf16.mxu0 0
        %4643 = vmatpush1.bf16.msra.mxu0 0
        %4644 = vmatprep.subr.bf16.mxu0 0
        %4645 = vmatpush1.bf16.msra.mxu0 0
        %4646 = vmatprep.subr.bf16.mxu0 0
        %4647 = vmatpush1.bf16.msra.mxu0 0
        %4648 = vmatprep.subr.bf16.mxu0 0
        %4649 = vmatpush1.bf16.msra.mxu0 0
        %4650 = vmatprep.subr.bf16.mxu0 0
        %4651 = vmatpush1.bf16.msra.mxu0 0
        %4652 = vmatprep.subr.bf16.mxu0 0
        %4653 = vmatpush1.bf16.msra.mxu0 0
        %4654 = vmatprep.subr.bf16.mxu0 0
        %4655 = vmatpush1.bf16.msra.mxu0 0
        %4656 = vmatprep.mubr.bf16.mxu0 0
        %4657 = vmatmul.mubr.bf16.gmra.mrb[0].mxu0 %v4622
        %v4658 = vpop.f32.mrb[0].mxu0
        %v4659 = vadd.f32 0.0, %v4658
        %v4660 = vpop.f32.mrb[0].mxu0
        %v4661 = vpop.f32.mrb[0].mxu0
        %v4662 = vpop.f32.mrb[0].mxu0
        %4663 = vdwg.mxu0
        %v4665 = vsel %vm4529, %v4576, 0
        %4667 = vmatprep.subr.bf16.mxu0 0
        %4668 = vmatpush1.bf16.msra.mxu0 %v4343
        %4669 = vmatprep.subr.bf16.mxu0 0
        %4670 = vmatpush1.bf16.msra.mxu0 0
        %4671 = vmatprep.subr.bf16.mxu0 0
        %4672 = vmatpush1.bf16.msra.mxu0 0
        %4673 = vmatprep.subr.bf16.mxu0 0
        %4674 = vmatpush1.bf16.msra.mxu0 0
        %4675 = vmatprep.subr.bf16.mxu0 0
        %4676 = vmatpush1.bf16.msra.mxu0 0
        %4677 = vmatprep.subr.bf16.mxu0 0
        %4678 = vmatpush1.bf16.msra.mxu0 0
        %4679 = vmatprep.subr.bf16.mxu0 0
        %4680 = vmatpush1.bf16.msra.mxu0 0
        %4681 = vmatprep.subr.bf16.mxu0 0
        %4682 = vmatpush1.bf16.msra.mxu0 0
        %4683 = vmatprep.subr.bf16.mxu0 0
        %4684 = vmatpush1.bf16.msra.mxu0 0
        %4685 = vmatprep.subr.bf16.mxu0 0
        %4686 = vmatpush1.bf16.msra.mxu0 0
        %4687 = vmatprep.subr.bf16.mxu0 0
        %4688 = vmatpush1.bf16.msra.mxu0 0
        %4689 = vmatprep.subr.bf16.mxu0 0
        %4690 = vmatpush1.bf16.msra.mxu0 0
        %4691 = vmatprep.subr.bf16.mxu0 0
        %4692 = vmatpush1.bf16.msra.mxu0 0
        %4693 = vmatprep.subr.bf16.mxu0 0
        %4694 = vmatpush1.bf16.msra.mxu0 0
        %4695 = vmatprep.subr.bf16.mxu0 0
        %4696 = vmatpush1.bf16.msra.mxu0 0
        %4697 = vmatprep.subr.bf16.mxu0 0
        %4698 = vmatpush1.bf16.msra.mxu0 0
        %4699 = vmatprep.mubr.bf16.mxu0 0
        %4700 = vmatmul.mubr.bf16.gmra.mrb[0].mxu0 %v4665
        %v4701 = vpop.f32.mrb[0].mxu0
        %v4702 = vadd.f32 0.0, %v4701
        %v4703 = vpop.f32.mrb[0].mxu0
        %v4704 = vpop.f32.mrb[0].mxu0
        %v4705 = vpop.f32.mrb[0].mxu0
        %4706 = vdwg.mxu0
        %v4708 = vsel %vm4529, %v4577, 0
        %4710 = vmatprep.subr.bf16.mxu0 0
        %4711 = vmatpush1.bf16.msra.mxu0 %v4344
        %4712 = vmatprep.subr.bf16.mxu0 0
        %4713 = vmatpush1.bf16.msra.mxu0 0
        %4714 = vmatprep.subr.bf16.mxu0 0
        %4715 = vmatpush1.bf16.msra.mxu0 0
        %4716 = vmatprep.subr.bf16.mxu0 0
        %4717 = vmatpush1.bf16.msra.mxu0 0
        %4718 = vmatprep.subr.bf16.mxu0 0
        %4719 = vmatpush1.bf16.msra.mxu0 0
        %4720 = vmatprep.subr.bf16.mxu0 0
        %4721 = vmatpush1.bf16.msra.mxu0 0
        %4722 = vmatprep.subr.bf16.mxu0 0
        %4723 = vmatpush1.bf16.msra.mxu0 0
        %4724 = vmatprep.subr.bf16.mxu0 0
        %4725 = vmatpush1.bf16.msra.mxu0 0
        %4726 = vmatprep.subr.bf16.mxu0 0
        %4727 = vmatpush1.bf16.msra.mxu0 0
        %4728 = vmatprep.subr.bf16.mxu0 0
        %4729 = vmatpush1.bf16.msra.mxu0 0
        %4730 = vmatprep.subr.bf16.mxu0 0
        %4731 = vmatpush1.bf16.msra.mxu0 0
        %4732 = vmatprep.subr.bf16.mxu0 0
        %4733 = vmatpush1.bf16.msra.mxu0 0
        %4734 = vmatprep.subr.bf16.mxu0 0
        %4735 = vmatpush1.bf16.msra.mxu0 0
        %4736 = vmatprep.subr.bf16.mxu0 0
        %4737 = vmatpush1.bf16.msra.mxu0 0
        %4738 = vmatprep.subr.bf16.mxu0 0
        %4739 = vmatpush1.bf16.msra.mxu0 0
        %4740 = vmatprep.subr.bf16.mxu0 0
        %4741 = vmatpush1.bf16.msra.mxu0 0
        %4742 = vmatprep.mubr.bf16.mxu0 0
        %4743 = vmatmul.mubr.bf16.gmra.mrb[0].mxu0 %v4708
        %v4744 = vpop.f32.mrb[0].mxu0
        %v4745 = vadd.f32 0.0, %v4744
        %v4746 = vpop.f32.mrb[0].mxu0
        %v4747 = vpop.f32.mrb[0].mxu0
        %v4748 = vpop.f32.mrb[0].mxu0
        %4749 = vdwg.mxu0
        %v4750 = vcombine.low %v4616, %v4702
        %v4751 = vcombine.high %v4616, %v4702
        %v4753 = vunpack.c.l.s4 1983009808
        %v4754 = vunpack.c.0.s8 %v4753
        %v4755 = vlaneseq
        %v4756 = vshrl.u32 %v4755, 7
        %v4757 = vsub.s32 %v4754, %v4756
        %v4758 = vrot.slane %v4750, %v4757
        %v4760 = vunpack.c.l.s4 1983009808
        %v4761 = vunpack.c.0.s8 %v4760
        %v4762 = vlaneseq
        %v4763 = vshrl.u32 %v4762, 7
        %v4764 = vsub.s32 %v4761, %v4763
        %v4765 = vrot.slane %v4751, %v4764
        %v4766 = vcombine.low %v4659, %v4745
        %v4767 = vcombine.high %v4659, %v4745
        %v4769 = vunpack.c.l.s4 1983009808
        %v4770 = vunpack.c.0.s8 %v4769
        %v4771 = vlaneseq
        %v4772 = vshrl.u32 %v4771, 7
        %v4773 = vsub.s32 %v4770, %v4772
        %v4774 = vrot.slane %v4766, %v4773
        %v4776 = vunpack.c.l.s4 1983009808
        %v4777 = vunpack.c.0.s8 %v4776
        %v4778 = vlaneseq
        %v4779 = vshrl.u32 %v4778, 7
        %v4780 = vsub.s32 %v4777, %v4779
        %v4781 = vrot.slane %v4767, %v4780
        %v4782 = vcombine.low %v4758, %v4774
        %v4783 = vcombine.high %v4758, %v4774
        %v4785 = vunpack.c.l.s4 1934713408
        %v4786 = vunpack.c.0.s8 %v4785
        %v4787 = vlaneseq
        %v4788 = vshrl.u32 %v4787, 7
        %v4789 = vsub.s32 %v4786, %v4788
        %v4790 = vrot.slane %v4782, %v4789
        %v4792 = vunpack.c.l.s4 1934713408
        %v4793 = vunpack.c.0.s8 %v4792
        %v4794 = vlaneseq
        %v4795 = vshrl.u32 %v4794, 7
        %v4796 = vsub.s32 %v4793, %v4795
        %v4797 = vrot.slane %v4783, %v4796
        %v4798 = vcombine.low %v4765, %v4781
        %v4799 = vcombine.high %v4765, %v4781
        %v4801 = vunpack.c.l.s4 1934713408
        %v4802 = vunpack.c.0.s8 %v4801
        %v4803 = vlaneseq
        %v4804 = vshrl.u32 %v4803, 7
        %v4805 = vsub.s32 %v4802, %v4804
        %v4806 = vrot.slane %v4798, %v4805
        %v4808 = vunpack.c.l.s4 1934713408
        %v4809 = vunpack.c.0.s8 %v4808
        %v4810 = vlaneseq
        %v4811 = vshrl.u32 %v4810, 7
        %v4812 = vsub.s32 %v4809, %v4811
        %v4813 = vrot.slane %v4799, %v4812
        %v4814 = vcombine.high %v4790, 0.0
        %v4815 = vcombine.high %v4797, 0.0
        %v4816 = vcombine.high %v4806, 0.0
        %v4817 = vcombine.high %v4813, 0.0
        %v4818 = vcombine.low %v4790, %v4797
        %v4820 = vunpack.c.l.s4 1983009808
        %v4821 = vunpack.c.0.s8 %v4820
        %v4822 = vlaneseq
        %v4823 = vshrl.u32 %v4822, 7
        %v4824 = vsub.s32 %v4821, %v4823
        %v4825 = vrot.slane %v4818, %v4824
        %v4826 = vcombine.low %v4814, %v4815
        %v4828 = vunpack.c.l.s4 1983009808
        %v4829 = vunpack.c.0.s8 %v4828
        %v4830 = vlaneseq
        %v4831 = vshrl.u32 %v4830, 7
        %v4832 = vsub.s32 %v4829, %v4831
        %v4833 = vrot.slane %v4826, %v4832
        %v4834 = vcombine.low %v4806, %v4813
        %v4836 = vunpack.c.l.s4 1983009808
        %v4837 = vunpack.c.0.s8 %v4836
        %v4838 = vlaneseq
        %v4839 = vshrl.u32 %v4838, 7
        %v4840 = vsub.s32 %v4837, %v4839
        %v4841 = vrot.slane %v4834, %v4840
        %v4842 = vcombine.low %v4816, %v4817
        %v4844 = vunpack.c.l.s4 1983009808
        %v4845 = vunpack.c.0.s8 %v4844
        %v4846 = vlaneseq
        %v4847 = vshrl.u32 %v4846, 7
        %v4848 = vsub.s32 %v4845, %v4847
        %v4849 = vrot.slane %v4842, %v4848
        %v4850 = vcombine.low %v4825, %v4833
        %v4851 = vcombine.high %v4825, %v4833
        %v4853 = vunpack.c.l.s4 1934713408
        %v4854 = vunpack.c.0.s8 %v4853
        %v4855 = vlaneseq
        %v4856 = vshrl.u32 %v4855, 7
        %v4857 = vsub.s32 %v4854, %v4856
        %v4858 = vrot.slane %v4850, %v4857
        %v4860 = vunpack.c.l.s4 1934713408
        %v4861 = vunpack.c.0.s8 %v4860
        %v4862 = vlaneseq
        %v4863 = vshrl.u32 %v4862, 7
        %v4864 = vsub.s32 %v4861, %v4863
        %v4865 = vrot.slane %v4851, %v4864
        %v4866 = vcombine.low %v4841, %v4849
        %v4867 = vcombine.high %v4841, %v4849
        %v4869 = vunpack.c.l.s4 1934713408
        %v4870 = vunpack.c.0.s8 %v4869
        %v4871 = vlaneseq
        %v4872 = vshrl.u32 %v4871, 7
        %v4873 = vsub.s32 %v4870, %v4872
        %v4874 = vrot.slane %v4866, %v4873
        %v4876 = vunpack.c.l.s4 1934713408
        %v4877 = vunpack.c.0.s8 %v4876
        %v4878 = vlaneseq
        %v4879 = vshrl.u32 %v4878, 7
        %v4880 = vsub.s32 %v4877, %v4879
        %v4881 = vrot.slane %v4867, %v4880
        %v4882 = vcombine.low %v4858, %v4874
        %v4883 = vcombine.high %v4858, %v4874
        %v4884 = vcombine.low %v4865, %v4881
        %v4885 = vcombine.high %v4865, %v4881
        %4887 = vrot.lane.b32.xlu0 %v4883, 32
        %v4888 = vpop.permute.xlu0 %4887
        %4891 = vrot.lane.b32.xlu0 %v4884, 64
        %v4892 = vpop.permute.xlu0 %4891
        %4895 = vrot.lane.b32.xlu0 %v4885, 96
        %v4896 = vpop.permute.xlu0 %4895
        %v4898 = vsel %vm1463, %v4882, %v4888
        %v4899 = vsel %vm2031, %v4898, %v4892
        %v4900 = vsel %vm2033, %v4899, %v4896
        %4902 = vrot.lane.b32.xlu0 %v3586, 96
        %v4903 = vpop.permute.xlu0 %4902
        %4905 = vrot.lane.b32.xlu0 %v3586, 64
        %v4906 = vpop.permute.xlu0 %4905
        %4908 = vrot.lane.b32.xlu0 %v3586, 32
        %v4909 = vpop.permute.xlu0 %4908
        %v4911 = vcombine.low %v3586, %v4906
        %v4912 = vcombine.high %v3586, %v4906
        %v4914 = vunpack.c.l.s4 1983009808
        %v4915 = vunpack.c.0.s8 %v4914
        %v4916 = vlaneseq
        %v4917 = vshrl.u32 %v4916, 7
        %v4918 = vsub.s32 %v4915, %v4917
        %v4919 = vrot.slane %v4911, %v4918
        %v4921 = vunpack.c.l.s4 1983009808
        %v4922 = vunpack.c.0.s8 %v4921
        %v4923 = vlaneseq
        %v4924 = vshrl.u32 %v4923, 7
        %v4925 = vsub.s32 %v4922, %v4924
        %v4926 = vrot.slane %v4912, %v4925
        %v4927 = vcombine.low %v4903, %v4909
        %v4928 = vcombine.high %v4903, %v4909
        %v4930 = vunpack.c.l.s4 1983009808
        %v4931 = vunpack.c.0.s8 %v4930
        %v4932 = vlaneseq
        %v4933 = vshrl.u32 %v4932, 7
        %v4934 = vsub.s32 %v4931, %v4933
        %v4935 = vrot.slane %v4927, %v4934
        %v4937 = vunpack.c.l.s4 1983009808
        %v4938 = vunpack.c.0.s8 %v4937
        %v4939 = vlaneseq
        %v4940 = vshrl.u32 %v4939, 7
        %v4941 = vsub.s32 %v4938, %v4940
        %v4942 = vrot.slane %v4928, %v4941
        %v4943 = vcombine.low %v4919, %v4935
        %v4944 = vcombine.high %v4919, %v4935
        %v4946 = vunpack.c.l.s4 1934713408
        %v4947 = vunpack.c.0.s8 %v4946
        %v4948 = vlaneseq
        %v4949 = vshrl.u32 %v4948, 7
        %v4950 = vsub.s32 %v4947, %v4949
        %v4951 = vrot.slane %v4943, %v4950
        %v4953 = vunpack.c.l.s4 1934713408
        %v4954 = vunpack.c.0.s8 %v4953
        %v4955 = vlaneseq
        %v4956 = vshrl.u32 %v4955, 7
        %v4957 = vsub.s32 %v4954, %v4956
        %v4958 = vrot.slane %v4944, %v4957
        %v4959 = vcombine.low %v4926, %v4942
        %v4960 = vcombine.high %v4926, %v4942
        %v4962 = vunpack.c.l.s4 1934713408
        %v4963 = vunpack.c.0.s8 %v4962
        %v4964 = vlaneseq
        %v4965 = vshrl.u32 %v4964, 7
        %v4966 = vsub.s32 %v4963, %v4965
        %v4967 = vrot.slane %v4959, %v4966
        %v4969 = vunpack.c.l.s4 1934713408
        %v4970 = vunpack.c.0.s8 %v4969
        %v4971 = vlaneseq
        %v4972 = vshrl.u32 %v4971, 7
        %v4973 = vsub.s32 %v4970, %v4972
        %v4974 = vrot.slane %v4960, %v4973
        %v4975 = vcombine.high %v4951, 0.0
        %v4976 = vcombine.high %v4958, 0.0
        %v4977 = vcombine.high %v4967, 0.0
        %v4978 = vcombine.high %v4974, 0.0
        %v4979 = vcombine.low %v4951, %v4958
        %v4981 = vunpack.c.l.s4 1983009808
        %v4982 = vunpack.c.0.s8 %v4981
        %v4983 = vlaneseq
        %v4984 = vshrl.u32 %v4983, 7
        %v4985 = vsub.s32 %v4982, %v4984
        %v4986 = vrot.slane %v4979, %v4985
        %v4987 = vcombine.low %v4975, %v4976
        %v4989 = vunpack.c.l.s4 1983009808
        %v4990 = vunpack.c.0.s8 %v4989
        %v4991 = vlaneseq
        %v4992 = vshrl.u32 %v4991, 7
        %v4993 = vsub.s32 %v4990, %v4992
        %v4994 = vrot.slane %v4987, %v4993
        %v4995 = vcombine.low %v4967, %v4974
        %v4997 = vunpack.c.l.s4 1983009808
        %v4998 = vunpack.c.0.s8 %v4997
        %v4999 = vlaneseq
        %v5000 = vshrl.u32 %v4999, 7
        %v5001 = vsub.s32 %v4998, %v5000
        %v5002 = vrot.slane %v4995, %v5001
        %v5003 = vcombine.low %v4977, %v4978
        %v5005 = vunpack.c.l.s4 1983009808
        %v5006 = vunpack.c.0.s8 %v5005
        %v5007 = vlaneseq
        %v5008 = vshrl.u32 %v5007, 7
        %v5009 = vsub.s32 %v5006, %v5008
        %v5010 = vrot.slane %v5003, %v5009
        %v5011 = vcombine.low %v4986, %v4994
        %v5012 = vcombine.high %v4986, %v4994
        %v5014 = vunpack.c.l.s4 1934713408
        %v5015 = vunpack.c.0.s8 %v5014
        %v5016 = vlaneseq
        %v5017 = vshrl.u32 %v5016, 7
        %v5018 = vsub.s32 %v5015, %v5017
        %v5019 = vrot.slane %v5011, %v5018
        %v5021 = vunpack.c.l.s4 1934713408
        %v5022 = vunpack.c.0.s8 %v5021
        %v5023 = vlaneseq
        %v5024 = vshrl.u32 %v5023, 7
        %v5025 = vsub.s32 %v5022, %v5024
        %v5026 = vrot.slane %v5012, %v5025
        %v5027 = vcombine.low %v5002, %v5010
        %v5028 = vcombine.high %v5002, %v5010
        %v5030 = vunpack.c.l.s4 1934713408
        %v5031 = vunpack.c.0.s8 %v5030
        %v5032 = vlaneseq
        %v5033 = vshrl.u32 %v5032, 7
        %v5034 = vsub.s32 %v5031, %v5033
        %v5035 = vrot.slane %v5027, %v5034
        %v5037 = vunpack.c.l.s4 1934713408
        %v5038 = vunpack.c.0.s8 %v5037
        %v5039 = vlaneseq
        %v5040 = vshrl.u32 %v5039, 7
        %v5041 = vsub.s32 %v5038, %v5040
        %v5042 = vrot.slane %v5028, %v5041
        %v5043 = vcombine.low %v5019, %v5035
        %v5044 = vcombine.high %v5019, %v5035
        %v5045 = vcombine.low %v5026, %v5042
        %v5046 = vcombine.high %v5026, %v5042
        %v5047 = vpack.c.bf16 %v5043, %v5043
        %v5048 = vpack.c.bf16 %v5044, %v5044
        %v5049 = vpack.c.bf16 %v5045, %v5045
        %v5050 = vpack.c.bf16 %v5046, %v5046
        %5053 = vrot.lane.b32.xlu0 %v3593, 96
        %v5054 = vpop.permute.xlu0 %5053
        %5055 = vrot.lane.b32.xlu0 %v3594, 96
        %v5056 = vpop.permute.xlu0 %5055
        %5059 = vrot.lane.b32.xlu0 %v3593, 64
        %v5060 = vpop.permute.xlu0 %5059
        %5061 = vrot.lane.b32.xlu0 %v3594, 64
        %v5062 = vpop.permute.xlu0 %5061
        %5065 = vrot.lane.b32.xlu0 %v3593, 32
        %v5066 = vpop.permute.xlu0 %5065
        %5067 = vrot.lane.b32.xlu0 %v3594, 32
        %v5068 = vpop.permute.xlu0 %5067
        %v5071 = vcombine.low %v3593, %v5060
        %v5072 = vcombine.high %v3593, %v5060
        %v5074 = vunpack.c.l.s4 1983009808
        %v5075 = vunpack.c.0.s8 %v5074
        %v5076 = vlaneseq
        %v5077 = vshrl.u32 %v5076, 7
        %v5078 = vsub.s32 %v5075, %v5077
        %v5079 = vrot.slane %v5071, %v5078
        %v5081 = vunpack.c.l.s4 1983009808
        %v5082 = vunpack.c.0.s8 %v5081
        %v5083 = vlaneseq
        %v5084 = vshrl.u32 %v5083, 7
        %v5085 = vsub.s32 %v5082, %v5084
        %v5086 = vrot.slane %v5072, %v5085
        %v5087 = vcombine.low %v5054, %v5066
        %v5088 = vcombine.high %v5054, %v5066
        %v5090 = vunpack.c.l.s4 1983009808
        %v5091 = vunpack.c.0.s8 %v5090
        %v5092 = vlaneseq
        %v5093 = vshrl.u32 %v5092, 7
        %v5094 = vsub.s32 %v5091, %v5093
        %v5095 = vrot.slane %v5087, %v5094
        %v5097 = vunpack.c.l.s4 1983009808
        %v5098 = vunpack.c.0.s8 %v5097
        %v5099 = vlaneseq
        %v5100 = vshrl.u32 %v5099, 7
        %v5101 = vsub.s32 %v5098, %v5100
        %v5102 = vrot.slane %v5088, %v5101
        %v5103 = vcombine.low %v5079, %v5095
        %v5104 = vcombine.high %v5079, %v5095
        %v5106 = vunpack.c.l.s4 1934713408
        %v5107 = vunpack.c.0.s8 %v5106
        %v5108 = vlaneseq
        %v5109 = vshrl.u32 %v5108, 7
        %v5110 = vsub.s32 %v5107, %v5109
        %v5111 = vrot.slane %v5103, %v5110
        %v5113 = vunpack.c.l.s4 1934713408
        %v5114 = vunpack.c.0.s8 %v5113
        %v5115 = vlaneseq
        %v5116 = vshrl.u32 %v5115, 7
        %v5117 = vsub.s32 %v5114, %v5116
        %v5118 = vrot.slane %v5104, %v5117
        %v5119 = vcombine.low %v5086, %v5102
        %v5120 = vcombine.high %v5086, %v5102
        %v5122 = vunpack.c.l.s4 1934713408
        %v5123 = vunpack.c.0.s8 %v5122
        %v5124 = vlaneseq
        %v5125 = vshrl.u32 %v5124, 7
        %v5126 = vsub.s32 %v5123, %v5125
        %v5127 = vrot.slane %v5119, %v5126
        %v5129 = vunpack.c.l.s4 1934713408
        %v5130 = vunpack.c.0.s8 %v5129
        %v5131 = vlaneseq
        %v5132 = vshrl.u32 %v5131, 7
        %v5133 = vsub.s32 %v5130, %v5132
        %v5134 = vrot.slane %v5120, %v5133
        %v5135 = vcombine.high %v5111, 0.0
        %v5136 = vcombine.high %v5118, 0.0
        %v5137 = vcombine.high %v5127, 0.0
        %v5138 = vcombine.high %v5134, 0.0
        %v5139 = vcombine.low %v3594, %v5062
        %v5140 = vcombine.high %v3594, %v5062
        %v5142 = vunpack.c.l.s4 1983009808
        %v5143 = vunpack.c.0.s8 %v5142
        %v5144 = vlaneseq
        %v5145 = vshrl.u32 %v5144, 7
        %v5146 = vsub.s32 %v5143, %v5145
        %v5147 = vrot.slane %v5139, %v5146
        %v5149 = vunpack.c.l.s4 1983009808
        %v5150 = vunpack.c.0.s8 %v5149
        %v5151 = vlaneseq
        %v5152 = vshrl.u32 %v5151, 7
        %v5153 = vsub.s32 %v5150, %v5152
        %v5154 = vrot.slane %v5140, %v5153
        %v5155 = vcombine.low %v5056, %v5068
        %v5156 = vcombine.high %v5056, %v5068
        %v5158 = vunpack.c.l.s4 1983009808
        %v5159 = vunpack.c.0.s8 %v5158
        %v5160 = vlaneseq
        %v5161 = vshrl.u32 %v5160, 7
        %v5162 = vsub.s32 %v5159, %v5161
        %v5163 = vrot.slane %v5155, %v5162
        %v5165 = vunpack.c.l.s4 1983009808
        %v5166 = vunpack.c.0.s8 %v5165
        %v5167 = vlaneseq
        %v5168 = vshrl.u32 %v5167, 7
        %v5169 = vsub.s32 %v5166, %v5168
        %v5170 = vrot.slane %v5156, %v5169
        %v5171 = vcombine.low %v5147, %v5163
        %v5172 = vcombine.high %v5147, %v5163
        %v5174 = vunpack.c.l.s4 1934713408
        %v5175 = vunpack.c.0.s8 %v5174
        %v5176 = vlaneseq
        %v5177 = vshrl.u32 %v5176, 7
        %v5178 = vsub.s32 %v5175, %v5177
        %v5179 = vrot.slane %v5171, %v5178
        %v5181 = vunpack.c.l.s4 1934713408
        %v5182 = vunpack.c.0.s8 %v5181
        %v5183 = vlaneseq
        %v5184 = vshrl.u32 %v5183, 7
        %v5185 = vsub.s32 %v5182, %v5184
        %v5186 = vrot.slane %v5172, %v5185
        %v5187 = vcombine.low %v5154, %v5170
        %v5188 = vcombine.high %v5154, %v5170
        %v5190 = vunpack.c.l.s4 1934713408
        %v5191 = vunpack.c.0.s8 %v5190
        %v5192 = vlaneseq
        %v5193 = vshrl.u32 %v5192, 7
        %v5194 = vsub.s32 %v5191, %v5193
        %v5195 = vrot.slane %v5187, %v5194
        %v5197 = vunpack.c.l.s4 1934713408
        %v5198 = vunpack.c.0.s8 %v5197
        %v5199 = vlaneseq
        %v5200 = vshrl.u32 %v5199, 7
        %v5201 = vsub.s32 %v5198, %v5200
        %v5202 = vrot.slane %v5188, %v5201
        %v5203 = vcombine.high %v5179, 0.0
        %v5204 = vcombine.high %v5186, 0.0
        %v5205 = vcombine.high %v5195, 0.0
        %v5206 = vcombine.high %v5202, 0.0
        %v5207 = vcombine.low %v5111, %v5118
        %v5209 = vunpack.c.l.s4 1983009808
        %v5210 = vunpack.c.0.s8 %v5209
        %v5211 = vlaneseq
        %v5212 = vshrl.u32 %v5211, 7
        %v5213 = vsub.s32 %v5210, %v5212
        %v5214 = vrot.slane %v5207, %v5213
        %v5215 = vcombine.low %v5135, %v5136
        %v5217 = vunpack.c.l.s4 1983009808
        %v5218 = vunpack.c.0.s8 %v5217
        %v5219 = vlaneseq
        %v5220 = vshrl.u32 %v5219, 7
        %v5221 = vsub.s32 %v5218, %v5220
        %v5222 = vrot.slane %v5215, %v5221
        %v5223 = vcombine.low %v5127, %v5134
        %v5225 = vunpack.c.l.s4 1983009808
        %v5226 = vunpack.c.0.s8 %v5225
        %v5227 = vlaneseq
        %v5228 = vshrl.u32 %v5227, 7
        %v5229 = vsub.s32 %v5226, %v5228
        %v5230 = vrot.slane %v5223, %v5229
        %v5231 = vcombine.low %v5137, %v5138
        %v5233 = vunpack.c.l.s4 1983009808
        %v5234 = vunpack.c.0.s8 %v5233
        %v5235 = vlaneseq
        %v5236 = vshrl.u32 %v5235, 7
        %v5237 = vsub.s32 %v5234, %v5236
        %v5238 = vrot.slane %v5231, %v5237
        %v5239 = vcombine.low %v5214, %v5222
        %v5240 = vcombine.high %v5214, %v5222
        %v5242 = vunpack.c.l.s4 1934713408
        %v5243 = vunpack.c.0.s8 %v5242
        %v5244 = vlaneseq
        %v5245 = vshrl.u32 %v5244, 7
        %v5246 = vsub.s32 %v5243, %v5245
        %v5247 = vrot.slane %v5239, %v5246
        %v5249 = vunpack.c.l.s4 1934713408
        %v5250 = vunpack.c.0.s8 %v5249
        %v5251 = vlaneseq
        %v5252 = vshrl.u32 %v5251, 7
        %v5253 = vsub.s32 %v5250, %v5252
        %v5254 = vrot.slane %v5240, %v5253
        %v5255 = vcombine.low %v5230, %v5238
        %v5256 = vcombine.high %v5230, %v5238
        %v5258 = vunpack.c.l.s4 1934713408
        %v5259 = vunpack.c.0.s8 %v5258
        %v5260 = vlaneseq
        %v5261 = vshrl.u32 %v5260, 7
        %v5262 = vsub.s32 %v5259, %v5261
        %v5263 = vrot.slane %v5255, %v5262
        %v5265 = vunpack.c.l.s4 1934713408
        %v5266 = vunpack.c.0.s8 %v5265
        %v5267 = vlaneseq
        %v5268 = vshrl.u32 %v5267, 7
        %v5269 = vsub.s32 %v5266, %v5268
        %v5270 = vrot.slane %v5256, %v5269
        %v5271 = vcombine.low %v5247, %v5263
        %v5272 = vcombine.high %v5247, %v5263
        %v5273 = vcombine.low %v5254, %v5270
        %v5274 = vcombine.high %v5254, %v5270
        %v5275 = vcombine.low %v5179, %v5186
        %v5277 = vunpack.c.l.s4 1983009808
        %v5278 = vunpack.c.0.s8 %v5277
        %v5279 = vlaneseq
        %v5280 = vshrl.u32 %v5279, 7
        %v5281 = vsub.s32 %v5278, %v5280
        %v5282 = vrot.slane %v5275, %v5281
        %v5283 = vcombine.low %v5203, %v5204
        %v5285 = vunpack.c.l.s4 1983009808
        %v5286 = vunpack.c.0.s8 %v5285
        %v5287 = vlaneseq
        %v5288 = vshrl.u32 %v5287, 7
        %v5289 = vsub.s32 %v5286, %v5288
        %v5290 = vrot.slane %v5283, %v5289
        %v5291 = vcombine.low %v5195, %v5202
        %v5293 = vunpack.c.l.s4 1983009808
        %v5294 = vunpack.c.0.s8 %v5293
        %v5295 = vlaneseq
        %v5296 = vshrl.u32 %v5295, 7
        %v5297 = vsub.s32 %v5294, %v5296
        %v5298 = vrot.slane %v5291, %v5297
        %v5299 = vcombine.low %v5205, %v5206
        %v5301 = vunpack.c.l.s4 1983009808
        %v5302 = vunpack.c.0.s8 %v5301
        %v5303 = vlaneseq
        %v5304 = vshrl.u32 %v5303, 7
        %v5305 = vsub.s32 %v5302, %v5304
        %v5306 = vrot.slane %v5299, %v5305
        %v5307 = vcombine.low %v5282, %v5290
        %v5308 = vcombine.high %v5282, %v5290
        %v5310 = vunpack.c.l.s4 1934713408
        %v5311 = vunpack.c.0.s8 %v5310
        %v5312 = vlaneseq
        %v5313 = vshrl.u32 %v5312, 7
        %v5314 = vsub.s32 %v5311, %v5313
        %v5315 = vrot.slane %v5307, %v5314
        %v5317 = vunpack.c.l.s4 1934713408
        %v5318 = vunpack.c.0.s8 %v5317
        %v5319 = vlaneseq
        %v5320 = vshrl.u32 %v5319, 7
        %v5321 = vsub.s32 %v5318, %v5320
        %v5322 = vrot.slane %v5308, %v5321
        %v5323 = vcombine.low %v5298, %v5306
        %v5324 = vcombine.high %v5298, %v5306
        %v5326 = vunpack.c.l.s4 1934713408
        %v5327 = vunpack.c.0.s8 %v5326
        %v5328 = vlaneseq
        %v5329 = vshrl.u32 %v5328, 7
        %v5330 = vsub.s32 %v5327, %v5329
        %v5331 = vrot.slane %v5323, %v5330
        %v5333 = vunpack.c.l.s4 1934713408
        %v5334 = vunpack.c.0.s8 %v5333
        %v5335 = vlaneseq
        %v5336 = vshrl.u32 %v5335, 7
        %v5337 = vsub.s32 %v5334, %v5336
        %v5338 = vrot.slane %v5324, %v5337
        %v5339 = vcombine.low %v5315, %v5331
        %v5340 = vcombine.high %v5315, %v5331
        %v5341 = vcombine.low %v5322, %v5338
        %v5342 = vcombine.high %v5322, %v5338
        %v5343 = vpack.c.bf16 %v5339, %v5271
        %v5344 = vpack.c.bf16 %v5340, %v5272
        %v5345 = vpack.c.bf16 %v5341, %v5273
        %v5346 = vpack.c.bf16 %v5342, %v5274
        %5349 = vrot.lane.b32.xlu0 %v3601, 96
        %v5350 = vpop.permute.xlu0 %5349
        %5351 = vrot.lane.b32.xlu0 %v3602, 96
        %v5352 = vpop.permute.xlu0 %5351
        %5355 = vrot.lane.b32.xlu0 %v3601, 64
        %v5356 = vpop.permute.xlu0 %5355
        %5357 = vrot.lane.b32.xlu0 %v3602, 64
        %v5358 = vpop.permute.xlu0 %5357
        %5361 = vrot.lane.b32.xlu0 %v3601, 32
        %v5362 = vpop.permute.xlu0 %5361
        %5363 = vrot.lane.b32.xlu0 %v3602, 32
        %v5364 = vpop.permute.xlu0 %5363
        %v5367 = vcombine.low %v3601, %v5356
        %v5368 = vcombine.high %v3601, %v5356
        %v5370 = vunpack.c.l.s4 1983009808
        %v5371 = vunpack.c.0.s8 %v5370
        %v5372 = vlaneseq
        %v5373 = vshrl.u32 %v5372, 7
        %v5374 = vsub.s32 %v5371, %v5373
        %v5375 = vrot.slane %v5367, %v5374
        %v5377 = vunpack.c.l.s4 1983009808
        %v5378 = vunpack.c.0.s8 %v5377
        %v5379 = vlaneseq
        %v5380 = vshrl.u32 %v5379, 7
        %v5381 = vsub.s32 %v5378, %v5380
        %v5382 = vrot.slane %v5368, %v5381
        %v5383 = vcombine.low %v5350, %v5362
        %v5384 = vcombine.high %v5350, %v5362
        %v5386 = vunpack.c.l.s4 1983009808
        %v5387 = vunpack.c.0.s8 %v5386
        %v5388 = vlaneseq
        %v5389 = vshrl.u32 %v5388, 7
        %v5390 = vsub.s32 %v5387, %v5389
        %v5391 = vrot.slane %v5383, %v5390
        %v5393 = vunpack.c.l.s4 1983009808
        %v5394 = vunpack.c.0.s8 %v5393
        %v5395 = vlaneseq
        %v5396 = vshrl.u32 %v5395, 7
        %v5397 = vsub.s32 %v5394, %v5396
        %v5398 = vrot.slane %v5384, %v5397
        %v5399 = vcombine.low %v5375, %v5391
        %v5400 = vcombine.high %v5375, %v5391
        %v5402 = vunpack.c.l.s4 1934713408
        %v5403 = vunpack.c.0.s8 %v5402
        %v5404 = vlaneseq
        %v5405 = vshrl.u32 %v5404, 7
        %v5406 = vsub.s32 %v5403, %v5405
        %v5407 = vrot.slane %v5399, %v5406
        %v5409 = vunpack.c.l.s4 1934713408
        %v5410 = vunpack.c.0.s8 %v5409
        %v5411 = vlaneseq
        %v5412 = vshrl.u32 %v5411, 7
        %v5413 = vsub.s32 %v5410, %v5412
        %v5414 = vrot.slane %v5400, %v5413
        %v5415 = vcombine.low %v5382, %v5398
        %v5416 = vcombine.high %v5382, %v5398
        %v5418 = vunpack.c.l.s4 1934713408
        %v5419 = vunpack.c.0.s8 %v5418
        %v5420 = vlaneseq
        %v5421 = vshrl.u32 %v5420, 7
        %v5422 = vsub.s32 %v5419, %v5421
        %v5423 = vrot.slane %v5415, %v5422
        %v5425 = vunpack.c.l.s4 1934713408
        %v5426 = vunpack.c.0.s8 %v5425
        %v5427 = vlaneseq
        %v5428 = vshrl.u32 %v5427, 7
        %v5429 = vsub.s32 %v5426, %v5428
        %v5430 = vrot.slane %v5416, %v5429
        %v5431 = vcombine.high %v5407, 0.0
        %v5432 = vcombine.high %v5414, 0.0
        %v5433 = vcombine.high %v5423, 0.0
        %v5434 = vcombine.high %v5430, 0.0
        %v5435 = vcombine.low %v3602, %v5358
        %v5436 = vcombine.high %v3602, %v5358
        %v5438 = vunpack.c.l.s4 1983009808
        %v5439 = vunpack.c.0.s8 %v5438
        %v5440 = vlaneseq
        %v5441 = vshrl.u32 %v5440, 7
        %v5442 = vsub.s32 %v5439, %v5441
        %v5443 = vrot.slane %v5435, %v5442
        %v5445 = vunpack.c.l.s4 1983009808
        %v5446 = vunpack.c.0.s8 %v5445
        %v5447 = vlaneseq
        %v5448 = vshrl.u32 %v5447, 7
        %v5449 = vsub.s32 %v5446, %v5448
        %v5450 = vrot.slane %v5436, %v5449
        %v5451 = vcombine.low %v5352, %v5364
        %v5452 = vcombine.high %v5352, %v5364
        %v5454 = vunpack.c.l.s4 1983009808
        %v5455 = vunpack.c.0.s8 %v5454
        %v5456 = vlaneseq
        %v5457 = vshrl.u32 %v5456, 7
        %v5458 = vsub.s32 %v5455, %v5457
        %v5459 = vrot.slane %v5451, %v5458
        %v5461 = vunpack.c.l.s4 1983009808
        %v5462 = vunpack.c.0.s8 %v5461
        %v5463 = vlaneseq
        %v5464 = vshrl.u32 %v5463, 7
        %v5465 = vsub.s32 %v5462, %v5464
        %v5466 = vrot.slane %v5452, %v5465
        %v5467 = vcombine.low %v5443, %v5459
        %v5468 = vcombine.high %v5443, %v5459
        %v5470 = vunpack.c.l.s4 1934713408
        %v5471 = vunpack.c.0.s8 %v5470
        %v5472 = vlaneseq
        %v5473 = vshrl.u32 %v5472, 7
        %v5474 = vsub.s32 %v5471, %v5473
        %v5475 = vrot.slane %v5467, %v5474
        %v5477 = vunpack.c.l.s4 1934713408
        %v5478 = vunpack.c.0.s8 %v5477
        %v5479 = vlaneseq
        %v5480 = vshrl.u32 %v5479, 7
        %v5481 = vsub.s32 %v5478, %v5480
        %v5482 = vrot.slane %v5468, %v5481
        %v5483 = vcombine.low %v5450, %v5466
        %v5484 = vcombine.high %v5450, %v5466
        %v5486 = vunpack.c.l.s4 1934713408
        %v5487 = vunpack.c.0.s8 %v5486
        %v5488 = vlaneseq
        %v5489 = vshrl.u32 %v5488, 7
        %v5490 = vsub.s32 %v5487, %v5489
        %v5491 = vrot.slane %v5483, %v5490
        %v5493 = vunpack.c.l.s4 1934713408
        %v5494 = vunpack.c.0.s8 %v5493
        %v5495 = vlaneseq
        %v5496 = vshrl.u32 %v5495, 7
        %v5497 = vsub.s32 %v5494, %v5496
        %v5498 = vrot.slane %v5484, %v5497
        %v5499 = vcombine.high %v5475, 0.0
        %v5500 = vcombine.high %v5482, 0.0
        %v5501 = vcombine.high %v5491, 0.0
        %v5502 = vcombine.high %v5498, 0.0
        %v5503 = vcombine.low %v5407, %v5414
        %v5505 = vunpack.c.l.s4 1983009808
        %v5506 = vunpack.c.0.s8 %v5505
        %v5507 = vlaneseq
        %v5508 = vshrl.u32 %v5507, 7
        %v5509 = vsub.s32 %v5506, %v5508
        %v5510 = vrot.slane %v5503, %v5509
        %v5511 = vcombine.low %v5431, %v5432
        %v5513 = vunpack.c.l.s4 1983009808
        %v5514 = vunpack.c.0.s8 %v5513
        %v5515 = vlaneseq
        %v5516 = vshrl.u32 %v5515, 7
        %v5517 = vsub.s32 %v5514, %v5516
        %v5518 = vrot.slane %v5511, %v5517
        %v5519 = vcombine.low %v5423, %v5430
        %v5521 = vunpack.c.l.s4 1983009808
        %v5522 = vunpack.c.0.s8 %v5521
        %v5523 = vlaneseq
        %v5524 = vshrl.u32 %v5523, 7
        %v5525 = vsub.s32 %v5522, %v5524
        %v5526 = vrot.slane %v5519, %v5525
        %v5527 = vcombine.low %v5433, %v5434
        %v5529 = vunpack.c.l.s4 1983009808
        %v5530 = vunpack.c.0.s8 %v5529
        %v5531 = vlaneseq
        %v5532 = vshrl.u32 %v5531, 7
        %v5533 = vsub.s32 %v5530, %v5532
        %v5534 = vrot.slane %v5527, %v5533
        %v5535 = vcombine.low %v5510, %v5518
        %v5536 = vcombine.high %v5510, %v5518
        %v5538 = vunpack.c.l.s4 1934713408
        %v5539 = vunpack.c.0.s8 %v5538
        %v5540 = vlaneseq
        %v5541 = vshrl.u32 %v5540, 7
        %v5542 = vsub.s32 %v5539, %v5541
        %v5543 = vrot.slane %v5535, %v5542
        %v5545 = vunpack.c.l.s4 1934713408
        %v5546 = vunpack.c.0.s8 %v5545
        %v5547 = vlaneseq
        %v5548 = vshrl.u32 %v5547, 7
        %v5549 = vsub.s32 %v5546, %v5548
        %v5550 = vrot.slane %v5536, %v5549
        %v5551 = vcombine.low %v5526, %v5534
        %v5552 = vcombine.high %v5526, %v5534
        %v5554 = vunpack.c.l.s4 1934713408
        %v5555 = vunpack.c.0.s8 %v5554
        %v5556 = vlaneseq
        %v5557 = vshrl.u32 %v5556, 7
        %v5558 = vsub.s32 %v5555, %v5557
        %v5559 = vrot.slane %v5551, %v5558
        %v5561 = vunpack.c.l.s4 1934713408
        %v5562 = vunpack.c.0.s8 %v5561
        %v5563 = vlaneseq
        %v5564 = vshrl.u32 %v5563, 7
        %v5565 = vsub.s32 %v5562, %v5564
        %v5566 = vrot.slane %v5552, %v5565
        %v5567 = vcombine.low %v5543, %v5559
        %v5568 = vcombine.high %v5543, %v5559
        %v5569 = vcombine.low %v5550, %v5566
        %v5570 = vcombine.high %v5550, %v5566
        %v5571 = vcombine.low %v5475, %v5482
        %v5573 = vunpack.c.l.s4 1983009808
        %v5574 = vunpack.c.0.s8 %v5573
        %v5575 = vlaneseq
        %v5576 = vshrl.u32 %v5575, 7
        %v5577 = vsub.s32 %v5574, %v5576
        %v5578 = vrot.slane %v5571, %v5577
        %v5579 = vcombine.low %v5499, %v5500
        %v5581 = vunpack.c.l.s4 1983009808
        %v5582 = vunpack.c.0.s8 %v5581
        %v5583 = vlaneseq
        %v5584 = vshrl.u32 %v5583, 7
        %v5585 = vsub.s32 %v5582, %v5584
        %v5586 = vrot.slane %v5579, %v5585
        %v5587 = vcombine.low %v5491, %v5498
        %v5589 = vunpack.c.l.s4 1983009808
        %v5590 = vunpack.c.0.s8 %v5589
        %v5591 = vlaneseq
        %v5592 = vshrl.u32 %v5591, 7
        %v5593 = vsub.s32 %v5590, %v5592
        %v5594 = vrot.slane %v5587, %v5593
        %v5595 = vcombine.low %v5501, %v5502
        %v5597 = vunpack.c.l.s4 1983009808
        %v5598 = vunpack.c.0.s8 %v5597
        %v5599 = vlaneseq
        %v5600 = vshrl.u32 %v5599, 7
        %v5601 = vsub.s32 %v5598, %v5600
        %v5602 = vrot.slane %v5595, %v5601
        %v5603 = vcombine.low %v5578, %v5586
        %v5604 = vcombine.high %v5578, %v5586
        %v5606 = vunpack.c.l.s4 1934713408
        %v5607 = vunpack.c.0.s8 %v5606
        %v5608 = vlaneseq
        %v5609 = vshrl.u32 %v5608, 7
        %v5610 = vsub.s32 %v5607, %v5609
        %v5611 = vrot.slane %v5603, %v5610
        %v5613 = vunpack.c.l.s4 1934713408
        %v5614 = vunpack.c.0.s8 %v5613
        %v5615 = vlaneseq
        %v5616 = vshrl.u32 %v5615, 7
        %v5617 = vsub.s32 %v5614, %v5616
        %v5618 = vrot.slane %v5604, %v5617
        %v5619 = vcombine.low %v5594, %v5602
        %v5620 = vcombine.high %v5594, %v5602
        %v5622 = vunpack.c.l.s4 1934713408
        %v5623 = vunpack.c.0.s8 %v5622
        %v5624 = vlaneseq
        %v5625 = vshrl.u32 %v5624, 7
        %v5626 = vsub.s32 %v5623, %v5625
        %v5627 = vrot.slane %v5619, %v5626
        %v5629 = vunpack.c.l.s4 1934713408
        %v5630 = vunpack.c.0.s8 %v5629
        %v5631 = vlaneseq
        %v5632 = vshrl.u32 %v5631, 7
        %v5633 = vsub.s32 %v5630, %v5632
        %v5634 = vrot.slane %v5620, %v5633
        %v5635 = vcombine.low %v5611, %v5627
        %v5636 = vcombine.high %v5611, %v5627
        %v5637 = vcombine.low %v5618, %v5634
        %v5638 = vcombine.high %v5618, %v5634
        %v5639 = vpack.c.bf16 %v5635, %v5567
        %v5640 = vpack.c.bf16 %v5636, %v5568
        %v5641 = vpack.c.bf16 %v5637, %v5569
        %v5642 = vpack.c.bf16 %v5638, %v5570
        %v5644 = vsel %vm1463, %v5047, 0
        %v5647 = vsel %vm1463, %v5343, 0
        %5649 = vmatprep.subr.bf16.mxu0 0
        %5650 = vmatpush1.bf16.xpose.msra.mxu0 %v5647
        %5651 = vmatprep.subr.bf16.mxu0 0
        %5652 = vmatpush1.bf16.xpose.msra.mxu0 0
        %5653 = vmatprep.subr.bf16.mxu0 0
        %5654 = vmatpush1.bf16.xpose.msra.mxu0 0
        %5655 = vmatprep.subr.bf16.mxu0 0
        %5656 = vmatpush1.bf16.xpose.msra.mxu0 0
        %5657 = vmatprep.subr.bf16.mxu0 0
        %5658 = vmatpush1.bf16.xpose.msra.mxu0 0
        %5659 = vmatprep.subr.bf16.mxu0 0
        %5660 = vmatpush1.bf16.xpose.msra.mxu0 0
        %5661 = vmatprep.subr.bf16.mxu0 0
        %5662 = vmatpush1.bf16.xpose.msra.mxu0 0
        %5663 = vmatprep.subr.bf16.mxu0 0
        %5664 = vmatpush1.bf16.xpose.msra.mxu0 0
        %5665 = vmatprep.subr.bf16.mxu0 0
        %5666 = vmatpush1.bf16.xpose.msra.mxu0 0
        %5667 = vmatprep.subr.bf16.mxu0 0
        %5668 = vmatpush1.bf16.xpose.msra.mxu0 0
        %5669 = vmatprep.subr.bf16.mxu0 0
        %5670 = vmatpush1.bf16.xpose.msra.mxu0 0
        %5671 = vmatprep.subr.bf16.mxu0 0
        %5672 = vmatpush1.bf16.xpose.msra.mxu0 0
        %5673 = vmatprep.subr.bf16.mxu0 0
        %5674 = vmatpush1.bf16.xpose.msra.mxu0 0
        %5675 = vmatprep.subr.bf16.mxu0 0
        %5676 = vmatpush1.bf16.xpose.msra.mxu0 0
        %5677 = vmatprep.subr.bf16.mxu0 0
        %5678 = vmatpush1.bf16.xpose.msra.mxu0 0
        %5679 = vmatprep.subr.bf16.mxu0 0
        %5680 = vmatpush1.bf16.xpose.msra.mxu0 0
        %5681 = vmatprep.mubr.bf16.mxu0 0
        %5682 = vmatmul.mubr.bf16.gmra.mrb[0].mxu0 %v5644
        %v5683 = vpop.f32.mrb[0].mxu0
        %v5684 = vadd.f32 0.0, %v5683
        %v5685 = vpop.f32.mrb[0].mxu0
        %v5686 = vpop.f32.mrb[0].mxu0
        %v5687 = vpop.f32.mrb[0].mxu0
        %5688 = vdwg.mxu0
        %v5690 = vsel %vm1463, %v5048, 0
        %v5693 = vsel %vm1463, %v5344, 0
        %5695 = vmatprep.subr.bf16.mxu0 0
        %5696 = vmatpush1.bf16.xpose.msra.mxu0 %v5693
        %5697 = vmatprep.subr.bf16.mxu0 0
        %5698 = vmatpush1.bf16.xpose.msra.mxu0 0
        %5699 = vmatprep.subr.bf16.mxu0 0
        %5700 = vmatpush1.bf16.xpose.msra.mxu0 0
        %5701 = vmatprep.subr.bf16.mxu0 0
        %5702 = vmatpush1.bf16.xpose.msra.mxu0 0
        %5703 = vmatprep.subr.bf16.mxu0 0
        %5704 = vmatpush1.bf16.xpose.msra.mxu0 0
        %5705 = vmatprep.subr.bf16.mxu0 0
        %5706 = vmatpush1.bf16.xpose.msra.mxu0 0
        %5707 = vmatprep.subr.bf16.mxu0 0
        %5708 = vmatpush1.bf16.xpose.msra.mxu0 0
        %5709 = vmatprep.subr.bf16.mxu0 0
        %5710 = vmatpush1.bf16.xpose.msra.mxu0 0
        %5711 = vmatprep.subr.bf16.mxu0 0
        %5712 = vmatpush1.bf16.xpose.msra.mxu0 0
        %5713 = vmatprep.subr.bf16.mxu0 0
        %5714 = vmatpush1.bf16.xpose.msra.mxu0 0
        %5715 = vmatprep.subr.bf16.mxu0 0
        %5716 = vmatpush1.bf16.xpose.msra.mxu0 0
        %5717 = vmatprep.subr.bf16.mxu0 0
        %5718 = vmatpush1.bf16.xpose.msra.mxu0 0
        %5719 = vmatprep.subr.bf16.mxu0 0
        %5720 = vmatpush1.bf16.xpose.msra.mxu0 0
        %5721 = vmatprep.subr.bf16.mxu0 0
        %5722 = vmatpush1.bf16.xpose.msra.mxu0 0
        %5723 = vmatprep.subr.bf16.mxu0 0
        %5724 = vmatpush1.bf16.xpose.msra.mxu0 0
        %5725 = vmatprep.subr.bf16.mxu0 0
        %5726 = vmatpush1.bf16.xpose.msra.mxu0 0
        %5727 = vmatprep.mubr.bf16.mxu0 0
        %5728 = vmatmul.mubr.bf16.gmra.mrb[0].mxu0 %v5690
        %v5729 = vpop.f32.mrb[0].mxu0
        %v5730 = vadd.f32 0.0, %v5729
        %v5731 = vpop.f32.mrb[0].mxu0
        %v5732 = vpop.f32.mrb[0].mxu0
        %v5733 = vpop.f32.mrb[0].mxu0
        %5734 = vdwg.mxu0
        %v5736 = vsel %vm1463, %v5049, 0
        %v5739 = vsel %vm1463, %v5345, 0
        %5741 = vmatprep.subr.bf16.mxu0 0
        %5742 = vmatpush1.bf16.xpose.msra.mxu0 %v5739
        %5743 = vmatprep.subr.bf16.mxu0 0
        %5744 = vmatpush1.bf16.xpose.msra.mxu0 0
        %5745 = vmatprep.subr.bf16.mxu0 0
        %5746 = vmatpush1.bf16.xpose.msra.mxu0 0
        %5747 = vmatprep.subr.bf16.mxu0 0
        %5748 = vmatpush1.bf16.xpose.msra.mxu0 0
        %5749 = vmatprep.subr.bf16.mxu0 0
        %5750 = vmatpush1.bf16.xpose.msra.mxu0 0
        %5751 = vmatprep.subr.bf16.mxu0 0
        %5752 = vmatpush1.bf16.xpose.msra.mxu0 0
        %5753 = vmatprep.subr.bf16.mxu0 0
        %5754 = vmatpush1.bf16.xpose.msra.mxu0 0
        %5755 = vmatprep.subr.bf16.mxu0 0
        %5756 = vmatpush1.bf16.xpose.msra.mxu0 0
        %5757 = vmatprep.subr.bf16.mxu0 0
        %5758 = vmatpush1.bf16.xpose.msra.mxu0 0
        %5759 = vmatprep.subr.bf16.mxu0 0
        %5760 = vmatpush1.bf16.xpose.msra.mxu0 0
        %5761 = vmatprep.subr.bf16.mxu0 0
        %5762 = vmatpush1.bf16.xpose.msra.mxu0 0
        %5763 = vmatprep.subr.bf16.mxu0 0
        %5764 = vmatpush1.bf16.xpose.msra.mxu0 0
        %5765 = vmatprep.subr.bf16.mxu0 0
        %5766 = vmatpush1.bf16.xpose.msra.mxu0 0
        %5767 = vmatprep.subr.bf16.mxu0 0
        %5768 = vmatpush1.bf16.xpose.msra.mxu0 0
        %5769 = vmatprep.subr.bf16.mxu0 0
        %5770 = vmatpush1.bf16.xpose.msra.mxu0 0
        %5771 = vmatprep.subr.bf16.mxu0 0
        %5772 = vmatpush1.bf16.xpose.msra.mxu0 0
        %5773 = vmatprep.mubr.bf16.mxu0 0
        %5774 = vmatmul.mubr.bf16.gmra.mrb[0].mxu0 %v5736
        %v5775 = vpop.f32.mrb[0].mxu0
        %v5776 = vadd.f32 0.0, %v5775
        %v5777 = vpop.f32.mrb[0].mxu0
        %v5778 = vpop.f32.mrb[0].mxu0
        %v5779 = vpop.f32.mrb[0].mxu0
        %5780 = vdwg.mxu0
        %v5782 = vsel %vm1463, %v5050, 0
        %v5785 = vsel %vm1463, %v5346, 0
        %5787 = vmatprep.subr.bf16.mxu0 0
        %5788 = vmatpush1.bf16.xpose.msra.mxu0 %v5785
        %5789 = vmatprep.subr.bf16.mxu0 0
        %5790 = vmatpush1.bf16.xpose.msra.mxu0 0
        %5791 = vmatprep.subr.bf16.mxu0 0
        %5792 = vmatpush1.bf16.xpose.msra.mxu0 0
        %5793 = vmatprep.subr.bf16.mxu0 0
        %5794 = vmatpush1.bf16.xpose.msra.mxu0 0
        %5795 = vmatprep.subr.bf16.mxu0 0
        %5796 = vmatpush1.bf16.xpose.msra.mxu0 0
        %5797 = vmatprep.subr.bf16.mxu0 0
        %5798 = vmatpush1.bf16.xpose.msra.mxu0 0
        %5799 = vmatprep.subr.bf16.mxu0 0
        %5800 = vmatpush1.bf16.xpose.msra.mxu0 0
        %5801 = vmatprep.subr.bf16.mxu0 0
        %5802 = vmatpush1.bf16.xpose.msra.mxu0 0
        %5803 = vmatprep.subr.bf16.mxu0 0
        %5804 = vmatpush1.bf16.xpose.msra.mxu0 0
        %5805 = vmatprep.subr.bf16.mxu0 0
        %5806 = vmatpush1.bf16.xpose.msra.mxu0 0
        %5807 = vmatprep.subr.bf16.mxu0 0
        %5808 = vmatpush1.bf16.xpose.msra.mxu0 0
        %5809 = vmatprep.subr.bf16.mxu0 0
        %5810 = vmatpush1.bf16.xpose.msra.mxu0 0
        %5811 = vmatprep.subr.bf16.mxu0 0
        %5812 = vmatpush1.bf16.xpose.msra.mxu0 0
        %5813 = vmatprep.subr.bf16.mxu0 0
        %5814 = vmatpush1.bf16.xpose.msra.mxu0 0
        %5815 = vmatprep.subr.bf16.mxu0 0
        %5816 = vmatpush1.bf16.xpose.msra.mxu0 0
        %5817 = vmatprep.subr.bf16.mxu0 0
        %5818 = vmatpush1.bf16.xpose.msra.mxu0 0
        %5819 = vmatprep.mubr.bf16.mxu0 0
        %5820 = vmatmul.mubr.bf16.gmra.mrb[0].mxu0 %v5782
        %v5821 = vpop.f32.mrb[0].mxu0
        %v5822 = vadd.f32 0.0, %v5821
        %v5823 = vpop.f32.mrb[0].mxu0
        %v5824 = vpop.f32.mrb[0].mxu0
        %v5825 = vpop.f32.mrb[0].mxu0
        %5826 = vdwg.mxu0
        %v5827 = vsel %vm4529, %v5684, -inf
        %5828 = vmax.xlane.f32.xlu0 %v5827
        %v5829 = vpop.xlane.xlu0 %5828
        %v5830 = vsel %vm4529, %v5730, -inf
        %5831 = vmax.xlane.f32.xlu0 %v5830
        %v5832 = vpop.xlane.xlu0 %5831
        %v5833 = vsel %vm4529, %v5776, -inf
        %5834 = vmax.xlane.f32.xlu0 %v5833
        %v5835 = vpop.xlane.xlu0 %5834
        %v5836 = vsel %vm4529, %v5822, -inf
        %5837 = vmax.xlane.f32.xlu0 %v5836
        %v5838 = vpop.xlane.xlu0 %5837
        %v5839 = vsub.f32 %v5684, %v5829
        %v5840 = vsub.f32 %v5730, %v5832
        %v5841 = vsub.f32 %v5776, %v5835
        %v5842 = vsub.f32 %v5822, %v5838
        %v5843 = vmul.f32 %v5839, 1.442695
        %v5844 = vpow.pop %v5843
        %v5845 = vmul.f32 %v5840, 1.442695
        %v5846 = vpow.pop %v5845
        %v5847 = vmul.f32 %v5841, 1.442695
        %v5848 = vpow.pop %v5847
        %v5849 = vmul.f32 %v5842, 1.442695
        %v5850 = vpow.pop %v5849
        %v5851 = vsel %vm4529, %v5844, 0.0
        %5852 = vadd.xlane.f32.xlu0 %v5851
        %v5853 = vpop.xlane.xlu0 %5852
        %v5854 = vsel %vm4529, %v5846, 0.0
        %5855 = vadd.xlane.f32.xlu0 %v5854
        %v5856 = vpop.xlane.xlu0 %5855
        %v5857 = vsel %vm4529, %v5848, 0.0
        %5858 = vadd.xlane.f32.xlu0 %v5857
        %v5859 = vpop.xlane.xlu0 %5858
        %v5860 = vsel %vm4529, %v5850, 0.0
        %5861 = vadd.xlane.f32.xlu0 %v5860
        %v5862 = vpop.xlane.xlu0 %5861
        %v5863 = vrcp.pop %v5853
        %v5864 = vrcp.pop %v5856
        %v5865 = vrcp.pop %v5859
        %v5866 = vrcp.pop %v5862
        %v5867 = vmul.f32 %v5844, %v5863
        %v5868 = vmul.f32 %v5846, %v5864
        %v5869 = vmul.f32 %v5848, %v5865
        %v5870 = vmul.f32 %v5850, %v5866
        %v5871 = vpack.c.bf16 %v5867, %v5867
        %v5872 = vpack.c.bf16 %v5868, %v5868
        %v5873 = vpack.c.bf16 %v5869, %v5869
        %v5874 = vpack.c.bf16 %v5870, %v5870
        %v5876 = vsel %vm4529, %v5871, 0
        %5878 = vmatprep.subr.bf16.mxu0 0
        %5879 = vmatpush1.bf16.msra.mxu0 %v5639
        %5880 = vmatprep.subr.bf16.mxu0 0
        %5881 = vmatpush1.bf16.msra.mxu0 0
        %5882 = vmatprep.subr.bf16.mxu0 0
        %5883 = vmatpush1.bf16.msra.mxu0 0
        %5884 = vmatprep.subr.bf16.mxu0 0
        %5885 = vmatpush1.bf16.msra.mxu0 0
        %5886 = vmatprep.subr.bf16.mxu0 0
        %5887 = vmatpush1.bf16.msra.mxu0 0
        %5888 = vmatprep.subr.bf16.mxu0 0
        %5889 = vmatpush1.bf16.msra.mxu0 0
        %5890 = vmatprep.subr.bf16.mxu0 0
        %5891 = vmatpush1.bf16.msra.mxu0 0
        %5892 = vmatprep.subr.bf16.mxu0 0
        %5893 = vmatpush1.bf16.msra.mxu0 0
        %5894 = vmatprep.subr.bf16.mxu0 0
        %5895 = vmatpush1.bf16.msra.mxu0 0
        %5896 = vmatprep.subr.bf16.mxu0 0
        %5897 = vmatpush1.bf16.msra.mxu0 0
        %5898 = vmatprep.subr.bf16.mxu0 0
        %5899 = vmatpush1.bf16.msra.mxu0 0
        %5900 = vmatprep.subr.bf16.mxu0 0
        %5901 = vmatpush1.bf16.msra.mxu0 0
        %5902 = vmatprep.subr.bf16.mxu0 0
        %5903 = vmatpush1.bf16.msra.mxu0 0
        %5904 = vmatprep.subr.bf16.mxu0 0
        %5905 = vmatpush1.bf16.msra.mxu0 0
        %5906 = vmatprep.subr.bf16.mxu0 0
        %5907 = vmatpush1.bf16.msra.mxu0 0
        %5908 = vmatprep.subr.bf16.mxu0 0
        %5909 = vmatpush1.bf16.msra.mxu0 0
        %5910 = vmatprep.mubr.bf16.mxu0 0
        %5911 = vmatmul.mubr.bf16.gmra.mrb[0].mxu0 %v5876
        %v5912 = vpop.f32.mrb[0].mxu0
        %v5913 = vadd.f32 0.0, %v5912
        %v5914 = vpop.f32.mrb[0].mxu0
        %v5915 = vpop.f32.mrb[0].mxu0
        %v5916 = vpop.f32.mrb[0].mxu0
        %5917 = vdwg.mxu0
        %v5919 = vsel %vm4529, %v5872, 0
        %5921 = vmatprep.subr.bf16.mxu0 0
        %5922 = vmatpush1.bf16.msra.mxu0 %v5640
        %5923 = vmatprep.subr.bf16.mxu0 0
        %5924 = vmatpush1.bf16.msra.mxu0 0
        %5925 = vmatprep.subr.bf16.mxu0 0
        %5926 = vmatpush1.bf16.msra.mxu0 0
        %5927 = vmatprep.subr.bf16.mxu0 0
        %5928 = vmatpush1.bf16.msra.mxu0 0
        %5929 = vmatprep.subr.bf16.mxu0 0
        %5930 = vmatpush1.bf16.msra.mxu0 0
        %5931 = vmatprep.subr.bf16.mxu0 0
        %5932 = vmatpush1.bf16.msra.mxu0 0
        %5933 = vmatprep.subr.bf16.mxu0 0
        %5934 = vmatpush1.bf16.msra.mxu0 0
        %5935 = vmatprep.subr.bf16.mxu0 0
        %5936 = vmatpush1.bf16.msra.mxu0 0
        %5937 = vmatprep.subr.bf16.mxu0 0
        %5938 = vmatpush1.bf16.msra.mxu0 0
        %5939 = vmatprep.subr.bf16.mxu0 0
        %5940 = vmatpush1.bf16.msra.mxu0 0
        %5941 = vmatprep.subr.bf16.mxu0 0
        %5942 = vmatpush1.bf16.msra.mxu0 0
        %5943 = vmatprep.subr.bf16.mxu0 0
        %5944 = vmatpush1.bf16.msra.mxu0 0
        %5945 = vmatprep.subr.bf16.mxu0 0
        %5946 = vmatpush1.bf16.msra.mxu0 0
        %5947 = vmatprep.subr.bf16.mxu0 0
        %5948 = vmatpush1.bf16.msra.mxu0 0
        %5949 = vmatprep.subr.bf16.mxu0 0
        %5950 = vmatpush1.bf16.msra.mxu0 0
        %5951 = vmatprep.subr.bf16.mxu0 0
        %5952 = vmatpush1.bf16.msra.mxu0 0
        %5953 = vmatprep.mubr.bf16.mxu0 0
        %5954 = vmatmul.mubr.bf16.gmra.mrb[0].mxu0 %v5919
        %v5955 = vpop.f32.mrb[0].mxu0
        %v5956 = vadd.f32 0.0, %v5955
        %v5957 = vpop.f32.mrb[0].mxu0
        %v5958 = vpop.f32.mrb[0].mxu0
        %v5959 = vpop.f32.mrb[0].mxu0
        %5960 = vdwg.mxu0
        %v5962 = vsel %vm4529, %v5873, 0
        %5964 = vmatprep.subr.bf16.mxu0 0
        %5965 = vmatpush1.bf16.msra.mxu0 %v5641
        %5966 = vmatprep.subr.bf16.mxu0 0
        %5967 = vmatpush1.bf16.msra.mxu0 0
        %5968 = vmatprep.subr.bf16.mxu0 0
        %5969 = vmatpush1.bf16.msra.mxu0 0
        %5970 = vmatprep.subr.bf16.mxu0 0
        %5971 = vmatpush1.bf16.msra.mxu0 0
        %5972 = vmatprep.subr.bf16.mxu0 0
        %5973 = vmatpush1.bf16.msra.mxu0 0
        %5974 = vmatprep.subr.bf16.mxu0 0
        %5975 = vmatpush1.bf16.msra.mxu0 0
        %5976 = vmatprep.subr.bf16.mxu0 0
        %5977 = vmatpush1.bf16.msra.mxu0 0
        %5978 = vmatprep.subr.bf16.mxu0 0
        %5979 = vmatpush1.bf16.msra.mxu0 0
        %5980 = vmatprep.subr.bf16.mxu0 0
        %5981 = vmatpush1.bf16.msra.mxu0 0
        %5982 = vmatprep.subr.bf16.mxu0 0
        %5983 = vmatpush1.bf16.msra.mxu0 0
        %5984 = vmatprep.subr.bf16.mxu0 0
        %5985 = vmatpush1.bf16.msra.mxu0 0
        %5986 = vmatprep.subr.bf16.mxu0 0
        %5987 = vmatpush1.bf16.msra.mxu0 0
        %5988 = vmatprep.subr.bf16.mxu0 0
        %5989 = vmatpush1.bf16.msra.mxu0 0
        %5990 = vmatprep.subr.bf16.mxu0 0
        %5991 = vmatpush1.bf16.msra.mxu0 0
        %5992 = vmatprep.subr.bf16.mxu0 0
        %5993 = vmatpush1.bf16.msra.mxu0 0
        %5994 = vmatprep.subr.bf16.mxu0 0
        %5995 = vmatpush1.bf16.msra.mxu0 0
        %5996 = vmatprep.mubr.bf16.mxu0 0
        %5997 = vmatmul.mubr.bf16.gmra.mrb[0].mxu0 %v5962
        %v5998 = vpop.f32.mrb[0].mxu0
        %v5999 = vadd.f32 0.0, %v5998
        %v6000 = vpop.f32.mrb[0].mxu0
        %v6001 = vpop.f32.mrb[0].mxu0
        %v6002 = vpop.f32.mrb[0].mxu0
        %6003 = vdwg.mxu0
        %v6005 = vsel %vm4529, %v5874, 0
        %6007 = vmatprep.subr.bf16.mxu0 0
        %6008 = vmatpush1.bf16.msra.mxu0 %v5642
        %6009 = vmatprep.subr.bf16.mxu0 0
        %6010 = vmatpush1.bf16.msra.mxu0 0
        %6011 = vmatprep.subr.bf16.mxu0 0
        %6012 = vmatpush1.bf16.msra.mxu0 0
        %6013 = vmatprep.subr.bf16.mxu0 0
        %6014 = vmatpush1.bf16.msra.mxu0 0
        %6015 = vmatprep.subr.bf16.mxu0 0
        %6016 = vmatpush1.bf16.msra.mxu0 0
        %6017 = vmatprep.subr.bf16.mxu0 0
        %6018 = vmatpush1.bf16.msra.mxu0 0
        %6019 = vmatprep.subr.bf16.mxu0 0
        %6020 = vmatpush1.bf16.msra.mxu0 0
        %6021 = vmatprep.subr.bf16.mxu0 0
        %6022 = vmatpush1.bf16.msra.mxu0 0
        %6023 = vmatprep.subr.bf16.mxu0 0
        %6024 = vmatpush1.bf16.msra.mxu0 0
        %6025 = vmatprep.subr.bf16.mxu0 0
        %6026 = vmatpush1.bf16.msra.mxu0 0
        %6027 = vmatprep.subr.bf16.mxu0 0
        %6028 = vmatpush1.bf16.msra.mxu0 0
        %6029 = vmatprep.subr.bf16.mxu0 0
        %6030 = vmatpush1.bf16.msra.mxu0 0
        %6031 = vmatprep.subr.bf16.mxu0 0
        %6032 = vmatpush1.bf16.msra.mxu0 0
        %6033 = vmatprep.subr.bf16.mxu0 0
        %6034 = vmatpush1.bf16.msra.mxu0 0
        %6035 = vmatprep.subr.bf16.mxu0 0
        %6036 = vmatpush1.bf16.msra.mxu0 0
        %6037 = vmatprep.subr.bf16.mxu0 0
        %6038 = vmatpush1.bf16.msra.mxu0 0
        %6039 = vmatprep.mubr.bf16.mxu0 0
        %6040 = vmatmul.mubr.bf16.gmra.mrb[0].mxu0 %v6005
        %v6041 = vpop.f32.mrb[0].mxu0
        %v6042 = vadd.f32 0.0, %v6041
        %v6043 = vpop.f32.mrb[0].mxu0
        %v6044 = vpop.f32.mrb[0].mxu0
        %v6045 = vpop.f32.mrb[0].mxu0
        %6046 = vdwg.mxu0
        %v6047 = vcombine.low %v5913, %v5999
        %v6048 = vcombine.high %v5913, %v5999
        %v6050 = vunpack.c.l.s4 1983009808
        %v6051 = vunpack.c.0.s8 %v6050
        %v6052 = vlaneseq
        %v6053 = vshrl.u32 %v6052, 7
        %v6054 = vsub.s32 %v6051, %v6053
        %v6055 = vrot.slane %v6047, %v6054
        %v6057 = vunpack.c.l.s4 1983009808
        %v6058 = vunpack.c.0.s8 %v6057
        %v6059 = vlaneseq
        %v6060 = vshrl.u32 %v6059, 7
        %v6061 = vsub.s32 %v6058, %v6060
        %v6062 = vrot.slane %v6048, %v6061
        %v6063 = vcombine.low %v5956, %v6042
        %v6064 = vcombine.high %v5956, %v6042
        %v6066 = vunpack.c.l.s4 1983009808
        %v6067 = vunpack.c.0.s8 %v6066
        %v6068 = vlaneseq
        %v6069 = vshrl.u32 %v6068, 7
        %v6070 = vsub.s32 %v6067, %v6069
        %v6071 = vrot.slane %v6063, %v6070
        %v6073 = vunpack.c.l.s4 1983009808
        %v6074 = vunpack.c.0.s8 %v6073
        %v6075 = vlaneseq
        %v6076 = vshrl.u32 %v6075, 7
        %v6077 = vsub.s32 %v6074, %v6076
        %v6078 = vrot.slane %v6064, %v6077
        %v6079 = vcombine.low %v6055, %v6071
        %v6080 = vcombine.high %v6055, %v6071
        %v6082 = vunpack.c.l.s4 1934713408
        %v6083 = vunpack.c.0.s8 %v6082
        %v6084 = vlaneseq
        %v6085 = vshrl.u32 %v6084, 7
        %v6086 = vsub.s32 %v6083, %v6085
        %v6087 = vrot.slane %v6079, %v6086
        %v6089 = vunpack.c.l.s4 1934713408
        %v6090 = vunpack.c.0.s8 %v6089
        %v6091 = vlaneseq
        %v6092 = vshrl.u32 %v6091, 7
        %v6093 = vsub.s32 %v6090, %v6092
        %v6094 = vrot.slane %v6080, %v6093
        %v6095 = vcombine.low %v6062, %v6078
        %v6096 = vcombine.high %v6062, %v6078
        %v6098 = vunpack.c.l.s4 1934713408
        %v6099 = vunpack.c.0.s8 %v6098
        %v6100 = vlaneseq
        %v6101 = vshrl.u32 %v6100, 7
        %v6102 = vsub.s32 %v6099, %v6101
        %v6103 = vrot.slane %v6095, %v6102
        %v6105 = vunpack.c.l.s4 1934713408
        %v6106 = vunpack.c.0.s8 %v6105
        %v6107 = vlaneseq
        %v6108 = vshrl.u32 %v6107, 7
        %v6109 = vsub.s32 %v6106, %v6108
        %v6110 = vrot.slane %v6096, %v6109
        %v6111 = vcombine.high %v6087, 0.0
        %v6112 = vcombine.high %v6094, 0.0
        %v6113 = vcombine.high %v6103, 0.0
        %v6114 = vcombine.high %v6110, 0.0
        %v6115 = vcombine.low %v6087, %v6094
        %v6117 = vunpack.c.l.s4 1983009808
        %v6118 = vunpack.c.0.s8 %v6117
        %v6119 = vlaneseq
        %v6120 = vshrl.u32 %v6119, 7
        %v6121 = vsub.s32 %v6118, %v6120
        %v6122 = vrot.slane %v6115, %v6121
        %v6123 = vcombine.low %v6111, %v6112
        %v6125 = vunpack.c.l.s4 1983009808
        %v6126 = vunpack.c.0.s8 %v6125
        %v6127 = vlaneseq
        %v6128 = vshrl.u32 %v6127, 7
        %v6129 = vsub.s32 %v6126, %v6128
        %v6130 = vrot.slane %v6123, %v6129
        %v6131 = vcombine.low %v6103, %v6110
        %v6133 = vunpack.c.l.s4 1983009808
        %v6134 = vunpack.c.0.s8 %v6133
        %v6135 = vlaneseq
        %v6136 = vshrl.u32 %v6135, 7
        %v6137 = vsub.s32 %v6134, %v6136
        %v6138 = vrot.slane %v6131, %v6137
        %v6139 = vcombine.low %v6113, %v6114
        %v6141 = vunpack.c.l.s4 1983009808
        %v6142 = vunpack.c.0.s8 %v6141
        %v6143 = vlaneseq
        %v6144 = vshrl.u32 %v6143, 7
        %v6145 = vsub.s32 %v6142, %v6144
        %v6146 = vrot.slane %v6139, %v6145
        %v6147 = vcombine.low %v6122, %v6130
        %v6148 = vcombine.high %v6122, %v6130
        %v6150 = vunpack.c.l.s4 1934713408
        %v6151 = vunpack.c.0.s8 %v6150
        %v6152 = vlaneseq
        %v6153 = vshrl.u32 %v6152, 7
        %v6154 = vsub.s32 %v6151, %v6153
        %v6155 = vrot.slane %v6147, %v6154
        %v6157 = vunpack.c.l.s4 1934713408
        %v6158 = vunpack.c.0.s8 %v6157
        %v6159 = vlaneseq
        %v6160 = vshrl.u32 %v6159, 7
        %v6161 = vsub.s32 %v6158, %v6160
        %v6162 = vrot.slane %v6148, %v6161
        %v6163 = vcombine.low %v6138, %v6146
        %v6164 = vcombine.high %v6138, %v6146
        %v6166 = vunpack.c.l.s4 1934713408
        %v6167 = vunpack.c.0.s8 %v6166
        %v6168 = vlaneseq
        %v6169 = vshrl.u32 %v6168, 7
        %v6170 = vsub.s32 %v6167, %v6169
        %v6171 = vrot.slane %v6163, %v6170
        %v6173 = vunpack.c.l.s4 1934713408
        %v6174 = vunpack.c.0.s8 %v6173
        %v6175 = vlaneseq
        %v6176 = vshrl.u32 %v6175, 7
        %v6177 = vsub.s32 %v6174, %v6176
        %v6178 = vrot.slane %v6164, %v6177
        %v6179 = vcombine.low %v6155, %v6171
        %v6180 = vcombine.high %v6155, %v6171
        %v6181 = vcombine.low %v6162, %v6178
        %v6182 = vcombine.high %v6162, %v6178
        %6184 = vrot.lane.b32.xlu0 %v6180, 32
        %v6185 = vpop.permute.xlu0 %6184
        %6188 = vrot.lane.b32.xlu0 %v6181, 64
        %v6189 = vpop.permute.xlu0 %6188
        %6192 = vrot.lane.b32.xlu0 %v6182, 96
        %v6193 = vpop.permute.xlu0 %6192
        %v6195 = vsel %vm1463, %v6179, %v6185
        %v6196 = vsel %vm2031, %v6195, %v6189
        %v6197 = vsel %vm2033, %v6196, %v6193
        %v6198 = vlaneseq
        %v6199 = vshrl.u32 %v6198, 7
        %v6200 = vsub.s32 4, %v6199
        %v6201 = vrot.slane %v773, %v6200
        %v6202 = vadd.f32 %v3301, %v6201
        %v6203 = vadd.f32 %v3305, %v6201
        %v6204 = vlaneseq
        %v6205 = vshrl.u32 %v6204, 7
        %v6206 = vsub.s32 7, %v6205
        %v6207 = vrot.slane %v773, %v6206
        %v6208 = vadd.f32 %v3573, %v6207
        %v6209 = vadd.f32 %v3577, %v6207
        %v6210 = vlaneseq
        %v6211 = vshrl.u32 %v6210, 7
        %v6212 = vsub.s32 0, %v6211
        %v6213 = vrot.slane %v774, %v6212
        %v6214 = vadd.f32 %v3575, %v6213
        %v6215 = vadd.f32 %v3579, %v6213
        %6217 = vrot.lane.b32.xlu0 %v6202, 96
        %v6218 = vpop.permute.xlu0 %6217
        %6220 = vrot.lane.b32.xlu0 %v6202, 64
        %v6221 = vpop.permute.xlu0 %6220
        %6223 = vrot.lane.b32.xlu0 %v6202, 32
        %v6224 = vpop.permute.xlu0 %6223
        %v6226 = vcombine.low %v6202, %v6221
        %v6227 = vcombine.high %v6202, %v6221
        %v6229 = vunpack.c.l.s4 1983009808
        %v6230 = vunpack.c.0.s8 %v6229
        %v6231 = vlaneseq
        %v6232 = vshrl.u32 %v6231, 7
        %v6233 = vsub.s32 %v6230, %v6232
        %v6234 = vrot.slane %v6226, %v6233
        %v6236 = vunpack.c.l.s4 1983009808
        %v6237 = vunpack.c.0.s8 %v6236
        %v6238 = vlaneseq
        %v6239 = vshrl.u32 %v6238, 7
        %v6240 = vsub.s32 %v6237, %v6239
        %v6241 = vrot.slane %v6227, %v6240
        %v6242 = vcombine.low %v6218, %v6224
        %v6243 = vcombine.high %v6218, %v6224
        %v6245 = vunpack.c.l.s4 1983009808
        %v6246 = vunpack.c.0.s8 %v6245
        %v6247 = vlaneseq
        %v6248 = vshrl.u32 %v6247, 7
        %v6249 = vsub.s32 %v6246, %v6248
        %v6250 = vrot.slane %v6242, %v6249
        %v6252 = vunpack.c.l.s4 1983009808
        %v6253 = vunpack.c.0.s8 %v6252
        %v6254 = vlaneseq
        %v6255 = vshrl.u32 %v6254, 7
        %v6256 = vsub.s32 %v6253, %v6255
        %v6257 = vrot.slane %v6243, %v6256
        %v6258 = vcombine.low %v6234, %v6250
        %v6259 = vcombine.high %v6234, %v6250
        %v6261 = vunpack.c.l.s4 1934713408
        %v6262 = vunpack.c.0.s8 %v6261
        %v6263 = vlaneseq
        %v6264 = vshrl.u32 %v6263, 7
        %v6265 = vsub.s32 %v6262, %v6264
        %v6266 = vrot.slane %v6258, %v6265
        %v6268 = vunpack.c.l.s4 1934713408
        %v6269 = vunpack.c.0.s8 %v6268
        %v6270 = vlaneseq
        %v6271 = vshrl.u32 %v6270, 7
        %v6272 = vsub.s32 %v6269, %v6271
        %v6273 = vrot.slane %v6259, %v6272
        %v6274 = vcombine.low %v6241, %v6257
        %v6275 = vcombine.high %v6241, %v6257
        %v6277 = vunpack.c.l.s4 1934713408
        %v6278 = vunpack.c.0.s8 %v6277
        %v6279 = vlaneseq
        %v6280 = vshrl.u32 %v6279, 7
        %v6281 = vsub.s32 %v6278, %v6280
        %v6282 = vrot.slane %v6274, %v6281
        %v6284 = vunpack.c.l.s4 1934713408
        %v6285 = vunpack.c.0.s8 %v6284
        %v6286 = vlaneseq
        %v6287 = vshrl.u32 %v6286, 7
        %v6288 = vsub.s32 %v6285, %v6287
        %v6289 = vrot.slane %v6275, %v6288
        %v6290 = vcombine.high %v6266, 0.0
        %v6291 = vcombine.high %v6273, 0.0
        %v6292 = vcombine.high %v6282, 0.0
        %v6293 = vcombine.high %v6289, 0.0
        %v6294 = vcombine.low %v6266, %v6273
        %v6296 = vunpack.c.l.s4 1983009808
        %v6297 = vunpack.c.0.s8 %v6296
        %v6298 = vlaneseq
        %v6299 = vshrl.u32 %v6298, 7
        %v6300 = vsub.s32 %v6297, %v6299
        %v6301 = vrot.slane %v6294, %v6300
        %v6302 = vcombine.low %v6290, %v6291
        %v6304 = vunpack.c.l.s4 1983009808
        %v6305 = vunpack.c.0.s8 %v6304
        %v6306 = vlaneseq
        %v6307 = vshrl.u32 %v6306, 7
        %v6308 = vsub.s32 %v6305, %v6307
        %v6309 = vrot.slane %v6302, %v6308
        %v6310 = vcombine.low %v6282, %v6289
        %v6312 = vunpack.c.l.s4 1983009808
        %v6313 = vunpack.c.0.s8 %v6312
        %v6314 = vlaneseq
        %v6315 = vshrl.u32 %v6314, 7
        %v6316 = vsub.s32 %v6313, %v6315
        %v6317 = vrot.slane %v6310, %v6316
        %v6318 = vcombine.low %v6292, %v6293
        %v6320 = vunpack.c.l.s4 1983009808
        %v6321 = vunpack.c.0.s8 %v6320
        %v6322 = vlaneseq
        %v6323 = vshrl.u32 %v6322, 7
        %v6324 = vsub.s32 %v6321, %v6323
        %v6325 = vrot.slane %v6318, %v6324
        %v6326 = vcombine.low %v6301, %v6309
        %v6327 = vcombine.high %v6301, %v6309
        %v6329 = vunpack.c.l.s4 1934713408
        %v6330 = vunpack.c.0.s8 %v6329
        %v6331 = vlaneseq
        %v6332 = vshrl.u32 %v6331, 7
        %v6333 = vsub.s32 %v6330, %v6332
        %v6334 = vrot.slane %v6326, %v6333
        %v6336 = vunpack.c.l.s4 1934713408
        %v6337 = vunpack.c.0.s8 %v6336
        %v6338 = vlaneseq
        %v6339 = vshrl.u32 %v6338, 7
        %v6340 = vsub.s32 %v6337, %v6339
        %v6341 = vrot.slane %v6327, %v6340
        %v6342 = vcombine.low %v6317, %v6325
        %v6343 = vcombine.high %v6317, %v6325
        %v6345 = vunpack.c.l.s4 1934713408
        %v6346 = vunpack.c.0.s8 %v6345
        %v6347 = vlaneseq
        %v6348 = vshrl.u32 %v6347, 7
        %v6349 = vsub.s32 %v6346, %v6348
        %v6350 = vrot.slane %v6342, %v6349
        %v6352 = vunpack.c.l.s4 1934713408
        %v6353 = vunpack.c.0.s8 %v6352
        %v6354 = vlaneseq
        %v6355 = vshrl.u32 %v6354, 7
        %v6356 = vsub.s32 %v6353, %v6355
        %v6357 = vrot.slane %v6343, %v6356
        %v6358 = vcombine.low %v6334, %v6350
        %v6359 = vcombine.high %v6334, %v6350
        %v6360 = vcombine.low %v6341, %v6357
        %v6361 = vcombine.high %v6341, %v6357
        %v6362 = vpack.c.bf16 %v6358, %v6358
        %v6363 = vpack.c.bf16 %v6359, %v6359
        %v6364 = vpack.c.bf16 %v6360, %v6360
        %v6365 = vpack.c.bf16 %v6361, %v6361
        %6367 = vrot.lane.b32.xlu0 %v6208, 96
        %v6368 = vpop.permute.xlu0 %6367
        %6370 = vrot.lane.b32.xlu0 %v6208, 64
        %v6371 = vpop.permute.xlu0 %6370
        %6373 = vrot.lane.b32.xlu0 %v6208, 32
        %v6374 = vpop.permute.xlu0 %6373
        %v6376 = vcombine.low %v6208, %v6371
        %v6377 = vcombine.high %v6208, %v6371
        %v6379 = vunpack.c.l.s4 1983009808
        %v6380 = vunpack.c.0.s8 %v6379
        %v6381 = vlaneseq
        %v6382 = vshrl.u32 %v6381, 7
        %v6383 = vsub.s32 %v6380, %v6382
        %v6384 = vrot.slane %v6376, %v6383
        %v6386 = vunpack.c.l.s4 1983009808
        %v6387 = vunpack.c.0.s8 %v6386
        %v6388 = vlaneseq
        %v6389 = vshrl.u32 %v6388, 7
        %v6390 = vsub.s32 %v6387, %v6389
        %v6391 = vrot.slane %v6377, %v6390
        %v6392 = vcombine.low %v6368, %v6374
        %v6393 = vcombine.high %v6368, %v6374
        %v6395 = vunpack.c.l.s4 1983009808
        %v6396 = vunpack.c.0.s8 %v6395
        %v6397 = vlaneseq
        %v6398 = vshrl.u32 %v6397, 7
        %v6399 = vsub.s32 %v6396, %v6398
        %v6400 = vrot.slane %v6392, %v6399
        %v6402 = vunpack.c.l.s4 1983009808
        %v6403 = vunpack.c.0.s8 %v6402
        %v6404 = vlaneseq
        %v6405 = vshrl.u32 %v6404, 7
        %v6406 = vsub.s32 %v6403, %v6405
        %v6407 = vrot.slane %v6393, %v6406
        %v6408 = vcombine.low %v6384, %v6400
        %v6409 = vcombine.high %v6384, %v6400
        %v6411 = vunpack.c.l.s4 1934713408
        %v6412 = vunpack.c.0.s8 %v6411
        %v6413 = vlaneseq
        %v6414 = vshrl.u32 %v6413, 7
        %v6415 = vsub.s32 %v6412, %v6414
        %v6416 = vrot.slane %v6408, %v6415
        %v6418 = vunpack.c.l.s4 1934713408
        %v6419 = vunpack.c.0.s8 %v6418
        %v6420 = vlaneseq
        %v6421 = vshrl.u32 %v6420, 7
        %v6422 = vsub.s32 %v6419, %v6421
        %v6423 = vrot.slane %v6409, %v6422
        %v6424 = vcombine.low %v6391, %v6407
        %v6425 = vcombine.high %v6391, %v6407
        %v6427 = vunpack.c.l.s4 1934713408
        %v6428 = vunpack.c.0.s8 %v6427
        %v6429 = vlaneseq
        %v6430 = vshrl.u32 %v6429, 7
        %v6431 = vsub.s32 %v6428, %v6430
        %v6432 = vrot.slane %v6424, %v6431
        %v6434 = vunpack.c.l.s4 1934713408
        %v6435 = vunpack.c.0.s8 %v6434
        %v6436 = vlaneseq
        %v6437 = vshrl.u32 %v6436, 7
        %v6438 = vsub.s32 %v6435, %v6437
        %v6439 = vrot.slane %v6425, %v6438
        %v6440 = vcombine.high %v6416, 0.0
        %v6441 = vcombine.high %v6423, 0.0
        %v6442 = vcombine.high %v6432, 0.0
        %v6443 = vcombine.high %v6439, 0.0
        %v6444 = vcombine.low %v6416, %v6423
        %v6446 = vunpack.c.l.s4 1983009808
        %v6447 = vunpack.c.0.s8 %v6446
        %v6448 = vlaneseq
        %v6449 = vshrl.u32 %v6448, 7
        %v6450 = vsub.s32 %v6447, %v6449
        %v6451 = vrot.slane %v6444, %v6450
        %v6452 = vcombine.low %v6440, %v6441
        %v6454 = vunpack.c.l.s4 1983009808
        %v6455 = vunpack.c.0.s8 %v6454
        %v6456 = vlaneseq
        %v6457 = vshrl.u32 %v6456, 7
        %v6458 = vsub.s32 %v6455, %v6457
        %v6459 = vrot.slane %v6452, %v6458
        %v6460 = vcombine.low %v6432, %v6439
        %v6462 = vunpack.c.l.s4 1983009808
        %v6463 = vunpack.c.0.s8 %v6462
        %v6464 = vlaneseq
        %v6465 = vshrl.u32 %v6464, 7
        %v6466 = vsub.s32 %v6463, %v6465
        %v6467 = vrot.slane %v6460, %v6466
        %v6468 = vcombine.low %v6442, %v6443
        %v6470 = vunpack.c.l.s4 1983009808
        %v6471 = vunpack.c.0.s8 %v6470
        %v6472 = vlaneseq
        %v6473 = vshrl.u32 %v6472, 7
        %v6474 = vsub.s32 %v6471, %v6473
        %v6475 = vrot.slane %v6468, %v6474
        %v6476 = vcombine.low %v6451, %v6459
        %v6477 = vcombine.high %v6451, %v6459
        %v6479 = vunpack.c.l.s4 1934713408
        %v6480 = vunpack.c.0.s8 %v6479
        %v6481 = vlaneseq
        %v6482 = vshrl.u32 %v6481, 7
        %v6483 = vsub.s32 %v6480, %v6482
        %v6484 = vrot.slane %v6476, %v6483
        %v6486 = vunpack.c.l.s4 1934713408
        %v6487 = vunpack.c.0.s8 %v6486
        %v6488 = vlaneseq
        %v6489 = vshrl.u32 %v6488, 7
        %v6490 = vsub.s32 %v6487, %v6489
        %v6491 = vrot.slane %v6477, %v6490
        %v6492 = vcombine.low %v6467, %v6475
        %v6493 = vcombine.high %v6467, %v6475
        %v6495 = vunpack.c.l.s4 1934713408
        %v6496 = vunpack.c.0.s8 %v6495
        %v6497 = vlaneseq
        %v6498 = vshrl.u32 %v6497, 7
        %v6499 = vsub.s32 %v6496, %v6498
        %v6500 = vrot.slane %v6492, %v6499
        %v6502 = vunpack.c.l.s4 1934713408
        %v6503 = vunpack.c.0.s8 %v6502
        %v6504 = vlaneseq
        %v6505 = vshrl.u32 %v6504, 7
        %v6506 = vsub.s32 %v6503, %v6505
        %v6507 = vrot.slane %v6493, %v6506
        %v6508 = vcombine.low %v6484, %v6500
        %v6509 = vcombine.high %v6484, %v6500
        %v6510 = vcombine.low %v6491, %v6507
        %v6511 = vcombine.high %v6491, %v6507
        %v6512 = vpack.c.bf16 %v6508, %v6508
        %v6513 = vpack.c.bf16 %v6509, %v6509
        %v6514 = vpack.c.bf16 %v6510, %v6510
        %v6515 = vpack.c.bf16 %v6511, %v6511
        %6517 = vrot.lane.b32.xlu0 %v6214, 96
        %v6518 = vpop.permute.xlu0 %6517
        %6520 = vrot.lane.b32.xlu0 %v6214, 64
        %v6521 = vpop.permute.xlu0 %6520
        %6523 = vrot.lane.b32.xlu0 %v6214, 32
        %v6524 = vpop.permute.xlu0 %6523
        %v6526 = vcombine.low %v6214, %v6521
        %v6527 = vcombine.high %v6214, %v6521
        %v6529 = vunpack.c.l.s4 1983009808
        %v6530 = vunpack.c.0.s8 %v6529
        %v6531 = vlaneseq
        %v6532 = vshrl.u32 %v6531, 7
        %v6533 = vsub.s32 %v6530, %v6532
        %v6534 = vrot.slane %v6526, %v6533
        %v6536 = vunpack.c.l.s4 1983009808
        %v6537 = vunpack.c.0.s8 %v6536
        %v6538 = vlaneseq
        %v6539 = vshrl.u32 %v6538, 7
        %v6540 = vsub.s32 %v6537, %v6539
        %v6541 = vrot.slane %v6527, %v6540
        %v6542 = vcombine.low %v6518, %v6524
        %v6543 = vcombine.high %v6518, %v6524
        %v6545 = vunpack.c.l.s4 1983009808
        %v6546 = vunpack.c.0.s8 %v6545
        %v6547 = vlaneseq
        %v6548 = vshrl.u32 %v6547, 7
        %v6549 = vsub.s32 %v6546, %v6548
        %v6550 = vrot.slane %v6542, %v6549
        %v6552 = vunpack.c.l.s4 1983009808
        %v6553 = vunpack.c.0.s8 %v6552
        %v6554 = vlaneseq
        %v6555 = vshrl.u32 %v6554, 7
        %v6556 = vsub.s32 %v6553, %v6555
        %v6557 = vrot.slane %v6543, %v6556
        %v6558 = vcombine.low %v6534, %v6550
        %v6559 = vcombine.high %v6534, %v6550
        %v6561 = vunpack.c.l.s4 1934713408
        %v6562 = vunpack.c.0.s8 %v6561
        %v6563 = vlaneseq
        %v6564 = vshrl.u32 %v6563, 7
        %v6565 = vsub.s32 %v6562, %v6564
        %v6566 = vrot.slane %v6558, %v6565
        %v6568 = vunpack.c.l.s4 1934713408
        %v6569 = vunpack.c.0.s8 %v6568
        %v6570 = vlaneseq
        %v6571 = vshrl.u32 %v6570, 7
        %v6572 = vsub.s32 %v6569, %v6571
        %v6573 = vrot.slane %v6559, %v6572
        %v6574 = vcombine.low %v6541, %v6557
        %v6575 = vcombine.high %v6541, %v6557
        %v6577 = vunpack.c.l.s4 1934713408
        %v6578 = vunpack.c.0.s8 %v6577
        %v6579 = vlaneseq
        %v6580 = vshrl.u32 %v6579, 7
        %v6581 = vsub.s32 %v6578, %v6580
        %v6582 = vrot.slane %v6574, %v6581
        %v6584 = vunpack.c.l.s4 1934713408
        %v6585 = vunpack.c.0.s8 %v6584
        %v6586 = vlaneseq
        %v6587 = vshrl.u32 %v6586, 7
        %v6588 = vsub.s32 %v6585, %v6587
        %v6589 = vrot.slane %v6575, %v6588
        %v6590 = vcombine.high %v6566, 0.0
        %v6591 = vcombine.high %v6573, 0.0
        %v6592 = vcombine.high %v6582, 0.0
        %v6593 = vcombine.high %v6589, 0.0
        %v6594 = vcombine.low %v6566, %v6573
        %v6596 = vunpack.c.l.s4 1983009808
        %v6597 = vunpack.c.0.s8 %v6596
        %v6598 = vlaneseq
        %v6599 = vshrl.u32 %v6598, 7
        %v6600 = vsub.s32 %v6597, %v6599
        %v6601 = vrot.slane %v6594, %v6600
        %v6602 = vcombine.low %v6590, %v6591
        %v6604 = vunpack.c.l.s4 1983009808
        %v6605 = vunpack.c.0.s8 %v6604
        %v6606 = vlaneseq
        %v6607 = vshrl.u32 %v6606, 7
        %v6608 = vsub.s32 %v6605, %v6607
        %v6609 = vrot.slane %v6602, %v6608
        %v6610 = vcombine.low %v6582, %v6589
        %v6612 = vunpack.c.l.s4 1983009808
        %v6613 = vunpack.c.0.s8 %v6612
        %v6614 = vlaneseq
        %v6615 = vshrl.u32 %v6614, 7
        %v6616 = vsub.s32 %v6613, %v6615
        %v6617 = vrot.slane %v6610, %v6616
        %v6618 = vcombine.low %v6592, %v6593
        %v6620 = vunpack.c.l.s4 1983009808
        %v6621 = vunpack.c.0.s8 %v6620
        %v6622 = vlaneseq
        %v6623 = vshrl.u32 %v6622, 7
        %v6624 = vsub.s32 %v6621, %v6623
        %v6625 = vrot.slane %v6618, %v6624
        %v6626 = vcombine.low %v6601, %v6609
        %v6627 = vcombine.high %v6601, %v6609
        %v6629 = vunpack.c.l.s4 1934713408
        %v6630 = vunpack.c.0.s8 %v6629
        %v6631 = vlaneseq
        %v6632 = vshrl.u32 %v6631, 7
        %v6633 = vsub.s32 %v6630, %v6632
        %v6634 = vrot.slane %v6626, %v6633
        %v6636 = vunpack.c.l.s4 1934713408
        %v6637 = vunpack.c.0.s8 %v6636
        %v6638 = vlaneseq
        %v6639 = vshrl.u32 %v6638, 7
        %v6640 = vsub.s32 %v6637, %v6639
        %v6641 = vrot.slane %v6627, %v6640
        %v6642 = vcombine.low %v6617, %v6625
        %v6643 = vcombine.high %v6617, %v6625
        %v6645 = vunpack.c.l.s4 1934713408
        %v6646 = vunpack.c.0.s8 %v6645
        %v6647 = vlaneseq
        %v6648 = vshrl.u32 %v6647, 7
        %v6649 = vsub.s32 %v6646, %v6648
        %v6650 = vrot.slane %v6642, %v6649
        %v6652 = vunpack.c.l.s4 1934713408
        %v6653 = vunpack.c.0.s8 %v6652
        %v6654 = vlaneseq
        %v6655 = vshrl.u32 %v6654, 7
        %v6656 = vsub.s32 %v6653, %v6655
        %v6657 = vrot.slane %v6643, %v6656
        %v6658 = vcombine.low %v6634, %v6650
        %v6659 = vcombine.high %v6634, %v6650
        %v6660 = vcombine.low %v6641, %v6657
        %v6661 = vcombine.high %v6641, %v6657
        %v6662 = vpack.c.bf16 %v6658, %v6658
        %v6663 = vpack.c.bf16 %v6659, %v6659
        %v6664 = vpack.c.bf16 %v6660, %v6660
        %v6665 = vpack.c.bf16 %v6661, %v6661
        %v6667 = vsel %vm1463, %v6362, 0
        %v6670 = vsel %vm1463, %v6512, 0
        %6672 = vmatprep.subr.bf16.mxu0 0
        %6673 = vmatpush1.bf16.xpose.msra.mxu0 %v6670
        %6674 = vmatprep.subr.bf16.mxu0 0
        %6675 = vmatpush1.bf16.xpose.msra.mxu0 0
        %6676 = vmatprep.subr.bf16.mxu0 0
        %6677 = vmatpush1.bf16.xpose.msra.mxu0 0
        %6678 = vmatprep.subr.bf16.mxu0 0
        %6679 = vmatpush1.bf16.xpose.msra.mxu0 0
        %6680 = vmatprep.subr.bf16.mxu0 0
        %6681 = vmatpush1.bf16.xpose.msra.mxu0 0
        %6682 = vmatprep.subr.bf16.mxu0 0
        %6683 = vmatpush1.bf16.xpose.msra.mxu0 0
        %6684 = vmatprep.subr.bf16.mxu0 0
        %6685 = vmatpush1.bf16.xpose.msra.mxu0 0
        %6686 = vmatprep.subr.bf16.mxu0 0
        %6687 = vmatpush1.bf16.xpose.msra.mxu0 0
        %6688 = vmatprep.subr.bf16.mxu0 0
        %6689 = vmatpush1.bf16.xpose.msra.mxu0 0
        %6690 = vmatprep.subr.bf16.mxu0 0
        %6691 = vmatpush1.bf16.xpose.msra.mxu0 0
        %6692 = vmatprep.subr.bf16.mxu0 0
        %6693 = vmatpush1.bf16.xpose.msra.mxu0 0
        %6694 = vmatprep.subr.bf16.mxu0 0
        %6695 = vmatpush1.bf16.xpose.msra.mxu0 0
        %6696 = vmatprep.subr.bf16.mxu0 0
        %6697 = vmatpush1.bf16.xpose.msra.mxu0 0
        %6698 = vmatprep.subr.bf16.mxu0 0
        %6699 = vmatpush1.bf16.xpose.msra.mxu0 0
        %6700 = vmatprep.subr.bf16.mxu0 0
        %6701 = vmatpush1.bf16.xpose.msra.mxu0 0
        %6702 = vmatprep.subr.bf16.mxu0 0
        %6703 = vmatpush1.bf16.xpose.msra.mxu0 0
        %6704 = vmatprep.mubr.bf16.mxu0 0
        %6705 = vmatmul.mubr.bf16.gmra.mrb[0].mxu0 %v6667
        %v6706 = vpop.f32.mrb[0].mxu0
        %v6707 = vadd.f32 0.0, %v6706
        %v6708 = vpop.f32.mrb[0].mxu0
        %v6709 = vpop.f32.mrb[0].mxu0
        %v6710 = vpop.f32.mrb[0].mxu0
        %6711 = vdwg.mxu0
        %v6713 = vsel %vm1463, %v6363, 0
        %v6716 = vsel %vm1463, %v6513, 0
        %6718 = vmatprep.subr.bf16.mxu0 0
        %6719 = vmatpush1.bf16.xpose.msra.mxu0 %v6716
        %6720 = vmatprep.subr.bf16.mxu0 0
        %6721 = vmatpush1.bf16.xpose.msra.mxu0 0
        %6722 = vmatprep.subr.bf16.mxu0 0
        %6723 = vmatpush1.bf16.xpose.msra.mxu0 0
        %6724 = vmatprep.subr.bf16.mxu0 0
        %6725 = vmatpush1.bf16.xpose.msra.mxu0 0
        %6726 = vmatprep.subr.bf16.mxu0 0
        %6727 = vmatpush1.bf16.xpose.msra.mxu0 0
        %6728 = vmatprep.subr.bf16.mxu0 0
        %6729 = vmatpush1.bf16.xpose.msra.mxu0 0
        %6730 = vmatprep.subr.bf16.mxu0 0
        %6731 = vmatpush1.bf16.xpose.msra.mxu0 0
        %6732 = vmatprep.subr.bf16.mxu0 0
        %6733 = vmatpush1.bf16.xpose.msra.mxu0 0
        %6734 = vmatprep.subr.bf16.mxu0 0
        %6735 = vmatpush1.bf16.xpose.msra.mxu0 0
        %6736 = vmatprep.subr.bf16.mxu0 0
        %6737 = vmatpush1.bf16.xpose.msra.mxu0 0
        %6738 = vmatprep.subr.bf16.mxu0 0
        %6739 = vmatpush1.bf16.xpose.msra.mxu0 0
        %6740 = vmatprep.subr.bf16.mxu0 0
        %6741 = vmatpush1.bf16.xpose.msra.mxu0 0
        %6742 = vmatprep.subr.bf16.mxu0 0
        %6743 = vmatpush1.bf16.xpose.msra.mxu0 0
        %6744 = vmatprep.subr.bf16.mxu0 0
        %6745 = vmatpush1.bf16.xpose.msra.mxu0 0
        %6746 = vmatprep.subr.bf16.mxu0 0
        %6747 = vmatpush1.bf16.xpose.msra.mxu0 0
        %6748 = vmatprep.subr.bf16.mxu0 0
        %6749 = vmatpush1.bf16.xpose.msra.mxu0 0
        %6750 = vmatprep.mubr.bf16.mxu0 0
        %6751 = vmatmul.mubr.bf16.gmra.mrb[0].mxu0 %v6713
        %v6752 = vpop.f32.mrb[0].mxu0
        %v6753 = vadd.f32 0.0, %v6752
        %v6754 = vpop.f32.mrb[0].mxu0
        %v6755 = vpop.f32.mrb[0].mxu0
        %v6756 = vpop.f32.mrb[0].mxu0
        %6757 = vdwg.mxu0
        %v6759 = vsel %vm1463, %v6364, 0
        %v6762 = vsel %vm1463, %v6514, 0
        %6764 = vmatprep.subr.bf16.mxu0 0
        %6765 = vmatpush1.bf16.xpose.msra.mxu0 %v6762
        %6766 = vmatprep.subr.bf16.mxu0 0
        %6767 = vmatpush1.bf16.xpose.msra.mxu0 0
        %6768 = vmatprep.subr.bf16.mxu0 0
        %6769 = vmatpush1.bf16.xpose.msra.mxu0 0
        %6770 = vmatprep.subr.bf16.mxu0 0
        %6771 = vmatpush1.bf16.xpose.msra.mxu0 0
        %6772 = vmatprep.subr.bf16.mxu0 0
        %6773 = vmatpush1.bf16.xpose.msra.mxu0 0
        %6774 = vmatprep.subr.bf16.mxu0 0
        %6775 = vmatpush1.bf16.xpose.msra.mxu0 0
        %6776 = vmatprep.subr.bf16.mxu0 0
        %6777 = vmatpush1.bf16.xpose.msra.mxu0 0
        %6778 = vmatprep.subr.bf16.mxu0 0
        %6779 = vmatpush1.bf16.xpose.msra.mxu0 0
        %6780 = vmatprep.subr.bf16.mxu0 0
        %6781 = vmatpush1.bf16.xpose.msra.mxu0 0
        %6782 = vmatprep.subr.bf16.mxu0 0
        %6783 = vmatpush1.bf16.xpose.msra.mxu0 0
        %6784 = vmatprep.subr.bf16.mxu0 0
        %6785 = vmatpush1.bf16.xpose.msra.mxu0 0
        %6786 = vmatprep.subr.bf16.mxu0 0
        %6787 = vmatpush1.bf16.xpose.msra.mxu0 0
        %6788 = vmatprep.subr.bf16.mxu0 0
        %6789 = vmatpush1.bf16.xpose.msra.mxu0 0
        %6790 = vmatprep.subr.bf16.mxu0 0
        %6791 = vmatpush1.bf16.xpose.msra.mxu0 0
        %6792 = vmatprep.subr.bf16.mxu0 0
        %6793 = vmatpush1.bf16.xpose.msra.mxu0 0
        %6794 = vmatprep.subr.bf16.mxu0 0
        %6795 = vmatpush1.bf16.xpose.msra.mxu0 0
        %6796 = vmatprep.mubr.bf16.mxu0 0
        %6797 = vmatmul.mubr.bf16.gmra.mrb[0].mxu0 %v6759
        %v6798 = vpop.f32.mrb[0].mxu0
        %v6799 = vadd.f32 0.0, %v6798
        %v6800 = vpop.f32.mrb[0].mxu0
        %v6801 = vpop.f32.mrb[0].mxu0
        %v6802 = vpop.f32.mrb[0].mxu0
        %6803 = vdwg.mxu0
        %v6805 = vsel %vm1463, %v6365, 0
        %v6808 = vsel %vm1463, %v6515, 0
        %6810 = vmatprep.subr.bf16.mxu0 0
        %6811 = vmatpush1.bf16.xpose.msra.mxu0 %v6808
        %6812 = vmatprep.subr.bf16.mxu0 0
        %6813 = vmatpush1.bf16.xpose.msra.mxu0 0
        %6814 = vmatprep.subr.bf16.mxu0 0
        %6815 = vmatpush1.bf16.xpose.msra.mxu0 0
        %6816 = vmatprep.subr.bf16.mxu0 0
        %6817 = vmatpush1.bf16.xpose.msra.mxu0 0
        %6818 = vmatprep.subr.bf16.mxu0 0
        %6819 = vmatpush1.bf16.xpose.msra.mxu0 0
        %6820 = vmatprep.subr.bf16.mxu0 0
        %6821 = vmatpush1.bf16.xpose.msra.mxu0 0
        %6822 = vmatprep.subr.bf16.mxu0 0
        %6823 = vmatpush1.bf16.xpose.msra.mxu0 0
        %6824 = vmatprep.subr.bf16.mxu0 0
        %6825 = vmatpush1.bf16.xpose.msra.mxu0 0
        %6826 = vmatprep.subr.bf16.mxu0 0
        %6827 = vmatpush1.bf16.xpose.msra.mxu0 0
        %6828 = vmatprep.subr.bf16.mxu0 0
        %6829 = vmatpush1.bf16.xpose.msra.mxu0 0
        %6830 = vmatprep.subr.bf16.mxu0 0
        %6831 = vmatpush1.bf16.xpose.msra.mxu0 0
        %6832 = vmatprep.subr.bf16.mxu0 0
        %6833 = vmatpush1.bf16.xpose.msra.mxu0 0
        %6834 = vmatprep.subr.bf16.mxu0 0
        %6835 = vmatpush1.bf16.xpose.msra.mxu0 0
        %6836 = vmatprep.subr.bf16.mxu0 0
        %6837 = vmatpush1.bf16.xpose.msra.mxu0 0
        %6838 = vmatprep.subr.bf16.mxu0 0
        %6839 = vmatpush1.bf16.xpose.msra.mxu0 0
        %6840 = vmatprep.subr.bf16.mxu0 0
        %6841 = vmatpush1.bf16.xpose.msra.mxu0 0
        %6842 = vmatprep.mubr.bf16.mxu0 0
        %6843 = vmatmul.mubr.bf16.gmra.mrb[0].mxu0 %v6805
        %v6844 = vpop.f32.mrb[0].mxu0
        %v6845 = vadd.f32 0.0, %v6844
        %v6846 = vpop.f32.mrb[0].mxu0
        %v6847 = vpop.f32.mrb[0].mxu0
        %v6848 = vpop.f32.mrb[0].mxu0
        %6849 = vdwg.mxu0
        %v6850 = vsel %vm1648, %v6707, -inf
        %6851 = vmax.xlane.f32.xlu0 %v6850
        %v6852 = vpop.xlane.xlu0 %6851
        %v6853 = vsel %vm1648, %v6753, -inf
        %6854 = vmax.xlane.f32.xlu0 %v6853
        %v6855 = vpop.xlane.xlu0 %6854
        %v6856 = vsel %vm1648, %v6799, -inf
        %6857 = vmax.xlane.f32.xlu0 %v6856
        %v6858 = vpop.xlane.xlu0 %6857
        %v6859 = vsel %vm1648, %v6845, -inf
        %6860 = vmax.xlane.f32.xlu0 %v6859
        %v6861 = vpop.xlane.xlu0 %6860
        %v6862 = vsub.f32 %v6707, %v6852
        %v6863 = vsub.f32 %v6753, %v6855
        %v6864 = vsub.f32 %v6799, %v6858
        %v6865 = vsub.f32 %v6845, %v6861
        %v6866 = vmul.f32 %v6862, 1.442695
        %v6867 = vpow.pop %v6866
        %v6868 = vmul.f32 %v6863, 1.442695
        %v6869 = vpow.pop %v6868
        %v6870 = vmul.f32 %v6864, 1.442695
        %v6871 = vpow.pop %v6870
        %v6872 = vmul.f32 %v6865, 1.442695
        %v6873 = vpow.pop %v6872
        %v6874 = vsel %vm1648, %v6867, 0.0
        %6875 = vadd.xlane.f32.xlu0 %v6874
        %v6876 = vpop.xlane.xlu0 %6875
        %v6877 = vsel %vm1648, %v6869, 0.0
        %6878 = vadd.xlane.f32.xlu0 %v6877
        %v6879 = vpop.xlane.xlu0 %6878
        %v6880 = vsel %vm1648, %v6871, 0.0
        %6881 = vadd.xlane.f32.xlu0 %v6880
        %v6882 = vpop.xlane.xlu0 %6881
        %v6883 = vsel %vm1648, %v6873, 0.0
        %6884 = vadd.xlane.f32.xlu0 %v6883
        %v6885 = vpop.xlane.xlu0 %6884
        %v6886 = vrcp.pop %v6876
        %v6887 = vrcp.pop %v6879
        %v6888 = vrcp.pop %v6882
        %v6889 = vrcp.pop %v6885
        %v6890 = vmul.f32 %v6867, %v6886
        %v6891 = vmul.f32 %v6869, %v6887
        %v6892 = vmul.f32 %v6871, %v6888
        %v6893 = vmul.f32 %v6873, %v6889
        %v6894 = vpack.c.bf16 %v6890, %v6890
        %v6895 = vpack.c.bf16 %v6891, %v6891
        %v6896 = vpack.c.bf16 %v6892, %v6892
        %v6897 = vpack.c.bf16 %v6893, %v6893
        %v6899 = vsel %vm1648, %v6894, 0
        %v6902 = vsel %vm1700, %v6662, 0
        %6904 = vmatprep.subr.bf16.mxu0 0
        %6905 = vmatpush1.bf16.msra.mxu0 %v6902
        %6906 = vmatprep.subr.bf16.mxu0 0
        %6907 = vmatpush1.bf16.msra.mxu0 0
        %6908 = vmatprep.subr.bf16.mxu0 0
        %6909 = vmatpush1.bf16.msra.mxu0 0
        %6910 = vmatprep.subr.bf16.mxu0 0
        %6911 = vmatpush1.bf16.msra.mxu0 0
        %6912 = vmatprep.subr.bf16.mxu0 0
        %6913 = vmatpush1.bf16.msra.mxu0 0
        %6914 = vmatprep.subr.bf16.mxu0 0
        %6915 = vmatpush1.bf16.msra.mxu0 0
        %6916 = vmatprep.subr.bf16.mxu0 0
        %6917 = vmatpush1.bf16.msra.mxu0 0
        %6918 = vmatprep.subr.bf16.mxu0 0
        %6919 = vmatpush1.bf16.msra.mxu0 0
        %6920 = vmatprep.subr.bf16.mxu0 0
        %6921 = vmatpush1.bf16.msra.mxu0 0
        %6922 = vmatprep.subr.bf16.mxu0 0
        %6923 = vmatpush1.bf16.msra.mxu0 0
        %6924 = vmatprep.subr.bf16.mxu0 0
        %6925 = vmatpush1.bf16.msra.mxu0 0
        %6926 = vmatprep.subr.bf16.mxu0 0
        %6927 = vmatpush1.bf16.msra.mxu0 0
        %6928 = vmatprep.subr.bf16.mxu0 0
        %6929 = vmatpush1.bf16.msra.mxu0 0
        %6930 = vmatprep.subr.bf16.mxu0 0
        %6931 = vmatpush1.bf16.msra.mxu0 0
        %6932 = vmatprep.subr.bf16.mxu0 0
        %6933 = vmatpush1.bf16.msra.mxu0 0
        %6934 = vmatprep.subr.bf16.mxu0 0
        %6935 = vmatpush1.bf16.msra.mxu0 0
        %6936 = vmatprep.mubr.bf16.mxu0 0
        %6937 = vmatmul.mubr.bf16.gmra.mrb[0].mxu0 %v6899
        %v6938 = vpop.f32.mrb[0].mxu0
        %v6939 = vadd.f32 0.0, %v6938
        %v6940 = vpop.f32.mrb[0].mxu0
        %v6941 = vpop.f32.mrb[0].mxu0
        %v6942 = vpop.f32.mrb[0].mxu0
        %6943 = vdwg.mxu0
        %v6945 = vsel %vm1648, %v6895, 0
        %v6948 = vsel %vm1700, %v6663, 0
        %6950 = vmatprep.subr.bf16.mxu0 0
        %6951 = vmatpush1.bf16.msra.mxu0 %v6948
        %6952 = vmatprep.subr.bf16.mxu0 0
        %6953 = vmatpush1.bf16.msra.mxu0 0
        %6954 = vmatprep.subr.bf16.mxu0 0
        %6955 = vmatpush1.bf16.msra.mxu0 0
        %6956 = vmatprep.subr.bf16.mxu0 0
        %6957 = vmatpush1.bf16.msra.mxu0 0
        %6958 = vmatprep.subr.bf16.mxu0 0
        %6959 = vmatpush1.bf16.msra.mxu0 0
        %6960 = vmatprep.subr.bf16.mxu0 0
        %6961 = vmatpush1.bf16.msra.mxu0 0
        %6962 = vmatprep.subr.bf16.mxu0 0
        %6963 = vmatpush1.bf16.msra.mxu0 0
        %6964 = vmatprep.subr.bf16.mxu0 0
        %6965 = vmatpush1.bf16.msra.mxu0 0
        %6966 = vmatprep.subr.bf16.mxu0 0
        %6967 = vmatpush1.bf16.msra.mxu0 0
        %6968 = vmatprep.subr.bf16.mxu0 0
        %6969 = vmatpush1.bf16.msra.mxu0 0
        %6970 = vmatprep.subr.bf16.mxu0 0
        %6971 = vmatpush1.bf16.msra.mxu0 0
        %6972 = vmatprep.subr.bf16.mxu0 0
        %6973 = vmatpush1.bf16.msra.mxu0 0
        %6974 = vmatprep.subr.bf16.mxu0 0
        %6975 = vmatpush1.bf16.msra.mxu0 0
        %6976 = vmatprep.subr.bf16.mxu0 0
        %6977 = vmatpush1.bf16.msra.mxu0 0
        %6978 = vmatprep.subr.bf16.mxu0 0
        %6979 = vmatpush1.bf16.msra.mxu0 0
        %6980 = vmatprep.subr.bf16.mxu0 0
        %6981 = vmatpush1.bf16.msra.mxu0 0
        %6982 = vmatprep.mubr.bf16.mxu0 0
        %6983 = vmatmul.mubr.bf16.gmra.mrb[0].mxu0 %v6945
        %v6984 = vpop.f32.mrb[0].mxu0
        %v6985 = vadd.f32 0.0, %v6984
        %v6986 = vpop.f32.mrb[0].mxu0
        %v6987 = vpop.f32.mrb[0].mxu0
        %v6988 = vpop.f32.mrb[0].mxu0
        %6989 = vdwg.mxu0
        %v6991 = vsel %vm1648, %v6896, 0
        %v6994 = vsel %vm1700, %v6664, 0
        %6996 = vmatprep.subr.bf16.mxu0 0
        %6997 = vmatpush1.bf16.msra.mxu0 %v6994
        %6998 = vmatprep.subr.bf16.mxu0 0
        %6999 = vmatpush1.bf16.msra.mxu0 0
        %7000 = vmatprep.subr.bf16.mxu0 0
        %7001 = vmatpush1.bf16.msra.mxu0 0
        %7002 = vmatprep.subr.bf16.mxu0 0
        %7003 = vmatpush1.bf16.msra.mxu0 0
        %7004 = vmatprep.subr.bf16.mxu0 0
        %7005 = vmatpush1.bf16.msra.mxu0 0
        %7006 = vmatprep.subr.bf16.mxu0 0
        %7007 = vmatpush1.bf16.msra.mxu0 0
        %7008 = vmatprep.subr.bf16.mxu0 0
        %7009 = vmatpush1.bf16.msra.mxu0 0
        %7010 = vmatprep.subr.bf16.mxu0 0
        %7011 = vmatpush1.bf16.msra.mxu0 0
        %7012 = vmatprep.subr.bf16.mxu0 0
        %7013 = vmatpush1.bf16.msra.mxu0 0
        %7014 = vmatprep.subr.bf16.mxu0 0
        %7015 = vmatpush1.bf16.msra.mxu0 0
        %7016 = vmatprep.subr.bf16.mxu0 0
        %7017 = vmatpush1.bf16.msra.mxu0 0
        %7018 = vmatprep.subr.bf16.mxu0 0
        %7019 = vmatpush1.bf16.msra.mxu0 0
        %7020 = vmatprep.subr.bf16.mxu0 0
        %7021 = vmatpush1.bf16.msra.mxu0 0
        %7022 = vmatprep.subr.bf16.mxu0 0
        %7023 = vmatpush1.bf16.msra.mxu0 0
        %7024 = vmatprep.subr.bf16.mxu0 0
        %7025 = vmatpush1.bf16.msra.mxu0 0
        %7026 = vmatprep.subr.bf16.mxu0 0
        %7027 = vmatpush1.bf16.msra.mxu0 0
        %7028 = vmatprep.mubr.bf16.mxu0 0
        %7029 = vmatmul.mubr.bf16.gmra.mrb[0].mxu0 %v6991
        %v7030 = vpop.f32.mrb[0].mxu0
        %v7031 = vadd.f32 0.0, %v7030
        %v7032 = vpop.f32.mrb[0].mxu0
        %v7033 = vpop.f32.mrb[0].mxu0
        %v7034 = vpop.f32.mrb[0].mxu0
        %7035 = vdwg.mxu0
        %v7037 = vsel %vm1648, %v6897, 0
        %v7040 = vsel %vm1700, %v6665, 0
        %7042 = vmatprep.subr.bf16.mxu0 0
        %7043 = vmatpush1.bf16.msra.mxu0 %v7040
        %7044 = vmatprep.subr.bf16.mxu0 0
        %7045 = vmatpush1.bf16.msra.mxu0 0
        %7046 = vmatprep.subr.bf16.mxu0 0
        %7047 = vmatpush1.bf16.msra.mxu0 0
        %7048 = vmatprep.subr.bf16.mxu0 0
        %7049 = vmatpush1.bf16.msra.mxu0 0
        %7050 = vmatprep.subr.bf16.mxu0 0
        %7051 = vmatpush1.bf16.msra.mxu0 0
        %7052 = vmatprep.subr.bf16.mxu0 0
        %7053 = vmatpush1.bf16.msra.mxu0 0
        %7054 = vmatprep.subr.bf16.mxu0 0
        %7055 = vmatpush1.bf16.msra.mxu0 0
        %7056 = vmatprep.subr.bf16.mxu0 0
        %7057 = vmatpush1.bf16.msra.mxu0 0
        %7058 = vmatprep.subr.bf16.mxu0 0
        %7059 = vmatpush1.bf16.msra.mxu0 0
        %7060 = vmatprep.subr.bf16.mxu0 0
        %7061 = vmatpush1.bf16.msra.mxu0 0
        %7062 = vmatprep.subr.bf16.mxu0 0
        %7063 = vmatpush1.bf16.msra.mxu0 0
        %7064 = vmatprep.subr.bf16.mxu0 0
        %7065 = vmatpush1.bf16.msra.mxu0 0
        %7066 = vmatprep.subr.bf16.mxu0 0
        %7067 = vmatpush1.bf16.msra.mxu0 0
        %7068 = vmatprep.subr.bf16.mxu0 0
        %7069 = vmatpush1.bf16.msra.mxu0 0
        %7070 = vmatprep.subr.bf16.mxu0 0
        %7071 = vmatpush1.bf16.msra.mxu0 0
        %7072 = vmatprep.subr.bf16.mxu0 0
        %7073 = vmatpush1.bf16.msra.mxu0 0
        %7074 = vmatprep.mubr.bf16.mxu0 0
        %7075 = vmatmul.mubr.bf16.gmra.mrb[0].mxu0 %v7037
        %v7076 = vpop.f32.mrb[0].mxu0
        %v7077 = vadd.f32 0.0, %v7076
        %v7078 = vpop.f32.mrb[0].mxu0
        %v7079 = vpop.f32.mrb[0].mxu0
        %v7080 = vpop.f32.mrb[0].mxu0
        %7081 = vdwg.mxu0
        %v7082 = vcombine.low %v6939, %v7031
        %v7083 = vcombine.high %v6939, %v7031
        %v7085 = vunpack.c.l.s4 1983009808
        %v7086 = vunpack.c.0.s8 %v7085
        %v7087 = vlaneseq
        %v7088 = vshrl.u32 %v7087, 7
        %v7089 = vsub.s32 %v7086, %v7088
        %v7090 = vrot.slane %v7082, %v7089
        %v7092 = vunpack.c.l.s4 1983009808
        %v7093 = vunpack.c.0.s8 %v7092
        %v7094 = vlaneseq
        %v7095 = vshrl.u32 %v7094, 7
        %v7096 = vsub.s32 %v7093, %v7095
        %v7097 = vrot.slane %v7083, %v7096
        %v7098 = vcombine.low %v6985, %v7077
        %v7099 = vcombine.high %v6985, %v7077
        %v7101 = vunpack.c.l.s4 1983009808
        %v7102 = vunpack.c.0.s8 %v7101
        %v7103 = vlaneseq
        %v7104 = vshrl.u32 %v7103, 7
        %v7105 = vsub.s32 %v7102, %v7104
        %v7106 = vrot.slane %v7098, %v7105
        %v7108 = vunpack.c.l.s4 1983009808
        %v7109 = vunpack.c.0.s8 %v7108
        %v7110 = vlaneseq
        %v7111 = vshrl.u32 %v7110, 7
        %v7112 = vsub.s32 %v7109, %v7111
        %v7113 = vrot.slane %v7099, %v7112
        %v7114 = vcombine.low %v7090, %v7106
        %v7115 = vcombine.high %v7090, %v7106
        %v7117 = vunpack.c.l.s4 1934713408
        %v7118 = vunpack.c.0.s8 %v7117
        %v7119 = vlaneseq
        %v7120 = vshrl.u32 %v7119, 7
        %v7121 = vsub.s32 %v7118, %v7120
        %v7122 = vrot.slane %v7114, %v7121
        %v7124 = vunpack.c.l.s4 1934713408
        %v7125 = vunpack.c.0.s8 %v7124
        %v7126 = vlaneseq
        %v7127 = vshrl.u32 %v7126, 7
        %v7128 = vsub.s32 %v7125, %v7127
        %v7129 = vrot.slane %v7115, %v7128
        %v7130 = vcombine.low %v7097, %v7113
        %v7131 = vcombine.high %v7097, %v7113
        %v7133 = vunpack.c.l.s4 1934713408
        %v7134 = vunpack.c.0.s8 %v7133
        %v7135 = vlaneseq
        %v7136 = vshrl.u32 %v7135, 7
        %v7137 = vsub.s32 %v7134, %v7136
        %v7138 = vrot.slane %v7130, %v7137
        %v7140 = vunpack.c.l.s4 1934713408
        %v7141 = vunpack.c.0.s8 %v7140
        %v7142 = vlaneseq
        %v7143 = vshrl.u32 %v7142, 7
        %v7144 = vsub.s32 %v7141, %v7143
        %v7145 = vrot.slane %v7131, %v7144
        %v7146 = vcombine.high %v7122, 0.0
        %v7147 = vcombine.high %v7129, 0.0
        %v7148 = vcombine.high %v7138, 0.0
        %v7149 = vcombine.high %v7145, 0.0
        %v7150 = vcombine.low %v7122, %v7129
        %v7152 = vunpack.c.l.s4 1983009808
        %v7153 = vunpack.c.0.s8 %v7152
        %v7154 = vlaneseq
        %v7155 = vshrl.u32 %v7154, 7
        %v7156 = vsub.s32 %v7153, %v7155
        %v7157 = vrot.slane %v7150, %v7156
        %v7158 = vcombine.low %v7146, %v7147
        %v7160 = vunpack.c.l.s4 1983009808
        %v7161 = vunpack.c.0.s8 %v7160
        %v7162 = vlaneseq
        %v7163 = vshrl.u32 %v7162, 7
        %v7164 = vsub.s32 %v7161, %v7163
        %v7165 = vrot.slane %v7158, %v7164
        %v7166 = vcombine.low %v7138, %v7145
        %v7168 = vunpack.c.l.s4 1983009808
        %v7169 = vunpack.c.0.s8 %v7168
        %v7170 = vlaneseq
        %v7171 = vshrl.u32 %v7170, 7
        %v7172 = vsub.s32 %v7169, %v7171
        %v7173 = vrot.slane %v7166, %v7172
        %v7174 = vcombine.low %v7148, %v7149
        %v7176 = vunpack.c.l.s4 1983009808
        %v7177 = vunpack.c.0.s8 %v7176
        %v7178 = vlaneseq
        %v7179 = vshrl.u32 %v7178, 7
        %v7180 = vsub.s32 %v7177, %v7179
        %v7181 = vrot.slane %v7174, %v7180
        %v7182 = vcombine.low %v7157, %v7165
        %v7183 = vcombine.high %v7157, %v7165
        %v7185 = vunpack.c.l.s4 1934713408
        %v7186 = vunpack.c.0.s8 %v7185
        %v7187 = vlaneseq
        %v7188 = vshrl.u32 %v7187, 7
        %v7189 = vsub.s32 %v7186, %v7188
        %v7190 = vrot.slane %v7182, %v7189
        %v7192 = vunpack.c.l.s4 1934713408
        %v7193 = vunpack.c.0.s8 %v7192
        %v7194 = vlaneseq
        %v7195 = vshrl.u32 %v7194, 7
        %v7196 = vsub.s32 %v7193, %v7195
        %v7197 = vrot.slane %v7183, %v7196
        %v7198 = vcombine.low %v7173, %v7181
        %v7199 = vcombine.high %v7173, %v7181
        %v7201 = vunpack.c.l.s4 1934713408
        %v7202 = vunpack.c.0.s8 %v7201
        %v7203 = vlaneseq
        %v7204 = vshrl.u32 %v7203, 7
        %v7205 = vsub.s32 %v7202, %v7204
        %v7206 = vrot.slane %v7198, %v7205
        %v7208 = vunpack.c.l.s4 1934713408
        %v7209 = vunpack.c.0.s8 %v7208
        %v7210 = vlaneseq
        %v7211 = vshrl.u32 %v7210, 7
        %v7212 = vsub.s32 %v7209, %v7211
        %v7213 = vrot.slane %v7199, %v7212
        %v7214 = vcombine.low %v7190, %v7206
        %v7215 = vcombine.high %v7190, %v7206
        %v7216 = vcombine.low %v7197, %v7213
        %v7217 = vcombine.high %v7197, %v7213
        %7219 = vrot.lane.b32.xlu0 %v7215, 32
        %v7220 = vpop.permute.xlu0 %7219
        %7223 = vrot.lane.b32.xlu0 %v7216, 64
        %v7224 = vpop.permute.xlu0 %7223
        %7227 = vrot.lane.b32.xlu0 %v7217, 96
        %v7228 = vpop.permute.xlu0 %7227
        %v7230 = vsel %vm1463, %v7214, %v7220
        %v7231 = vsel %vm2031, %v7230, %v7224
        %v7232 = vsel %vm2033, %v7231, %v7228
        %7234 = vrot.lane.b32.xlu0 %v6203, 96
        %v7235 = vpop.permute.xlu0 %7234
        %7237 = vrot.lane.b32.xlu0 %v6203, 64
        %v7238 = vpop.permute.xlu0 %7237
        %7240 = vrot.lane.b32.xlu0 %v6203, 32
        %v7241 = vpop.permute.xlu0 %7240
        %v7243 = vcombine.low %v6203, %v7238
        %v7244 = vcombine.high %v6203, %v7238
        %v7246 = vunpack.c.l.s4 1983009808
        %v7247 = vunpack.c.0.s8 %v7246
        %v7248 = vlaneseq
        %v7249 = vshrl.u32 %v7248, 7
        %v7250 = vsub.s32 %v7247, %v7249
        %v7251 = vrot.slane %v7243, %v7250
        %v7253 = vunpack.c.l.s4 1983009808
        %v7254 = vunpack.c.0.s8 %v7253
        %v7255 = vlaneseq
        %v7256 = vshrl.u32 %v7255, 7
        %v7257 = vsub.s32 %v7254, %v7256
        %v7258 = vrot.slane %v7244, %v7257
        %v7259 = vcombine.low %v7235, %v7241
        %v7260 = vcombine.high %v7235, %v7241
        %v7262 = vunpack.c.l.s4 1983009808
        %v7263 = vunpack.c.0.s8 %v7262
        %v7264 = vlaneseq
        %v7265 = vshrl.u32 %v7264, 7
        %v7266 = vsub.s32 %v7263, %v7265
        %v7267 = vrot.slane %v7259, %v7266
        %v7269 = vunpack.c.l.s4 1983009808
        %v7270 = vunpack.c.0.s8 %v7269
        %v7271 = vlaneseq
        %v7272 = vshrl.u32 %v7271, 7
        %v7273 = vsub.s32 %v7270, %v7272
        %v7274 = vrot.slane %v7260, %v7273
        %v7275 = vcombine.low %v7251, %v7267
        %v7276 = vcombine.high %v7251, %v7267
        %v7278 = vunpack.c.l.s4 1934713408
        %v7279 = vunpack.c.0.s8 %v7278
        %v7280 = vlaneseq
        %v7281 = vshrl.u32 %v7280, 7
        %v7282 = vsub.s32 %v7279, %v7281
        %v7283 = vrot.slane %v7275, %v7282
        %v7285 = vunpack.c.l.s4 1934713408
        %v7286 = vunpack.c.0.s8 %v7285
        %v7287 = vlaneseq
        %v7288 = vshrl.u32 %v7287, 7
        %v7289 = vsub.s32 %v7286, %v7288
        %v7290 = vrot.slane %v7276, %v7289
        %v7291 = vcombine.low %v7258, %v7274
        %v7292 = vcombine.high %v7258, %v7274
        %v7294 = vunpack.c.l.s4 1934713408
        %v7295 = vunpack.c.0.s8 %v7294
        %v7296 = vlaneseq
        %v7297 = vshrl.u32 %v7296, 7
        %v7298 = vsub.s32 %v7295, %v7297
        %v7299 = vrot.slane %v7291, %v7298
        %v7301 = vunpack.c.l.s4 1934713408
        %v7302 = vunpack.c.0.s8 %v7301
        %v7303 = vlaneseq
        %v7304 = vshrl.u32 %v7303, 7
        %v7305 = vsub.s32 %v7302, %v7304
        %v7306 = vrot.slane %v7292, %v7305
        %v7307 = vcombine.high %v7283, 0.0
        %v7308 = vcombine.high %v7290, 0.0
        %v7309 = vcombine.high %v7299, 0.0
        %v7310 = vcombine.high %v7306, 0.0
        %v7311 = vcombine.low %v7283, %v7290
        %v7313 = vunpack.c.l.s4 1983009808
        %v7314 = vunpack.c.0.s8 %v7313
        %v7315 = vlaneseq
        %v7316 = vshrl.u32 %v7315, 7
        %v7317 = vsub.s32 %v7314, %v7316
        %v7318 = vrot.slane %v7311, %v7317
        %v7319 = vcombine.low %v7307, %v7308
        %v7321 = vunpack.c.l.s4 1983009808
        %v7322 = vunpack.c.0.s8 %v7321
        %v7323 = vlaneseq
        %v7324 = vshrl.u32 %v7323, 7
        %v7325 = vsub.s32 %v7322, %v7324
        %v7326 = vrot.slane %v7319, %v7325
        %v7327 = vcombine.low %v7299, %v7306
        %v7329 = vunpack.c.l.s4 1983009808
        %v7330 = vunpack.c.0.s8 %v7329
        %v7331 = vlaneseq
        %v7332 = vshrl.u32 %v7331, 7
        %v7333 = vsub.s32 %v7330, %v7332
        %v7334 = vrot.slane %v7327, %v7333
        %v7335 = vcombine.low %v7309, %v7310
        %v7337 = vunpack.c.l.s4 1983009808
        %v7338 = vunpack.c.0.s8 %v7337
        %v7339 = vlaneseq
        %v7340 = vshrl.u32 %v7339, 7
        %v7341 = vsub.s32 %v7338, %v7340
        %v7342 = vrot.slane %v7335, %v7341
        %v7343 = vcombine.low %v7318, %v7326
        %v7344 = vcombine.high %v7318, %v7326
        %v7346 = vunpack.c.l.s4 1934713408
        %v7347 = vunpack.c.0.s8 %v7346
        %v7348 = vlaneseq
        %v7349 = vshrl.u32 %v7348, 7
        %v7350 = vsub.s32 %v7347, %v7349
        %v7351 = vrot.slane %v7343, %v7350
        %v7353 = vunpack.c.l.s4 1934713408
        %v7354 = vunpack.c.0.s8 %v7353
        %v7355 = vlaneseq
        %v7356 = vshrl.u32 %v7355, 7
        %v7357 = vsub.s32 %v7354, %v7356
        %v7358 = vrot.slane %v7344, %v7357
        %v7359 = vcombine.low %v7334, %v7342
        %v7360 = vcombine.high %v7334, %v7342
        %v7362 = vunpack.c.l.s4 1934713408
        %v7363 = vunpack.c.0.s8 %v7362
        %v7364 = vlaneseq
        %v7365 = vshrl.u32 %v7364, 7
        %v7366 = vsub.s32 %v7363, %v7365
        %v7367 = vrot.slane %v7359, %v7366
        %v7369 = vunpack.c.l.s4 1934713408
        %v7370 = vunpack.c.0.s8 %v7369
        %v7371 = vlaneseq
        %v7372 = vshrl.u32 %v7371, 7
        %v7373 = vsub.s32 %v7370, %v7372
        %v7374 = vrot.slane %v7360, %v7373
        %v7375 = vcombine.low %v7351, %v7367
        %v7376 = vcombine.high %v7351, %v7367
        %v7377 = vcombine.low %v7358, %v7374
        %v7378 = vcombine.high %v7358, %v7374
        %v7379 = vpack.c.bf16 %v7375, %v7375
        %v7380 = vpack.c.bf16 %v7376, %v7376
        %v7381 = vpack.c.bf16 %v7377, %v7377
        %v7382 = vpack.c.bf16 %v7378, %v7378
        %7384 = vrot.lane.b32.xlu0 %v6209, 96
        %v7385 = vpop.permute.xlu0 %7384
        %7387 = vrot.lane.b32.xlu0 %v6209, 64
        %v7388 = vpop.permute.xlu0 %7387
        %7390 = vrot.lane.b32.xlu0 %v6209, 32
        %v7391 = vpop.permute.xlu0 %7390
        %v7393 = vcombine.low %v6209, %v7388
        %v7394 = vcombine.high %v6209, %v7388
        %v7396 = vunpack.c.l.s4 1983009808
        %v7397 = vunpack.c.0.s8 %v7396
        %v7398 = vlaneseq
        %v7399 = vshrl.u32 %v7398, 7
        %v7400 = vsub.s32 %v7397, %v7399
        %v7401 = vrot.slane %v7393, %v7400
        %v7403 = vunpack.c.l.s4 1983009808
        %v7404 = vunpack.c.0.s8 %v7403
        %v7405 = vlaneseq
        %v7406 = vshrl.u32 %v7405, 7
        %v7407 = vsub.s32 %v7404, %v7406
        %v7408 = vrot.slane %v7394, %v7407
        %v7409 = vcombine.low %v7385, %v7391
        %v7410 = vcombine.high %v7385, %v7391
        %v7412 = vunpack.c.l.s4 1983009808
        %v7413 = vunpack.c.0.s8 %v7412
        %v7414 = vlaneseq
        %v7415 = vshrl.u32 %v7414, 7
        %v7416 = vsub.s32 %v7413, %v7415
        %v7417 = vrot.slane %v7409, %v7416
        %v7419 = vunpack.c.l.s4 1983009808
        %v7420 = vunpack.c.0.s8 %v7419
        %v7421 = vlaneseq
        %v7422 = vshrl.u32 %v7421, 7
        %v7423 = vsub.s32 %v7420, %v7422
        %v7424 = vrot.slane %v7410, %v7423
        %v7425 = vcombine.low %v7401, %v7417
        %v7426 = vcombine.high %v7401, %v7417
        %v7428 = vunpack.c.l.s4 1934713408
        %v7429 = vunpack.c.0.s8 %v7428
        %v7430 = vlaneseq
        %v7431 = vshrl.u32 %v7430, 7
        %v7432 = vsub.s32 %v7429, %v7431
        %v7433 = vrot.slane %v7425, %v7432
        %v7435 = vunpack.c.l.s4 1934713408
        %v7436 = vunpack.c.0.s8 %v7435
        %v7437 = vlaneseq
        %v7438 = vshrl.u32 %v7437, 7
        %v7439 = vsub.s32 %v7436, %v7438
        %v7440 = vrot.slane %v7426, %v7439
        %v7441 = vcombine.low %v7408, %v7424
        %v7442 = vcombine.high %v7408, %v7424
        %v7444 = vunpack.c.l.s4 1934713408
        %v7445 = vunpack.c.0.s8 %v7444
        %v7446 = vlaneseq
        %v7447 = vshrl.u32 %v7446, 7
        %v7448 = vsub.s32 %v7445, %v7447
        %v7449 = vrot.slane %v7441, %v7448
        %v7451 = vunpack.c.l.s4 1934713408
        %v7452 = vunpack.c.0.s8 %v7451
        %v7453 = vlaneseq
        %v7454 = vshrl.u32 %v7453, 7
        %v7455 = vsub.s32 %v7452, %v7454
        %v7456 = vrot.slane %v7442, %v7455
        %v7457 = vcombine.high %v7433, 0.0
        %v7458 = vcombine.high %v7440, 0.0
        %v7459 = vcombine.high %v7449, 0.0
        %v7460 = vcombine.high %v7456, 0.0
        %v7461 = vcombine.low %v7433, %v7440
        %v7463 = vunpack.c.l.s4 1983009808
        %v7464 = vunpack.c.0.s8 %v7463
        %v7465 = vlaneseq
        %v7466 = vshrl.u32 %v7465, 7
        %v7467 = vsub.s32 %v7464, %v7466
        %v7468 = vrot.slane %v7461, %v7467
        %v7469 = vcombine.low %v7457, %v7458
        %v7471 = vunpack.c.l.s4 1983009808
        %v7472 = vunpack.c.0.s8 %v7471
        %v7473 = vlaneseq
        %v7474 = vshrl.u32 %v7473, 7
        %v7475 = vsub.s32 %v7472, %v7474
        %v7476 = vrot.slane %v7469, %v7475
        %v7477 = vcombine.low %v7449, %v7456
        %v7479 = vunpack.c.l.s4 1983009808
        %v7480 = vunpack.c.0.s8 %v7479
        %v7481 = vlaneseq
        %v7482 = vshrl.u32 %v7481, 7
        %v7483 = vsub.s32 %v7480, %v7482
        %v7484 = vrot.slane %v7477, %v7483
        %v7485 = vcombine.low %v7459, %v7460
        %v7487 = vunpack.c.l.s4 1983009808
        %v7488 = vunpack.c.0.s8 %v7487
        %v7489 = vlaneseq
        %v7490 = vshrl.u32 %v7489, 7
        %v7491 = vsub.s32 %v7488, %v7490
        %v7492 = vrot.slane %v7485, %v7491
        %v7493 = vcombine.low %v7468, %v7476
        %v7494 = vcombine.high %v7468, %v7476
        %v7496 = vunpack.c.l.s4 1934713408
        %v7497 = vunpack.c.0.s8 %v7496
        %v7498 = vlaneseq
        %v7499 = vshrl.u32 %v7498, 7
        %v7500 = vsub.s32 %v7497, %v7499
        %v7501 = vrot.slane %v7493, %v7500
        %v7503 = vunpack.c.l.s4 1934713408
        %v7504 = vunpack.c.0.s8 %v7503
        %v7505 = vlaneseq
        %v7506 = vshrl.u32 %v7505, 7
        %v7507 = vsub.s32 %v7504, %v7506
        %v7508 = vrot.slane %v7494, %v7507
        %v7509 = vcombine.low %v7484, %v7492
        %v7510 = vcombine.high %v7484, %v7492
        %v7512 = vunpack.c.l.s4 1934713408
        %v7513 = vunpack.c.0.s8 %v7512
        %v7514 = vlaneseq
        %v7515 = vshrl.u32 %v7514, 7
        %v7516 = vsub.s32 %v7513, %v7515
        %v7517 = vrot.slane %v7509, %v7516
        %v7519 = vunpack.c.l.s4 1934713408
        %v7520 = vunpack.c.0.s8 %v7519
        %v7521 = vlaneseq
        %v7522 = vshrl.u32 %v7521, 7
        %v7523 = vsub.s32 %v7520, %v7522
        %v7524 = vrot.slane %v7510, %v7523
        %v7525 = vcombine.low %v7501, %v7517
        %v7526 = vcombine.high %v7501, %v7517
        %v7527 = vcombine.low %v7508, %v7524
        %v7528 = vcombine.high %v7508, %v7524
        %v7529 = vpack.c.bf16 %v7525, %v7525
        %v7530 = vpack.c.bf16 %v7526, %v7526
        %v7531 = vpack.c.bf16 %v7527, %v7527
        %v7532 = vpack.c.bf16 %v7528, %v7528
        %7534 = vrot.lane.b32.xlu0 %v6215, 96
        %v7535 = vpop.permute.xlu0 %7534
        %7537 = vrot.lane.b32.xlu0 %v6215, 64
        %v7538 = vpop.permute.xlu0 %7537
        %7540 = vrot.lane.b32.xlu0 %v6215, 32
        %v7541 = vpop.permute.xlu0 %7540
        %v7543 = vcombine.low %v6215, %v7538
        %v7544 = vcombine.high %v6215, %v7538
        %v7546 = vunpack.c.l.s4 1983009808
        %v7547 = vunpack.c.0.s8 %v7546
        %v7548 = vlaneseq
        %v7549 = vshrl.u32 %v7548, 7
        %v7550 = vsub.s32 %v7547, %v7549
        %v7551 = vrot.slane %v7543, %v7550
        %v7553 = vunpack.c.l.s4 1983009808
        %v7554 = vunpack.c.0.s8 %v7553
        %v7555 = vlaneseq
        %v7556 = vshrl.u32 %v7555, 7
        %v7557 = vsub.s32 %v7554, %v7556
        %v7558 = vrot.slane %v7544, %v7557
        %v7559 = vcombine.low %v7535, %v7541
        %v7560 = vcombine.high %v7535, %v7541
        %v7562 = vunpack.c.l.s4 1983009808
        %v7563 = vunpack.c.0.s8 %v7562
        %v7564 = vlaneseq
        %v7565 = vshrl.u32 %v7564, 7
        %v7566 = vsub.s32 %v7563, %v7565
        %v7567 = vrot.slane %v7559, %v7566
        %v7569 = vunpack.c.l.s4 1983009808
        %v7570 = vunpack.c.0.s8 %v7569
        %v7571 = vlaneseq
        %v7572 = vshrl.u32 %v7571, 7
        %v7573 = vsub.s32 %v7570, %v7572
        %v7574 = vrot.slane %v7560, %v7573
        %v7575 = vcombine.low %v7551, %v7567
        %v7576 = vcombine.high %v7551, %v7567
        %v7578 = vunpack.c.l.s4 1934713408
        %v7579 = vunpack.c.0.s8 %v7578
        %v7580 = vlaneseq
        %v7581 = vshrl.u32 %v7580, 7
        %v7582 = vsub.s32 %v7579, %v7581
        %v7583 = vrot.slane %v7575, %v7582
        %v7585 = vunpack.c.l.s4 1934713408
        %v7586 = vunpack.c.0.s8 %v7585
        %v7587 = vlaneseq
        %v7588 = vshrl.u32 %v7587, 7
        %v7589 = vsub.s32 %v7586, %v7588
        %v7590 = vrot.slane %v7576, %v7589
        %v7591 = vcombine.low %v7558, %v7574
        %v7592 = vcombine.high %v7558, %v7574
        %v7594 = vunpack.c.l.s4 1934713408
        %v7595 = vunpack.c.0.s8 %v7594
        %v7596 = vlaneseq
        %v7597 = vshrl.u32 %v7596, 7
        %v7598 = vsub.s32 %v7595, %v7597
        %v7599 = vrot.slane %v7591, %v7598
        %v7601 = vunpack.c.l.s4 1934713408
        %v7602 = vunpack.c.0.s8 %v7601
        %v7603 = vlaneseq
        %v7604 = vshrl.u32 %v7603, 7
        %v7605 = vsub.s32 %v7602, %v7604
        %v7606 = vrot.slane %v7592, %v7605
        %v7607 = vcombine.high %v7583, 0.0
        %v7608 = vcombine.high %v7590, 0.0
        %v7609 = vcombine.high %v7599, 0.0
        %v7610 = vcombine.high %v7606, 0.0
        %v7611 = vcombine.low %v7583, %v7590
        %v7613 = vunpack.c.l.s4 1983009808
        %v7614 = vunpack.c.0.s8 %v7613
        %v7615 = vlaneseq
        %v7616 = vshrl.u32 %v7615, 7
        %v7617 = vsub.s32 %v7614, %v7616
        %v7618 = vrot.slane %v7611, %v7617
        %v7619 = vcombine.low %v7607, %v7608
        %v7621 = vunpack.c.l.s4 1983009808
        %v7622 = vunpack.c.0.s8 %v7621
        %v7623 = vlaneseq
        %v7624 = vshrl.u32 %v7623, 7
        %v7625 = vsub.s32 %v7622, %v7624
        %v7626 = vrot.slane %v7619, %v7625
        %v7627 = vcombine.low %v7599, %v7606
        %v7629 = vunpack.c.l.s4 1983009808
        %v7630 = vunpack.c.0.s8 %v7629
        %v7631 = vlaneseq
        %v7632 = vshrl.u32 %v7631, 7
        %v7633 = vsub.s32 %v7630, %v7632
        %v7634 = vrot.slane %v7627, %v7633
        %v7635 = vcombine.low %v7609, %v7610
        %v7637 = vunpack.c.l.s4 1983009808
        %v7638 = vunpack.c.0.s8 %v7637
        %v7639 = vlaneseq
        %v7640 = vshrl.u32 %v7639, 7
        %v7641 = vsub.s32 %v7638, %v7640
        %v7642 = vrot.slane %v7635, %v7641
        %v7643 = vcombine.low %v7618, %v7626
        %v7644 = vcombine.high %v7618, %v7626
        %v7646 = vunpack.c.l.s4 1934713408
        %v7647 = vunpack.c.0.s8 %v7646
        %v7648 = vlaneseq
        %v7649 = vshrl.u32 %v7648, 7
        %v7650 = vsub.s32 %v7647, %v7649
        %v7651 = vrot.slane %v7643, %v7650
        %v7653 = vunpack.c.l.s4 1934713408
        %v7654 = vunpack.c.0.s8 %v7653
        %v7655 = vlaneseq
        %v7656 = vshrl.u32 %v7655, 7
        %v7657 = vsub.s32 %v7654, %v7656
        %v7658 = vrot.slane %v7644, %v7657
        %v7659 = vcombine.low %v7634, %v7642
        %v7660 = vcombine.high %v7634, %v7642
        %v7662 = vunpack.c.l.s4 1934713408
        %v7663 = vunpack.c.0.s8 %v7662
        %v7664 = vlaneseq
        %v7665 = vshrl.u32 %v7664, 7
        %v7666 = vsub.s32 %v7663, %v7665
        %v7667 = vrot.slane %v7659, %v7666
        %v7669 = vunpack.c.l.s4 1934713408
        %v7670 = vunpack.c.0.s8 %v7669
        %v7671 = vlaneseq
        %v7672 = vshrl.u32 %v7671, 7
        %v7673 = vsub.s32 %v7670, %v7672
        %v7674 = vrot.slane %v7660, %v7673
        %v7675 = vcombine.low %v7651, %v7667
        %v7676 = vcombine.high %v7651, %v7667
        %v7677 = vcombine.low %v7658, %v7674
        %v7678 = vcombine.high %v7658, %v7674
        %v7679 = vpack.c.bf16 %v7675, %v7675
        %v7680 = vpack.c.bf16 %v7676, %v7676
        %v7681 = vpack.c.bf16 %v7677, %v7677
        %v7682 = vpack.c.bf16 %v7678, %v7678
        %v7684 = vsel %vm1463, %v7379, 0
        %v7687 = vsel %vm1463, %v7529, 0
        %7689 = vmatprep.subr.bf16.mxu0 0
        %7690 = vmatpush1.bf16.xpose.msra.mxu0 %v7687
        %7691 = vmatprep.subr.bf16.mxu0 0
        %7692 = vmatpush1.bf16.xpose.msra.mxu0 0
        %7693 = vmatprep.subr.bf16.mxu0 0
        %7694 = vmatpush1.bf16.xpose.msra.mxu0 0
        %7695 = vmatprep.subr.bf16.mxu0 0
        %7696 = vmatpush1.bf16.xpose.msra.mxu0 0
        %7697 = vmatprep.subr.bf16.mxu0 0
        %7698 = vmatpush1.bf16.xpose.msra.mxu0 0
        %7699 = vmatprep.subr.bf16.mxu0 0
        %7700 = vmatpush1.bf16.xpose.msra.mxu0 0
        %7701 = vmatprep.subr.bf16.mxu0 0
        %7702 = vmatpush1.bf16.xpose.msra.mxu0 0
        %7703 = vmatprep.subr.bf16.mxu0 0
        %7704 = vmatpush1.bf16.xpose.msra.mxu0 0
        %7705 = vmatprep.subr.bf16.mxu0 0
        %7706 = vmatpush1.bf16.xpose.msra.mxu0 0
        %7707 = vmatprep.subr.bf16.mxu0 0
        %7708 = vmatpush1.bf16.xpose.msra.mxu0 0
        %7709 = vmatprep.subr.bf16.mxu0 0
        %7710 = vmatpush1.bf16.xpose.msra.mxu0 0
        %7711 = vmatprep.subr.bf16.mxu0 0
        %7712 = vmatpush1.bf16.xpose.msra.mxu0 0
        %7713 = vmatprep.subr.bf16.mxu0 0
        %7714 = vmatpush1.bf16.xpose.msra.mxu0 0
        %7715 = vmatprep.subr.bf16.mxu0 0
        %7716 = vmatpush1.bf16.xpose.msra.mxu0 0
        %7717 = vmatprep.subr.bf16.mxu0 0
        %7718 = vmatpush1.bf16.xpose.msra.mxu0 0
        %7719 = vmatprep.subr.bf16.mxu0 0
        %7720 = vmatpush1.bf16.xpose.msra.mxu0 0
        %7721 = vmatprep.mubr.bf16.mxu0 0
        %7722 = vmatmul.mubr.bf16.gmra.mrb[0].mxu0 %v7684
        %v7723 = vpop.f32.mrb[0].mxu0
        %v7724 = vadd.f32 0.0, %v7723
        %v7725 = vpop.f32.mrb[0].mxu0
        %v7726 = vpop.f32.mrb[0].mxu0
        %v7727 = vpop.f32.mrb[0].mxu0
        %7728 = vdwg.mxu0
        %v7730 = vsel %vm1463, %v7380, 0
        %v7733 = vsel %vm1463, %v7530, 0
        %7735 = vmatprep.subr.bf16.mxu0 0
        %7736 = vmatpush1.bf16.xpose.msra.mxu0 %v7733
        %7737 = vmatprep.subr.bf16.mxu0 0
        %7738 = vmatpush1.bf16.xpose.msra.mxu0 0
        %7739 = vmatprep.subr.bf16.mxu0 0
        %7740 = vmatpush1.bf16.xpose.msra.mxu0 0
        %7741 = vmatprep.subr.bf16.mxu0 0
        %7742 = vmatpush1.bf16.xpose.msra.mxu0 0
        %7743 = vmatprep.subr.bf16.mxu0 0
        %7744 = vmatpush1.bf16.xpose.msra.mxu0 0
        %7745 = vmatprep.subr.bf16.mxu0 0
        %7746 = vmatpush1.bf16.xpose.msra.mxu0 0
        %7747 = vmatprep.subr.bf16.mxu0 0
        %7748 = vmatpush1.bf16.xpose.msra.mxu0 0
        %7749 = vmatprep.subr.bf16.mxu0 0
        %7750 = vmatpush1.bf16.xpose.msra.mxu0 0
        %7751 = vmatprep.subr.bf16.mxu0 0
        %7752 = vmatpush1.bf16.xpose.msra.mxu0 0
        %7753 = vmatprep.subr.bf16.mxu0 0
        %7754 = vmatpush1.bf16.xpose.msra.mxu0 0
        %7755 = vmatprep.subr.bf16.mxu0 0
        %7756 = vmatpush1.bf16.xpose.msra.mxu0 0
        %7757 = vmatprep.subr.bf16.mxu0 0
        %7758 = vmatpush1.bf16.xpose.msra.mxu0 0
        %7759 = vmatprep.subr.bf16.mxu0 0
        %7760 = vmatpush1.bf16.xpose.msra.mxu0 0
        %7761 = vmatprep.subr.bf16.mxu0 0
        %7762 = vmatpush1.bf16.xpose.msra.mxu0 0
        %7763 = vmatprep.subr.bf16.mxu0 0
        %7764 = vmatpush1.bf16.xpose.msra.mxu0 0
        %7765 = vmatprep.subr.bf16.mxu0 0
        %7766 = vmatpush1.bf16.xpose.msra.mxu0 0
        %7767 = vmatprep.mubr.bf16.mxu0 0
        %7768 = vmatmul.mubr.bf16.gmra.mrb[0].mxu0 %v7730
        %v7769 = vpop.f32.mrb[0].mxu0
        %v7770 = vadd.f32 0.0, %v7769
        %v7771 = vpop.f32.mrb[0].mxu0
        %v7772 = vpop.f32.mrb[0].mxu0
        %v7773 = vpop.f32.mrb[0].mxu0
        %7774 = vdwg.mxu0
        %v7776 = vsel %vm1463, %v7381, 0
        %v7779 = vsel %vm1463, %v7531, 0
        %7781 = vmatprep.subr.bf16.mxu0 0
        %7782 = vmatpush1.bf16.xpose.msra.mxu0 %v7779
        %7783 = vmatprep.subr.bf16.mxu0 0
        %7784 = vmatpush1.bf16.xpose.msra.mxu0 0
        %7785 = vmatprep.subr.bf16.mxu0 0
        %7786 = vmatpush1.bf16.xpose.msra.mxu0 0
        %7787 = vmatprep.subr.bf16.mxu0 0
        %7788 = vmatpush1.bf16.xpose.msra.mxu0 0
        %7789 = vmatprep.subr.bf16.mxu0 0
        %7790 = vmatpush1.bf16.xpose.msra.mxu0 0
        %7791 = vmatprep.subr.bf16.mxu0 0
        %7792 = vmatpush1.bf16.xpose.msra.mxu0 0
        %7793 = vmatprep.subr.bf16.mxu0 0
        %7794 = vmatpush1.bf16.xpose.msra.mxu0 0
        %7795 = vmatprep.subr.bf16.mxu0 0
        %7796 = vmatpush1.bf16.xpose.msra.mxu0 0
        %7797 = vmatprep.subr.bf16.mxu0 0
        %7798 = vmatpush1.bf16.xpose.msra.mxu0 0
        %7799 = vmatprep.subr.bf16.mxu0 0
        %7800 = vmatpush1.bf16.xpose.msra.mxu0 0
        %7801 = vmatprep.subr.bf16.mxu0 0
        %7802 = vmatpush1.bf16.xpose.msra.mxu0 0
        %7803 = vmatprep.subr.bf16.mxu0 0
        %7804 = vmatpush1.bf16.xpose.msra.mxu0 0
        %7805 = vmatprep.subr.bf16.mxu0 0
        %7806 = vmatpush1.bf16.xpose.msra.mxu0 0
        %7807 = vmatprep.subr.bf16.mxu0 0
        %7808 = vmatpush1.bf16.xpose.msra.mxu0 0
        %7809 = vmatprep.subr.bf16.mxu0 0
        %7810 = vmatpush1.bf16.xpose.msra.mxu0 0
        %7811 = vmatprep.subr.bf16.mxu0 0
        %7812 = vmatpush1.bf16.xpose.msra.mxu0 0
        %7813 = vmatprep.mubr.bf16.mxu0 0
        %7814 = vmatmul.mubr.bf16.gmra.mrb[0].mxu0 %v7776
        %v7815 = vpop.f32.mrb[0].mxu0
        %v7816 = vadd.f32 0.0, %v7815
        %v7817 = vpop.f32.mrb[0].mxu0
        %v7818 = vpop.f32.mrb[0].mxu0
        %v7819 = vpop.f32.mrb[0].mxu0
        %7820 = vdwg.mxu0
        %v7822 = vsel %vm1463, %v7382, 0
        %v7825 = vsel %vm1463, %v7532, 0
        %7827 = vmatprep.subr.bf16.mxu0 0
        %7828 = vmatpush1.bf16.xpose.msra.mxu0 %v7825
        %7829 = vmatprep.subr.bf16.mxu0 0
        %7830 = vmatpush1.bf16.xpose.msra.mxu0 0
        %7831 = vmatprep.subr.bf16.mxu0 0
        %7832 = vmatpush1.bf16.xpose.msra.mxu0 0
        %7833 = vmatprep.subr.bf16.mxu0 0
        %7834 = vmatpush1.bf16.xpose.msra.mxu0 0
        %7835 = vmatprep.subr.bf16.mxu0 0
        %7836 = vmatpush1.bf16.xpose.msra.mxu0 0
        %7837 = vmatprep.subr.bf16.mxu0 0
        %7838 = vmatpush1.bf16.xpose.msra.mxu0 0
        %7839 = vmatprep.subr.bf16.mxu0 0
        %7840 = vmatpush1.bf16.xpose.msra.mxu0 0
        %7841 = vmatprep.subr.bf16.mxu0 0
        %7842 = vmatpush1.bf16.xpose.msra.mxu0 0
        %7843 = vmatprep.subr.bf16.mxu0 0
        %7844 = vmatpush1.bf16.xpose.msra.mxu0 0
        %7845 = vmatprep.subr.bf16.mxu0 0
        %7846 = vmatpush1.bf16.xpose.msra.mxu0 0
        %7847 = vmatprep.subr.bf16.mxu0 0
        %7848 = vmatpush1.bf16.xpose.msra.mxu0 0
        %7849 = vmatprep.subr.bf16.mxu0 0
        %7850 = vmatpush1.bf16.xpose.msra.mxu0 0
        %7851 = vmatprep.subr.bf16.mxu0 0
        %7852 = vmatpush1.bf16.xpose.msra.mxu0 0
        %7853 = vmatprep.subr.bf16.mxu0 0
        %7854 = vmatpush1.bf16.xpose.msra.mxu0 0
        %7855 = vmatprep.subr.bf16.mxu0 0
        %7856 = vmatpush1.bf16.xpose.msra.mxu0 0
        %7857 = vmatprep.subr.bf16.mxu0 0
        %7858 = vmatpush1.bf16.xpose.msra.mxu0 0
        %7859 = vmatprep.mubr.bf16.mxu0 0
        %7860 = vmatmul.mubr.bf16.gmra.mrb[0].mxu0 %v7822
        %v7861 = vpop.f32.mrb[0].mxu0
        %v7862 = vadd.f32 0.0, %v7861
        %v7863 = vpop.f32.mrb[0].mxu0
        %v7864 = vpop.f32.mrb[0].mxu0
        %v7865 = vpop.f32.mrb[0].mxu0
        %7866 = vdwg.mxu0
        %v7867 = vsel %vm1648, %v7724, -inf
        %7868 = vmax.xlane.f32.xlu0 %v7867
        %v7869 = vpop.xlane.xlu0 %7868
        %v7870 = vsel %vm1648, %v7770, -inf
        %7871 = vmax.xlane.f32.xlu0 %v7870
        %v7872 = vpop.xlane.xlu0 %7871
        %v7873 = vsel %vm1648, %v7816, -inf
        %7874 = vmax.xlane.f32.xlu0 %v7873
        %v7875 = vpop.xlane.xlu0 %7874
        %v7876 = vsel %vm1648, %v7862, -inf
        %7877 = vmax.xlane.f32.xlu0 %v7876
        %v7878 = vpop.xlane.xlu0 %7877
        %v7879 = vsub.f32 %v7724, %v7869
        %v7880 = vsub.f32 %v7770, %v7872
        %v7881 = vsub.f32 %v7816, %v7875
        %v7882 = vsub.f32 %v7862, %v7878
        %v7883 = vmul.f32 %v7879, 1.442695
        %v7884 = vpow.pop %v7883
        %v7885 = vmul.f32 %v7880, 1.442695
        %v7886 = vpow.pop %v7885
        %v7887 = vmul.f32 %v7881, 1.442695
        %v7888 = vpow.pop %v7887
        %v7889 = vmul.f32 %v7882, 1.442695
        %v7890 = vpow.pop %v7889
        %v7891 = vsel %vm1648, %v7884, 0.0
        %7892 = vadd.xlane.f32.xlu0 %v7891
        %v7893 = vpop.xlane.xlu0 %7892
        %v7894 = vsel %vm1648, %v7886, 0.0
        %7895 = vadd.xlane.f32.xlu0 %v7894
        %v7896 = vpop.xlane.xlu0 %7895
        %v7897 = vsel %vm1648, %v7888, 0.0
        %7898 = vadd.xlane.f32.xlu0 %v7897
        %v7899 = vpop.xlane.xlu0 %7898
        %v7900 = vsel %vm1648, %v7890, 0.0
        %7901 = vadd.xlane.f32.xlu0 %v7900
        %v7902 = vpop.xlane.xlu0 %7901
        %v7903 = vrcp.pop %v7893
        %v7904 = vrcp.pop %v7896
        %v7905 = vrcp.pop %v7899
        %v7906 = vrcp.pop %v7902
        %v7907 = vmul.f32 %v7884, %v7903
        %v7908 = vmul.f32 %v7886, %v7904
        %v7909 = vmul.f32 %v7888, %v7905
        %v7910 = vmul.f32 %v7890, %v7906
        %v7911 = vpack.c.bf16 %v7907, %v7907
        %v7912 = vpack.c.bf16 %v7908, %v7908
        %v7913 = vpack.c.bf16 %v7909, %v7909
        %v7914 = vpack.c.bf16 %v7910, %v7910
        %v7916 = vsel %vm1648, %v7911, 0
        %v7919 = vsel %vm1700, %v7679, 0
        %7921 = vmatprep.subr.bf16.mxu0 0
        %7922 = vmatpush1.bf16.msra.mxu0 %v7919
        %7923 = vmatprep.subr.bf16.mxu0 0
        %7924 = vmatpush1.bf16.msra.mxu0 0
        %7925 = vmatprep.subr.bf16.mxu0 0
        %7926 = vmatpush1.bf16.msra.mxu0 0
        %7927 = vmatprep.subr.bf16.mxu0 0
        %7928 = vmatpush1.bf16.msra.mxu0 0
        %7929 = vmatprep.subr.bf16.mxu0 0
        %7930 = vmatpush1.bf16.msra.mxu0 0
        %7931 = vmatprep.subr.bf16.mxu0 0
        %7932 = vmatpush1.bf16.msra.mxu0 0
        %7933 = vmatprep.subr.bf16.mxu0 0
        %7934 = vmatpush1.bf16.msra.mxu0 0
        %7935 = vmatprep.subr.bf16.mxu0 0
        %7936 = vmatpush1.bf16.msra.mxu0 0
        %7937 = vmatprep.subr.bf16.mxu0 0
        %7938 = vmatpush1.bf16.msra.mxu0 0
        %7939 = vmatprep.subr.bf16.mxu0 0
        %7940 = vmatpush1.bf16.msra.mxu0 0
        %7941 = vmatprep.subr.bf16.mxu0 0
        %7942 = vmatpush1.bf16.msra.mxu0 0
        %7943 = vmatprep.subr.bf16.mxu0 0
        %7944 = vmatpush1.bf16.msra.mxu0 0
        %7945 = vmatprep.subr.bf16.mxu0 0
        %7946 = vmatpush1.bf16.msra.mxu0 0
        %7947 = vmatprep.subr.bf16.mxu0 0
        %7948 = vmatpush1.bf16.msra.mxu0 0
        %7949 = vmatprep.subr.bf16.mxu0 0
        %7950 = vmatpush1.bf16.msra.mxu0 0
        %7951 = vmatprep.subr.bf16.mxu0 0
        %7952 = vmatpush1.bf16.msra.mxu0 0
        %7953 = vmatprep.mubr.bf16.mxu0 0
        %7954 = vmatmul.mubr.bf16.gmra.mrb[0].mxu0 %v7916
        %v7955 = vpop.f32.mrb[0].mxu0
        %v7956 = vadd.f32 0.0, %v7955
        %v7957 = vpop.f32.mrb[0].mxu0
        %v7958 = vpop.f32.mrb[0].mxu0
        %v7959 = vpop.f32.mrb[0].mxu0
        %7960 = vdwg.mxu0
        %v7962 = vsel %vm1648, %v7912, 0
        %v7965 = vsel %vm1700, %v7680, 0
        %7967 = vmatprep.subr.bf16.mxu0 0
        %7968 = vmatpush1.bf16.msra.mxu0 %v7965
        %7969 = vmatprep.subr.bf16.mxu0 0
        %7970 = vmatpush1.bf16.msra.mxu0 0
        %7971 = vmatprep.subr.bf16.mxu0 0
        %7972 = vmatpush1.bf16.msra.mxu0 0
        %7973 = vmatprep.subr.bf16.mxu0 0
        %7974 = vmatpush1.bf16.msra.mxu0 0
        %7975 = vmatprep.subr.bf16.mxu0 0
        %7976 = vmatpush1.bf16.msra.mxu0 0
        %7977 = vmatprep.subr.bf16.mxu0 0
        %7978 = vmatpush1.bf16.msra.mxu0 0
        %7979 = vmatprep.subr.bf16.mxu0 0
        %7980 = vmatpush1.bf16.msra.mxu0 0
        %7981 = vmatprep.subr.bf16.mxu0 0
        %7982 = vmatpush1.bf16.msra.mxu0 0
        %7983 = vmatprep.subr.bf16.mxu0 0
        %7984 = vmatpush1.bf16.msra.mxu0 0
        %7985 = vmatprep.subr.bf16.mxu0 0
        %7986 = vmatpush1.bf16.msra.mxu0 0
        %7987 = vmatprep.subr.bf16.mxu0 0
        %7988 = vmatpush1.bf16.msra.mxu0 0
        %7989 = vmatprep.subr.bf16.mxu0 0
        %7990 = vmatpush1.bf16.msra.mxu0 0
        %7991 = vmatprep.subr.bf16.mxu0 0
        %7992 = vmatpush1.bf16.msra.mxu0 0
        %7993 = vmatprep.subr.bf16.mxu0 0
        %7994 = vmatpush1.bf16.msra.mxu0 0
        %7995 = vmatprep.subr.bf16.mxu0 0
        %7996 = vmatpush1.bf16.msra.mxu0 0
        %7997 = vmatprep.subr.bf16.mxu0 0
        %7998 = vmatpush1.bf16.msra.mxu0 0
        %7999 = vmatprep.mubr.bf16.mxu0 0
        %8000 = vmatmul.mubr.bf16.gmra.mrb[0].mxu0 %v7962
        %v8001 = vpop.f32.mrb[0].mxu0
        %v8002 = vadd.f32 0.0, %v8001
        %v8003 = vpop.f32.mrb[0].mxu0
        %v8004 = vpop.f32.mrb[0].mxu0
        %v8005 = vpop.f32.mrb[0].mxu0
        %8006 = vdwg.mxu0
        %v8008 = vsel %vm1648, %v7913, 0
        %v8011 = vsel %vm1700, %v7681, 0
        %8013 = vmatprep.subr.bf16.mxu0 0
        %8014 = vmatpush1.bf16.msra.mxu0 %v8011
        %8015 = vmatprep.subr.bf16.mxu0 0
        %8016 = vmatpush1.bf16.msra.mxu0 0
        %8017 = vmatprep.subr.bf16.mxu0 0
        %8018 = vmatpush1.bf16.msra.mxu0 0
        %8019 = vmatprep.subr.bf16.mxu0 0
        %8020 = vmatpush1.bf16.msra.mxu0 0
        %8021 = vmatprep.subr.bf16.mxu0 0
        %8022 = vmatpush1.bf16.msra.mxu0 0
        %8023 = vmatprep.subr.bf16.mxu0 0
        %8024 = vmatpush1.bf16.msra.mxu0 0
        %8025 = vmatprep.subr.bf16.mxu0 0
        %8026 = vmatpush1.bf16.msra.mxu0 0
        %8027 = vmatprep.subr.bf16.mxu0 0
        %8028 = vmatpush1.bf16.msra.mxu0 0
        %8029 = vmatprep.subr.bf16.mxu0 0
        %8030 = vmatpush1.bf16.msra.mxu0 0
        %8031 = vmatprep.subr.bf16.mxu0 0
        %8032 = vmatpush1.bf16.msra.mxu0 0
        %8033 = vmatprep.subr.bf16.mxu0 0
        %8034 = vmatpush1.bf16.msra.mxu0 0
        %8035 = vmatprep.subr.bf16.mxu0 0
        %8036 = vmatpush1.bf16.msra.mxu0 0
        %8037 = vmatprep.subr.bf16.mxu0 0
        %8038 = vmatpush1.bf16.msra.mxu0 0
        %8039 = vmatprep.subr.bf16.mxu0 0
        %8040 = vmatpush1.bf16.msra.mxu0 0
        %8041 = vmatprep.subr.bf16.mxu0 0
        %8042 = vmatpush1.bf16.msra.mxu0 0
        %8043 = vmatprep.subr.bf16.mxu0 0
        %8044 = vmatpush1.bf16.msra.mxu0 0
        %8045 = vmatprep.mubr.bf16.mxu0 0
        %8046 = vmatmul.mubr.bf16.gmra.mrb[0].mxu0 %v8008
        %v8047 = vpop.f32.mrb[0].mxu0
        %v8048 = vadd.f32 0.0, %v8047
        %v8049 = vpop.f32.mrb[0].mxu0
        %v8050 = vpop.f32.mrb[0].mxu0
        %v8051 = vpop.f32.mrb[0].mxu0
        %8052 = vdwg.mxu0
        %v8054 = vsel %vm1648, %v7914, 0
        %v8057 = vsel %vm1700, %v7682, 0
        %8059 = vmatprep.subr.bf16.mxu0 0
        %8060 = vmatpush1.bf16.msra.mxu0 %v8057
        %8061 = vmatprep.subr.bf16.mxu0 0
        %8062 = vmatpush1.bf16.msra.mxu0 0
        %8063 = vmatprep.subr.bf16.mxu0 0
        %8064 = vmatpush1.bf16.msra.mxu0 0
        %8065 = vmatprep.subr.bf16.mxu0 0
        %8066 = vmatpush1.bf16.msra.mxu0 0
        %8067 = vmatprep.subr.bf16.mxu0 0
        %8068 = vmatpush1.bf16.msra.mxu0 0
        %8069 = vmatprep.subr.bf16.mxu0 0
        %8070 = vmatpush1.bf16.msra.mxu0 0
        %8071 = vmatprep.subr.bf16.mxu0 0
        %8072 = vmatpush1.bf16.msra.mxu0 0
        %8073 = vmatprep.subr.bf16.mxu0 0
        %8074 = vmatpush1.bf16.msra.mxu0 0
        %8075 = vmatprep.subr.bf16.mxu0 0
        %8076 = vmatpush1.bf16.msra.mxu0 0
        %8077 = vmatprep.subr.bf16.mxu0 0
        %8078 = vmatpush1.bf16.msra.mxu0 0
        %8079 = vmatprep.subr.bf16.mxu0 0
        %8080 = vmatpush1.bf16.msra.mxu0 0
        %8081 = vmatprep.subr.bf16.mxu0 0
        %8082 = vmatpush1.bf16.msra.mxu0 0
        %8083 = vmatprep.subr.bf16.mxu0 0
        %8084 = vmatpush1.bf16.msra.mxu0 0
        %8085 = vmatprep.subr.bf16.mxu0 0
        %8086 = vmatpush1.bf16.msra.mxu0 0
        %8087 = vmatprep.subr.bf16.mxu0 0
        %8088 = vmatpush1.bf16.msra.mxu0 0
        %8089 = vmatprep.subr.bf16.mxu0 0
        %8090 = vmatpush1.bf16.msra.mxu0 0
        %8091 = vmatprep.mubr.bf16.mxu0 0
        %8092 = vmatmul.mubr.bf16.gmra.mrb[0].mxu0 %v8054
        %v8093 = vpop.f32.mrb[0].mxu0
        %v8094 = vadd.f32 0.0, %v8093
        %v8095 = vpop.f32.mrb[0].mxu0
        %v8096 = vpop.f32.mrb[0].mxu0
        %v8097 = vpop.f32.mrb[0].mxu0
        %8098 = vdwg.mxu0
        %v8099 = vcombine.low %v7956, %v8048
        %v8100 = vcombine.high %v7956, %v8048
        %v8102 = vunpack.c.l.s4 1983009808
        %v8103 = vunpack.c.0.s8 %v8102
        %v8104 = vlaneseq
        %v8105 = vshrl.u32 %v8104, 7
        %v8106 = vsub.s32 %v8103, %v8105
        %v8107 = vrot.slane %v8099, %v8106
        %v8109 = vunpack.c.l.s4 1983009808
        %v8110 = vunpack.c.0.s8 %v8109
        %v8111 = vlaneseq
        %v8112 = vshrl.u32 %v8111, 7
        %v8113 = vsub.s32 %v8110, %v8112
        %v8114 = vrot.slane %v8100, %v8113
        %v8115 = vcombine.low %v8002, %v8094
        %v8116 = vcombine.high %v8002, %v8094
        %v8118 = vunpack.c.l.s4 1983009808
        %v8119 = vunpack.c.0.s8 %v8118
        %v8120 = vlaneseq
        %v8121 = vshrl.u32 %v8120, 7
        %v8122 = vsub.s32 %v8119, %v8121
        %v8123 = vrot.slane %v8115, %v8122
        %v8125 = vunpack.c.l.s4 1983009808
        %v8126 = vunpack.c.0.s8 %v8125
        %v8127 = vlaneseq
        %v8128 = vshrl.u32 %v8127, 7
        %v8129 = vsub.s32 %v8126, %v8128
        %v8130 = vrot.slane %v8116, %v8129
        %v8131 = vcombine.low %v8107, %v8123
        %v8132 = vcombine.high %v8107, %v8123
        %v8134 = vunpack.c.l.s4 1934713408
        %v8135 = vunpack.c.0.s8 %v8134
        %v8136 = vlaneseq
        %v8137 = vshrl.u32 %v8136, 7
        %v8138 = vsub.s32 %v8135, %v8137
        %v8139 = vrot.slane %v8131, %v8138
        %v8141 = vunpack.c.l.s4 1934713408
        %v8142 = vunpack.c.0.s8 %v8141
        %v8143 = vlaneseq
        %v8144 = vshrl.u32 %v8143, 7
        %v8145 = vsub.s32 %v8142, %v8144
        %v8146 = vrot.slane %v8132, %v8145
        %v8147 = vcombine.low %v8114, %v8130
        %v8148 = vcombine.high %v8114, %v8130
        %v8150 = vunpack.c.l.s4 1934713408
        %v8151 = vunpack.c.0.s8 %v8150
        %v8152 = vlaneseq
        %v8153 = vshrl.u32 %v8152, 7
        %v8154 = vsub.s32 %v8151, %v8153
        %v8155 = vrot.slane %v8147, %v8154
        %v8157 = vunpack.c.l.s4 1934713408
        %v8158 = vunpack.c.0.s8 %v8157
        %v8159 = vlaneseq
        %v8160 = vshrl.u32 %v8159, 7
        %v8161 = vsub.s32 %v8158, %v8160
        %v8162 = vrot.slane %v8148, %v8161
        %v8163 = vcombine.high %v8139, 0.0
        %v8164 = vcombine.high %v8146, 0.0
        %v8165 = vcombine.high %v8155, 0.0
        %v8166 = vcombine.high %v8162, 0.0
        %v8167 = vcombine.low %v8139, %v8146
        %v8169 = vunpack.c.l.s4 1983009808
        %v8170 = vunpack.c.0.s8 %v8169
        %v8171 = vlaneseq
        %v8172 = vshrl.u32 %v8171, 7
        %v8173 = vsub.s32 %v8170, %v8172
        %v8174 = vrot.slane %v8167, %v8173
        %v8175 = vcombine.low %v8163, %v8164
        %v8177 = vunpack.c.l.s4 1983009808
        %v8178 = vunpack.c.0.s8 %v8177
        %v8179 = vlaneseq
        %v8180 = vshrl.u32 %v8179, 7
        %v8181 = vsub.s32 %v8178, %v8180
        %v8182 = vrot.slane %v8175, %v8181
        %v8183 = vcombine.low %v8155, %v8162
        %v8185 = vunpack.c.l.s4 1983009808
        %v8186 = vunpack.c.0.s8 %v8185
        %v8187 = vlaneseq
        %v8188 = vshrl.u32 %v8187, 7
        %v8189 = vsub.s32 %v8186, %v8188
        %v8190 = vrot.slane %v8183, %v8189
        %v8191 = vcombine.low %v8165, %v8166
        %v8193 = vunpack.c.l.s4 1983009808
        %v8194 = vunpack.c.0.s8 %v8193
        %v8195 = vlaneseq
        %v8196 = vshrl.u32 %v8195, 7
        %v8197 = vsub.s32 %v8194, %v8196
        %v8198 = vrot.slane %v8191, %v8197
        %v8199 = vcombine.low %v8174, %v8182
        %v8200 = vcombine.high %v8174, %v8182
        %v8202 = vunpack.c.l.s4 1934713408
        %v8203 = vunpack.c.0.s8 %v8202
        %v8204 = vlaneseq
        %v8205 = vshrl.u32 %v8204, 7
        %v8206 = vsub.s32 %v8203, %v8205
        %v8207 = vrot.slane %v8199, %v8206
        %v8209 = vunpack.c.l.s4 1934713408
        %v8210 = vunpack.c.0.s8 %v8209
        %v8211 = vlaneseq
        %v8212 = vshrl.u32 %v8211, 7
        %v8213 = vsub.s32 %v8210, %v8212
        %v8214 = vrot.slane %v8200, %v8213
        %v8215 = vcombine.low %v8190, %v8198
        %v8216 = vcombine.high %v8190, %v8198
        %v8218 = vunpack.c.l.s4 1934713408
        %v8219 = vunpack.c.0.s8 %v8218
        %v8220 = vlaneseq
        %v8221 = vshrl.u32 %v8220, 7
        %v8222 = vsub.s32 %v8219, %v8221
        %v8223 = vrot.slane %v8215, %v8222
        %v8225 = vunpack.c.l.s4 1934713408
        %v8226 = vunpack.c.0.s8 %v8225
        %v8227 = vlaneseq
        %v8228 = vshrl.u32 %v8227, 7
        %v8229 = vsub.s32 %v8226, %v8228
        %v8230 = vrot.slane %v8216, %v8229
        %v8231 = vcombine.low %v8207, %v8223
        %v8232 = vcombine.high %v8207, %v8223
        %v8233 = vcombine.low %v8214, %v8230
        %v8234 = vcombine.high %v8214, %v8230
        %8236 = vrot.lane.b32.xlu0 %v8232, 32
        %v8237 = vpop.permute.xlu0 %8236
        %8240 = vrot.lane.b32.xlu0 %v8233, 64
        %v8241 = vpop.permute.xlu0 %8240
        %8244 = vrot.lane.b32.xlu0 %v8234, 96
        %v8245 = vpop.permute.xlu0 %8244
        %v8247 = vsel %vm1463, %v8231, %v8237
        %v8248 = vsel %vm2031, %v8247, %v8241
        %v8249 = vsel %vm2033, %v8248, %v8245
        %v8250 = vpack.c.bf16 %v6197, %v4900
        %v8251 = vpack.c.bf16 %v8249, %v7232
        %v8252 = vlaneseq
        %v8253 = vshrl.u32 %v8252, 7
        %v8254 = vsub.s32 2, %v8253
        %v8255 = vrot.slane %v774, %v8254
        %v8288 = vunpack.c.l.b16 %v741
        %v8289 = vunpack.c.l.b16 %v742
        %v8290 = vunpack.c.l.b16 %v743
        %v8291 = vunpack.c.l.b16 %v744
        %v8292 = vunpack.c.l.b16 %v745
        %v8293 = vunpack.c.l.b16 %v746
        %v8294 = vunpack.c.l.b16 %v747
        %v8295 = vunpack.c.l.b16 %v748
        %v8296 = vunpack.c.l.b16 %v749
        %v8297 = vunpack.c.l.b16 %v750
        %v8298 = vunpack.c.l.b16 %v751
        %v8299 = vunpack.c.l.b16 %v752
        %v8300 = vunpack.c.l.b16 %v753
        %v8301 = vunpack.c.l.b16 %v754
        %v8302 = vunpack.c.l.b16 %v755
        %v8303 = vunpack.c.l.b16 %v756
        %v8304 = vunpack.c.l.b16 %v757
        %v8305 = vunpack.c.l.b16 %v758
        %v8306 = vunpack.c.l.b16 %v759
        %v8307 = vunpack.c.l.b16 %v760
        %v8308 = vunpack.c.l.b16 %v761
        %v8309 = vunpack.c.l.b16 %v762
        %v8310 = vunpack.c.l.b16 %v763
        %v8311 = vunpack.c.l.b16 %v764
        %v8312 = vunpack.c.l.b16 %v765
        %v8313 = vunpack.c.l.b16 %v766
        %v8314 = vunpack.c.l.b16 %v767
        %v8315 = vunpack.c.l.b16 %v768
        %v8316 = vunpack.c.l.b16 %v769
        %v8317 = vunpack.c.l.b16 %v770
        %v8318 = vunpack.c.l.b16 %v771
        %v8319 = vunpack.c.l.b16 %v772
        %v8320 = vpack.c.b16 %v8289, %v8288
        %v8321 = vpack.c.b16 %v8291, %v8290
        %v8322 = vpack.c.b16 %v8293, %v8292
        %v8323 = vpack.c.b16 %v8295, %v8294
        %v8324 = vpack.c.b16 %v8297, %v8296
        %v8325 = vpack.c.b16 %v8299, %v8298
        %v8326 = vpack.c.b16 %v8301, %v8300
        %v8327 = vpack.c.b16 %v8303, %v8302
        %v8328 = vpack.c.b16 %v8305, %v8304
        %v8329 = vpack.c.b16 %v8307, %v8306
        %v8330 = vpack.c.b16 %v8309, %v8308
        %v8331 = vpack.c.b16 %v8311, %v8310
        %v8332 = vpack.c.b16 %v8313, %v8312
        %v8333 = vpack.c.b16 %v8315, %v8314
        %v8334 = vpack.c.b16 %v8317, %v8316
        %v8335 = vpack.c.b16 %v8319, %v8318
        %8352 = vmatprep.subr.bf16.mxu0 0
        %8353 = vmatpush1.bf16.msra.mxu0 %v8320
        %8354 = vmatprep.subr.bf16.mxu0 0
        %8355 = vmatpush1.bf16.msra.mxu0 %v8321
        %8356 = vmatprep.subr.bf16.mxu0 0
        %8357 = vmatpush1.bf16.msra.mxu0 %v8322
        %8358 = vmatprep.subr.bf16.mxu0 0
        %8359 = vmatpush1.bf16.msra.mxu0 %v8323
        %8360 = vmatprep.subr.bf16.mxu0 0
        %8361 = vmatpush1.bf16.msra.mxu0 %v8324
        %8362 = vmatprep.subr.bf16.mxu0 0
        %8363 = vmatpush1.bf16.msra.mxu0 %v8325
        %8364 = vmatprep.subr.bf16.mxu0 0
        %8365 = vmatpush1.bf16.msra.mxu0 %v8326
        %8366 = vmatprep.subr.bf16.mxu0 0
        %8367 = vmatpush1.bf16.msra.mxu0 %v8327
        %8368 = vmatprep.subr.bf16.mxu0 0
        %8369 = vmatpush1.bf16.msra.mxu0 %v8328
        %8370 = vmatprep.subr.bf16.mxu0 0
        %8371 = vmatpush1.bf16.msra.mxu0 %v8329
        %8372 = vmatprep.subr.bf16.mxu0 0
        %8373 = vmatpush1.bf16.msra.mxu0 %v8330
        %8374 = vmatprep.subr.bf16.mxu0 0
        %8375 = vmatpush1.bf16.msra.mxu0 %v8331
        %8376 = vmatprep.subr.bf16.mxu0 0
        %8377 = vmatpush1.bf16.msra.mxu0 %v8332
        %8378 = vmatprep.subr.bf16.mxu0 0
        %8379 = vmatpush1.bf16.msra.mxu0 %v8333
        %8380 = vmatprep.subr.bf16.mxu0 0
        %8381 = vmatpush1.bf16.msra.mxu0 %v8334
        %8382 = vmatprep.subr.bf16.mxu0 0
        %8383 = vmatpush1.bf16.msra.mxu0 %v8335
        %8384 = vmatprep.mubr.bf16.mxu0 %v8251
        %8385 = vmatmul.mubr.bf16.gmra.mrb[0].mxu0 %v8250
        %v8386 = vpop.f32.mrb[0].mxu0
        %v8387 = vadd.f32 %v8255, %v8386
        %v8388 = vpop.f32.mrb[0].mxu0
        %v8389 = vpop.f32.mrb[0].mxu0
        %v8390 = vadd.f32 %v8255, %v8389
        %v8391 = vpop.f32.mrb[0].mxu0
        %8392 = vdwg.mxu0
        %v8393 = vadd.f32 %v3181, %v8387
        %v8394 = vadd.f32 %v3182, %v8390
        %8395 = vadd.xlane.f32.xlu0 %v8393
        %v8396 = vpop.xlane.xlu0 %8395
        %8397 = vadd.xlane.f32.xlu0 %v8394
        %v8398 = vpop.xlane.xlu0 %8397
        %v8399 = vmul.f32 %v8396, %v3152
        %v8400 = vmul.f32 %v8398, %v3152
        %v8401 = vsub.f32 %v8393, %v8399
        %v8402 = vsub.f32 %v8394, %v8400
        %v8403 = vmul.f32 %v8401, %v8401
        %v8404 = vmul.f32 %v8402, %v8402
        %8405 = vadd.xlane.f32.xlu0 %v8403
        %v8406 = vpop.xlane.xlu0 %8405
        %8407 = vadd.xlane.f32.xlu0 %v8404
        %v8408 = vpop.xlane.xlu0 %8407
        %v8409 = vmul.f32 %v8406, %v3152
        %v8410 = vmul.f32 %v8408, %v3152
        %v8411 = vadd.f32 %v8409, 1e-05
        %v8412 = vadd.f32 %v8410, 1e-05
        %v8413 = vrsqrt.pop %v8411
        %v8414 = vrsqrt.pop %v8412
        %v8415 = vmul.f32 %v8401, %v8413
        %v8416 = vmul.f32 %v8402, %v8414
        %v8417 = vlaneseq
        %v8418 = vshrl.u32 %v8417, 7
        %v8419 = vsub.s32 6, %v8418
        %v8420 = vrot.slane %v774, %v8419
        %v8421 = vmul.f32 %v8415, %v8420
        %v8422 = vmul.f32 %v8416, %v8420
        %v8423 = vlaneseq
        %v8424 = vshrl.u32 %v8423, 7
        %v8425 = vsub.s32 7, %v8424
        %v8426 = vrot.slane %v774, %v8425
        %v8427 = vadd.f32 %v8421, %v8426
        %v8428 = vadd.f32 %v8422, %v8426
        %v8429 = vpack.c.bf16 %v8428, %v8427
        %v8430 = vld [vmem:[%s522] sm:$0xff]
        %v8431 = vld [vmem:[%s522 + $0x8] sm:$0xff]
        %v8432 = vld [vmem:[%s522 + $0x10] sm:$0xff]
        %v8433 = vld [vmem:[%s522 + $0x18] sm:$0xff]
        %v8434 = vld [vmem:[%s522 + $0x20] sm:$0xff]
        %v8435 = vld [vmem:[%s522 + $0x28] sm:$0xff]
        %v8436 = vld [vmem:[%s522 + $0x30] sm:$0xff]
        %v8437 = vld [vmem:[%s522 + $0x38] sm:$0xff]
        %v8438 = vld [vmem:[%s522 + $0x40] sm:$0xff]
        %v8439 = vld [vmem:[%s522 + $0x48] sm:$0xff]
        %v8440 = vld [vmem:[%s522 + $0x50] sm:$0xff]
        %v8441 = vld [vmem:[%s522 + $0x58] sm:$0xff]
        %v8442 = vld [vmem:[%s522 + $0x60] sm:$0xff]
        %v8443 = vld [vmem:[%s522 + $0x68] sm:$0xff]
        %v8444 = vld [vmem:[%s522 + $0x70] sm:$0xff]
        %v8445 = vld [vmem:[%s522 + $0x78] sm:$0xff]
        %v8446 = vld [vmem:[%s632] sm:$0x3]
        %v8448 = vlaneseq
        %v8449 = vshrl.u32 %v8448, 7
        %v8450 = vsub.s32 0, %v8449
        %v8451 = vrot.slane %v8446, %v8450
        %v8452 = vlaneseq
        %v8453 = vshrl.u32 %v8452, 7
        %v8454 = vsub.s32 1, %v8453
        %v8455 = vrot.slane %v8446, %v8454
        %v8474 = vunpack.c.l.b16 %v8430
        %v8475 = vunpack.c.h.b16 %v8430
        %v8476 = vunpack.c.l.b16 %v8431
        %v8477 = vunpack.c.h.b16 %v8431
        %v8478 = vunpack.c.l.b16 %v8432
        %v8479 = vunpack.c.h.b16 %v8432
        %v8480 = vunpack.c.l.b16 %v8433
        %v8481 = vunpack.c.h.b16 %v8433
        %v8482 = vunpack.c.l.b16 %v8434
        %v8483 = vunpack.c.h.b16 %v8434
        %v8484 = vunpack.c.l.b16 %v8435
        %v8485 = vunpack.c.h.b16 %v8435
        %v8486 = vunpack.c.l.b16 %v8436
        %v8487 = vunpack.c.h.b16 %v8436
        %v8488 = vunpack.c.l.b16 %v8437
        %v8489 = vunpack.c.h.b16 %v8437
        %v8490 = vunpack.c.l.b16 %v8438
        %v8491 = vunpack.c.h.b16 %v8438
        %v8492 = vunpack.c.l.b16 %v8439
        %v8493 = vunpack.c.h.b16 %v8439
        %v8494 = vunpack.c.l.b16 %v8440
        %v8495 = vunpack.c.h.b16 %v8440
        %v8496 = vunpack.c.l.b16 %v8441
        %v8497 = vunpack.c.h.b16 %v8441
        %v8498 = vunpack.c.l.b16 %v8442
        %v8499 = vunpack.c.h.b16 %v8442
        %v8500 = vunpack.c.l.b16 %v8443
        %v8501 = vunpack.c.h.b16 %v8443
        %v8502 = vunpack.c.l.b16 %v8444
        %v8503 = vunpack.c.h.b16 %v8444
        %v8504 = vunpack.c.l.b16 %v8445
        %v8505 = vunpack.c.h.b16 %v8445
        %v8506 = vpack.c.b16 %v8476, %v8474
        %v8507 = vpack.c.b16 %v8477, %v8475
        %v8508 = vpack.c.b16 %v8480, %v8478
        %v8509 = vpack.c.b16 %v8481, %v8479
        %v8510 = vpack.c.b16 %v8484, %v8482
        %v8511 = vpack.c.b16 %v8485, %v8483
        %v8512 = vpack.c.b16 %v8488, %v8486
        %v8513 = vpack.c.b16 %v8489, %v8487
        %v8514 = vpack.c.b16 %v8492, %v8490
        %v8515 = vpack.c.b16 %v8493, %v8491
        %v8516 = vpack.c.b16 %v8496, %v8494
        %v8517 = vpack.c.b16 %v8497, %v8495
        %v8518 = vpack.c.b16 %v8500, %v8498
        %v8519 = vpack.c.b16 %v8501, %v8499
        %v8520 = vpack.c.b16 %v8504, %v8502
        %v8521 = vpack.c.b16 %v8505, %v8503
        %8538 = vmatprep.subr.bf16.mxu0 %v8507
        %8539 = vmatpush1.bf16.msra.mxu0 %v8506
        %8540 = vmatprep.subr.bf16.mxu0 %v8509
        %8541 = vmatpush1.bf16.msra.mxu0 %v8508
        %8542 = vmatprep.subr.bf16.mxu0 %v8511
        %8543 = vmatpush1.bf16.msra.mxu0 %v8510
        %8544 = vmatprep.subr.bf16.mxu0 %v8513
        %8545 = vmatpush1.bf16.msra.mxu0 %v8512
        %8546 = vmatprep.subr.bf16.mxu0 %v8515
        %8547 = vmatpush1.bf16.msra.mxu0 %v8514
        %8548 = vmatprep.subr.bf16.mxu0 %v8517
        %8549 = vmatpush1.bf16.msra.mxu0 %v8516
        %8550 = vmatprep.subr.bf16.mxu0 %v8519
        %8551 = vmatpush1.bf16.msra.mxu0 %v8518
        %8552 = vmatprep.subr.bf16.mxu0 %v8521
        %8553 = vmatpush1.bf16.msra.mxu0 %v8520
        %8554 = vmatprep.subr.bf16.mxu0 0
        %8555 = vmatpush1.bf16.msra.mxu0 0
        %8556 = vmatprep.subr.bf16.mxu0 0
        %8557 = vmatpush1.bf16.msra.mxu0 0
        %8558 = vmatprep.subr.bf16.mxu0 0
        %8559 = vmatpush1.bf16.msra.mxu0 0
        %8560 = vmatprep.subr.bf16.mxu0 0
        %8561 = vmatpush1.bf16.msra.mxu0 0
        %8562 = vmatprep.subr.bf16.mxu0 0
        %8563 = vmatpush1.bf16.msra.mxu0 0
        %8564 = vmatprep.subr.bf16.mxu0 0
        %8565 = vmatpush1.bf16.msra.mxu0 0
        %8566 = vmatprep.subr.bf16.mxu0 0
        %8567 = vmatpush1.bf16.msra.mxu0 0
        %8568 = vmatprep.subr.bf16.mxu0 0
        %8569 = vmatpush1.bf16.msra.mxu0 0
        %8570 = vmatprep.mubr.bf16.mxu0 0
        %8571 = vmatmul.mubr.bf16.gmra.mrb[0].mxu0 %v8429
        %v8572 = vpop.f32.mrb[0].mxu0
        %v8573 = vadd.f32 %v8451, %v8572
        %v8574 = vpop.f32.mrb[0].mxu0
        %v8575 = vadd.f32 %v8455, %v8574
        %v8576 = vpop.f32.mrb[0].mxu0
        %v8577 = vadd.f32 %v8451, %v8576
        %v8578 = vpop.f32.mrb[0].mxu0
        %v8579 = vadd.f32 %v8455, %v8578
        %8580 = vdwg.mxu0
        %v8581 = vmax.f32 %v8573, 0.0
        %v8582 = vmax.f32 %v8575, 0.0
        %v8583 = vmax.f32 %v8577, 0.0
        %v8584 = vmax.f32 %v8579, 0.0
        %v8585 = vpack.c.bf16 %v8583, %v8581
        %v8586 = vpack.c.bf16 %v8584, %v8582
        %v8587 = vld [vmem:[%s531] sm:$0xf]
        %v8588 = vld [vmem:[%s531 + $0x4] sm:$0xf]
        %v8589 = vld [vmem:[%s531 + $0x8] sm:$0xf]
        %v8590 = vld [vmem:[%s531 + $0xc] sm:$0xf]
        %v8591 = vld [vmem:[%s531 + $0x10] sm:$0xf]
        %v8592 = vld [vmem:[%s531 + $0x14] sm:$0xf]
        %v8593 = vld [vmem:[%s531 + $0x18] sm:$0xf]
        %v8594 = vld [vmem:[%s531 + $0x1c] sm:$0xf]
        %v8595 = vld [vmem:[%s531 + $0x20] sm:$0xf]
        %v8596 = vld [vmem:[%s531 + $0x24] sm:$0xf]
        %v8597 = vld [vmem:[%s531 + $0x28] sm:$0xf]
        %v8598 = vld [vmem:[%s531 + $0x2c] sm:$0xf]
        %v8599 = vld [vmem:[%s531 + $0x30] sm:$0xf]
        %v8600 = vld [vmem:[%s531 + $0x34] sm:$0xf]
        %v8601 = vld [vmem:[%s531 + $0x38] sm:$0xf]
        %v8602 = vld [vmem:[%s531 + $0x3c] sm:$0xf]
        %v8603 = vld [vmem:[%s531 + $0x40] sm:$0xf]
        %v8604 = vld [vmem:[%s531 + $0x44] sm:$0xf]
        %v8605 = vld [vmem:[%s531 + $0x48] sm:$0xf]
        %v8606 = vld [vmem:[%s531 + $0x4c] sm:$0xf]
        %v8607 = vld [vmem:[%s531 + $0x50] sm:$0xf]
        %v8608 = vld [vmem:[%s531 + $0x54] sm:$0xf]
        %v8609 = vld [vmem:[%s531 + $0x58] sm:$0xf]
        %v8610 = vld [vmem:[%s531 + $0x5c] sm:$0xf]
        %v8611 = vld [vmem:[%s531 + $0x60] sm:$0xf]
        %v8612 = vld [vmem:[%s531 + $0x64] sm:$0xf]
        %v8613 = vld [vmem:[%s531 + $0x68] sm:$0xf]
        %v8614 = vld [vmem:[%s531 + $0x6c] sm:$0xf]
        %v8615 = vld [vmem:[%s531 + $0x70] sm:$0xf]
        %v8616 = vld [vmem:[%s531 + $0x74] sm:$0xf]
        %v8617 = vld [vmem:[%s531 + $0x78] sm:$0xf]
        %v8618 = vld [vmem:[%s531 + $0x7c] sm:$0xf]
        %v8619 = vlaneseq
        %v8620 = vshrl.u32 %v8619, 7
        %v8621 = vsub.s32 3, %v8620
        %v8622 = vrot.slane %v774, %v8621
        %v8655 = vunpack.c.l.b16 %v8587
        %v8656 = vunpack.c.l.b16 %v8588
        %v8657 = vunpack.c.l.b16 %v8589
        %v8658 = vunpack.c.l.b16 %v8590
        %v8659 = vunpack.c.l.b16 %v8591
        %v8660 = vunpack.c.l.b16 %v8592
        %v8661 = vunpack.c.l.b16 %v8593
        %v8662 = vunpack.c.l.b16 %v8594
        %v8663 = vunpack.c.l.b16 %v8595
        %v8664 = vunpack.c.l.b16 %v8596
        %v8665 = vunpack.c.l.b16 %v8597
        %v8666 = vunpack.c.l.b16 %v8598
        %v8667 = vunpack.c.l.b16 %v8599
        %v8668 = vunpack.c.l.b16 %v8600
        %v8669 = vunpack.c.l.b16 %v8601
        %v8670 = vunpack.c.l.b16 %v8602
        %v8671 = vunpack.c.l.b16 %v8603
        %v8672 = vunpack.c.l.b16 %v8604
        %v8673 = vunpack.c.l.b16 %v8605
        %v8674 = vunpack.c.l.b16 %v8606
        %v8675 = vunpack.c.l.b16 %v8607
        %v8676 = vunpack.c.l.b16 %v8608
        %v8677 = vunpack.c.l.b16 %v8609
        %v8678 = vunpack.c.l.b16 %v8610
        %v8679 = vunpack.c.l.b16 %v8611
        %v8680 = vunpack.c.l.b16 %v8612
        %v8681 = vunpack.c.l.b16 %v8613
        %v8682 = vunpack.c.l.b16 %v8614
        %v8683 = vunpack.c.l.b16 %v8615
        %v8684 = vunpack.c.l.b16 %v8616
        %v8685 = vunpack.c.l.b16 %v8617
        %v8686 = vunpack.c.l.b16 %v8618
        %v8687 = vpack.c.b16 %v8656, %v8655
        %v8688 = vpack.c.b16 %v8658, %v8657
        %v8689 = vpack.c.b16 %v8660, %v8659
        %v8690 = vpack.c.b16 %v8662, %v8661
        %v8691 = vpack.c.b16 %v8664, %v8663
        %v8692 = vpack.c.b16 %v8666, %v8665
        %v8693 = vpack.c.b16 %v8668, %v8667
        %v8694 = vpack.c.b16 %v8670, %v8669
        %v8695 = vpack.c.b16 %v8672, %v8671
        %v8696 = vpack.c.b16 %v8674, %v8673
        %v8697 = vpack.c.b16 %v8676, %v8675
        %v8698 = vpack.c.b16 %v8678, %v8677
        %v8699 = vpack.c.b16 %v8680, %v8679
        %v8700 = vpack.c.b16 %v8682, %v8681
        %v8701 = vpack.c.b16 %v8684, %v8683
        %v8702 = vpack.c.b16 %v8686, %v8685
        %8719 = vmatprep.subr.bf16.mxu0 0
        %8720 = vmatpush1.bf16.msra.mxu0 %v8687
        %8721 = vmatprep.subr.bf16.mxu0 0
        %8722 = vmatpush1.bf16.msra.mxu0 %v8688
        %8723 = vmatprep.subr.bf16.mxu0 0
        %8724 = vmatpush1.bf16.msra.mxu0 %v8689
        %8725 = vmatprep.subr.bf16.mxu0 0
        %8726 = vmatpush1.bf16.msra.mxu0 %v8690
        %8727 = vmatprep.subr.bf16.mxu0 0
        %8728 = vmatpush1.bf16.msra.mxu0 %v8691
        %8729 = vmatprep.subr.bf16.mxu0 0
        %8730 = vmatpush1.bf16.msra.mxu0 %v8692
        %8731 = vmatprep.subr.bf16.mxu0 0
        %8732 = vmatpush1.bf16.msra.mxu0 %v8693
        %8733 = vmatprep.subr.bf16.mxu0 0
        %8734 = vmatpush1.bf16.msra.mxu0 %v8694
        %8735 = vmatprep.subr.bf16.mxu0 0
        %8736 = vmatpush1.bf16.msra.mxu0 %v8695
        %8737 = vmatprep.subr.bf16.mxu0 0
        %8738 = vmatpush1.bf16.msra.mxu0 %v8696
        %8739 = vmatprep.subr.bf16.mxu0 0
        %8740 = vmatpush1.bf16.msra.mxu0 %v8697
        %8741 = vmatprep.subr.bf16.mxu0 0
        %8742 = vmatpush1.bf16.msra.mxu0 %v8698
        %8743 = vmatprep.subr.bf16.mxu0 0
        %8744 = vmatpush1.bf16.msra.mxu0 %v8699
        %8745 = vmatprep.subr.bf16.mxu0 0
        %8746 = vmatpush1.bf16.msra.mxu0 %v8700
        %8747 = vmatprep.subr.bf16.mxu0 0
        %8748 = vmatpush1.bf16.msra.mxu0 %v8701
        %8749 = vmatprep.subr.bf16.mxu0 0
        %8750 = vmatpush1.bf16.msra.mxu0 %v8702
        %8751 = vmatprep.mubr.bf16.mxu0 %v8586
        %8752 = vmatmul.mubr.bf16.gmra.mrb[0].mxu0 %v8585
        %v8753 = vpop.f32.mrb[0].mxu0
        %v8754 = vadd.f32 %v8622, %v8753
        %v8755 = vpop.f32.mrb[0].mxu0
        %v8756 = vpop.f32.mrb[0].mxu0
        %v8757 = vadd.f32 %v8622, %v8756
        %v8758 = vpop.f32.mrb[0].mxu0
        %8759 = vdwg.mxu0
        %v8760 = vadd.f32 %v8427, %v8754
        %v8761 = vadd.f32 %v8428, %v8757
        %8762 = vadd.xlane.f32.xlu0 %v8760
        %v8763 = vpop.xlane.xlu0 %8762
        %8764 = vadd.xlane.f32.xlu0 %v8761
        %v8765 = vpop.xlane.xlu0 %8764
        %v8766 = vmul.f32 %v8763, %v3152
        %v8767 = vmul.f32 %v8765, %v3152
        %v8768 = vsub.f32 %v8760, %v8766
        %v8769 = vsub.f32 %v8761, %v8767
        %v8770 = vmul.f32 %v8768, %v8768
        %v8771 = vmul.f32 %v8769, %v8769
        %8772 = vadd.xlane.f32.xlu0 %v8770
        %v8773 = vpop.xlane.xlu0 %8772
        %8774 = vadd.xlane.f32.xlu0 %v8771
        %v8775 = vpop.xlane.xlu0 %8774
        %v8776 = vmul.f32 %v8773, %v3152
        %v8777 = vmul.f32 %v8775, %v3152
        %v8778 = vadd.f32 %v8776, 1e-05
        %v8779 = vadd.f32 %v8777, 1e-05
        %v8780 = vrsqrt.pop %v8778
        %v8781 = vrsqrt.pop %v8779
        %v8782 = vmul.f32 %v8768, %v8780
        %v8783 = vmul.f32 %v8769, %v8781
        %v8784 = vlaneseq
        %v8785 = vshrl.u32 %v8784, 7
        %v8786 = vsub.s32 0, %v8785
        %v8787 = vrot.slane %v775, %v8786
        %v8788 = vmul.f32 %v8782, %v8787
        %v8789 = vmul.f32 %v8783, %v8787
        %v8790 = vlaneseq
        %v8791 = vshrl.u32 %v8790, 7
        %v8792 = vsub.s32 1, %v8791
        %v8793 = vrot.slane %v775, %v8792
        %v8794 = vadd.f32 %v8788, %v8793
        %v8795 = vadd.f32 %v8789, %v8793
        %8796 = vst [vmem:[#allocation10] sm:$0xff] %v8794
        %8797 = vst [vmem:[#allocation10 + $0x8] sm:$0xff] %v8795
        %p8798 = scmp.eq.s32.totalorder %s37, 1
        // Predicated region
        $region85: #{tpu_custom_call.1} parent=63 // pred_check
          %p8799 = pneg %p8798
        $region86: #{tpu_custom_call.1} parent=63 // pred_check_branch
          %8801 = sbr.rel (%p8799) target = $region88
        $region87: #{tpu_custom_call.1} parent=63 // pred_region
          %v8802 = vld [vmem:[%s9] sm:$0x1]
          %v8803 = vld [vmem:[%s10] sm:$0x1]
          %8804 = vadd.xlane.f32.xlu0 %v8794
          %v8805 = vpop.xlane.xlu0 %8804
          %8806 = vadd.xlane.f32.xlu0 %v8795
          %v8807 = vpop.xlane.xlu0 %8806
          %v8808 = vmul.f32 %v8805, %v3152
          %v8809 = vmul.f32 %v8807, %v3152
          %v8810 = vsub.f32 %v8794, %v8808
          %v8811 = vsub.f32 %v8795, %v8809
          %v8812 = vmul.f32 %v8810, %v8810
          %v8813 = vmul.f32 %v8811, %v8811
          %8814 = vadd.xlane.f32.xlu0 %v8812
          %v8815 = vpop.xlane.xlu0 %8814
          %8816 = vadd.xlane.f32.xlu0 %v8813
          %v8817 = vpop.xlane.xlu0 %8816
          %v8818 = vmul.f32 %v8815, %v3152
          %v8819 = vmul.f32 %v8817, %v3152
          %v8820 = vadd.f32 %v8818, 1e-05
          %v8821 = vadd.f32 %v8819, 1e-05
          %v8822 = vrsqrt.pop %v8820
          %v8823 = vrsqrt.pop %v8821
          %v8824 = vmul.f32 %v8810, %v8822
          %v8825 = vmul.f32 %v8811, %v8823
          %v8827 = vlaneseq
          %v8828 = vshrl.u32 %v8827, 7
          %v8829 = vsub.s32 0, %v8828
          %v8830 = vrot.slane %v8802, %v8829
          %v8832 = vmul.f32 %v8824, %v8830
          %v8833 = vmul.f32 %v8825, %v8830
          %v8835 = vlaneseq
          %v8836 = vshrl.u32 %v8835, 7
          %v8837 = vsub.s32 0, %v8836
          %v8838 = vrot.slane %v8803, %v8837
          %v8840 = vadd.f32 %v8832, %v8838
          %v8841 = vadd.f32 %v8833, %v8838
          %8842 = vst [vmem:[#allocation10] sm:$0xff] %v8840
          %8843 = vst [vmem:[#allocation10 + $0x8] sm:$0xff] %v8841
        $region88: #{tpu_custom_call.1} parent=63 // pred_fallthru
          _
        // Predicated region
        $region89: #{tpu_custom_call.1} parent=63 // pred_check
          %p8844 = pneg %p338
        $region90: #{tpu_custom_call.1} parent=63 // pred_check_branch
          %8846 = sbr.rel (%p8844) target = $region92
        $region91: #{tpu_custom_call.1} parent=63 // pred_region
          %s8847 = smul.u32 2, %s36
          %s8849 = ssub.s32 256, 256
          %8850 = vsyncadd [#allocation4], %s8849
          %s8851 = smul.addr %s8847, 128
          %s8852 = scalar_lea.hbm %s11, %s8851
          %s8853 = sshll.u32 [#allocation10], 4
          %s8854 = int_to_ptr.vmem [resolvable:$true] %s8853
          %8859 = dma.vmem_to_hbm [thread:$0]  %s8854, 256, %s8852, [#allocation4], 128, 128, 8
        $region92: #{tpu_custom_call.1} parent=63 // pred_fallthru
          _
        // Predicated region
        $region93: #{tpu_custom_call.1} parent=63 // pred_check
          %p8860 = pneg %p338
        $region94: #{tpu_custom_call.1} parent=63 // pred_check_branch
          %8862 = sbr.rel (%p8860) target = $region96
        $region95: #{tpu_custom_call.1} parent=63 // pred_region
          %8863 = dma.done [#allocation4], 256
        $region96: #{tpu_custom_call.1} parent=63 // pred_fallthru
          _
      $region64: #{tpu_custom_call.1} parent=5 // pred_fallthru
        _
      %p8864 = scmp.le.s32.totalorder 2, %s27
      // Predicated region
      $region97: #{tpu_custom_call.1} parent=5 // pred_check
        %p8865 = pneg %p8864
      $region98: #{tpu_custom_call.1} parent=5 // pred_check_branch
        %8867 = sbr.rel (%p8865) target = $region100
      $region99: #{tpu_custom_call.1} parent=5 // pred_region
        %s8868 = ssub.s32 %s27, 2
      $region100: #{tpu_custom_call.1} parent=5 // pred_fallthru
        _
    $region6: #{tpu_custom_call.1} parent=1 // loop_footer
      %s31 = sadd.s32 1, %s27
    $region7: #{tpu_custom_call.1} parent=1 // loop_footer_branch
      %26 = sbr.rel target = $region3
    $region8: #{tpu_custom_call.1} parent=1 // loop_exit
      _
    %8869 = vsyncpa [#allocation3], 1
    %s8870 = scalar_lea.sflag [#allocation3], 1
    %8871 = vsyncpa %s8870, 1
    %8872 = vsyncpa [#allocation6], 1
    %s8873 = scalar_lea.sflag [#allocation6], 1
    %8874 = vsyncpa %s8873, 1
    %8875 = vsyncpa [#allocation9], 1
    %s8876 = scalar_lea.sflag [#allocation9], 1
    %8877 = vsyncpa %s8876, 1
    %8878 = vsyncpa [#allocation4], 1
    %s8879 = scalar_lea.sflag [#allocation4], 1
    %8880 = vsyncpa %s8879, 1

</llo_original>
